<compile_context>
chip_gen: v5e
topology: v5e:2x2
jax: 0.10.0
libtpu: 0.0.40
codegen_flags: <defaults>
</compile_context>

<pallas_src>
import functools
import math

import jax
import jax.numpy as jnp
from jax import lax
from jax.experimental import pallas as pl
from jax.experimental.pallas import tpu as pltpu


# ----------------------------------------------------------------------------
# Pallas kernel: all 9 (a, b) cross-attention pairs for one (batch, column-tile)
# ----------------------------------------------------------------------------
def _cross_attn_kernel(qT_ref, k_ref, ev_ref, xb_ref, o_ref, *, n_valid, exp_dtype):
    """
    qT_ref : (3C, tl)  bf16   q_a^T column slice, branches stacked on sublanes
    k_ref  : (3C, Lp)  bf16   k_b (full padded key length), branches stacked
    ev_ref : (3C, Lp)  bf16   W_a @ v_a (1x1 conv folded into v), branches stacked
    xb_ref : (3C, tl)  f32    x_a (flattened) + conv bias, branches stacked
    o_ref  : (9C, tl)  f32    rows [a*3C + b*C : a*3C + (b+1)*C] hold out_ab's column slice
    """
    c3, tl = qT_ref.shape
    C = c3 // 3
    Lp = k_ref.shape[1]

    if n_valid != Lp:  # static: additive mask for padded key rows of S^T
        row = lax.broadcasted_iota(jnp.int32, (Lp, 1), 0)
        key_mask = jnp.where(row < n_valid, 0.0, -jnp.inf).astype(jnp.float32)

    outs = []
    for a in range(3):
        ev_a = ev_ref[pl.ds(a * C, C), :]            # (C, Lp) bf16
        qa_t = qT_ref[pl.ds(a * C, C), :]            # (C, tl) bf16
        xb_a = xb_ref[pl.ds(a * C, C), :]            # (C, tl) f32
        ps, invs = [], []
        for b in range(3):
            kb = k_ref[pl.ds(b * C, C), :]           # (C, Lp) bf16
            # S^T[i, j] = sum_c k_b[c, i] * q_a[j, c]  (contract dim 0 of both -> no transpose)
            st = lax.dot_general(kb, qa_t, (((0,), (0,)), ((), ())),
                                 preferred_element_type=jnp.float32)      # (Lp, tl) f32
            if n_valid != Lp:
                st = st + key_mask
            # softmax over the original last axis == axis 0 of S^T (per output column)
            m = jnp.max(st, axis=0, keepdims=True)                        # (1, tl) f32
            p = jnp.exp((st - m).astype(exp_dtype))                       # unnormalized P^T
            denom = jnp.sum(p, axis=0, keepdims=True, dtype=jnp.float32)  # f32 accumulation
            invs.append(pl.reciprocal(denom, approx=True))                # EUP slot
            ps.append(p.astype(jnp.bfloat16))
        # One MXU call per branch a:  (C, Lp) @ (Lp, 3*tl), f32 accumulation.
        o_cat = jnp.dot(ev_a, jnp.concatenate(ps, axis=1),
                        preferred_element_type=jnp.float32)               # (C, 3*tl)
        for b in range(3):
            outs.append(o_cat[:, b * tl:(b + 1) * tl] * invs[b] + xb_a)   # f32 epilogue
    # Single dense (9C, tl) store per grid step.
    o_ref[...] = jnp.concatenate(outs, axis=0).astype(o_ref.dtype)


# ----------------------------------------------------------------------------
# Host wrapper
# ----------------------------------------------------------------------------
def _device_kind():
    try:
        return jax.devices()[0].device_kind.lower()
    except Exception:
        return ""


def _pick_tile(Lp, B, kind):
    """Largest lane tile (multiple of 128 dividing padded L) under a generation-aware cap."""
    cap = 256 if "v7" in kind else 512        # v7x: halved VMEM; v5e/v6e: amortize per-step cost
    divisors = [d for d in range(128, Lp + 1, 128) if Lp % d == 0]
    fitting = [d for d in divisors if d <= cap]
    tl = max(fitting) if fitting else min(divisors)
    if B * (Lp // tl) < 2:                    # keep both TensorCores busy (v7x megacore)
        multi = [d for d in divisors if Lp // d >= 2]
        if multi:
            tl = max(multi)
    return tl


def image_cross_attention_forward(params,
                                  poi_q, poi_k, poi_v,
                                  point_q, point_k, point_v,
                                  pop_q, pop_k, pop_v,
                                  x_poi, x_point, x_pop,
                                  out_dtype=jnp.float32):
    # TODO(synk): set out_dtype=jnp.bfloat16 on v5e if downstream consumers tolerate it
    #             (halves the dominant 9*C*L HBM writeback).
    B, C, Wd, Hd = x_poi.shape
    L = Wd * Hd
    f32, bf16 = jnp.float32, jnp.bfloat16

    kind = _device_kind()
    # bf16 EUP exists on v6e / v7x; keep exp in f32 on v5e and unknown chips.
    exp_dtype = bf16 if ("v6" in kind or "v7" in kind) else f32

    qs = [poi_q, point_q, pop_q]              # (B, L, C) each
    ks = [poi_k, point_k, pop_k]              # (B, C, L)
    vs = [poi_v, point_v, pop_v]              # (B, C, L)
    xs = [x_poi, x_point, x_pop]              # (B, C, W, H)

    # Launch-side layout plumbing: cast first, fold branches into the sublane (channel) axis.
    qT = jnp.concatenate([jnp.swapaxes(q.astype(bf16), -1, -2) for q in qs], axis=1)  # (B,3C,L)
    k = jnp.concatenate([kk.astype(bf16) for kk in ks], axis=1)                       # (B,3C,L)
    # Hoisted conv-weight fold:  ev_a = W_a @ v_a  (tiny XLA matmul, done once).
    ev = jnp.concatenate(
        [jnp.einsum("oc,bcl->bol", params["w"][a].astype(f32), vs[a].astype(f32),
                    precision=lax.Precision.HIGHEST) for a in range(3)],
        axis=1).astype(bf16)                                                           # (B,3C,L)
    # Residual + conv bias folded into one epilogue add.
    xb = jnp.concatenate(
        [xs[a].reshape(B, C, L).astype(f32) + params["b"][a].astype(f32)[None, :, None]
         for a in range(3)], axis=1)                                                   # (B,3C,L)

    # Pad L to a multiple of 128 so the lane axis stays dense (padded keys masked in-kernel).
    Lp = ((L + 127) // 128) * 128
    if Lp != L:
        pad = [(0, 0), (0, 0), (0, Lp - L)]
        qT = jnp.pad(qT, pad)
        k = jnp.pad(k, pad)
        ev = jnp.pad(ev, pad)
        xb = jnp.pad(xb, pad)

    tl = _pick_tile(Lp, B, kind)
    grid = (B, Lp // tl)

    kernel = functools.partial(_cross_attn_kernel, n_valid=L, exp_dtype=exp_dtype)

    # Generation-aware scoped-VMEM limit (the default 16/32 MiB scoped limits are the real ceiling).
    vmem_limit = (48 << 20) if "v7" in kind else (100 << 20)

    out = pl.pallas_call(
        kernel,
        out_shape=jax.ShapeDtypeStruct((B, 9 * C, Lp), out_dtype),
        grid=grid,
        in_specs=[
            pl.BlockSpec((None, 3 * C, tl), lambda n, j: (n, 0, j)),   # qT column slice (bf16)
            pl.BlockSpec((None, 3 * C, Lp), lambda n, j: (n, 0, 0)),   # k  full padded L (bf16)
            pl.BlockSpec((None, 3 * C, Lp), lambda n, j: (n, 0, 0)),   # ev full padded L (bf16)
            pl.BlockSpec((None, 3 * C, tl), lambda n, j: (n, 0, j)),   # x + bias (f32 epilogue)
        ],
        out_specs=pl.BlockSpec((None, 9 * C, tl), lambda n, j: (n, 0, j)),
        compiler_params=pltpu.CompilerParams(
            dimension_semantics=("parallel", "parallel"),
            vmem_limit_bytes=vmem_limit),
    )(qT, k, ev, xb)

    out = out[:, :, :L]
    out_poi = out[:, 0 * 3 * C:1 * 3 * C].reshape(B, 3 * C, Wd, Hd)
    out_point = out[:, 1 * 3 * C:2 * 3 * C].reshape(B, 3 * C, Wd, Hd)
    out_pop = out[:, 2 * 3 * C:3 * 3 * C].reshape(B, 3 * C, Wd, Hd)
    return out_poi, out_point, out_pop


# ----------------------------------------------------------------------------
# Parameters (PyTorch Conv2d(k=1) default init) and pure-JAX reference
# ----------------------------------------------------------------------------
def init_params(key, input_dim):
    bound = 1.0 / math.sqrt(input_dim)
    kw, kb = jax.random.split(key)
    w = jax.random.uniform(kw, (3, input_dim, input_dim), jnp.float32, -bound, bound)
    b = jax.random.uniform(kb, (3, input_dim), jnp.float32, -bound, bound)
    return {"w": w, "b": b}


def _reference_forward(params, qs, ks, vs, xs):
    hi = lax.Precision.HIGHEST
    outs = []
    for a in range(3):
        B, C, Wd, Hd = xs[a].shape
        L = Wd * Hd
        x_flat = xs[a].reshape(B, C, L)
        wa, ba = params["w"][a], params["b"][a]
        cat = []
        for b in range(3):
            s = jnp.einsum("blc,bcm->blm", qs[a], ks[b], precision=hi)   # (B, L, L)
            p = jax.nn.softmax(s, axis=-1)
            y = jnp.einsum("bci,bji->bcj", vs[a], p, precision=hi)       # v_a @ p^T -> (B, C, L)
            z = jnp.einsum("oc,bcl->bol", wa, y, precision=hi) + ba[None, :, None]
            cat.append((z + x_flat).reshape(B, C, Wd, Hd))
        outs.append(jnp.concatenate(cat, axis=1))
    return tuple(outs)


# ----------------------------------------------------------------------------
# Demo
# ----------------------------------------------------------------------------
if __name__ == "__main__":
    B, C, Wd, Hd = 2, 4, 16, 16          # L = 256 (multiple of 128)
    L = Wd * Hd

    root = jax.random.PRNGKey(0)
    keys = jax.random.split(root, 13)
    params = init_params(keys[0], C)

    mk = lambda kk, shape: jax.random.normal(kk, shape, jnp.float32)
    poi_q, point_q, pop_q = (mk(keys[i], (B, L, C)) for i in (1, 2, 3))
    poi_k, point_k, pop_k = (mk(keys[i], (B, C, L)) for i in (4, 5, 6))
    poi_v, point_v, pop_v = (mk(keys[i], (B, C, L)) for i in (7, 8, 9))
    x_poi, x_point, x_pop = (mk(keys[i], (B, C, Wd, Hd)) for i in (10, 11, 12))

    fwd = jax.jit(image_cross_attention_forward)
    out_poi, out_point, out_pop = jax.block_until_ready(
        fwd(params,
            poi_q, poi_k, poi_v,
            point_q, point_k, point_v,
            pop_q, pop_k, pop_v,
            x_poi, x_point, x_pop))

    expected = (B, 3 * C, Wd, Hd)
    for o in (out_poi, out_point, out_pop):
        assert o.shape == expected, (o.shape, expected)
        assert bool(jnp.all(jnp.isfinite(o)))

    ref = _reference_forward(params,
                             [poi_q, point_q, pop_q],
                             [poi_k, point_k, pop_k],
                             [poi_v, point_v, pop_v],
                             [x_poi, x_point, x_pop])
    # bf16 MXU operands (scores + PV), bf16 exp on v6e/v7x, approx EUP reciprocal -> mixed tol.
    for got, want in zip((out_poi, out_point, out_pop), ref):
        diff = jnp.abs(got.astype(jnp.float32) - want)
        tol = 5e-2 + 5e-2 * jnp.abs(want)
        excess = float(jnp.max(diff - tol))
        assert excess <= 0.0, f"tolerance exceeded by {excess}"

    print("KERNEL_OK")
</pallas_src>

<mosaic_0001>
module attributes {stable_mosaic.version = 11 : i64} {
  func.func @_cross_attn_kernel(%arg0: i32, %arg1: i32, %arg2: memref<1x12x256xbf16, #tpu.memory_space<vmem>>, %arg3: memref<1x12x256xbf16, #tpu.memory_space<vmem>>, %arg4: memref<1x12x256xbf16, #tpu.memory_space<vmem>>, %arg5: memref<1x12x256xf32, #tpu.memory_space<vmem>>, %arg6: memref<1x36x256xf32, #tpu.memory_space<vmem>>) attributes {dimension_semantics = [#tpu.dimension_semantics<parallel>, #tpu.dimension_semantics<parallel>], iteration_bounds = array<i64: 2, 1>, scalar_prefetch = 0 : i64, scratch_operands = 0 : i64, tpu.core_type = #tpu.core_type<tc>, window_params = [{transform_indices = @transform_0, window_bounds = array<i64: 1, 12, 256>}, {transform_indices = @transform_1, window_bounds = array<i64: 1, 12, 256>}, {transform_indices = @transform_2, window_bounds = array<i64: 1, 12, 256>}, {transform_indices = @transform_3, window_bounds = array<i64: 1, 12, 256>}, {transform_indices = @transform_4, window_bounds = array<i64: 1, 36, 256>}]} {
    %c0 = arith.constant 0 : index
    %c0_0 = arith.constant 0 : index
    %c0_1 = arith.constant 0 : index
    %0 = vector.load %arg4[%c0, %c0_0, %c0_1] : memref<1x12x256xbf16, #tpu.memory_space<vmem>>, vector<1x4x256xbf16>
    %1 = vector.shape_cast %0 : vector<1x4x256xbf16> to vector<4x256xbf16>
    %c0_2 = arith.constant 0 : index
    %c0_3 = arith.constant 0 : index
    %c0_4 = arith.constant 0 : index
    %2 = vector.load %arg2[%c0_2, %c0_3, %c0_4] : memref<1x12x256xbf16, #tpu.memory_space<vmem>>, vector<1x4x256xbf16>
    %3 = vector.shape_cast %2 : vector<1x4x256xbf16> to vector<4x256xbf16>
    %c0_5 = arith.constant 0 : index
    %c0_6 = arith.constant 0 : index
    %c0_7 = arith.constant 0 : index
    %4 = vector.load %arg5[%c0_5, %c0_6, %c0_7] : memref<1x12x256xf32, #tpu.memory_space<vmem>>, vector<1x4x256xf32>
    %5 = vector.shape_cast %4 : vector<1x4x256xf32> to vector<4x256xf32>
    %c0_8 = arith.constant 0 : index
    %c0_9 = arith.constant 0 : index
    %c0_10 = arith.constant 0 : index
    %6 = vector.load %arg3[%c0_8, %c0_9, %c0_10] : memref<1x12x256xbf16, #tpu.memory_space<vmem>>, vector<1x4x256xbf16>
    %7 = vector.shape_cast %6 : vector<1x4x256xbf16> to vector<4x256xbf16>
    %cst = arith.constant dense<0.000000e+00> : vector<256x256xf32>
    %8 = tpu.matmul %7, %3, %cst {dimension_numbers = #tpu.dot_dimension_numbers<[0], [0], [1], [1], [0, 1, 1, 1], [], []>} : vector<4x256xbf16>, vector<4x256xbf16>, vector<256x256xf32> -> vector<256x256xf32>
    %cst_11 = arith.constant dense<0xFF800000> : vector<256xf32>
    %9 = vector.multi_reduction <maximumf>, %8, %cst_11 [0] : vector<256x256xf32> to vector<256xf32>
    %10 = vector.shape_cast %9 : vector<256xf32> to vector<1x256xf32>
    %11 = vector.broadcast %10 : vector<1x256xf32> to vector<256x256xf32>
    %12 = arith.subf %8, %11 : vector<256x256xf32>
    %13 = math.exp %12 : vector<256x256xf32>
    %cst_12 = arith.constant dense<0.000000e+00> : vector<256xf32>
    %14 = vector.multi_reduction <add>, %13, %cst_12 [0] : vector<256x256xf32> to vector<256xf32>
    %15 = vector.shape_cast %14 : vector<256xf32> to vector<1x256xf32>
    %16 = tpu.reciprocal %15 {approx = true} : vector<1x256xf32> -> vector<1x256xf32>
    %17 = arith.truncf %13 : vector<256x256xf32> to vector<256x256xbf16>
    %c0_13 = arith.constant 0 : index
    %c4 = arith.constant 4 : index
    %c0_14 = arith.constant 0 : index
    %18 = vector.load %arg3[%c0_13, %c4, %c0_14] : memref<1x12x256xbf16, #tpu.memory_space<vmem>>, vector<1x4x256xbf16>
    %19 = vector.shape_cast %18 : vector<1x4x256xbf16> to vector<4x256xbf16>
    %cst_15 = arith.constant dense<0.000000e+00> : vector<256x256xf32>
    %20 = tpu.matmul %19, %3, %cst_15 {dimension_numbers = #tpu.dot_dimension_numbers<[0], [0], [1], [1], [0, 1, 1, 1], [], []>} : vector<4x256xbf16>, vector<4x256xbf16>, vector<256x256xf32> -> vector<256x256xf32>
    %cst_16 = arith.constant dense<0xFF800000> : vector<256xf32>
    %21 = vector.multi_reduction <maximumf>, %20, %cst_16 [0] : vector<256x256xf32> to vector<256xf32>
    %22 = vector.shape_cast %21 : vector<256xf32> to vector<1x256xf32>
    %23 = vector.broadcast %22 : vector<1x256xf32> to vector<256x256xf32>
    %24 = arith.subf %20, %23 : vector<256x256xf32>
    %25 = math.exp %24 : vector<256x256xf32>
    %cst_17 = arith.constant dense<0.000000e+00> : vector<256xf32>
    %26 = vector.multi_reduction <add>, %25, %cst_17 [0] : vector<256x256xf32> to vector<256xf32>
    %27 = vector.shape_cast %26 : vector<256xf32> to vector<1x256xf32>
    %28 = tpu.reciprocal %27 {approx = true} : vector<1x256xf32> -> vector<1x256xf32>
    %29 = arith.truncf %25 : vector<256x256xf32> to vector<256x256xbf16>
    %c0_18 = arith.constant 0 : index
    %c8 = arith.constant 8 : index
    %c0_19 = arith.constant 0 : index
    %30 = vector.load %arg3[%c0_18, %c8, %c0_19] : memref<1x12x256xbf16, #tpu.memory_space<vmem>>, vector<1x4x256xbf16>
    %31 = vector.shape_cast %30 : vector<1x4x256xbf16> to vector<4x256xbf16>
    %cst_20 = arith.constant dense<0.000000e+00> : vector<256x256xf32>
    %32 = tpu.matmul %31, %3, %cst_20 {dimension_numbers = #tpu.dot_dimension_numbers<[0], [0], [1], [1], [0, 1, 1, 1], [], []>} : vector<4x256xbf16>, vector<4x256xbf16>, vector<256x256xf32> -> vector<256x256xf32>
    %cst_21 = arith.constant dense<0xFF800000> : vector<256xf32>
    %33 = vector.multi_reduction <maximumf>, %32, %cst_21 [0] : vector<256x256xf32> to vector<256xf32>
    %34 = vector.shape_cast %33 : vector<256xf32> to vector<1x256xf32>
    %35 = vector.broadcast %34 : vector<1x256xf32> to vector<256x256xf32>
    %36 = arith.subf %32, %35 : vector<256x256xf32>
    %37 = math.exp %36 : vector<256x256xf32>
    %cst_22 = arith.constant dense<0.000000e+00> : vector<256xf32>
    %38 = vector.multi_reduction <add>, %37, %cst_22 [0] : vector<256x256xf32> to vector<256xf32>
    %39 = vector.shape_cast %38 : vector<256xf32> to vector<1x256xf32>
    %40 = tpu.reciprocal %39 {approx = true} : vector<1x256xf32> -> vector<1x256xf32>
    %41 = arith.truncf %37 : vector<256x256xf32> to vector<256x256xbf16>
    %42 = tpu.concatenate %17, %29, %41 in 1 : vector<256x256xbf16>, vector<256x256xbf16>, vector<256x256xbf16> -> vector<256x768xbf16>
    %cst_23 = arith.constant dense<0.000000e+00> : vector<4x768xf32>
    %43 = tpu.matmul %1, %42, %cst_23 {dimension_numbers = #tpu.dot_dimension_numbers<[1], [0], [0], [1], [0, 0, 1, 1], [], []>} : vector<4x256xbf16>, vector<256x768xbf16>, vector<4x768xf32> -> vector<4x768xf32>
    %44 = vector.extract_strided_slice %43 {offsets = [0, 0], sizes = [4, 256], strides = [1, 1]} : vector<4x768xf32> to vector<4x256xf32>
    %45 = vector.broadcast %16 : vector<1x256xf32> to vector<4x256xf32>
    %46 = arith.mulf %44, %45 : vector<4x256xf32>
    %47 = arith.addf %46, %5 : vector<4x256xf32>
    %48 = vector.extract_strided_slice %43 {offsets = [0, 256], sizes = [4, 256], strides = [1, 1]} : vector<4x768xf32> to vector<4x256xf32>
    %49 = vector.broadcast %28 : vector<1x256xf32> to vector<4x256xf32>
    %50 = arith.mulf %48, %49 : vector<4x256xf32>
    %51 = arith.addf %50, %5 : vector<4x256xf32>
    %52 = vector.extract_strided_slice %43 {offsets = [0, 512], sizes = [4, 256], strides = [1, 1]} : vector<4x768xf32> to vector<4x256xf32>
    %53 = vector.broadcast %40 : vector<1x256xf32> to vector<4x256xf32>
    %54 = arith.mulf %52, %53 : vector<4x256xf32>
    %55 = arith.addf %54, %5 : vector<4x256xf32>
    %c0_24 = arith.constant 0 : index
    %c4_25 = arith.constant 4 : index
    %c0_26 = arith.constant 0 : index
    %56 = vector.load %arg4[%c0_24, %c4_25, %c0_26] : memref<1x12x256xbf16, #tpu.memory_space<vmem>>, vector<1x4x256xbf16>
    %57 = vector.shape_cast %56 : vector<1x4x256xbf16> to vector<4x256xbf16>
    %c0_27 = arith.constant 0 : index
    %c4_28 = arith.constant 4 : index
    %c0_29 = arith.constant 0 : index
    %58 = vector.load %arg2[%c0_27, %c4_28, %c0_29] : memref<1x12x256xbf16, #tpu.memory_space<vmem>>, vector<1x4x256xbf16>
    %59 = vector.shape_cast %58 : vector<1x4x256xbf16> to vector<4x256xbf16>
    %c0_30 = arith.constant 0 : index
    %c4_31 = arith.constant 4 : index
    %c0_32 = arith.constant 0 : index
    %60 = vector.load %arg5[%c0_30, %c4_31, %c0_32] : memref<1x12x256xf32, #tpu.memory_space<vmem>>, vector<1x4x256xf32>
    %61 = vector.shape_cast %60 : vector<1x4x256xf32> to vector<4x256xf32>
    %c0_33 = arith.constant 0 : index
    %c0_34 = arith.constant 0 : index
    %c0_35 = arith.constant 0 : index
    %62 = vector.load %arg3[%c0_33, %c0_34, %c0_35] : memref<1x12x256xbf16, #tpu.memory_space<vmem>>, vector<1x4x256xbf16>
    %63 = vector.shape_cast %62 : vector<1x4x256xbf16> to vector<4x256xbf16>
    %cst_36 = arith.constant dense<0.000000e+00> : vector<256x256xf32>
    %64 = tpu.matmul %63, %59, %cst_36 {dimension_numbers = #tpu.dot_dimension_numbers<[0], [0], [1], [1], [0, 1, 1, 1], [], []>} : vector<4x256xbf16>, vector<4x256xbf16>, vector<256x256xf32> -> vector<256x256xf32>
    %cst_37 = arith.constant dense<0xFF800000> : vector<256xf32>
    %65 = vector.multi_reduction <maximumf>, %64, %cst_37 [0] : vector<256x256xf32> to vector<256xf32>
    %66 = vector.shape_cast %65 : vector<256xf32> to vector<1x256xf32>
    %67 = vector.broadcast %66 : vector<1x256xf32> to vector<256x256xf32>
    %68 = arith.subf %64, %67 : vector<256x256xf32>
    %69 = math.exp %68 : vector<256x256xf32>
    %cst_38 = arith.constant dense<0.000000e+00> : vector<256xf32>
    %70 = vector.multi_reduction <add>, %69, %cst_38 [0] : vector<256x256xf32> to vector<256xf32>
    %71 = vector.shape_cast %70 : vector<256xf32> to vector<1x256xf32>
    %72 = tpu.reciprocal %71 {approx = true} : vector<1x256xf32> -> vector<1x256xf32>
    %73 = arith.truncf %69 : vector<256x256xf32> to vector<256x256xbf16>
    %c0_39 = arith.constant 0 : index
    %c4_40 = arith.constant 4 : index
    %c0_41 = arith.constant 0 : index
    %74 = vector.load %arg3[%c0_39, %c4_40, %c0_41] : memref<1x12x256xbf16, #tpu.memory_space<vmem>>, vector<1x4x256xbf16>
    %75 = vector.shape_cast %74 : vector<1x4x256xbf16> to vector<4x256xbf16>
    %cst_42 = arith.constant dense<0.000000e+00> : vector<256x256xf32>
    %76 = tpu.matmul %75, %59, %cst_42 {dimension_numbers = #tpu.dot_dimension_numbers<[0], [0], [1], [1], [0, 1, 1, 1], [], []>} : vector<4x256xbf16>, vector<4x256xbf16>, vector<256x256xf32> -> vector<256x256xf32>
    %cst_43 = arith.constant dense<0xFF800000> : vector<256xf32>
    %77 = vector.multi_reduction <maximumf>, %76, %cst_43 [0] : vector<256x256xf32> to vector<256xf32>
    %78 = vector.shape_cast %77 : vector<256xf32> to vector<1x256xf32>
    %79 = vector.broadcast %78 : vector<1x256xf32> to vector<256x256xf32>
    %80 = arith.subf %76, %79 : vector<256x256xf32>
    %81 = math.exp %80 : vector<256x256xf32>
    %cst_44 = arith.constant dense<0.000000e+00> : vector<256xf32>
    %82 = vector.multi_reduction <add>, %81, %cst_44 [0] : vector<256x256xf32> to vector<256xf32>
    %83 = vector.shape_cast %82 : vector<256xf32> to vector<1x256xf32>
    %84 = tpu.reciprocal %83 {approx = true} : vector<1x256xf32> -> vector<1x256xf32>
    %85 = arith.truncf %81 : vector<256x256xf32> to vector<256x256xbf16>
    %c0_45 = arith.constant 0 : index
    %c8_46 = arith.constant 8 : index
    %c0_47 = arith.constant 0 : index
    %86 = vector.load %arg3[%c0_45, %c8_46, %c0_47] : memref<1x12x256xbf16, #tpu.memory_space<vmem>>, vector<1x4x256xbf16>
    %87 = vector.shape_cast %86 : vector<1x4x256xbf16> to vector<4x256xbf16>
    %cst_48 = arith.constant dense<0.000000e+00> : vector<256x256xf32>
    %88 = tpu.matmul %87, %59, %cst_48 {dimension_numbers = #tpu.dot_dimension_numbers<[0], [0], [1], [1], [0, 1, 1, 1], [], []>} : vector<4x256xbf16>, vector<4x256xbf16>, vector<256x256xf32> -> vector<256x256xf32>
    %cst_49 = arith.constant dense<0xFF800000> : vector<256xf32>
    %89 = vector.multi_reduction <maximumf>, %88, %cst_49 [0] : vector<256x256xf32> to vector<256xf32>
    %90 = vector.shape_cast %89 : vector<256xf32> to vector<1x256xf32>
    %91 = vector.broadcast %90 : vector<1x256xf32> to vector<256x256xf32>
    %92 = arith.subf %88, %91 : vector<256x256xf32>
    %93 = math.exp %92 : vector<256x256xf32>
    %cst_50 = arith.constant dense<0.000000e+00> : vector<256xf32>
    %94 = vector.multi_reduction <add>, %93, %cst_50 [0] : vector<256x256xf32> to vector<256xf32>
    %95 = vector.shape_cast %94 : vector<256xf32> to vector<1x256xf32>
    %96 = tpu.reciprocal %95 {approx = true} : vector<1x256xf32> -> vector<1x256xf32>
    %97 = arith.truncf %93 : vector<256x256xf32> to vector<256x256xbf16>
    %98 = tpu.concatenate %73, %85, %97 in 1 : vector<256x256xbf16>, vector<256x256xbf16>, vector<256x256xbf16> -> vector<256x768xbf16>
    %cst_51 = arith.constant dense<0.000000e+00> : vector<4x768xf32>
    %99 = tpu.matmul %57, %98, %cst_51 {dimension_numbers = #tpu.dot_dimension_numbers<[1], [0], [0], [1], [0, 0, 1, 1], [], []>} : vector<4x256xbf16>, vector<256x768xbf16>, vector<4x768xf32> -> vector<4x768xf32>
    %100 = vector.extract_strided_slice %99 {offsets = [0, 0], sizes = [4, 256], strides = [1, 1]} : vector<4x768xf32> to vector<4x256xf32>
    %101 = vector.broadcast %72 : vector<1x256xf32> to vector<4x256xf32>
    %102 = arith.mulf %100, %101 : vector<4x256xf32>
    %103 = arith.addf %102, %61 : vector<4x256xf32>
    %104 = vector.extract_strided_slice %99 {offsets = [0, 256], sizes = [4, 256], strides = [1, 1]} : vector<4x768xf32> to vector<4x256xf32>
    %105 = vector.broadcast %84 : vector<1x256xf32> to vector<4x256xf32>
    %106 = arith.mulf %104, %105 : vector<4x256xf32>
    %107 = arith.addf %106, %61 : vector<4x256xf32>
    %108 = vector.extract_strided_slice %99 {offsets = [0, 512], sizes = [4, 256], strides = [1, 1]} : vector<4x768xf32> to vector<4x256xf32>
    %109 = vector.broadcast %96 : vector<1x256xf32> to vector<4x256xf32>
    %110 = arith.mulf %108, %109 : vector<4x256xf32>
    %111 = arith.addf %110, %61 : vector<4x256xf32>
    %c0_52 = arith.constant 0 : index
    %c8_53 = arith.constant 8 : index
    %c0_54 = arith.constant 0 : index
    %112 = vector.load %arg4[%c0_52, %c8_53, %c0_54] : memref<1x12x256xbf16, #tpu.memory_space<vmem>>, vector<1x4x256xbf16>
    %113 = vector.shape_cast %112 : vector<1x4x256xbf16> to vector<4x256xbf16>
    %c0_55 = arith.constant 0 : index
    %c8_56 = arith.constant 8 : index
    %c0_57 = arith.constant 0 : index
    %114 = vector.load %arg2[%c0_55, %c8_56, %c0_57] : memref<1x12x256xbf16, #tpu.memory_space<vmem>>, vector<1x4x256xbf16>
    %115 = vector.shape_cast %114 : vector<1x4x256xbf16> to vector<4x256xbf16>
    %c0_58 = arith.constant 0 : index
    %c8_59 = arith.constant 8 : index
    %c0_60 = arith.constant 0 : index
    %116 = vector.load %arg5[%c0_58, %c8_59, %c0_60] : memref<1x12x256xf32, #tpu.memory_space<vmem>>, vector<1x4x256xf32>
    %117 = vector.shape_cast %116 : vector<1x4x256xf32> to vector<4x256xf32>
    %c0_61 = arith.constant 0 : index
    %c0_62 = arith.constant 0 : index
    %c0_63 = arith.constant 0 : index
    %118 = vector.load %arg3[%c0_61, %c0_62, %c0_63] : memref<1x12x256xbf16, #tpu.memory_space<vmem>>, vector<1x4x256xbf16>
    %119 = vector.shape_cast %118 : vector<1x4x256xbf16> to vector<4x256xbf16>
    %cst_64 = arith.constant dense<0.000000e+00> : vector<256x256xf32>
    %120 = tpu.matmul %119, %115, %cst_64 {dimension_numbers = #tpu.dot_dimension_numbers<[0], [0], [1], [1], [0, 1, 1, 1], [], []>} : vector<4x256xbf16>, vector<4x256xbf16>, vector<256x256xf32> -> vector<256x256xf32>
    %cst_65 = arith.constant dense<0xFF800000> : vector<256xf32>
    %121 = vector.multi_reduction <maximumf>, %120, %cst_65 [0] : vector<256x256xf32> to vector<256xf32>
    %122 = vector.shape_cast %121 : vector<256xf32> to vector<1x256xf32>
    %123 = vector.broadcast %122 : vector<1x256xf32> to vector<256x256xf32>
    %124 = arith.subf %120, %123 : vector<256x256xf32>
    %125 = math.exp %124 : vector<256x256xf32>
    %cst_66 = arith.constant dense<0.000000e+00> : vector<256xf32>
    %126 = vector.multi_reduction <add>, %125, %cst_66 [0] : vector<256x256xf32> to vector<256xf32>
    %127 = vector.shape_cast %126 : vector<256xf32> to vector<1x256xf32>
    %128 = tpu.reciprocal %127 {approx = true} : vector<1x256xf32> -> vector<1x256xf32>
    %129 = arith.truncf %125 : vector<256x256xf32> to vector<256x256xbf16>
    %c0_67 = arith.constant 0 : index
    %c4_68 = arith.constant 4 : index
    %c0_69 = arith.constant 0 : index
    %130 = vector.load %arg3[%c0_67, %c4_68, %c0_69] : memref<1x12x256xbf16, #tpu.memory_space<vmem>>, vector<1x4x256xbf16>
    %131 = vector.shape_cast %130 : vector<1x4x256xbf16> to vector<4x256xbf16>
    %cst_70 = arith.constant dense<0.000000e+00> : vector<256x256xf32>
    %132 = tpu.matmul %131, %115, %cst_70 {dimension_numbers = #tpu.dot_dimension_numbers<[0], [0], [1], [1], [0, 1, 1, 1], [], []>} : vector<4x256xbf16>, vector<4x256xbf16>, vector<256x256xf32> -> vector<256x256xf32>
    %cst_71 = arith.constant dense<0xFF800000> : vector<256xf32>
    %133 = vector.multi_reduction <maximumf>, %132, %cst_71 [0] : vector<256x256xf32> to vector<256xf32>
    %134 = vector.shape_cast %133 : vector<256xf32> to vector<1x256xf32>
    %135 = vector.broadcast %134 : vector<1x256xf32> to vector<256x256xf32>
    %136 = arith.subf %132, %135 : vector<256x256xf32>
    %137 = math.exp %136 : vector<256x256xf32>
    %cst_72 = arith.constant dense<0.000000e+00> : vector<256xf32>
    %138 = vector.multi_reduction <add>, %137, %cst_72 [0] : vector<256x256xf32> to vector<256xf32>
    %139 = vector.shape_cast %138 : vector<256xf32> to vector<1x256xf32>
    %140 = tpu.reciprocal %139 {approx = true} : vector<1x256xf32> -> vector<1x256xf32>
    %141 = arith.truncf %137 : vector<256x256xf32> to vector<256x256xbf16>
    %c0_73 = arith.constant 0 : index
    %c8_74 = arith.constant 8 : index
    %c0_75 = arith.constant 0 : index
    %142 = vector.load %arg3[%c0_73, %c8_74, %c0_75] : memref<1x12x256xbf16, #tpu.memory_space<vmem>>, vector<1x4x256xbf16>
    %143 = vector.shape_cast %142 : vector<1x4x256xbf16> to vector<4x256xbf16>
    %cst_76 = arith.constant dense<0.000000e+00> : vector<256x256xf32>
    %144 = tpu.matmul %143, %115, %cst_76 {dimension_numbers = #tpu.dot_dimension_numbers<[0], [0], [1], [1], [0, 1, 1, 1], [], []>} : vector<4x256xbf16>, vector<4x256xbf16>, vector<256x256xf32> -> vector<256x256xf32>
    %cst_77 = arith.constant dense<0xFF800000> : vector<256xf32>
    %145 = vector.multi_reduction <maximumf>, %144, %cst_77 [0] : vector<256x256xf32> to vector<256xf32>
    %146 = vector.shape_cast %145 : vector<256xf32> to vector<1x256xf32>
    %147 = vector.broadcast %146 : vector<1x256xf32> to vector<256x256xf32>
    %148 = arith.subf %144, %147 : vector<256x256xf32>
    %149 = math.exp %148 : vector<256x256xf32>
    %cst_78 = arith.constant dense<0.000000e+00> : vector<256xf32>
    %150 = vector.multi_reduction <add>, %149, %cst_78 [0] : vector<256x256xf32> to vector<256xf32>
    %151 = vector.shape_cast %150 : vector<256xf32> to vector<1x256xf32>
    %152 = tpu.reciprocal %151 {approx = true} : vector<1x256xf32> -> vector<1x256xf32>
    %153 = arith.truncf %149 : vector<256x256xf32> to vector<256x256xbf16>
    %154 = tpu.concatenate %129, %141, %153 in 1 : vector<256x256xbf16>, vector<256x256xbf16>, vector<256x256xbf16> -> vector<256x768xbf16>
    %cst_79 = arith.constant dense<0.000000e+00> : vector<4x768xf32>
    %155 = tpu.matmul %113, %154, %cst_79 {dimension_numbers = #tpu.dot_dimension_numbers<[1], [0], [0], [1], [0, 0, 1, 1], [], []>} : vector<4x256xbf16>, vector<256x768xbf16>, vector<4x768xf32> -> vector<4x768xf32>
    %156 = vector.extract_strided_slice %155 {offsets = [0, 0], sizes = [4, 256], strides = [1, 1]} : vector<4x768xf32> to vector<4x256xf32>
    %157 = vector.broadcast %128 : vector<1x256xf32> to vector<4x256xf32>
    %158 = arith.mulf %156, %157 : vector<4x256xf32>
    %159 = arith.addf %158, %117 : vector<4x256xf32>
    %160 = vector.extract_strided_slice %155 {offsets = [0, 256], sizes = [4, 256], strides = [1, 1]} : vector<4x768xf32> to vector<4x256xf32>
    %161 = vector.broadcast %140 : vector<1x256xf32> to vector<4x256xf32>
    %162 = arith.mulf %160, %161 : vector<4x256xf32>
    %163 = arith.addf %162, %117 : vector<4x256xf32>
    %164 = vector.extract_strided_slice %155 {offsets = [0, 512], sizes = [4, 256], strides = [1, 1]} : vector<4x768xf32> to vector<4x256xf32>
    %165 = vector.broadcast %152 : vector<1x256xf32> to vector<4x256xf32>
    %166 = arith.mulf %164, %165 : vector<4x256xf32>
    %167 = arith.addf %166, %117 : vector<4x256xf32>
    %168 = tpu.concatenate %47, %51, %55, %103, %107, %111, %159, %163, %167 in 0 : vector<4x256xf32>, vector<4x256xf32>, vector<4x256xf32>, vector<4x256xf32>, vector<4x256xf32>, vector<4x256xf32>, vector<4x256xf32>, vector<4x256xf32>, vector<4x256xf32> -> vector<36x256xf32>
    %c0_80 = arith.constant 0 : index
    %c0_81 = arith.constant 0 : index
    %c0_82 = arith.constant 0 : index
    %169 = vector.load %arg6[%c0_80, %c0_81, %c0_82] : memref<1x36x256xf32, #tpu.memory_space<vmem>>, vector<1x36x256xf32>
    %170 = vector.shape_cast %169 : vector<1x36x256xf32> to vector<36x256xf32>
    %171 = vector.shape_cast %168 : vector<36x256xf32> to vector<1x36x256xf32>
    tpu.vector_store %arg6[%c0_80, %c0_81, %c0_82], %171 {strides = array<i32>} : memref<1x36x256xf32, #tpu.memory_space<vmem>>, vector<1x36x256xf32>,
    return
  }
  func.func @transform_0(%arg0: i32, %arg1: i32) -> (i32, i32, i32) {
    %c0_i32 = arith.constant 0 : i32
    %c0_i32_0 = arith.constant 0 : i32
    return %arg0, %c0_i32, %arg1 : i32, i32, i32
  }
  func.func @transform_1(%arg0: i32, %arg1: i32) -> (i32, i32, i32) {
    %c0_i32 = arith.constant 0 : i32
    %c0_i32_0 = arith.constant 0 : i32
    %c0_i32_1 = arith.constant 0 : i32
    return %arg0, %c0_i32, %c0_i32_0 : i32, i32, i32
  }
  func.func @transform_2(%arg0: i32, %arg1: i32) -> (i32, i32, i32) {
    %c0_i32 = arith.constant 0 : i32
    %c0_i32_0 = arith.constant 0 : i32
    %c0_i32_1 = arith.constant 0 : i32
    return %arg0, %c0_i32, %c0_i32_0 : i32, i32, i32
  }
  func.func @transform_3(%arg0: i32, %arg1: i32) -> (i32, i32, i32) {
    %c0_i32 = arith.constant 0 : i32
    %c0_i32_0 = arith.constant 0 : i32
    return %arg0, %c0_i32, %arg1 : i32, i32, i32
  }
  func.func @transform_4(%arg0: i32, %arg1: i32) -> (i32, i32, i32) {
    %c0_i32 = arith.constant 0 : i32
    %c0_i32_0 = arith.constant 0 : i32
    return %arg0, %c0_i32, %arg1 : i32, i32, i32
  }
}

</mosaic_0001>

<llo_original>
// kernel: image_cross_attention_forward.1
$region0: #{image_cross_attention_forward.1}
  #allocation0 [shape = 'u32[]', space=smem, size = 0x4, offset = 0x4, fixed_abs, tag = 'smem constant byte address 0x4 - core index']
  #allocation1 [shape = 'u32[72,128]{1,0:T(1,128)}', space=vmem, size = 0x9000, scoped, tag = 'internal scratch']
  %s0 = inlined_call_operand.vmem [shape: bf16[2,12,256], index: 0, kind: input, shape index: {}]
  %s1 = inlined_call_operand.vmem [shape: bf16[2,12,256], index: 1, kind: input, shape index: {}]
  %s2 = inlined_call_operand.vmem [shape: bf16[2,12,256], index: 2, kind: input, shape index: {}]
  %s3 = inlined_call_operand.vmem [shape: f32[2,12,256], index: 3, kind: input, shape index: {}]
  %s4 = inlined_call_operand.vmem [shape: f32[2,36,256], index: 4, kind: output, shape index: {}]
  %s5 = sld [smem:[#allocation0]]
  $region49: #{image_cross_attention_forward.1} parent=0
    _
  %s7 = ssub.s32 1, %s5
  %s8 = scalar_select 0, %s7, %s5
  loop: start=0, step=1, limit=4
  $region2: #{image_cross_attention_forward.1} parent=0 // loop_pre_header
    _
  $region3: #{image_cross_attention_forward.1} parent=0 // loop_header
    %s10 = sphi 0, %s14
    %p11 = scmp.ge.s32.totalorder %s10, 4
    %s17 = sphi 0, %s29
    %s18 = sphi 0, %s25
    %s19 = sphi 0, %s17
    %s20 = sphi 0, %s18
    %s21 = sphi 0, %s19
    %s22 = sphi 0, %s20
    %s34 = sphi 0, %s36
    %s37 = sphi 0, %s34
    %s38 = sphi 0, %s37
    %s54 = sphi 0, %s38
    %s60 = sphi 0, %s62
    %s63 = sphi 0, %s60
    %s64 = sphi 0, %s63
    %s80 = sphi 0, %s64
    %s86 = sphi 0, %s88
    %s89 = sphi 0, %s86
    %s90 = sphi 0, %s89
    %s106 = sphi 0, %s90
    %s114 = sphi 0, %s116
    %s117 = sphi 0, %s114
    %s118 = sphi 0, %s117
    %s134 = sphi 0, %s118
    %s142 = sphi 0, %s144
    %s145 = sphi 0, %s142
    %s146 = sphi 0, %s145
    %s162 = sphi 0, %s146
  $region4: #{image_cross_attention_forward.1} parent=0 // loop_header_branch
    %13 = sbr.rel (%p11) target = $region8
  $region5: #{image_cross_attention_forward.1} parent=0 // loop_body
    %s15 = ssub.s32 %s10, 1
    %s16 = ssub.s32 %s10, 2
    %s23 = sadd.s32 1, %s18
    %p24 = scmp.ge.s32.totalorder %s23, 1
    %s25 = scalar_select %p24, 0, %s23
    %s26 = sadd.s32 1, %s17
    %s27 = scalar_select %p24, %s26, %s17
    %p28 = scmp.ge.s32.totalorder %s27, 2
    %s29 = scalar_select %p28, 0, %s27
    %s30 = ssub.s32 %s17, %s29
    %s31 = ssub.s32 %s18, %s25
    %s32 = sor.u32 %s30, %s31
    %p33 = scmp.eq.s32.totalorder %s32, 0
    %s35 = sadd.s32 %s34, 1
    %s36 = scalar_select %p33, %s34, %s35
    %p39 = pneg %p33
    %p40 = scmp.eq.s32.totalorder %s10, 1
    %p41 = por %p39, %p40
    %p42 = scmp.ne.s32.totalorder %s34, %s37
    %p43 = scmp.eq.s32.totalorder %s10, 0
    %p44 = por %p42, %p43
    %p45 = scmp.ne.s32.totalorder %s34, %s37
    %p46 = scmp.eq.s32.totalorder %s15, 1
    %p47 = por %p45, %p46
    %p48 = scmp.ne.s32.totalorder %s37, %s38
    %p49 = scmp.eq.s32.totalorder %s15, 0
    %p50 = por %p48, %p49
    %p51 = scmp.ne.s32.totalorder %s37, %s38
    %p52 = scmp.eq.s32.totalorder %s16, 1
    %p53 = por %p51, %p52
    %p55 = scmp.ne.s32.totalorder %s38, %s54
    %p56 = scmp.eq.s32.totalorder %s16, 0
    %p57 = por %p55, %p56
    %s58 = ssub.s32 %s17, %s29
    %p59 = scmp.eq.s32.totalorder %s58, 0
    %s61 = sadd.s32 %s60, 1
    %s62 = scalar_select %p59, %s60, %s61
    %p65 = pneg %p59
    %p66 = scmp.eq.s32.totalorder %s10, 1
    %p67 = por %p65, %p66
    %p68 = scmp.ne.s32.totalorder %s60, %s63
    %p69 = scmp.eq.s32.totalorder %s10, 0
    %p70 = por %p68, %p69
    %p71 = scmp.ne.s32.totalorder %s60, %s63
    %p72 = scmp.eq.s32.totalorder %s15, 1
    %p73 = por %p71, %p72
    %p74 = scmp.ne.s32.totalorder %s63, %s64
    %p75 = scmp.eq.s32.totalorder %s15, 0
    %p76 = por %p74, %p75
    %p77 = scmp.ne.s32.totalorder %s63, %s64
    %p78 = scmp.eq.s32.totalorder %s16, 1
    %p79 = por %p77, %p78
    %p81 = scmp.ne.s32.totalorder %s64, %s80
    %p82 = scmp.eq.s32.totalorder %s16, 0
    %p83 = por %p81, %p82
    %s84 = ssub.s32 %s17, %s29
    %p85 = scmp.eq.s32.totalorder %s84, 0
    %s87 = sadd.s32 %s86, 1
    %s88 = scalar_select %p85, %s86, %s87
    %p91 = pneg %p85
    %p92 = scmp.eq.s32.totalorder %s10, 1
    %p93 = por %p91, %p92
    %p94 = scmp.ne.s32.totalorder %s86, %s89
    %p95 = scmp.eq.s32.totalorder %s10, 0
    %p96 = por %p94, %p95
    %p97 = scmp.ne.s32.totalorder %s86, %s89
    %p98 = scmp.eq.s32.totalorder %s15, 1
    %p99 = por %p97, %p98
    %p100 = scmp.ne.s32.totalorder %s89, %s90
    %p101 = scmp.eq.s32.totalorder %s15, 0
    %p102 = por %p100, %p101
    %p103 = scmp.ne.s32.totalorder %s89, %s90
    %p104 = scmp.eq.s32.totalorder %s16, 1
    %p105 = por %p103, %p104
    %p107 = scmp.ne.s32.totalorder %s90, %s106
    %p108 = scmp.eq.s32.totalorder %s16, 0
    %p109 = por %p107, %p108
    %s110 = ssub.s32 %s17, %s29
    %s111 = ssub.s32 %s18, %s25
    %s112 = sor.u32 %s110, %s111
    %p113 = scmp.eq.s32.totalorder %s112, 0
    %s115 = sadd.s32 %s114, 1
    %s116 = scalar_select %p113, %s114, %s115
    %p119 = pneg %p113
    %p120 = scmp.eq.s32.totalorder %s10, 1
    %p121 = por %p119, %p120
    %p122 = scmp.ne.s32.totalorder %s114, %s117
    %p123 = scmp.eq.s32.totalorder %s10, 0
    %p124 = por %p122, %p123
    %p125 = scmp.ne.s32.totalorder %s114, %s117
    %p126 = scmp.eq.s32.totalorder %s15, 1
    %p127 = por %p125, %p126
    %p128 = scmp.ne.s32.totalorder %s117, %s118
    %p129 = scmp.eq.s32.totalorder %s15, 0
    %p130 = por %p128, %p129
    %p131 = scmp.ne.s32.totalorder %s117, %s118
    %p132 = scmp.eq.s32.totalorder %s16, 1
    %p133 = por %p131, %p132
    %p135 = scmp.ne.s32.totalorder %s118, %s134
    %p136 = scmp.eq.s32.totalorder %s16, 0
    %p137 = por %p135, %p136
    %s138 = ssub.s32 %s17, %s29
    %s139 = ssub.s32 %s18, %s25
    %s140 = sor.u32 %s138, %s139
    %p141 = scmp.eq.s32.totalorder %s140, 0
    %s143 = sadd.s32 %s142, 1
    %s144 = scalar_select %p141, %s142, %s143
    %p147 = pneg %p141
    %p148 = scmp.eq.s32.totalorder %s10, 1
    %p149 = por %p147, %p148
    %p150 = scmp.ne.s32.totalorder %s142, %s145
    %p151 = scmp.eq.s32.totalorder %s10, 0
    %p152 = por %p150, %p151
    %p153 = scmp.ne.s32.totalorder %s142, %s145
    %p154 = scmp.eq.s32.totalorder %s15, 1
    %p155 = por %p153, %p154
    %p156 = scmp.ne.s32.totalorder %s145, %s146
    %p157 = scmp.eq.s32.totalorder %s15, 0
    %p158 = por %p156, %p157
    %p159 = scmp.ne.s32.totalorder %s145, %s146
    %p160 = scmp.eq.s32.totalorder %s16, 1
    %p161 = por %p159, %p160
    %p163 = scmp.ne.s32.totalorder %s146, %s162
    %p164 = scmp.eq.s32.totalorder %s16, 0
    %p165 = por %p163, %p164
    %p166 = scmp.le.s32.totalorder 1, %s10
    %p167 = scmp.lt.s32.totalorder %s10, 3
    %p168 = pnand %p166, %p167
    %p169 = pneg %p168
    // Predicated region
    $region9: #{image_cross_attention_forward.1} parent=5 // pred_check
      _
    $region10: #{image_cross_attention_forward.1} parent=5 // pred_check_branch
      %171 = sbr.rel (%p168) target = $region12
    $region11: #{image_cross_attention_forward.1} parent=5 // pred_region
      %s172 = ssub.s32 %s10, 1
    $region12: #{image_cross_attention_forward.1} parent=5 // pred_fallthru
      _
    %p173 = scmp.lt.s32.totalorder %s10, 2
    // Predicated region
    $region13: #{image_cross_attention_forward.1} parent=5 // pred_check
      %p174 = pneg %p173
    $region14: #{image_cross_attention_forward.1} parent=5 // pred_check_branch
      %176 = sbr.rel (%p174) target = $region16
    $region15: #{image_cross_attention_forward.1} parent=5 // pred_region
      // Predicated region
      $region17: #{image_cross_attention_forward.1} parent=15 // pred_check
        %p177 = pneg %p44
      $region18: #{image_cross_attention_forward.1} parent=15 // pred_check_branch
        %179 = sbr.rel (%p177) target = $region20
      $region19: #{image_cross_attention_forward.1} parent=15 // pred_region
        %s180 = smul.u32 2, %s18
        %p181 = scmp.lt.s32.totalorder %s17, 1
        %s182 = scalar_select %p181, %s17, 1
        %p183 = scmp.lt.s32.totalorder %s180, 1
        %s184 = scalar_select %p183, %s180, 1
        %s185 = smul.addr %s182, 4
        %s186 = sadd.s32 %s184, %s185
        %s187 = smul.addr %s186, 4
        %s188 = scalar_lea.vmem %s0, %s187
        %s189 = smul.u32 2, %s18
      $region20: #{image_cross_attention_forward.1} parent=15 // pred_fallthru
        _
      // Predicated region
      $region21: #{image_cross_attention_forward.1} parent=15 // pred_check
        %p190 = pneg %p70
      $region22: #{image_cross_attention_forward.1} parent=15 // pred_check_branch
        %192 = sbr.rel (%p190) target = $region24
      $region23: #{image_cross_attention_forward.1} parent=15 // pred_region
        %p193 = scmp.lt.s32.totalorder %s17, 1
        %s194 = scalar_select %p193, %s17, 1
        %s195 = smul.addr %s194, 4
        %s196 = smul.addr %s195, 4
        %s197 = scalar_lea.vmem %s1, %s196
      $region24: #{image_cross_attention_forward.1} parent=15 // pred_fallthru
        _
      // Predicated region
      $region25: #{image_cross_attention_forward.1} parent=15 // pred_check
        %p198 = pneg %p96
      $region26: #{image_cross_attention_forward.1} parent=15 // pred_check_branch
        %200 = sbr.rel (%p198) target = $region28
      $region27: #{image_cross_attention_forward.1} parent=15 // pred_region
        %p201 = scmp.lt.s32.totalorder %s17, 1
        %s202 = scalar_select %p201, %s17, 1
        %s203 = smul.addr %s202, 4
        %s204 = smul.addr %s203, 4
        %s205 = scalar_lea.vmem %s2, %s204
      $region28: #{image_cross_attention_forward.1} parent=15 // pred_fallthru
        _
      // Predicated region
      $region29: #{image_cross_attention_forward.1} parent=15 // pred_check
        %p206 = pneg %p124
      $region30: #{image_cross_attention_forward.1} parent=15 // pred_check_branch
        %208 = sbr.rel (%p206) target = $region32
      $region31: #{image_cross_attention_forward.1} parent=15 // pred_region
        %s209 = smul.u32 2, %s18
        %p210 = scmp.lt.s32.totalorder %s17, 1
        %s211 = scalar_select %p210, %s17, 1
        %p212 = scmp.lt.s32.totalorder %s209, 1
        %s213 = scalar_select %p212, %s209, 1
        %s214 = smul.addr %s211, 4
        %s215 = sadd.s32 %s213, %s214
        %s216 = smul.addr %s215, 8
        %s217 = scalar_lea.vmem %s3, %s216
        %s218 = smul.u32 2, %s18
      $region32: #{image_cross_attention_forward.1} parent=15 // pred_fallthru
        _
    $region16: #{image_cross_attention_forward.1} parent=5 // pred_fallthru
      _
    %p219 = scmp.le.s32.totalorder 1, %s10
    %p220 = scmp.lt.s32.totalorder %s10, 3
    %p221 = pnand %p219, %p220
    %p222 = pneg %p221
    // Predicated region
    $region33: #{image_cross_attention_forward.1} parent=5 // pred_check
      _
    $region34: #{image_cross_attention_forward.1} parent=5 // pred_check_branch
      %224 = sbr.rel (%p221) target = $region36
    $region35: #{image_cross_attention_forward.1} parent=5 // pred_region
      %s225 = ssub.s32 %s10, 1
      %s226 = smul.u32 2, %s20
      %p227 = scmp.lt.s32.totalorder %s19, 1
      %s228 = scalar_select %p227, %s19, 1
      %p229 = scmp.lt.s32.totalorder %s226, 1
      %s230 = scalar_select %p229, %s226, 1
      %s231 = smul.addr %s228, 4
      %s232 = sadd.s32 %s230, %s231
      %s233 = smul.addr %s232, 4
      %s234 = scalar_lea.vmem %s0, %s233
      %p235 = pneg %p50
      %p236 = pneg %p47
      %p237 = scmp.lt.s32.totalorder %s19, 1
      %s238 = scalar_select %p237, %s19, 1
      %s239 = smul.addr %s238, 4
      %s240 = smul.addr %s239, 4
      %s241 = scalar_lea.vmem %s1, %s240
      %p242 = pneg %p76
      %p243 = pneg %p73
      %p244 = scmp.lt.s32.totalorder %s19, 1
      %s245 = scalar_select %p244, %s19, 1
      %s246 = smul.addr %s245, 4
      %s247 = smul.addr %s246, 4
      %s248 = scalar_lea.vmem %s2, %s247
      %p249 = pneg %p102
      %p250 = pneg %p99
      %s251 = smul.u32 2, %s20
      %p252 = scmp.lt.s32.totalorder %s19, 1
      %s253 = scalar_select %p252, %s19, 1
      %p254 = scmp.lt.s32.totalorder %s251, 1
      %s255 = scalar_select %p254, %s251, 1
      %s256 = smul.addr %s253, 4
      %s257 = sadd.s32 %s255, %s256
      %s258 = smul.addr %s257, 8
      %s259 = scalar_lea.vmem %s3, %s258
      %p260 = pneg %p130
      %p261 = pneg %p127
      %p262 = pneg %p158
      %p263 = pneg %p155
      %s264 = smul.u32 2, %s20
      %p265 = scmp.lt.s32.totalorder %s19, 1
      %s266 = scalar_select %p265, %s19, 1
      %p267 = scmp.lt.s32.totalorder %s264, 1
      %s268 = scalar_select %p267, %s264, 1
      %s269 = smul.addr %s266, 10
      %s270 = sadd.s32 %s268, %s269
      %s271 = smul.addr %s270, 8
      %s272 = scalar_lea.vmem %s4, %s271
      %s273 = smul.u32 2, %s20
      %p274 = scmp.lt.s32.totalorder %s19, 1
      %s275 = scalar_select %p274, %s19, 1
      %p276 = scmp.lt.s32.totalorder %s273, 1
      %s277 = scalar_select %p276, %s273, 1
      %s278 = smul.addr %s275, 4
      %s279 = sadd.s32 %s277, %s278
      %s280 = smul.addr %s279, 4
      %s281 = scalar_lea.vmem %s0, %s280
      %s282 = smul.u32 2, %s20
      %p283 = scmp.lt.s32.totalorder %s19, 1
      %s284 = scalar_select %p283, %s19, 1
      %s285 = smul.addr %s284, 4
      %s286 = smul.addr %s285, 4
      %s287 = scalar_lea.vmem %s1, %s286
      %p288 = scmp.lt.s32.totalorder %s19, 1
      %s289 = scalar_select %p288, %s19, 1
      %s290 = smul.addr %s289, 4
      %s291 = smul.addr %s290, 4
      %s292 = scalar_lea.vmem %s2, %s291
      %s293 = smul.u32 2, %s20
      %p294 = scmp.lt.s32.totalorder %s19, 1
      %s295 = scalar_select %p294, %s19, 1
      %p296 = scmp.lt.s32.totalorder %s293, 1
      %s297 = scalar_select %p296, %s293, 1
      %s298 = smul.addr %s295, 4
      %s299 = sadd.s32 %s297, %s298
      %s300 = smul.addr %s299, 8
      %s301 = scalar_lea.vmem %s3, %s300
      %s302 = smul.u32 2, %s20
      %s303 = smul.u32 2, %s20
      %p304 = scmp.lt.s32.totalorder %s19, 1
      %s305 = scalar_select %p304, %s19, 1
      %p306 = scmp.lt.s32.totalorder %s303, 1
      %s307 = scalar_select %p306, %s303, 1
      %s308 = smul.addr %s305, 10
      %s309 = sadd.s32 %s307, %s308
      %s310 = smul.addr %s309, 8
      %s311 = scalar_lea.vmem %s4, %s310
      %s312 = smul.u32 2, %s20
      %v314 = vld [vmem:[%s292] sm:$0x33]
      %v315 = vld [vmem:[%s281] sm:$0x33]
      %v316 = vld [vmem:[%s301] sm:$0xf]
      %v317 = vld [vmem:[%s301 + $0x8] sm:$0xf]
      %v318 = vld [vmem:[%s287] sm:$0x33]
      %v320 = vunpack.c.l.b16 %v318
      %v321 = vunpack.c.h.b16 %v318
      %v322 = vpack.c.b16 %v320, %v320
      %v323 = vpack.c.b16 %v321, %v321
      %326 = vxpose.binary.xlu0.c.b16.start [1/16] %v323, %v322, 128
      %327 = vxpose.binary.xlu0.c.b16.cont [2/16] 0, 0, 128
      %328 = vxpose.binary.xlu0.c.b16.cont [3/16] 0, 0, 128
      %329 = vxpose.binary.xlu0.c.b16.cont [4/16] 0, 0, 128
      %330 = vxpose.binary.xlu0.c.b16.cont [5/16] 0, 0, 128
      %331 = vxpose.binary.xlu0.c.b16.cont [6/16] 0, 0, 128
      %332 = vxpose.binary.xlu0.c.b16.cont [7/16] 0, 0, 128
      %333 = vxpose.binary.xlu0.c.b16.end [8/16] 0, 0, 128
      %v334 = vpop.trf.xlu0
      %v335 = vpop.trf.xlu0
      %v336 = vpop.trf.xlu0
      %v337 = vpop.trf.xlu0
      %v338 = vpop.trf.xlu0
      %v339 = vpop.trf.xlu0
      %v340 = vpop.trf.xlu0
      %v341 = vpop.trf.xlu0
      %v342 = vpop.trf.xlu0
      %v343 = vpop.trf.xlu0
      %v344 = vpop.trf.xlu0
      %v345 = vpop.trf.xlu0
      %v346 = vpop.trf.xlu0
      %v347 = vpop.trf.xlu0
      %v348 = vpop.trf.xlu0
      %v349 = vpop.trf.xlu0
      %v351 = vunpack.c.l.b16 %v315
      %v352 = vunpack.c.h.b16 %v315
      %v353 = vpack.c.b16 %v351, %v351
      %v354 = vpack.c.b16 %v352, %v352
      %vm355 = vcmask 31744
      %v357 = vsel %vm355, %v334, 0
      %v360 = vsel %vm355, %v336, 0
      %v363 = vsel %vm355, %v338, 0
      %v366 = vsel %vm355, %v340, 0
      %v369 = vsel %vm355, %v342, 0
      %v372 = vsel %vm355, %v344, 0
      %v375 = vsel %vm355, %v346, 0
      %v378 = vsel %vm355, %v348, 0
      %v381 = vsel %vm355, %v335, 0
      %v384 = vsel %vm355, %v337, 0
      %v387 = vsel %vm355, %v339, 0
      %v390 = vsel %vm355, %v341, 0
      %v393 = vsel %vm355, %v343, 0
      %v396 = vsel %vm355, %v345, 0
      %v399 = vsel %vm355, %v347, 0
      %v402 = vsel %vm355, %v349, 0
      %vm404 = vcmask 1041408
      %v406 = vsel %vm404, %v353, 0
      %v409 = vsel %vm404, %v354, 0
      %411 = vmatpush.bf16.msra.mxu0 0
      %412 = vmatpush.bf16.msra.mxu0 0
      %413 = vmatpush.bf16.msra.mxu0 0
      %414 = vmatpush.bf16.msra.mxu0 0
      %415 = vmatpush.bf16.msra.mxu0 0
      %416 = vmatpush.bf16.msra.mxu0 0
      %417 = vmatpush.bf16.msra.mxu0 0
      %418 = vmatpush.bf16.msra.mxu0 %v406
      %419 = vmatmul.bf16.gmra.mxu0 %v357
      %v420 = vpop.f32.mrf.mxu0
      %v421 = vadd.f32 0.0, %v420
      %v422 = vpop.f32.mrf.mxu0
      %v423 = vadd.f32 0.0, %v422
      %424 = vmatmul.bf16.gmra.mxu0 %v360
      %v425 = vpop.f32.mrf.mxu0
      %v426 = vadd.f32 0.0, %v425
      %v427 = vpop.f32.mrf.mxu0
      %v428 = vadd.f32 0.0, %v427
      %429 = vmatmul.bf16.gmra.mxu0 %v363
      %v430 = vpop.f32.mrf.mxu0
      %v431 = vadd.f32 0.0, %v430
      %v432 = vpop.f32.mrf.mxu0
      %v433 = vadd.f32 0.0, %v432
      %434 = vmatmul.bf16.gmra.mxu0 %v366
      %v435 = vpop.f32.mrf.mxu0
      %v436 = vadd.f32 0.0, %v435
      %v437 = vpop.f32.mrf.mxu0
      %v438 = vadd.f32 0.0, %v437
      %439 = vmatmul.bf16.gmra.mxu0 %v369
      %v440 = vpop.f32.mrf.mxu0
      %v441 = vadd.f32 0.0, %v440
      %v442 = vpop.f32.mrf.mxu0
      %v443 = vadd.f32 0.0, %v442
      %444 = vmatmul.bf16.gmra.mxu0 %v372
      %v445 = vpop.f32.mrf.mxu0
      %v446 = vadd.f32 0.0, %v445
      %v447 = vpop.f32.mrf.mxu0
      %v448 = vadd.f32 0.0, %v447
      %449 = vmatmul.bf16.gmra.mxu0 %v375
      %v450 = vpop.f32.mrf.mxu0
      %v451 = vadd.f32 0.0, %v450
      %v452 = vpop.f32.mrf.mxu0
      %v453 = vadd.f32 0.0, %v452
      %454 = vmatmul.bf16.gmra.mxu0 %v378
      %v455 = vpop.f32.mrf.mxu0
      %v456 = vadd.f32 0.0, %v455
      %v457 = vpop.f32.mrf.mxu0
      %v458 = vadd.f32 0.0, %v457
      %459 = vmatmul.bf16.gmra.mxu0 %v381
      %v460 = vpop.f32.mrf.mxu0
      %v461 = vadd.f32 0.0, %v460
      %v462 = vpop.f32.mrf.mxu0
      %v463 = vadd.f32 0.0, %v462
      %464 = vmatmul.bf16.gmra.mxu0 %v384
      %v465 = vpop.f32.mrf.mxu0
      %v466 = vadd.f32 0.0, %v465
      %v467 = vpop.f32.mrf.mxu0
      %v468 = vadd.f32 0.0, %v467
      %469 = vmatmul.bf16.gmra.mxu0 %v387
      %v470 = vpop.f32.mrf.mxu0
      %v471 = vadd.f32 0.0, %v470
      %v472 = vpop.f32.mrf.mxu0
      %v473 = vadd.f32 0.0, %v472
      %474 = vmatmul.bf16.gmra.mxu0 %v390
      %v475 = vpop.f32.mrf.mxu0
      %v476 = vadd.f32 0.0, %v475
      %v477 = vpop.f32.mrf.mxu0
      %v478 = vadd.f32 0.0, %v477
      %479 = vmatmul.bf16.gmra.mxu0 %v393
      %v480 = vpop.f32.mrf.mxu0
      %v481 = vadd.f32 0.0, %v480
      %v482 = vpop.f32.mrf.mxu0
      %v483 = vadd.f32 0.0, %v482
      %484 = vmatmul.bf16.gmra.mxu0 %v396
      %v485 = vpop.f32.mrf.mxu0
      %v486 = vadd.f32 0.0, %v485
      %v487 = vpop.f32.mrf.mxu0
      %v488 = vadd.f32 0.0, %v487
      %489 = vmatmul.bf16.gmra.mxu0 %v399
      %v490 = vpop.f32.mrf.mxu0
      %v491 = vadd.f32 0.0, %v490
      %v492 = vpop.f32.mrf.mxu0
      %v493 = vadd.f32 0.0, %v492
      %494 = vmatmul.bf16.gmra.mxu0 %v402
      %v495 = vpop.f32.mrf.mxu0
      %v496 = vadd.f32 0.0, %v495
      %v497 = vpop.f32.mrf.mxu0
      %v498 = vadd.f32 0.0, %v497
      %499 = vdwg.mxu0
      %500 = vmatpush.bf16.msra.mxu0 0
      %501 = vmatpush.bf16.msra.mxu0 0
      %502 = vmatpush.bf16.msra.mxu0 0
      %503 = vmatpush.bf16.msra.mxu0 0
      %504 = vmatpush.bf16.msra.mxu0 0
      %505 = vmatpush.bf16.msra.mxu0 0
      %506 = vmatpush.bf16.msra.mxu0 0
      %507 = vmatpush.bf16.msra.mxu0 %v409
      %508 = vmatmul.bf16.gmra.mxu0 %v357
      %v509 = vpop.f32.mrf.mxu0
      %v510 = vadd.f32 0.0, %v509
      %v511 = vpop.f32.mrf.mxu0
      %v512 = vadd.f32 0.0, %v511
      %513 = vmatmul.bf16.gmra.mxu0 %v360
      %v514 = vpop.f32.mrf.mxu0
      %v515 = vadd.f32 0.0, %v514
      %v516 = vpop.f32.mrf.mxu0
      %v517 = vadd.f32 0.0, %v516
      %518 = vmatmul.bf16.gmra.mxu0 %v363
      %v519 = vpop.f32.mrf.mxu0
      %v520 = vadd.f32 0.0, %v519
      %v521 = vpop.f32.mrf.mxu0
      %v522 = vadd.f32 0.0, %v521
      %523 = vmatmul.bf16.gmra.mxu0 %v366
      %v524 = vpop.f32.mrf.mxu0
      %v525 = vadd.f32 0.0, %v524
      %v526 = vpop.f32.mrf.mxu0
      %v527 = vadd.f32 0.0, %v526
      %528 = vmatmul.bf16.gmra.mxu0 %v369
      %v529 = vpop.f32.mrf.mxu0
      %v530 = vadd.f32 0.0, %v529
      %v531 = vpop.f32.mrf.mxu0
      %v532 = vadd.f32 0.0, %v531
      %533 = vmatmul.bf16.gmra.mxu0 %v372
      %v534 = vpop.f32.mrf.mxu0
      %v535 = vadd.f32 0.0, %v534
      %v536 = vpop.f32.mrf.mxu0
      %v537 = vadd.f32 0.0, %v536
      %538 = vmatmul.bf16.gmra.mxu0 %v375
      %v539 = vpop.f32.mrf.mxu0
      %v540 = vadd.f32 0.0, %v539
      %v541 = vpop.f32.mrf.mxu0
      %v542 = vadd.f32 0.0, %v541
      %543 = vmatmul.bf16.gmra.mxu0 %v378
      %v544 = vpop.f32.mrf.mxu0
      %v545 = vadd.f32 0.0, %v544
      %v546 = vpop.f32.mrf.mxu0
      %v547 = vadd.f32 0.0, %v546
      %548 = vmatmul.bf16.gmra.mxu0 %v381
      %v549 = vpop.f32.mrf.mxu0
      %v550 = vadd.f32 0.0, %v549
      %v551 = vpop.f32.mrf.mxu0
      %v552 = vadd.f32 0.0, %v551
      %553 = vmatmul.bf16.gmra.mxu0 %v384
      %v554 = vpop.f32.mrf.mxu0
      %v555 = vadd.f32 0.0, %v554
      %v556 = vpop.f32.mrf.mxu0
      %v557 = vadd.f32 0.0, %v556
      %558 = vmatmul.bf16.gmra.mxu0 %v387
      %v559 = vpop.f32.mrf.mxu0
      %v560 = vadd.f32 0.0, %v559
      %v561 = vpop.f32.mrf.mxu0
      %v562 = vadd.f32 0.0, %v561
      %563 = vmatmul.bf16.gmra.mxu0 %v390
      %v564 = vpop.f32.mrf.mxu0
      %v565 = vadd.f32 0.0, %v564
      %v566 = vpop.f32.mrf.mxu0
      %v567 = vadd.f32 0.0, %v566
      %568 = vmatmul.bf16.gmra.mxu0 %v393
      %v569 = vpop.f32.mrf.mxu0
      %v570 = vadd.f32 0.0, %v569
      %v571 = vpop.f32.mrf.mxu0
      %v572 = vadd.f32 0.0, %v571
      %573 = vmatmul.bf16.gmra.mxu0 %v396
      %v574 = vpop.f32.mrf.mxu0
      %v575 = vadd.f32 0.0, %v574
      %v576 = vpop.f32.mrf.mxu0
      %v577 = vadd.f32 0.0, %v576
      %578 = vmatmul.bf16.gmra.mxu0 %v399
      %v579 = vpop.f32.mrf.mxu0
      %v580 = vadd.f32 0.0, %v579
      %v581 = vpop.f32.mrf.mxu0
      %v582 = vadd.f32 0.0, %v581
      %583 = vmatmul.bf16.gmra.mxu0 %v402
      %v584 = vpop.f32.mrf.mxu0
      %v585 = vadd.f32 0.0, %v584
      %v586 = vpop.f32.mrf.mxu0
      %v587 = vadd.f32 0.0, %v586
      %588 = vdwg.mxu0
      %v589 = vmax.f32 %v421, %v426
      %v590 = vmax.f32 %v423, %v428
      %v591 = vmax.f32 %v589, %v431
      %v592 = vmax.f32 %v590, %v433
      %v593 = vmax.f32 %v591, %v436
      %v594 = vmax.f32 %v592, %v438
      %v595 = vmax.f32 %v593, %v441
      %v596 = vmax.f32 %v594, %v443
      %v597 = vmax.f32 %v595, %v446
      %v598 = vmax.f32 %v596, %v448
      %v599 = vmax.f32 %v597, %v451
      %v600 = vmax.f32 %v598, %v453
      %v601 = vmax.f32 %v599, %v456
      %v602 = vmax.f32 %v600, %v458
      %v603 = vmax.f32 %v601, %v461
      %v604 = vmax.f32 %v602, %v463
      %v605 = vmax.f32 %v603, %v466
      %v606 = vmax.f32 %v604, %v468
      %v607 = vmax.f32 %v605, %v471
      %v608 = vmax.f32 %v606, %v473
      %v609 = vmax.f32 %v607, %v476
      %v610 = vmax.f32 %v608, %v478
      %v611 = vmax.f32 %v609, %v481
      %v612 = vmax.f32 %v610, %v483
      %v613 = vmax.f32 %v611, %v486
      %v614 = vmax.f32 %v612, %v488
      %v615 = vmax.f32 %v613, %v491
      %v616 = vmax.f32 %v614, %v493
      %v617 = vmax.f32 %v615, %v496
      %v618 = vmax.f32 %v616, %v498
      %v619 = vmax.f32 %v617, %v618
      %v620 = vrot.slane %v619, 4
      %v621 = vmax.f32 %v619, %v620
      %v622 = vrot.slane %v621, 2
      %v623 = vmax.f32 %v621, %v622
      %v624 = vrot.slane %v623, 1
      %v625 = vmax.f32 %v623, %v624
      %v626 = vmax.f32 %v510, %v515
      %v627 = vmax.f32 %v512, %v517
      %v628 = vmax.f32 %v626, %v520
      %v629 = vmax.f32 %v627, %v522
      %v630 = vmax.f32 %v628, %v525
      %v631 = vmax.f32 %v629, %v527
      %v632 = vmax.f32 %v630, %v530
      %v633 = vmax.f32 %v631, %v532
      %v634 = vmax.f32 %v632, %v535
      %v635 = vmax.f32 %v633, %v537
      %v636 = vmax.f32 %v634, %v540
      %v637 = vmax.f32 %v635, %v542
      %v638 = vmax.f32 %v636, %v545
      %v639 = vmax.f32 %v637, %v547
      %v640 = vmax.f32 %v638, %v550
      %v641 = vmax.f32 %v639, %v552
      %v642 = vmax.f32 %v640, %v555
      %v643 = vmax.f32 %v641, %v557
      %v644 = vmax.f32 %v642, %v560
      %v645 = vmax.f32 %v643, %v562
      %v646 = vmax.f32 %v644, %v565
      %v647 = vmax.f32 %v645, %v567
      %v648 = vmax.f32 %v646, %v570
      %v649 = vmax.f32 %v647, %v572
      %v650 = vmax.f32 %v648, %v575
      %v651 = vmax.f32 %v649, %v577
      %v652 = vmax.f32 %v650, %v580
      %v653 = vmax.f32 %v651, %v582
      %v654 = vmax.f32 %v652, %v585
      %v655 = vmax.f32 %v653, %v587
      %v656 = vmax.f32 %v654, %v655
      %v657 = vrot.slane %v656, 4
      %v658 = vmax.f32 %v656, %v657
      %v659 = vrot.slane %v658, 2
      %v660 = vmax.f32 %v658, %v659
      %v661 = vrot.slane %v660, 1
      %v662 = vmax.f32 %v660, %v661
      %v663 = vsub.f32 %v421, %v625
      %v664 = vsub.f32 %v510, %v662
      %v665 = vsub.f32 %v423, %v625
      %v666 = vsub.f32 %v512, %v662
      %v667 = vsub.f32 %v426, %v625
      %v668 = vsub.f32 %v515, %v662
      %v669 = vsub.f32 %v428, %v625
      %v670 = vsub.f32 %v517, %v662
      %v671 = vsub.f32 %v431, %v625
      %v672 = vsub.f32 %v520, %v662
      %v673 = vsub.f32 %v433, %v625
      %v674 = vsub.f32 %v522, %v662
      %v675 = vsub.f32 %v436, %v625
      %v676 = vsub.f32 %v525, %v662
      %v677 = vsub.f32 %v438, %v625
      %v678 = vsub.f32 %v527, %v662
      %v679 = vsub.f32 %v441, %v625
      %v680 = vsub.f32 %v530, %v662
      %v681 = vsub.f32 %v443, %v625
      %v682 = vsub.f32 %v532, %v662
      %v683 = vsub.f32 %v446, %v625
      %v684 = vsub.f32 %v535, %v662
      %v685 = vsub.f32 %v448, %v625
      %v686 = vsub.f32 %v537, %v662
      %v687 = vsub.f32 %v451, %v625
      %v688 = vsub.f32 %v540, %v662
      %v689 = vsub.f32 %v453, %v625
      %v690 = vsub.f32 %v542, %v662
      %v691 = vsub.f32 %v456, %v625
      %v692 = vsub.f32 %v545, %v662
      %v693 = vsub.f32 %v458, %v625
      %v694 = vsub.f32 %v547, %v662
      %v695 = vsub.f32 %v461, %v625
      %v696 = vsub.f32 %v550, %v662
      %v697 = vsub.f32 %v463, %v625
      %v698 = vsub.f32 %v552, %v662
      %v699 = vsub.f32 %v466, %v625
      %v700 = vsub.f32 %v555, %v662
      %v701 = vsub.f32 %v468, %v625
      %v702 = vsub.f32 %v557, %v662
      %v703 = vsub.f32 %v471, %v625
      %v704 = vsub.f32 %v560, %v662
      %v705 = vsub.f32 %v473, %v625
      %v706 = vsub.f32 %v562, %v662
      %v707 = vsub.f32 %v476, %v625
      %v708 = vsub.f32 %v565, %v662
      %v709 = vsub.f32 %v478, %v625
      %v710 = vsub.f32 %v567, %v662
      %v711 = vsub.f32 %v481, %v625
      %v712 = vsub.f32 %v570, %v662
      %v713 = vsub.f32 %v483, %v625
      %v714 = vsub.f32 %v572, %v662
      %v715 = vsub.f32 %v486, %v625
      %v716 = vsub.f32 %v575, %v662
      %v717 = vsub.f32 %v488, %v625
      %v718 = vsub.f32 %v577, %v662
      %v719 = vsub.f32 %v491, %v625
      %v720 = vsub.f32 %v580, %v662
      %v721 = vsub.f32 %v493, %v625
      %v722 = vsub.f32 %v582, %v662
      %v723 = vsub.f32 %v496, %v625
      %v724 = vsub.f32 %v585, %v662
      %v725 = vsub.f32 %v498, %v625
      %v726 = vsub.f32 %v587, %v662
      %v727 = vmul.f32 %v663, 1.442695
      %v728 = vpow.pop %v727
      %v729 = vmul.f32 %v664, 1.442695
      %v730 = vpow.pop %v729
      %v731 = vmul.f32 %v665, 1.442695
      %v732 = vpow.pop %v731
      %v733 = vmul.f32 %v666, 1.442695
      %v734 = vpow.pop %v733
      %v735 = vmul.f32 %v667, 1.442695
      %v736 = vpow.pop %v735
      %v737 = vmul.f32 %v668, 1.442695
      %v738 = vpow.pop %v737
      %v739 = vmul.f32 %v669, 1.442695
      %v740 = vpow.pop %v739
      %v741 = vmul.f32 %v670, 1.442695
      %v742 = vpow.pop %v741
      %v743 = vmul.f32 %v671, 1.442695
      %v744 = vpow.pop %v743
      %v745 = vmul.f32 %v672, 1.442695
      %v746 = vpow.pop %v745
      %v747 = vmul.f32 %v673, 1.442695
      %v748 = vpow.pop %v747
      %v749 = vmul.f32 %v674, 1.442695
      %v750 = vpow.pop %v749
      %v751 = vmul.f32 %v675, 1.442695
      %v752 = vpow.pop %v751
      %v753 = vmul.f32 %v676, 1.442695
      %v754 = vpow.pop %v753
      %v755 = vmul.f32 %v677, 1.442695
      %v756 = vpow.pop %v755
      %v757 = vmul.f32 %v678, 1.442695
      %v758 = vpow.pop %v757
      %v759 = vmul.f32 %v679, 1.442695
      %v760 = vpow.pop %v759
      %v761 = vmul.f32 %v680, 1.442695
      %v762 = vpow.pop %v761
      %v763 = vmul.f32 %v681, 1.442695
      %v764 = vpow.pop %v763
      %v765 = vmul.f32 %v682, 1.442695
      %v766 = vpow.pop %v765
      %v767 = vmul.f32 %v683, 1.442695
      %v768 = vpow.pop %v767
      %v769 = vmul.f32 %v684, 1.442695
      %v770 = vpow.pop %v769
      %v771 = vmul.f32 %v685, 1.442695
      %v772 = vpow.pop %v771
      %v773 = vmul.f32 %v686, 1.442695
      %v774 = vpow.pop %v773
      %v775 = vmul.f32 %v687, 1.442695
      %v776 = vpow.pop %v775
      %v777 = vmul.f32 %v688, 1.442695
      %v778 = vpow.pop %v777
      %v779 = vmul.f32 %v689, 1.442695
      %v780 = vpow.pop %v779
      %v781 = vmul.f32 %v690, 1.442695
      %v782 = vpow.pop %v781
      %v783 = vmul.f32 %v691, 1.442695
      %v784 = vpow.pop %v783
      %v785 = vmul.f32 %v692, 1.442695
      %v786 = vpow.pop %v785
      %v787 = vmul.f32 %v693, 1.442695
      %v788 = vpow.pop %v787
      %v789 = vmul.f32 %v694, 1.442695
      %v790 = vpow.pop %v789
      %v791 = vmul.f32 %v695, 1.442695
      %v792 = vpow.pop %v791
      %v793 = vmul.f32 %v696, 1.442695
      %v794 = vpow.pop %v793
      %v795 = vmul.f32 %v697, 1.442695
      %v796 = vpow.pop %v795
      %v797 = vmul.f32 %v698, 1.442695
      %v798 = vpow.pop %v797
      %v799 = vmul.f32 %v699, 1.442695
      %v800 = vpow.pop %v799
      %v801 = vmul.f32 %v700, 1.442695
      %v802 = vpow.pop %v801
      %v803 = vmul.f32 %v701, 1.442695
      %v804 = vpow.pop %v803
      %v805 = vmul.f32 %v702, 1.442695
      %v806 = vpow.pop %v805
      %v807 = vmul.f32 %v703, 1.442695
      %v808 = vpow.pop %v807
      %v809 = vmul.f32 %v704, 1.442695
      %v810 = vpow.pop %v809
      %v811 = vmul.f32 %v705, 1.442695
      %v812 = vpow.pop %v811
      %v813 = vmul.f32 %v706, 1.442695
      %v814 = vpow.pop %v813
      %v815 = vmul.f32 %v707, 1.442695
      %v816 = vpow.pop %v815
      %v817 = vmul.f32 %v708, 1.442695
      %v818 = vpow.pop %v817
      %v819 = vmul.f32 %v709, 1.442695
      %v820 = vpow.pop %v819
      %v821 = vmul.f32 %v710, 1.442695
      %v822 = vpow.pop %v821
      %v823 = vmul.f32 %v711, 1.442695
      %v824 = vpow.pop %v823
      %v825 = vmul.f32 %v712, 1.442695
      %v826 = vpow.pop %v825
      %v827 = vmul.f32 %v713, 1.442695
      %v828 = vpow.pop %v827
      %v829 = vmul.f32 %v714, 1.442695
      %v830 = vpow.pop %v829
      %v831 = vmul.f32 %v715, 1.442695
      %v832 = vpow.pop %v831
      %v833 = vmul.f32 %v716, 1.442695
      %v834 = vpow.pop %v833
      %v835 = vmul.f32 %v717, 1.442695
      %v836 = vpow.pop %v835
      %v837 = vmul.f32 %v718, 1.442695
      %v838 = vpow.pop %v837
      %v839 = vmul.f32 %v719, 1.442695
      %v840 = vpow.pop %v839
      %v841 = vmul.f32 %v720, 1.442695
      %v842 = vpow.pop %v841
      %v843 = vmul.f32 %v721, 1.442695
      %v844 = vpow.pop %v843
      %v845 = vmul.f32 %v722, 1.442695
      %v846 = vpow.pop %v845
      %v847 = vmul.f32 %v723, 1.442695
      %v848 = vpow.pop %v847
      %v849 = vmul.f32 %v724, 1.442695
      %v850 = vpow.pop %v849
      %v851 = vmul.f32 %v725, 1.442695
      %v852 = vpow.pop %v851
      %v853 = vmul.f32 %v726, 1.442695
      %v854 = vpow.pop %v853
      %v855 = vadd.f32 %v728, %v732
      %v856 = vadd.f32 %v855, %v736
      %v857 = vadd.f32 %v856, %v740
      %v858 = vadd.f32 %v857, %v744
      %v859 = vadd.f32 %v858, %v748
      %v860 = vadd.f32 %v859, %v752
      %v861 = vadd.f32 %v860, %v756
      %v862 = vadd.f32 %v861, %v760
      %v863 = vadd.f32 %v862, %v764
      %v864 = vadd.f32 %v863, %v768
      %v865 = vadd.f32 %v864, %v772
      %v866 = vadd.f32 %v865, %v776
      %v867 = vadd.f32 %v866, %v780
      %v868 = vadd.f32 %v867, %v784
      %v869 = vadd.f32 %v868, %v788
      %v870 = vadd.f32 %v869, %v792
      %v871 = vadd.f32 %v870, %v796
      %v872 = vadd.f32 %v871, %v800
      %v873 = vadd.f32 %v872, %v804
      %v874 = vadd.f32 %v873, %v808
      %v875 = vadd.f32 %v874, %v812
      %v876 = vadd.f32 %v875, %v816
      %v877 = vadd.f32 %v876, %v820
      %v878 = vadd.f32 %v877, %v824
      %v879 = vadd.f32 %v878, %v828
      %v880 = vadd.f32 %v879, %v832
      %v881 = vadd.f32 %v880, %v836
      %v882 = vadd.f32 %v881, %v840
      %v883 = vadd.f32 %v882, %v844
      %v884 = vadd.f32 %v883, %v848
      %v885 = vadd.f32 %v884, %v852
      %v886 = vrot.slane %v885, 4
      %v887 = vadd.f32 %v885, %v886
      %v888 = vrot.slane %v887, 2
      %v889 = vadd.f32 %v887, %v888
      %v890 = vrot.slane %v889, 1
      %v891 = vadd.f32 %v889, %v890
      %v892 = vadd.f32 %v730, %v734
      %v893 = vadd.f32 %v892, %v738
      %v894 = vadd.f32 %v893, %v742
      %v895 = vadd.f32 %v894, %v746
      %v896 = vadd.f32 %v895, %v750
      %v897 = vadd.f32 %v896, %v754
      %v898 = vadd.f32 %v897, %v758
      %v899 = vadd.f32 %v898, %v762
      %v900 = vadd.f32 %v899, %v766
      %v901 = vadd.f32 %v900, %v770
      %v902 = vadd.f32 %v901, %v774
      %v903 = vadd.f32 %v902, %v778
      %v904 = vadd.f32 %v903, %v782
      %v905 = vadd.f32 %v904, %v786
      %v906 = vadd.f32 %v905, %v790
      %v907 = vadd.f32 %v906, %v794
      %v908 = vadd.f32 %v907, %v798
      %v909 = vadd.f32 %v908, %v802
      %v910 = vadd.f32 %v909, %v806
      %v911 = vadd.f32 %v910, %v810
      %v912 = vadd.f32 %v911, %v814
      %v913 = vadd.f32 %v912, %v818
      %v914 = vadd.f32 %v913, %v822
      %v915 = vadd.f32 %v914, %v826
      %v916 = vadd.f32 %v915, %v830
      %v917 = vadd.f32 %v916, %v834
      %v918 = vadd.f32 %v917, %v838
      %v919 = vadd.f32 %v918, %v842
      %v920 = vadd.f32 %v919, %v846
      %v921 = vadd.f32 %v920, %v850
      %v922 = vadd.f32 %v921, %v854
      %v923 = vrot.slane %v922, 4
      %v924 = vadd.f32 %v922, %v923
      %v925 = vrot.slane %v924, 2
      %v926 = vadd.f32 %v924, %v925
      %v927 = vrot.slane %v926, 1
      %v928 = vadd.f32 %v926, %v927
      %v929 = vrcp.pop %v891
      %v930 = vrcp.pop %v928
      %v931 = vpack.c.bf16 %v730, %v728
      %v932 = vpack.c.bf16 %v734, %v732
      %v933 = vpack.c.bf16 %v738, %v736
      %v934 = vpack.c.bf16 %v742, %v740
      %v935 = vpack.c.bf16 %v746, %v744
      %v936 = vpack.c.bf16 %v750, %v748
      %v937 = vpack.c.bf16 %v754, %v752
      %v938 = vpack.c.bf16 %v758, %v756
      %v939 = vpack.c.bf16 %v762, %v760
      %v940 = vpack.c.bf16 %v766, %v764
      %v941 = vpack.c.bf16 %v770, %v768
      %v942 = vpack.c.bf16 %v774, %v772
      %v943 = vpack.c.bf16 %v778, %v776
      %v944 = vpack.c.bf16 %v782, %v780
      %v945 = vpack.c.bf16 %v786, %v784
      %v946 = vpack.c.bf16 %v790, %v788
      %v947 = vpack.c.bf16 %v794, %v792
      %v948 = vpack.c.bf16 %v798, %v796
      %v949 = vpack.c.bf16 %v802, %v800
      %v950 = vpack.c.bf16 %v806, %v804
      %v951 = vpack.c.bf16 %v810, %v808
      %v952 = vpack.c.bf16 %v814, %v812
      %v953 = vpack.c.bf16 %v818, %v816
      %v954 = vpack.c.bf16 %v822, %v820
      %v955 = vpack.c.bf16 %v826, %v824
      %v956 = vpack.c.bf16 %v830, %v828
      %v957 = vpack.c.bf16 %v834, %v832
      %v958 = vpack.c.bf16 %v838, %v836
      %v959 = vpack.c.bf16 %v842, %v840
      %v960 = vpack.c.bf16 %v846, %v844
      %v961 = vpack.c.bf16 %v850, %v848
      %v962 = vpack.c.bf16 %v854, %v852
      %v963 = vld [vmem:[%s287] sm:$0xcc]
      %v965 = vunpack.c.l.b16 %v963
      %v966 = vunpack.c.h.b16 %v963
      %v967 = vpack.c.b16 %v965, %v965
      %v968 = vpack.c.b16 %v966, %v966
      %v969 = vrot.slane %v967, 2
      %v970 = vrot.slane %v968, 2
      %973 = vxpose.binary.xlu0.c.b16.start [1/16] %v970, %v969, 128
      %974 = vxpose.binary.xlu0.c.b16.cont [2/16] 0, 0, 128
      %975 = vxpose.binary.xlu0.c.b16.cont [3/16] 0, 0, 128
      %976 = vxpose.binary.xlu0.c.b16.cont [4/16] 0, 0, 128
      %977 = vxpose.binary.xlu0.c.b16.cont [5/16] 0, 0, 128
      %978 = vxpose.binary.xlu0.c.b16.cont [6/16] 0, 0, 128
      %979 = vxpose.binary.xlu0.c.b16.cont [7/16] 0, 0, 128
      %980 = vxpose.binary.xlu0.c.b16.end [8/16] 0, 0, 128
      %v981 = vpop.trf.xlu0
      %v982 = vpop.trf.xlu0
      %v983 = vpop.trf.xlu0
      %v984 = vpop.trf.xlu0
      %v985 = vpop.trf.xlu0
      %v986 = vpop.trf.xlu0
      %v987 = vpop.trf.xlu0
      %v988 = vpop.trf.xlu0
      %v989 = vpop.trf.xlu0
      %v990 = vpop.trf.xlu0
      %v991 = vpop.trf.xlu0
      %v992 = vpop.trf.xlu0
      %v993 = vpop.trf.xlu0
      %v994 = vpop.trf.xlu0
      %v995 = vpop.trf.xlu0
      %v996 = vpop.trf.xlu0
      %v998 = vsel %vm355, %v981, 0
      %v1001 = vsel %vm355, %v983, 0
      %v1004 = vsel %vm355, %v985, 0
      %v1007 = vsel %vm355, %v987, 0
      %v1010 = vsel %vm355, %v989, 0
      %v1013 = vsel %vm355, %v991, 0
      %v1016 = vsel %vm355, %v993, 0
      %v1019 = vsel %vm355, %v995, 0
      %v1022 = vsel %vm355, %v982, 0
      %v1025 = vsel %vm355, %v984, 0
      %v1028 = vsel %vm355, %v986, 0
      %v1031 = vsel %vm355, %v988, 0
      %v1034 = vsel %vm355, %v990, 0
      %v1037 = vsel %vm355, %v992, 0
      %v1040 = vsel %vm355, %v994, 0
      %v1043 = vsel %vm355, %v996, 0
      %1045 = vmatpush.bf16.msra.mxu0 0
      %1046 = vmatpush.bf16.msra.mxu0 0
      %1047 = vmatpush.bf16.msra.mxu0 0
      %1048 = vmatpush.bf16.msra.mxu0 0
      %1049 = vmatpush.bf16.msra.mxu0 0
      %1050 = vmatpush.bf16.msra.mxu0 0
      %1051 = vmatpush.bf16.msra.mxu0 0
      %1052 = vmatpush.bf16.msra.mxu0 %v406
      %1053 = vmatmul.bf16.gmra.mxu0 %v998
      %v1054 = vpop.f32.mrf.mxu0
      %v1055 = vadd.f32 0.0, %v1054
      %v1056 = vpop.f32.mrf.mxu0
      %v1057 = vadd.f32 0.0, %v1056
      %1058 = vmatmul.bf16.gmra.mxu0 %v1001
      %v1059 = vpop.f32.mrf.mxu0
      %v1060 = vadd.f32 0.0, %v1059
      %v1061 = vpop.f32.mrf.mxu0
      %v1062 = vadd.f32 0.0, %v1061
      %1063 = vmatmul.bf16.gmra.mxu0 %v1004
      %v1064 = vpop.f32.mrf.mxu0
      %v1065 = vadd.f32 0.0, %v1064
      %v1066 = vpop.f32.mrf.mxu0
      %v1067 = vadd.f32 0.0, %v1066
      %1068 = vmatmul.bf16.gmra.mxu0 %v1007
      %v1069 = vpop.f32.mrf.mxu0
      %v1070 = vadd.f32 0.0, %v1069
      %v1071 = vpop.f32.mrf.mxu0
      %v1072 = vadd.f32 0.0, %v1071
      %1073 = vmatmul.bf16.gmra.mxu0 %v1010
      %v1074 = vpop.f32.mrf.mxu0
      %v1075 = vadd.f32 0.0, %v1074
      %v1076 = vpop.f32.mrf.mxu0
      %v1077 = vadd.f32 0.0, %v1076
      %1078 = vmatmul.bf16.gmra.mxu0 %v1013
      %v1079 = vpop.f32.mrf.mxu0
      %v1080 = vadd.f32 0.0, %v1079
      %v1081 = vpop.f32.mrf.mxu0
      %v1082 = vadd.f32 0.0, %v1081
      %1083 = vmatmul.bf16.gmra.mxu0 %v1016
      %v1084 = vpop.f32.mrf.mxu0
      %v1085 = vadd.f32 0.0, %v1084
      %v1086 = vpop.f32.mrf.mxu0
      %v1087 = vadd.f32 0.0, %v1086
      %1088 = vmatmul.bf16.gmra.mxu0 %v1019
      %v1089 = vpop.f32.mrf.mxu0
      %v1090 = vadd.f32 0.0, %v1089
      %v1091 = vpop.f32.mrf.mxu0
      %v1092 = vadd.f32 0.0, %v1091
      %1093 = vmatmul.bf16.gmra.mxu0 %v1022
      %v1094 = vpop.f32.mrf.mxu0
      %v1095 = vadd.f32 0.0, %v1094
      %v1096 = vpop.f32.mrf.mxu0
      %v1097 = vadd.f32 0.0, %v1096
      %1098 = vmatmul.bf16.gmra.mxu0 %v1025
      %v1099 = vpop.f32.mrf.mxu0
      %v1100 = vadd.f32 0.0, %v1099
      %v1101 = vpop.f32.mrf.mxu0
      %v1102 = vadd.f32 0.0, %v1101
      %1103 = vmatmul.bf16.gmra.mxu0 %v1028
      %v1104 = vpop.f32.mrf.mxu0
      %v1105 = vadd.f32 0.0, %v1104
      %v1106 = vpop.f32.mrf.mxu0
      %v1107 = vadd.f32 0.0, %v1106
      %1108 = vmatmul.bf16.gmra.mxu0 %v1031
      %v1109 = vpop.f32.mrf.mxu0
      %v1110 = vadd.f32 0.0, %v1109
      %v1111 = vpop.f32.mrf.mxu0
      %v1112 = vadd.f32 0.0, %v1111
      %1113 = vmatmul.bf16.gmra.mxu0 %v1034
      %v1114 = vpop.f32.mrf.mxu0
      %v1115 = vadd.f32 0.0, %v1114
      %v1116 = vpop.f32.mrf.mxu0
      %v1117 = vadd.f32 0.0, %v1116
      %1118 = vmatmul.bf16.gmra.mxu0 %v1037
      %v1119 = vpop.f32.mrf.mxu0
      %v1120 = vadd.f32 0.0, %v1119
      %v1121 = vpop.f32.mrf.mxu0
      %v1122 = vadd.f32 0.0, %v1121
      %1123 = vmatmul.bf16.gmra.mxu0 %v1040
      %v1124 = vpop.f32.mrf.mxu0
      %v1125 = vadd.f32 0.0, %v1124
      %v1126 = vpop.f32.mrf.mxu0
      %v1127 = vadd.f32 0.0, %v1126
      %1128 = vmatmul.bf16.gmra.mxu0 %v1043
      %v1129 = vpop.f32.mrf.mxu0
      %v1130 = vadd.f32 0.0, %v1129
      %v1131 = vpop.f32.mrf.mxu0
      %v1132 = vadd.f32 0.0, %v1131
      %1133 = vdwg.mxu0
      %1134 = vmatpush.bf16.msra.mxu0 0
      %1135 = vmatpush.bf16.msra.mxu0 0
      %1136 = vmatpush.bf16.msra.mxu0 0
      %1137 = vmatpush.bf16.msra.mxu0 0
      %1138 = vmatpush.bf16.msra.mxu0 0
      %1139 = vmatpush.bf16.msra.mxu0 0
      %1140 = vmatpush.bf16.msra.mxu0 0
      %1141 = vmatpush.bf16.msra.mxu0 %v409
      %1142 = vmatmul.bf16.gmra.mxu0 %v998
      %v1143 = vpop.f32.mrf.mxu0
      %v1144 = vadd.f32 0.0, %v1143
      %v1145 = vpop.f32.mrf.mxu0
      %v1146 = vadd.f32 0.0, %v1145
      %1147 = vmatmul.bf16.gmra.mxu0 %v1001
      %v1148 = vpop.f32.mrf.mxu0
      %v1149 = vadd.f32 0.0, %v1148
      %v1150 = vpop.f32.mrf.mxu0
      %v1151 = vadd.f32 0.0, %v1150
      %1152 = vmatmul.bf16.gmra.mxu0 %v1004
      %v1153 = vpop.f32.mrf.mxu0
      %v1154 = vadd.f32 0.0, %v1153
      %v1155 = vpop.f32.mrf.mxu0
      %v1156 = vadd.f32 0.0, %v1155
      %1157 = vmatmul.bf16.gmra.mxu0 %v1007
      %v1158 = vpop.f32.mrf.mxu0
      %v1159 = vadd.f32 0.0, %v1158
      %v1160 = vpop.f32.mrf.mxu0
      %v1161 = vadd.f32 0.0, %v1160
      %1162 = vmatmul.bf16.gmra.mxu0 %v1010
      %v1163 = vpop.f32.mrf.mxu0
      %v1164 = vadd.f32 0.0, %v1163
      %v1165 = vpop.f32.mrf.mxu0
      %v1166 = vadd.f32 0.0, %v1165
      %1167 = vmatmul.bf16.gmra.mxu0 %v1013
      %v1168 = vpop.f32.mrf.mxu0
      %v1169 = vadd.f32 0.0, %v1168
      %v1170 = vpop.f32.mrf.mxu0
      %v1171 = vadd.f32 0.0, %v1170
      %1172 = vmatmul.bf16.gmra.mxu0 %v1016
      %v1173 = vpop.f32.mrf.mxu0
      %v1174 = vadd.f32 0.0, %v1173
      %v1175 = vpop.f32.mrf.mxu0
      %v1176 = vadd.f32 0.0, %v1175
      %1177 = vmatmul.bf16.gmra.mxu0 %v1019
      %v1178 = vpop.f32.mrf.mxu0
      %v1179 = vadd.f32 0.0, %v1178
      %v1180 = vpop.f32.mrf.mxu0
      %v1181 = vadd.f32 0.0, %v1180
      %1182 = vmatmul.bf16.gmra.mxu0 %v1022
      %v1183 = vpop.f32.mrf.mxu0
      %v1184 = vadd.f32 0.0, %v1183
      %v1185 = vpop.f32.mrf.mxu0
      %v1186 = vadd.f32 0.0, %v1185
      %1187 = vmatmul.bf16.gmra.mxu0 %v1025
      %v1188 = vpop.f32.mrf.mxu0
      %v1189 = vadd.f32 0.0, %v1188
      %v1190 = vpop.f32.mrf.mxu0
      %v1191 = vadd.f32 0.0, %v1190
      %1192 = vmatmul.bf16.gmra.mxu0 %v1028
      %v1193 = vpop.f32.mrf.mxu0
      %v1194 = vadd.f32 0.0, %v1193
      %v1195 = vpop.f32.mrf.mxu0
      %v1196 = vadd.f32 0.0, %v1195
      %1197 = vmatmul.bf16.gmra.mxu0 %v1031
      %v1198 = vpop.f32.mrf.mxu0
      %v1199 = vadd.f32 0.0, %v1198
      %v1200 = vpop.f32.mrf.mxu0
      %v1201 = vadd.f32 0.0, %v1200
      %1202 = vmatmul.bf16.gmra.mxu0 %v1034
      %v1203 = vpop.f32.mrf.mxu0
      %v1204 = vadd.f32 0.0, %v1203
      %v1205 = vpop.f32.mrf.mxu0
      %v1206 = vadd.f32 0.0, %v1205
      %1207 = vmatmul.bf16.gmra.mxu0 %v1037
      %v1208 = vpop.f32.mrf.mxu0
      %v1209 = vadd.f32 0.0, %v1208
      %v1210 = vpop.f32.mrf.mxu0
      %v1211 = vadd.f32 0.0, %v1210
      %1212 = vmatmul.bf16.gmra.mxu0 %v1040
      %v1213 = vpop.f32.mrf.mxu0
      %v1214 = vadd.f32 0.0, %v1213
      %v1215 = vpop.f32.mrf.mxu0
      %v1216 = vadd.f32 0.0, %v1215
      %1217 = vmatmul.bf16.gmra.mxu0 %v1043
      %v1218 = vpop.f32.mrf.mxu0
      %v1219 = vadd.f32 0.0, %v1218
      %v1220 = vpop.f32.mrf.mxu0
      %v1221 = vadd.f32 0.0, %v1220
      %1222 = vdwg.mxu0
      %v1223 = vmax.f32 %v1055, %v1060
      %v1224 = vmax.f32 %v1057, %v1062
      %v1225 = vmax.f32 %v1223, %v1065
      %v1226 = vmax.f32 %v1224, %v1067
      %v1227 = vmax.f32 %v1225, %v1070
      %v1228 = vmax.f32 %v1226, %v1072
      %v1229 = vmax.f32 %v1227, %v1075
      %v1230 = vmax.f32 %v1228, %v1077
      %v1231 = vmax.f32 %v1229, %v1080
      %v1232 = vmax.f32 %v1230, %v1082
      %v1233 = vmax.f32 %v1231, %v1085
      %v1234 = vmax.f32 %v1232, %v1087
      %v1235 = vmax.f32 %v1233, %v1090
      %v1236 = vmax.f32 %v1234, %v1092
      %v1237 = vmax.f32 %v1235, %v1095
      %v1238 = vmax.f32 %v1236, %v1097
      %v1239 = vmax.f32 %v1237, %v1100
      %v1240 = vmax.f32 %v1238, %v1102
      %v1241 = vmax.f32 %v1239, %v1105
      %v1242 = vmax.f32 %v1240, %v1107
      %v1243 = vmax.f32 %v1241, %v1110
      %v1244 = vmax.f32 %v1242, %v1112
      %v1245 = vmax.f32 %v1243, %v1115
      %v1246 = vmax.f32 %v1244, %v1117
      %v1247 = vmax.f32 %v1245, %v1120
      %v1248 = vmax.f32 %v1246, %v1122
      %v1249 = vmax.f32 %v1247, %v1125
      %v1250 = vmax.f32 %v1248, %v1127
      %v1251 = vmax.f32 %v1249, %v1130
      %v1252 = vmax.f32 %v1250, %v1132
      %v1253 = vmax.f32 %v1251, %v1252
      %v1254 = vrot.slane %v1253, 4
      %v1255 = vmax.f32 %v1253, %v1254
      %v1256 = vrot.slane %v1255, 2
      %v1257 = vmax.f32 %v1255, %v1256
      %v1258 = vrot.slane %v1257, 1
      %v1259 = vmax.f32 %v1257, %v1258
      %v1260 = vmax.f32 %v1144, %v1149
      %v1261 = vmax.f32 %v1146, %v1151
      %v1262 = vmax.f32 %v1260, %v1154
      %v1263 = vmax.f32 %v1261, %v1156
      %v1264 = vmax.f32 %v1262, %v1159
      %v1265 = vmax.f32 %v1263, %v1161
      %v1266 = vmax.f32 %v1264, %v1164
      %v1267 = vmax.f32 %v1265, %v1166
      %v1268 = vmax.f32 %v1266, %v1169
      %v1269 = vmax.f32 %v1267, %v1171
      %v1270 = vmax.f32 %v1268, %v1174
      %v1271 = vmax.f32 %v1269, %v1176
      %v1272 = vmax.f32 %v1270, %v1179
      %v1273 = vmax.f32 %v1271, %v1181
      %v1274 = vmax.f32 %v1272, %v1184
      %v1275 = vmax.f32 %v1273, %v1186
      %v1276 = vmax.f32 %v1274, %v1189
      %v1277 = vmax.f32 %v1275, %v1191
      %v1278 = vmax.f32 %v1276, %v1194
      %v1279 = vmax.f32 %v1277, %v1196
      %v1280 = vmax.f32 %v1278, %v1199
      %v1281 = vmax.f32 %v1279, %v1201
      %v1282 = vmax.f32 %v1280, %v1204
      %v1283 = vmax.f32 %v1281, %v1206
      %v1284 = vmax.f32 %v1282, %v1209
      %v1285 = vmax.f32 %v1283, %v1211
      %v1286 = vmax.f32 %v1284, %v1214
      %v1287 = vmax.f32 %v1285, %v1216
      %v1288 = vmax.f32 %v1286, %v1219
      %v1289 = vmax.f32 %v1287, %v1221
      %v1290 = vmax.f32 %v1288, %v1289
      %v1291 = vrot.slane %v1290, 4
      %v1292 = vmax.f32 %v1290, %v1291
      %v1293 = vrot.slane %v1292, 2
      %v1294 = vmax.f32 %v1292, %v1293
      %v1295 = vrot.slane %v1294, 1
      %v1296 = vmax.f32 %v1294, %v1295
      %v1297 = vsub.f32 %v1055, %v1259
      %v1298 = vsub.f32 %v1144, %v1296
      %v1299 = vsub.f32 %v1057, %v1259
      %v1300 = vsub.f32 %v1146, %v1296
      %v1301 = vsub.f32 %v1060, %v1259
      %v1302 = vsub.f32 %v1149, %v1296
      %v1303 = vsub.f32 %v1062, %v1259
      %v1304 = vsub.f32 %v1151, %v1296
      %v1305 = vsub.f32 %v1065, %v1259
      %v1306 = vsub.f32 %v1154, %v1296
      %v1307 = vsub.f32 %v1067, %v1259
      %v1308 = vsub.f32 %v1156, %v1296
      %v1309 = vsub.f32 %v1070, %v1259
      %v1310 = vsub.f32 %v1159, %v1296
      %v1311 = vsub.f32 %v1072, %v1259
      %v1312 = vsub.f32 %v1161, %v1296
      %v1313 = vsub.f32 %v1075, %v1259
      %v1314 = vsub.f32 %v1164, %v1296
      %v1315 = vsub.f32 %v1077, %v1259
      %v1316 = vsub.f32 %v1166, %v1296
      %v1317 = vsub.f32 %v1080, %v1259
      %v1318 = vsub.f32 %v1169, %v1296
      %v1319 = vsub.f32 %v1082, %v1259
      %v1320 = vsub.f32 %v1171, %v1296
      %v1321 = vsub.f32 %v1085, %v1259
      %v1322 = vsub.f32 %v1174, %v1296
      %v1323 = vsub.f32 %v1087, %v1259
      %v1324 = vsub.f32 %v1176, %v1296
      %v1325 = vsub.f32 %v1090, %v1259
      %v1326 = vsub.f32 %v1179, %v1296
      %v1327 = vsub.f32 %v1092, %v1259
      %v1328 = vsub.f32 %v1181, %v1296
      %v1329 = vsub.f32 %v1095, %v1259
      %v1330 = vsub.f32 %v1184, %v1296
      %v1331 = vsub.f32 %v1097, %v1259
      %v1332 = vsub.f32 %v1186, %v1296
      %v1333 = vsub.f32 %v1100, %v1259
      %v1334 = vsub.f32 %v1189, %v1296
      %v1335 = vsub.f32 %v1102, %v1259
      %v1336 = vsub.f32 %v1191, %v1296
      %v1337 = vsub.f32 %v1105, %v1259
      %v1338 = vsub.f32 %v1194, %v1296
      %v1339 = vsub.f32 %v1107, %v1259
      %v1340 = vsub.f32 %v1196, %v1296
      %v1341 = vsub.f32 %v1110, %v1259
      %v1342 = vsub.f32 %v1199, %v1296
      %v1343 = vsub.f32 %v1112, %v1259
      %v1344 = vsub.f32 %v1201, %v1296
      %v1345 = vsub.f32 %v1115, %v1259
      %v1346 = vsub.f32 %v1204, %v1296
      %v1347 = vsub.f32 %v1117, %v1259
      %v1348 = vsub.f32 %v1206, %v1296
      %v1349 = vsub.f32 %v1120, %v1259
      %v1350 = vsub.f32 %v1209, %v1296
      %v1351 = vsub.f32 %v1122, %v1259
      %v1352 = vsub.f32 %v1211, %v1296
      %v1353 = vsub.f32 %v1125, %v1259
      %v1354 = vsub.f32 %v1214, %v1296
      %v1355 = vsub.f32 %v1127, %v1259
      %v1356 = vsub.f32 %v1216, %v1296
      %v1357 = vsub.f32 %v1130, %v1259
      %v1358 = vsub.f32 %v1219, %v1296
      %v1359 = vsub.f32 %v1132, %v1259
      %v1360 = vsub.f32 %v1221, %v1296
      %v1361 = vmul.f32 %v1297, 1.442695
      %v1362 = vpow.pop %v1361
      %v1363 = vmul.f32 %v1298, 1.442695
      %v1364 = vpow.pop %v1363
      %v1365 = vmul.f32 %v1299, 1.442695
      %v1366 = vpow.pop %v1365
      %v1367 = vmul.f32 %v1300, 1.442695
      %v1368 = vpow.pop %v1367
      %v1369 = vmul.f32 %v1301, 1.442695
      %v1370 = vpow.pop %v1369
      %v1371 = vmul.f32 %v1302, 1.442695
      %v1372 = vpow.pop %v1371
      %v1373 = vmul.f32 %v1303, 1.442695
      %v1374 = vpow.pop %v1373
      %v1375 = vmul.f32 %v1304, 1.442695
      %v1376 = vpow.pop %v1375
      %v1377 = vmul.f32 %v1305, 1.442695
      %v1378 = vpow.pop %v1377
      %v1379 = vmul.f32 %v1306, 1.442695
      %v1380 = vpow.pop %v1379
      %v1381 = vmul.f32 %v1307, 1.442695
      %v1382 = vpow.pop %v1381
      %v1383 = vmul.f32 %v1308, 1.442695
      %v1384 = vpow.pop %v1383
      %v1385 = vmul.f32 %v1309, 1.442695
      %v1386 = vpow.pop %v1385
      %v1387 = vmul.f32 %v1310, 1.442695
      %v1388 = vpow.pop %v1387
      %v1389 = vmul.f32 %v1311, 1.442695
      %v1390 = vpow.pop %v1389
      %v1391 = vmul.f32 %v1312, 1.442695
      %v1392 = vpow.pop %v1391
      %v1393 = vmul.f32 %v1313, 1.442695
      %v1394 = vpow.pop %v1393
      %v1395 = vmul.f32 %v1314, 1.442695
      %v1396 = vpow.pop %v1395
      %v1397 = vmul.f32 %v1315, 1.442695
      %v1398 = vpow.pop %v1397
      %v1399 = vmul.f32 %v1316, 1.442695
      %v1400 = vpow.pop %v1399
      %v1401 = vmul.f32 %v1317, 1.442695
      %v1402 = vpow.pop %v1401
      %v1403 = vmul.f32 %v1318, 1.442695
      %v1404 = vpow.pop %v1403
      %v1405 = vmul.f32 %v1319, 1.442695
      %v1406 = vpow.pop %v1405
      %v1407 = vmul.f32 %v1320, 1.442695
      %v1408 = vpow.pop %v1407
      %v1409 = vmul.f32 %v1321, 1.442695
      %v1410 = vpow.pop %v1409
      %v1411 = vmul.f32 %v1322, 1.442695
      %v1412 = vpow.pop %v1411
      %v1413 = vmul.f32 %v1323, 1.442695
      %v1414 = vpow.pop %v1413
      %v1415 = vmul.f32 %v1324, 1.442695
      %v1416 = vpow.pop %v1415
      %v1417 = vmul.f32 %v1325, 1.442695
      %v1418 = vpow.pop %v1417
      %v1419 = vmul.f32 %v1326, 1.442695
      %v1420 = vpow.pop %v1419
      %v1421 = vmul.f32 %v1327, 1.442695
      %v1422 = vpow.pop %v1421
      %v1423 = vmul.f32 %v1328, 1.442695
      %v1424 = vpow.pop %v1423
      %v1425 = vmul.f32 %v1329, 1.442695
      %v1426 = vpow.pop %v1425
      %v1427 = vmul.f32 %v1330, 1.442695
      %v1428 = vpow.pop %v1427
      %v1429 = vmul.f32 %v1331, 1.442695
      %v1430 = vpow.pop %v1429
      %v1431 = vmul.f32 %v1332, 1.442695
      %v1432 = vpow.pop %v1431
      %v1433 = vmul.f32 %v1333, 1.442695
      %v1434 = vpow.pop %v1433
      %v1435 = vmul.f32 %v1334, 1.442695
      %v1436 = vpow.pop %v1435
      %v1437 = vmul.f32 %v1335, 1.442695
      %v1438 = vpow.pop %v1437
      %v1439 = vmul.f32 %v1336, 1.442695
      %v1440 = vpow.pop %v1439
      %v1441 = vmul.f32 %v1337, 1.442695
      %v1442 = vpow.pop %v1441
      %v1443 = vmul.f32 %v1338, 1.442695
      %v1444 = vpow.pop %v1443
      %v1445 = vmul.f32 %v1339, 1.442695
      %v1446 = vpow.pop %v1445
      %v1447 = vmul.f32 %v1340, 1.442695
      %v1448 = vpow.pop %v1447
      %v1449 = vmul.f32 %v1341, 1.442695
      %v1450 = vpow.pop %v1449
      %v1451 = vmul.f32 %v1342, 1.442695
      %v1452 = vpow.pop %v1451
      %v1453 = vmul.f32 %v1343, 1.442695
      %v1454 = vpow.pop %v1453
      %v1455 = vmul.f32 %v1344, 1.442695
      %v1456 = vpow.pop %v1455
      %v1457 = vmul.f32 %v1345, 1.442695
      %v1458 = vpow.pop %v1457
      %v1459 = vmul.f32 %v1346, 1.442695
      %v1460 = vpow.pop %v1459
      %v1461 = vmul.f32 %v1347, 1.442695
      %v1462 = vpow.pop %v1461
      %v1463 = vmul.f32 %v1348, 1.442695
      %v1464 = vpow.pop %v1463
      %v1465 = vmul.f32 %v1349, 1.442695
      %v1466 = vpow.pop %v1465
      %v1467 = vmul.f32 %v1350, 1.442695
      %v1468 = vpow.pop %v1467
      %v1469 = vmul.f32 %v1351, 1.442695
      %v1470 = vpow.pop %v1469
      %v1471 = vmul.f32 %v1352, 1.442695
      %v1472 = vpow.pop %v1471
      %v1473 = vmul.f32 %v1353, 1.442695
      %v1474 = vpow.pop %v1473
      %v1475 = vmul.f32 %v1354, 1.442695
      %v1476 = vpow.pop %v1475
      %v1477 = vmul.f32 %v1355, 1.442695
      %v1478 = vpow.pop %v1477
      %v1479 = vmul.f32 %v1356, 1.442695
      %v1480 = vpow.pop %v1479
      %v1481 = vmul.f32 %v1357, 1.442695
      %v1482 = vpow.pop %v1481
      %v1483 = vmul.f32 %v1358, 1.442695
      %v1484 = vpow.pop %v1483
      %v1485 = vmul.f32 %v1359, 1.442695
      %v1486 = vpow.pop %v1485
      %v1487 = vmul.f32 %v1360, 1.442695
      %v1488 = vpow.pop %v1487
      %v1489 = vadd.f32 %v1362, %v1366
      %v1490 = vadd.f32 %v1489, %v1370
      %v1491 = vadd.f32 %v1490, %v1374
      %v1492 = vadd.f32 %v1491, %v1378
      %v1493 = vadd.f32 %v1492, %v1382
      %v1494 = vadd.f32 %v1493, %v1386
      %v1495 = vadd.f32 %v1494, %v1390
      %v1496 = vadd.f32 %v1495, %v1394
      %v1497 = vadd.f32 %v1496, %v1398
      %v1498 = vadd.f32 %v1497, %v1402
      %v1499 = vadd.f32 %v1498, %v1406
      %v1500 = vadd.f32 %v1499, %v1410
      %v1501 = vadd.f32 %v1500, %v1414
      %v1502 = vadd.f32 %v1501, %v1418
      %v1503 = vadd.f32 %v1502, %v1422
      %v1504 = vadd.f32 %v1503, %v1426
      %v1505 = vadd.f32 %v1504, %v1430
      %v1506 = vadd.f32 %v1505, %v1434
      %v1507 = vadd.f32 %v1506, %v1438
      %v1508 = vadd.f32 %v1507, %v1442
      %v1509 = vadd.f32 %v1508, %v1446
      %v1510 = vadd.f32 %v1509, %v1450
      %v1511 = vadd.f32 %v1510, %v1454
      %v1512 = vadd.f32 %v1511, %v1458
      %v1513 = vadd.f32 %v1512, %v1462
      %v1514 = vadd.f32 %v1513, %v1466
      %v1515 = vadd.f32 %v1514, %v1470
      %v1516 = vadd.f32 %v1515, %v1474
      %v1517 = vadd.f32 %v1516, %v1478
      %v1518 = vadd.f32 %v1517, %v1482
      %v1519 = vadd.f32 %v1518, %v1486
      %v1520 = vrot.slane %v1519, 4
      %v1521 = vadd.f32 %v1519, %v1520
      %v1522 = vrot.slane %v1521, 2
      %v1523 = vadd.f32 %v1521, %v1522
      %v1524 = vrot.slane %v1523, 1
      %v1525 = vadd.f32 %v1523, %v1524
      %v1526 = vadd.f32 %v1364, %v1368
      %v1527 = vadd.f32 %v1526, %v1372
      %v1528 = vadd.f32 %v1527, %v1376
      %v1529 = vadd.f32 %v1528, %v1380
      %v1530 = vadd.f32 %v1529, %v1384
      %v1531 = vadd.f32 %v1530, %v1388
      %v1532 = vadd.f32 %v1531, %v1392
      %v1533 = vadd.f32 %v1532, %v1396
      %v1534 = vadd.f32 %v1533, %v1400
      %v1535 = vadd.f32 %v1534, %v1404
      %v1536 = vadd.f32 %v1535, %v1408
      %v1537 = vadd.f32 %v1536, %v1412
      %v1538 = vadd.f32 %v1537, %v1416
      %v1539 = vadd.f32 %v1538, %v1420
      %v1540 = vadd.f32 %v1539, %v1424
      %v1541 = vadd.f32 %v1540, %v1428
      %v1542 = vadd.f32 %v1541, %v1432
      %v1543 = vadd.f32 %v1542, %v1436
      %v1544 = vadd.f32 %v1543, %v1440
      %v1545 = vadd.f32 %v1544, %v1444
      %v1546 = vadd.f32 %v1545, %v1448
      %v1547 = vadd.f32 %v1546, %v1452
      %v1548 = vadd.f32 %v1547, %v1456
      %v1549 = vadd.f32 %v1548, %v1460
      %v1550 = vadd.f32 %v1549, %v1464
      %v1551 = vadd.f32 %v1550, %v1468
      %v1552 = vadd.f32 %v1551, %v1472
      %v1553 = vadd.f32 %v1552, %v1476
      %v1554 = vadd.f32 %v1553, %v1480
      %v1555 = vadd.f32 %v1554, %v1484
      %v1556 = vadd.f32 %v1555, %v1488
      %v1557 = vrot.slane %v1556, 4
      %v1558 = vadd.f32 %v1556, %v1557
      %v1559 = vrot.slane %v1558, 2
      %v1560 = vadd.f32 %v1558, %v1559
      %v1561 = vrot.slane %v1560, 1
      %v1562 = vadd.f32 %v1560, %v1561
      %v1563 = vrcp.pop %v1525
      %v1564 = vrcp.pop %v1562
      %v1565 = vpack.c.bf16 %v1364, %v1362
      %v1566 = vpack.c.bf16 %v1368, %v1366
      %v1567 = vpack.c.bf16 %v1372, %v1370
      %v1568 = vpack.c.bf16 %v1376, %v1374
      %v1569 = vpack.c.bf16 %v1380, %v1378
      %v1570 = vpack.c.bf16 %v1384, %v1382
      %v1571 = vpack.c.bf16 %v1388, %v1386
      %v1572 = vpack.c.bf16 %v1392, %v1390
      %v1573 = vpack.c.bf16 %v1396, %v1394
      %v1574 = vpack.c.bf16 %v1400, %v1398
      %v1575 = vpack.c.bf16 %v1404, %v1402
      %v1576 = vpack.c.bf16 %v1408, %v1406
      %v1577 = vpack.c.bf16 %v1412, %v1410
      %v1578 = vpack.c.bf16 %v1416, %v1414
      %v1579 = vpack.c.bf16 %v1420, %v1418
      %v1580 = vpack.c.bf16 %v1424, %v1422
      %v1581 = vpack.c.bf16 %v1428, %v1426
      %v1582 = vpack.c.bf16 %v1432, %v1430
      %v1583 = vpack.c.bf16 %v1436, %v1434
      %v1584 = vpack.c.bf16 %v1440, %v1438
      %v1585 = vpack.c.bf16 %v1444, %v1442
      %v1586 = vpack.c.bf16 %v1448, %v1446
      %v1587 = vpack.c.bf16 %v1452, %v1450
      %v1588 = vpack.c.bf16 %v1456, %v1454
      %v1589 = vpack.c.bf16 %v1460, %v1458
      %v1590 = vpack.c.bf16 %v1464, %v1462
      %v1591 = vpack.c.bf16 %v1468, %v1466
      %v1592 = vpack.c.bf16 %v1472, %v1470
      %v1593 = vpack.c.bf16 %v1476, %v1474
      %v1594 = vpack.c.bf16 %v1480, %v1478
      %v1595 = vpack.c.bf16 %v1484, %v1482
      %v1596 = vpack.c.bf16 %v1488, %v1486
      %v1597 = vld [vmem:[%s287 + $0x8] sm:$0x33]
      %v1599 = vunpack.c.l.b16 %v1597
      %v1600 = vunpack.c.h.b16 %v1597
      %v1601 = vpack.c.b16 %v1599, %v1599
      %v1602 = vpack.c.b16 %v1600, %v1600
      %1605 = vxpose.binary.xlu0.c.b16.start [1/16] %v1602, %v1601, 128
      %1606 = vxpose.binary.xlu0.c.b16.cont [2/16] 0, 0, 128
      %1607 = vxpose.binary.xlu0.c.b16.cont [3/16] 0, 0, 128
      %1608 = vxpose.binary.xlu0.c.b16.cont [4/16] 0, 0, 128
      %1609 = vxpose.binary.xlu0.c.b16.cont [5/16] 0, 0, 128
      %1610 = vxpose.binary.xlu0.c.b16.cont [6/16] 0, 0, 128
      %1611 = vxpose.binary.xlu0.c.b16.cont [7/16] 0, 0, 128
      %1612 = vxpose.binary.xlu0.c.b16.end [8/16] 0, 0, 128
      %v1613 = vpop.trf.xlu0
      %v1614 = vpop.trf.xlu0
      %v1615 = vpop.trf.xlu0
      %v1616 = vpop.trf.xlu0
      %v1617 = vpop.trf.xlu0
      %v1618 = vpop.trf.xlu0
      %v1619 = vpop.trf.xlu0
      %v1620 = vpop.trf.xlu0
      %v1621 = vpop.trf.xlu0
      %v1622 = vpop.trf.xlu0
      %v1623 = vpop.trf.xlu0
      %v1624 = vpop.trf.xlu0
      %v1625 = vpop.trf.xlu0
      %v1626 = vpop.trf.xlu0
      %v1627 = vpop.trf.xlu0
      %v1628 = vpop.trf.xlu0
      %v1630 = vsel %vm355, %v1613, 0
      %v1633 = vsel %vm355, %v1615, 0
      %v1636 = vsel %vm355, %v1617, 0
      %v1639 = vsel %vm355, %v1619, 0
      %v1642 = vsel %vm355, %v1621, 0
      %v1645 = vsel %vm355, %v1623, 0
      %v1648 = vsel %vm355, %v1625, 0
      %v1651 = vsel %vm355, %v1627, 0
      %v1654 = vsel %vm355, %v1614, 0
      %v1657 = vsel %vm355, %v1616, 0
      %v1660 = vsel %vm355, %v1618, 0
      %v1663 = vsel %vm355, %v1620, 0
      %v1666 = vsel %vm355, %v1622, 0
      %v1669 = vsel %vm355, %v1624, 0
      %v1672 = vsel %vm355, %v1626, 0
      %v1675 = vsel %vm355, %v1628, 0
      %1677 = vmatpush.bf16.msra.mxu0 0
      %1678 = vmatpush.bf16.msra.mxu0 0
      %1679 = vmatpush.bf16.msra.mxu0 0
      %1680 = vmatpush.bf16.msra.mxu0 0
      %1681 = vmatpush.bf16.msra.mxu0 0
      %1682 = vmatpush.bf16.msra.mxu0 0
      %1683 = vmatpush.bf16.msra.mxu0 0
      %1684 = vmatpush.bf16.msra.mxu0 %v406
      %1685 = vmatmul.bf16.gmra.mxu0 %v1630
      %v1686 = vpop.f32.mrf.mxu0
      %v1687 = vadd.f32 0.0, %v1686
      %v1688 = vpop.f32.mrf.mxu0
      %v1689 = vadd.f32 0.0, %v1688
      %1690 = vmatmul.bf16.gmra.mxu0 %v1633
      %v1691 = vpop.f32.mrf.mxu0
      %v1692 = vadd.f32 0.0, %v1691
      %v1693 = vpop.f32.mrf.mxu0
      %v1694 = vadd.f32 0.0, %v1693
      %1695 = vmatmul.bf16.gmra.mxu0 %v1636
      %v1696 = vpop.f32.mrf.mxu0
      %v1697 = vadd.f32 0.0, %v1696
      %v1698 = vpop.f32.mrf.mxu0
      %v1699 = vadd.f32 0.0, %v1698
      %1700 = vmatmul.bf16.gmra.mxu0 %v1639
      %v1701 = vpop.f32.mrf.mxu0
      %v1702 = vadd.f32 0.0, %v1701
      %v1703 = vpop.f32.mrf.mxu0
      %v1704 = vadd.f32 0.0, %v1703
      %1705 = vmatmul.bf16.gmra.mxu0 %v1642
      %v1706 = vpop.f32.mrf.mxu0
      %v1707 = vadd.f32 0.0, %v1706
      %v1708 = vpop.f32.mrf.mxu0
      %v1709 = vadd.f32 0.0, %v1708
      %1710 = vmatmul.bf16.gmra.mxu0 %v1645
      %v1711 = vpop.f32.mrf.mxu0
      %v1712 = vadd.f32 0.0, %v1711
      %v1713 = vpop.f32.mrf.mxu0
      %v1714 = vadd.f32 0.0, %v1713
      %1715 = vmatmul.bf16.gmra.mxu0 %v1648
      %v1716 = vpop.f32.mrf.mxu0
      %v1717 = vadd.f32 0.0, %v1716
      %v1718 = vpop.f32.mrf.mxu0
      %v1719 = vadd.f32 0.0, %v1718
      %1720 = vmatmul.bf16.gmra.mxu0 %v1651
      %v1721 = vpop.f32.mrf.mxu0
      %v1722 = vadd.f32 0.0, %v1721
      %v1723 = vpop.f32.mrf.mxu0
      %v1724 = vadd.f32 0.0, %v1723
      %1725 = vmatmul.bf16.gmra.mxu0 %v1654
      %v1726 = vpop.f32.mrf.mxu0
      %v1727 = vadd.f32 0.0, %v1726
      %v1728 = vpop.f32.mrf.mxu0
      %v1729 = vadd.f32 0.0, %v1728
      %1730 = vmatmul.bf16.gmra.mxu0 %v1657
      %v1731 = vpop.f32.mrf.mxu0
      %v1732 = vadd.f32 0.0, %v1731
      %v1733 = vpop.f32.mrf.mxu0
      %v1734 = vadd.f32 0.0, %v1733
      %1735 = vmatmul.bf16.gmra.mxu0 %v1660
      %v1736 = vpop.f32.mrf.mxu0
      %v1737 = vadd.f32 0.0, %v1736
      %v1738 = vpop.f32.mrf.mxu0
      %v1739 = vadd.f32 0.0, %v1738
      %1740 = vmatmul.bf16.gmra.mxu0 %v1663
      %v1741 = vpop.f32.mrf.mxu0
      %v1742 = vadd.f32 0.0, %v1741
      %v1743 = vpop.f32.mrf.mxu0
      %v1744 = vadd.f32 0.0, %v1743
      %1745 = vmatmul.bf16.gmra.mxu0 %v1666
      %v1746 = vpop.f32.mrf.mxu0
      %v1747 = vadd.f32 0.0, %v1746
      %v1748 = vpop.f32.mrf.mxu0
      %v1749 = vadd.f32 0.0, %v1748
      %1750 = vmatmul.bf16.gmra.mxu0 %v1669
      %v1751 = vpop.f32.mrf.mxu0
      %v1752 = vadd.f32 0.0, %v1751
      %v1753 = vpop.f32.mrf.mxu0
      %v1754 = vadd.f32 0.0, %v1753
      %1755 = vmatmul.bf16.gmra.mxu0 %v1672
      %v1756 = vpop.f32.mrf.mxu0
      %v1757 = vadd.f32 0.0, %v1756
      %v1758 = vpop.f32.mrf.mxu0
      %v1759 = vadd.f32 0.0, %v1758
      %1760 = vmatmul.bf16.gmra.mxu0 %v1675
      %v1761 = vpop.f32.mrf.mxu0
      %v1762 = vadd.f32 0.0, %v1761
      %v1763 = vpop.f32.mrf.mxu0
      %v1764 = vadd.f32 0.0, %v1763
      %1765 = vdwg.mxu0
      %1766 = vmatpush.bf16.msra.mxu0 0
      %1767 = vmatpush.bf16.msra.mxu0 0
      %1768 = vmatpush.bf16.msra.mxu0 0
      %1769 = vmatpush.bf16.msra.mxu0 0
      %1770 = vmatpush.bf16.msra.mxu0 0
      %1771 = vmatpush.bf16.msra.mxu0 0
      %1772 = vmatpush.bf16.msra.mxu0 0
      %1773 = vmatpush.bf16.msra.mxu0 %v409
      %1774 = vmatmul.bf16.gmra.mxu0 %v1630
      %v1775 = vpop.f32.mrf.mxu0
      %v1776 = vadd.f32 0.0, %v1775
      %v1777 = vpop.f32.mrf.mxu0
      %v1778 = vadd.f32 0.0, %v1777
      %1779 = vmatmul.bf16.gmra.mxu0 %v1633
      %v1780 = vpop.f32.mrf.mxu0
      %v1781 = vadd.f32 0.0, %v1780
      %v1782 = vpop.f32.mrf.mxu0
      %v1783 = vadd.f32 0.0, %v1782
      %1784 = vmatmul.bf16.gmra.mxu0 %v1636
      %v1785 = vpop.f32.mrf.mxu0
      %v1786 = vadd.f32 0.0, %v1785
      %v1787 = vpop.f32.mrf.mxu0
      %v1788 = vadd.f32 0.0, %v1787
      %1789 = vmatmul.bf16.gmra.mxu0 %v1639
      %v1790 = vpop.f32.mrf.mxu0
      %v1791 = vadd.f32 0.0, %v1790
      %v1792 = vpop.f32.mrf.mxu0
      %v1793 = vadd.f32 0.0, %v1792
      %1794 = vmatmul.bf16.gmra.mxu0 %v1642
      %v1795 = vpop.f32.mrf.mxu0
      %v1796 = vadd.f32 0.0, %v1795
      %v1797 = vpop.f32.mrf.mxu0
      %v1798 = vadd.f32 0.0, %v1797
      %1799 = vmatmul.bf16.gmra.mxu0 %v1645
      %v1800 = vpop.f32.mrf.mxu0
      %v1801 = vadd.f32 0.0, %v1800
      %v1802 = vpop.f32.mrf.mxu0
      %v1803 = vadd.f32 0.0, %v1802
      %1804 = vmatmul.bf16.gmra.mxu0 %v1648
      %v1805 = vpop.f32.mrf.mxu0
      %v1806 = vadd.f32 0.0, %v1805
      %v1807 = vpop.f32.mrf.mxu0
      %v1808 = vadd.f32 0.0, %v1807
      %1809 = vmatmul.bf16.gmra.mxu0 %v1651
      %v1810 = vpop.f32.mrf.mxu0
      %v1811 = vadd.f32 0.0, %v1810
      %v1812 = vpop.f32.mrf.mxu0
      %v1813 = vadd.f32 0.0, %v1812
      %1814 = vmatmul.bf16.gmra.mxu0 %v1654
      %v1815 = vpop.f32.mrf.mxu0
      %v1816 = vadd.f32 0.0, %v1815
      %v1817 = vpop.f32.mrf.mxu0
      %v1818 = vadd.f32 0.0, %v1817
      %1819 = vmatmul.bf16.gmra.mxu0 %v1657
      %v1820 = vpop.f32.mrf.mxu0
      %v1821 = vadd.f32 0.0, %v1820
      %v1822 = vpop.f32.mrf.mxu0
      %v1823 = vadd.f32 0.0, %v1822
      %1824 = vmatmul.bf16.gmra.mxu0 %v1660
      %v1825 = vpop.f32.mrf.mxu0
      %v1826 = vadd.f32 0.0, %v1825
      %v1827 = vpop.f32.mrf.mxu0
      %v1828 = vadd.f32 0.0, %v1827
      %1829 = vmatmul.bf16.gmra.mxu0 %v1663
      %v1830 = vpop.f32.mrf.mxu0
      %v1831 = vadd.f32 0.0, %v1830
      %v1832 = vpop.f32.mrf.mxu0
      %v1833 = vadd.f32 0.0, %v1832
      %1834 = vmatmul.bf16.gmra.mxu0 %v1666
      %v1835 = vpop.f32.mrf.mxu0
      %v1836 = vadd.f32 0.0, %v1835
      %v1837 = vpop.f32.mrf.mxu0
      %v1838 = vadd.f32 0.0, %v1837
      %1839 = vmatmul.bf16.gmra.mxu0 %v1669
      %v1840 = vpop.f32.mrf.mxu0
      %v1841 = vadd.f32 0.0, %v1840
      %v1842 = vpop.f32.mrf.mxu0
      %v1843 = vadd.f32 0.0, %v1842
      %1844 = vmatmul.bf16.gmra.mxu0 %v1672
      %v1845 = vpop.f32.mrf.mxu0
      %v1846 = vadd.f32 0.0, %v1845
      %v1847 = vpop.f32.mrf.mxu0
      %v1848 = vadd.f32 0.0, %v1847
      %1849 = vmatmul.bf16.gmra.mxu0 %v1675
      %v1850 = vpop.f32.mrf.mxu0
      %v1851 = vadd.f32 0.0, %v1850
      %v1852 = vpop.f32.mrf.mxu0
      %v1853 = vadd.f32 0.0, %v1852
      %1854 = vdwg.mxu0
      %v1855 = vmax.f32 %v1687, %v1692
      %v1856 = vmax.f32 %v1689, %v1694
      %v1857 = vmax.f32 %v1855, %v1697
      %v1858 = vmax.f32 %v1856, %v1699
      %v1859 = vmax.f32 %v1857, %v1702
      %v1860 = vmax.f32 %v1858, %v1704
      %v1861 = vmax.f32 %v1859, %v1707
      %v1862 = vmax.f32 %v1860, %v1709
      %v1863 = vmax.f32 %v1861, %v1712
      %v1864 = vmax.f32 %v1862, %v1714
      %v1865 = vmax.f32 %v1863, %v1717
      %v1866 = vmax.f32 %v1864, %v1719
      %v1867 = vmax.f32 %v1865, %v1722
      %v1868 = vmax.f32 %v1866, %v1724
      %v1869 = vmax.f32 %v1867, %v1727
      %v1870 = vmax.f32 %v1868, %v1729
      %v1871 = vmax.f32 %v1869, %v1732
      %v1872 = vmax.f32 %v1870, %v1734
      %v1873 = vmax.f32 %v1871, %v1737
      %v1874 = vmax.f32 %v1872, %v1739
      %v1875 = vmax.f32 %v1873, %v1742
      %v1876 = vmax.f32 %v1874, %v1744
      %v1877 = vmax.f32 %v1875, %v1747
      %v1878 = vmax.f32 %v1876, %v1749
      %v1879 = vmax.f32 %v1877, %v1752
      %v1880 = vmax.f32 %v1878, %v1754
      %v1881 = vmax.f32 %v1879, %v1757
      %v1882 = vmax.f32 %v1880, %v1759
      %v1883 = vmax.f32 %v1881, %v1762
      %v1884 = vmax.f32 %v1882, %v1764
      %v1885 = vmax.f32 %v1883, %v1884
      %v1886 = vrot.slane %v1885, 4
      %v1887 = vmax.f32 %v1885, %v1886
      %v1888 = vrot.slane %v1887, 2
      %v1889 = vmax.f32 %v1887, %v1888
      %v1890 = vrot.slane %v1889, 1
      %v1891 = vmax.f32 %v1889, %v1890
      %v1892 = vmax.f32 %v1776, %v1781
      %v1893 = vmax.f32 %v1778, %v1783
      %v1894 = vmax.f32 %v1892, %v1786
      %v1895 = vmax.f32 %v1893, %v1788
      %v1896 = vmax.f32 %v1894, %v1791
      %v1897 = vmax.f32 %v1895, %v1793
      %v1898 = vmax.f32 %v1896, %v1796
      %v1899 = vmax.f32 %v1897, %v1798
      %v1900 = vmax.f32 %v1898, %v1801
      %v1901 = vmax.f32 %v1899, %v1803
      %v1902 = vmax.f32 %v1900, %v1806
      %v1903 = vmax.f32 %v1901, %v1808
      %v1904 = vmax.f32 %v1902, %v1811
      %v1905 = vmax.f32 %v1903, %v1813
      %v1906 = vmax.f32 %v1904, %v1816
      %v1907 = vmax.f32 %v1905, %v1818
      %v1908 = vmax.f32 %v1906, %v1821
      %v1909 = vmax.f32 %v1907, %v1823
      %v1910 = vmax.f32 %v1908, %v1826
      %v1911 = vmax.f32 %v1909, %v1828
      %v1912 = vmax.f32 %v1910, %v1831
      %v1913 = vmax.f32 %v1911, %v1833
      %v1914 = vmax.f32 %v1912, %v1836
      %v1915 = vmax.f32 %v1913, %v1838
      %v1916 = vmax.f32 %v1914, %v1841
      %v1917 = vmax.f32 %v1915, %v1843
      %v1918 = vmax.f32 %v1916, %v1846
      %v1919 = vmax.f32 %v1917, %v1848
      %v1920 = vmax.f32 %v1918, %v1851
      %v1921 = vmax.f32 %v1919, %v1853
      %v1922 = vmax.f32 %v1920, %v1921
      %v1923 = vrot.slane %v1922, 4
      %v1924 = vmax.f32 %v1922, %v1923
      %v1925 = vrot.slane %v1924, 2
      %v1926 = vmax.f32 %v1924, %v1925
      %v1927 = vrot.slane %v1926, 1
      %v1928 = vmax.f32 %v1926, %v1927
      %v1929 = vsub.f32 %v1687, %v1891
      %v1930 = vsub.f32 %v1776, %v1928
      %v1931 = vsub.f32 %v1689, %v1891
      %v1932 = vsub.f32 %v1778, %v1928
      %v1933 = vsub.f32 %v1692, %v1891
      %v1934 = vsub.f32 %v1781, %v1928
      %v1935 = vsub.f32 %v1694, %v1891
      %v1936 = vsub.f32 %v1783, %v1928
      %v1937 = vsub.f32 %v1697, %v1891
      %v1938 = vsub.f32 %v1786, %v1928
      %v1939 = vsub.f32 %v1699, %v1891
      %v1940 = vsub.f32 %v1788, %v1928
      %v1941 = vsub.f32 %v1702, %v1891
      %v1942 = vsub.f32 %v1791, %v1928
      %v1943 = vsub.f32 %v1704, %v1891
      %v1944 = vsub.f32 %v1793, %v1928
      %v1945 = vsub.f32 %v1707, %v1891
      %v1946 = vsub.f32 %v1796, %v1928
      %v1947 = vsub.f32 %v1709, %v1891
      %v1948 = vsub.f32 %v1798, %v1928
      %v1949 = vsub.f32 %v1712, %v1891
      %v1950 = vsub.f32 %v1801, %v1928
      %v1951 = vsub.f32 %v1714, %v1891
      %v1952 = vsub.f32 %v1803, %v1928
      %v1953 = vsub.f32 %v1717, %v1891
      %v1954 = vsub.f32 %v1806, %v1928
      %v1955 = vsub.f32 %v1719, %v1891
      %v1956 = vsub.f32 %v1808, %v1928
      %v1957 = vsub.f32 %v1722, %v1891
      %v1958 = vsub.f32 %v1811, %v1928
      %v1959 = vsub.f32 %v1724, %v1891
      %v1960 = vsub.f32 %v1813, %v1928
      %v1961 = vsub.f32 %v1727, %v1891
      %v1962 = vsub.f32 %v1816, %v1928
      %v1963 = vsub.f32 %v1729, %v1891
      %v1964 = vsub.f32 %v1818, %v1928
      %v1965 = vsub.f32 %v1732, %v1891
      %v1966 = vsub.f32 %v1821, %v1928
      %v1967 = vsub.f32 %v1734, %v1891
      %v1968 = vsub.f32 %v1823, %v1928
      %v1969 = vsub.f32 %v1737, %v1891
      %v1970 = vsub.f32 %v1826, %v1928
      %v1971 = vsub.f32 %v1739, %v1891
      %v1972 = vsub.f32 %v1828, %v1928
      %v1973 = vsub.f32 %v1742, %v1891
      %v1974 = vsub.f32 %v1831, %v1928
      %v1975 = vsub.f32 %v1744, %v1891
      %v1976 = vsub.f32 %v1833, %v1928
      %v1977 = vsub.f32 %v1747, %v1891
      %v1978 = vsub.f32 %v1836, %v1928
      %v1979 = vsub.f32 %v1749, %v1891
      %v1980 = vsub.f32 %v1838, %v1928
      %v1981 = vsub.f32 %v1752, %v1891
      %v1982 = vsub.f32 %v1841, %v1928
      %v1983 = vsub.f32 %v1754, %v1891
      %v1984 = vsub.f32 %v1843, %v1928
      %v1985 = vsub.f32 %v1757, %v1891
      %v1986 = vsub.f32 %v1846, %v1928
      %v1987 = vsub.f32 %v1759, %v1891
      %v1988 = vsub.f32 %v1848, %v1928
      %v1989 = vsub.f32 %v1762, %v1891
      %v1990 = vsub.f32 %v1851, %v1928
      %v1991 = vsub.f32 %v1764, %v1891
      %v1992 = vsub.f32 %v1853, %v1928
      %v1993 = vmul.f32 %v1929, 1.442695
      %v1994 = vpow.pop %v1993
      %v1995 = vmul.f32 %v1930, 1.442695
      %v1996 = vpow.pop %v1995
      %v1997 = vmul.f32 %v1931, 1.442695
      %v1998 = vpow.pop %v1997
      %v1999 = vmul.f32 %v1932, 1.442695
      %v2000 = vpow.pop %v1999
      %v2001 = vmul.f32 %v1933, 1.442695
      %v2002 = vpow.pop %v2001
      %v2003 = vmul.f32 %v1934, 1.442695
      %v2004 = vpow.pop %v2003
      %v2005 = vmul.f32 %v1935, 1.442695
      %v2006 = vpow.pop %v2005
      %v2007 = vmul.f32 %v1936, 1.442695
      %v2008 = vpow.pop %v2007
      %v2009 = vmul.f32 %v1937, 1.442695
      %v2010 = vpow.pop %v2009
      %v2011 = vmul.f32 %v1938, 1.442695
      %v2012 = vpow.pop %v2011
      %v2013 = vmul.f32 %v1939, 1.442695
      %v2014 = vpow.pop %v2013
      %v2015 = vmul.f32 %v1940, 1.442695
      %v2016 = vpow.pop %v2015
      %v2017 = vmul.f32 %v1941, 1.442695
      %v2018 = vpow.pop %v2017
      %v2019 = vmul.f32 %v1942, 1.442695
      %v2020 = vpow.pop %v2019
      %v2021 = vmul.f32 %v1943, 1.442695
      %v2022 = vpow.pop %v2021
      %v2023 = vmul.f32 %v1944, 1.442695
      %v2024 = vpow.pop %v2023
      %v2025 = vmul.f32 %v1945, 1.442695
      %v2026 = vpow.pop %v2025
      %v2027 = vmul.f32 %v1946, 1.442695
      %v2028 = vpow.pop %v2027
      %v2029 = vmul.f32 %v1947, 1.442695
      %v2030 = vpow.pop %v2029
      %v2031 = vmul.f32 %v1948, 1.442695
      %v2032 = vpow.pop %v2031
      %v2033 = vmul.f32 %v1949, 1.442695
      %v2034 = vpow.pop %v2033
      %v2035 = vmul.f32 %v1950, 1.442695
      %v2036 = vpow.pop %v2035
      %v2037 = vmul.f32 %v1951, 1.442695
      %v2038 = vpow.pop %v2037
      %v2039 = vmul.f32 %v1952, 1.442695
      %v2040 = vpow.pop %v2039
      %v2041 = vmul.f32 %v1953, 1.442695
      %v2042 = vpow.pop %v2041
      %v2043 = vmul.f32 %v1954, 1.442695
      %v2044 = vpow.pop %v2043
      %v2045 = vmul.f32 %v1955, 1.442695
      %v2046 = vpow.pop %v2045
      %v2047 = vmul.f32 %v1956, 1.442695
      %v2048 = vpow.pop %v2047
      %v2049 = vmul.f32 %v1957, 1.442695
      %v2050 = vpow.pop %v2049
      %v2051 = vmul.f32 %v1958, 1.442695
      %v2052 = vpow.pop %v2051
      %v2053 = vmul.f32 %v1959, 1.442695
      %v2054 = vpow.pop %v2053
      %v2055 = vmul.f32 %v1960, 1.442695
      %v2056 = vpow.pop %v2055
      %v2057 = vmul.f32 %v1961, 1.442695
      %v2058 = vpow.pop %v2057
      %v2059 = vmul.f32 %v1962, 1.442695
      %v2060 = vpow.pop %v2059
      %v2061 = vmul.f32 %v1963, 1.442695
      %v2062 = vpow.pop %v2061
      %v2063 = vmul.f32 %v1964, 1.442695
      %v2064 = vpow.pop %v2063
      %v2065 = vmul.f32 %v1965, 1.442695
      %v2066 = vpow.pop %v2065
      %v2067 = vmul.f32 %v1966, 1.442695
      %v2068 = vpow.pop %v2067
      %v2069 = vmul.f32 %v1967, 1.442695
      %v2070 = vpow.pop %v2069
      %v2071 = vmul.f32 %v1968, 1.442695
      %v2072 = vpow.pop %v2071
      %v2073 = vmul.f32 %v1969, 1.442695
      %v2074 = vpow.pop %v2073
      %v2075 = vmul.f32 %v1970, 1.442695
      %v2076 = vpow.pop %v2075
      %v2077 = vmul.f32 %v1971, 1.442695
      %v2078 = vpow.pop %v2077
      %v2079 = vmul.f32 %v1972, 1.442695
      %v2080 = vpow.pop %v2079
      %v2081 = vmul.f32 %v1973, 1.442695
      %v2082 = vpow.pop %v2081
      %v2083 = vmul.f32 %v1974, 1.442695
      %v2084 = vpow.pop %v2083
      %v2085 = vmul.f32 %v1975, 1.442695
      %v2086 = vpow.pop %v2085
      %v2087 = vmul.f32 %v1976, 1.442695
      %v2088 = vpow.pop %v2087
      %v2089 = vmul.f32 %v1977, 1.442695
      %v2090 = vpow.pop %v2089
      %v2091 = vmul.f32 %v1978, 1.442695
      %v2092 = vpow.pop %v2091
      %v2093 = vmul.f32 %v1979, 1.442695
      %v2094 = vpow.pop %v2093
      %v2095 = vmul.f32 %v1980, 1.442695
      %v2096 = vpow.pop %v2095
      %v2097 = vmul.f32 %v1981, 1.442695
      %v2098 = vpow.pop %v2097
      %v2099 = vmul.f32 %v1982, 1.442695
      %v2100 = vpow.pop %v2099
      %v2101 = vmul.f32 %v1983, 1.442695
      %v2102 = vpow.pop %v2101
      %v2103 = vmul.f32 %v1984, 1.442695
      %v2104 = vpow.pop %v2103
      %v2105 = vmul.f32 %v1985, 1.442695
      %v2106 = vpow.pop %v2105
      %v2107 = vmul.f32 %v1986, 1.442695
      %v2108 = vpow.pop %v2107
      %v2109 = vmul.f32 %v1987, 1.442695
      %v2110 = vpow.pop %v2109
      %v2111 = vmul.f32 %v1988, 1.442695
      %v2112 = vpow.pop %v2111
      %v2113 = vmul.f32 %v1989, 1.442695
      %v2114 = vpow.pop %v2113
      %v2115 = vmul.f32 %v1990, 1.442695
      %v2116 = vpow.pop %v2115
      %v2117 = vmul.f32 %v1991, 1.442695
      %v2118 = vpow.pop %v2117
      %v2119 = vmul.f32 %v1992, 1.442695
      %v2120 = vpow.pop %v2119
      %v2121 = vadd.f32 %v1994, %v1998
      %v2122 = vadd.f32 %v2121, %v2002
      %v2123 = vadd.f32 %v2122, %v2006
      %v2124 = vadd.f32 %v2123, %v2010
      %v2125 = vadd.f32 %v2124, %v2014
      %v2126 = vadd.f32 %v2125, %v2018
      %v2127 = vadd.f32 %v2126, %v2022
      %v2128 = vadd.f32 %v2127, %v2026
      %v2129 = vadd.f32 %v2128, %v2030
      %v2130 = vadd.f32 %v2129, %v2034
      %v2131 = vadd.f32 %v2130, %v2038
      %v2132 = vadd.f32 %v2131, %v2042
      %v2133 = vadd.f32 %v2132, %v2046
      %v2134 = vadd.f32 %v2133, %v2050
      %v2135 = vadd.f32 %v2134, %v2054
      %v2136 = vadd.f32 %v2135, %v2058
      %v2137 = vadd.f32 %v2136, %v2062
      %v2138 = vadd.f32 %v2137, %v2066
      %v2139 = vadd.f32 %v2138, %v2070
      %v2140 = vadd.f32 %v2139, %v2074
      %v2141 = vadd.f32 %v2140, %v2078
      %v2142 = vadd.f32 %v2141, %v2082
      %v2143 = vadd.f32 %v2142, %v2086
      %v2144 = vadd.f32 %v2143, %v2090
      %v2145 = vadd.f32 %v2144, %v2094
      %v2146 = vadd.f32 %v2145, %v2098
      %v2147 = vadd.f32 %v2146, %v2102
      %v2148 = vadd.f32 %v2147, %v2106
      %v2149 = vadd.f32 %v2148, %v2110
      %v2150 = vadd.f32 %v2149, %v2114
      %v2151 = vadd.f32 %v2150, %v2118
      %v2152 = vrot.slane %v2151, 4
      %v2153 = vadd.f32 %v2151, %v2152
      %v2154 = vrot.slane %v2153, 2
      %v2155 = vadd.f32 %v2153, %v2154
      %v2156 = vrot.slane %v2155, 1
      %v2157 = vadd.f32 %v2155, %v2156
      %v2158 = vadd.f32 %v1996, %v2000
      %v2159 = vadd.f32 %v2158, %v2004
      %v2160 = vadd.f32 %v2159, %v2008
      %v2161 = vadd.f32 %v2160, %v2012
      %v2162 = vadd.f32 %v2161, %v2016
      %v2163 = vadd.f32 %v2162, %v2020
      %v2164 = vadd.f32 %v2163, %v2024
      %v2165 = vadd.f32 %v2164, %v2028
      %v2166 = vadd.f32 %v2165, %v2032
      %v2167 = vadd.f32 %v2166, %v2036
      %v2168 = vadd.f32 %v2167, %v2040
      %v2169 = vadd.f32 %v2168, %v2044
      %v2170 = vadd.f32 %v2169, %v2048
      %v2171 = vadd.f32 %v2170, %v2052
      %v2172 = vadd.f32 %v2171, %v2056
      %v2173 = vadd.f32 %v2172, %v2060
      %v2174 = vadd.f32 %v2173, %v2064
      %v2175 = vadd.f32 %v2174, %v2068
      %v2176 = vadd.f32 %v2175, %v2072
      %v2177 = vadd.f32 %v2176, %v2076
      %v2178 = vadd.f32 %v2177, %v2080
      %v2179 = vadd.f32 %v2178, %v2084
      %v2180 = vadd.f32 %v2179, %v2088
      %v2181 = vadd.f32 %v2180, %v2092
      %v2182 = vadd.f32 %v2181, %v2096
      %v2183 = vadd.f32 %v2182, %v2100
      %v2184 = vadd.f32 %v2183, %v2104
      %v2185 = vadd.f32 %v2184, %v2108
      %v2186 = vadd.f32 %v2185, %v2112
      %v2187 = vadd.f32 %v2186, %v2116
      %v2188 = vadd.f32 %v2187, %v2120
      %v2189 = vrot.slane %v2188, 4
      %v2190 = vadd.f32 %v2188, %v2189
      %v2191 = vrot.slane %v2190, 2
      %v2192 = vadd.f32 %v2190, %v2191
      %v2193 = vrot.slane %v2192, 1
      %v2194 = vadd.f32 %v2192, %v2193
      %v2195 = vrcp.pop %v2157
      %v2196 = vrcp.pop %v2194
      %v2197 = vpack.c.bf16 %v1996, %v1994
      %v2198 = vpack.c.bf16 %v2000, %v1998
      %v2199 = vpack.c.bf16 %v2004, %v2002
      %v2200 = vpack.c.bf16 %v2008, %v2006
      %v2201 = vpack.c.bf16 %v2012, %v2010
      %v2202 = vpack.c.bf16 %v2016, %v2014
      %v2203 = vpack.c.bf16 %v2020, %v2018
      %v2204 = vpack.c.bf16 %v2024, %v2022
      %v2205 = vpack.c.bf16 %v2028, %v2026
      %v2206 = vpack.c.bf16 %v2032, %v2030
      %v2207 = vpack.c.bf16 %v2036, %v2034
      %v2208 = vpack.c.bf16 %v2040, %v2038
      %v2209 = vpack.c.bf16 %v2044, %v2042
      %v2210 = vpack.c.bf16 %v2048, %v2046
      %v2211 = vpack.c.bf16 %v2052, %v2050
      %v2212 = vpack.c.bf16 %v2056, %v2054
      %v2213 = vpack.c.bf16 %v2060, %v2058
      %v2214 = vpack.c.bf16 %v2064, %v2062
      %v2215 = vpack.c.bf16 %v2068, %v2066
      %v2216 = vpack.c.bf16 %v2072, %v2070
      %v2217 = vpack.c.bf16 %v2076, %v2074
      %v2218 = vpack.c.bf16 %v2080, %v2078
      %v2219 = vpack.c.bf16 %v2084, %v2082
      %v2220 = vpack.c.bf16 %v2088, %v2086
      %v2221 = vpack.c.bf16 %v2092, %v2090
      %v2222 = vpack.c.bf16 %v2096, %v2094
      %v2223 = vpack.c.bf16 %v2100, %v2098
      %v2224 = vpack.c.bf16 %v2104, %v2102
      %v2225 = vpack.c.bf16 %v2108, %v2106
      %v2226 = vpack.c.bf16 %v2112, %v2110
      %v2227 = vpack.c.bf16 %v2116, %v2114
      %v2228 = vpack.c.bf16 %v2120, %v2118
      %v2261 = vunpack.c.l.b16 %v931
      %v2262 = vunpack.c.h.b16 %v931
      %v2263 = vunpack.c.l.b16 %v932
      %v2264 = vunpack.c.h.b16 %v932
      %v2265 = vunpack.c.l.b16 %v933
      %v2266 = vunpack.c.h.b16 %v933
      %v2267 = vunpack.c.l.b16 %v934
      %v2268 = vunpack.c.h.b16 %v934
      %v2269 = vunpack.c.l.b16 %v935
      %v2270 = vunpack.c.h.b16 %v935
      %v2271 = vunpack.c.l.b16 %v936
      %v2272 = vunpack.c.h.b16 %v936
      %v2273 = vunpack.c.l.b16 %v937
      %v2274 = vunpack.c.h.b16 %v937
      %v2275 = vunpack.c.l.b16 %v938
      %v2276 = vunpack.c.h.b16 %v938
      %v2277 = vunpack.c.l.b16 %v939
      %v2278 = vunpack.c.h.b16 %v939
      %v2279 = vunpack.c.l.b16 %v940
      %v2280 = vunpack.c.h.b16 %v940
      %v2281 = vunpack.c.l.b16 %v941
      %v2282 = vunpack.c.h.b16 %v941
      %v2283 = vunpack.c.l.b16 %v942
      %v2284 = vunpack.c.h.b16 %v942
      %v2285 = vunpack.c.l.b16 %v943
      %v2286 = vunpack.c.h.b16 %v943
      %v2287 = vunpack.c.l.b16 %v944
      %v2288 = vunpack.c.h.b16 %v944
      %v2289 = vunpack.c.l.b16 %v945
      %v2290 = vunpack.c.h.b16 %v945
      %v2291 = vunpack.c.l.b16 %v946
      %v2292 = vunpack.c.h.b16 %v946
      %v2293 = vunpack.c.l.b16 %v947
      %v2294 = vunpack.c.h.b16 %v947
      %v2295 = vunpack.c.l.b16 %v948
      %v2296 = vunpack.c.h.b16 %v948
      %v2297 = vunpack.c.l.b16 %v949
      %v2298 = vunpack.c.h.b16 %v949
      %v2299 = vunpack.c.l.b16 %v950
      %v2300 = vunpack.c.h.b16 %v950
      %v2301 = vunpack.c.l.b16 %v951
      %v2302 = vunpack.c.h.b16 %v951
      %v2303 = vunpack.c.l.b16 %v952
      %v2304 = vunpack.c.h.b16 %v952
      %v2305 = vunpack.c.l.b16 %v953
      %v2306 = vunpack.c.h.b16 %v953
      %v2307 = vunpack.c.l.b16 %v954
      %v2308 = vunpack.c.h.b16 %v954
      %v2309 = vunpack.c.l.b16 %v955
      %v2310 = vunpack.c.h.b16 %v955
      %v2311 = vunpack.c.l.b16 %v956
      %v2312 = vunpack.c.h.b16 %v956
      %v2313 = vunpack.c.l.b16 %v957
      %v2314 = vunpack.c.h.b16 %v957
      %v2315 = vunpack.c.l.b16 %v958
      %v2316 = vunpack.c.h.b16 %v958
      %v2317 = vunpack.c.l.b16 %v959
      %v2318 = vunpack.c.h.b16 %v959
      %v2319 = vunpack.c.l.b16 %v960
      %v2320 = vunpack.c.h.b16 %v960
      %v2321 = vunpack.c.l.b16 %v961
      %v2322 = vunpack.c.h.b16 %v961
      %v2323 = vunpack.c.l.b16 %v962
      %v2324 = vunpack.c.h.b16 %v962
      %v2325 = vpack.c.b16 %v2263, %v2261
      %v2326 = vpack.c.b16 %v2264, %v2262
      %v2327 = vpack.c.b16 %v2267, %v2265
      %v2328 = vpack.c.b16 %v2268, %v2266
      %v2329 = vpack.c.b16 %v2271, %v2269
      %v2330 = vpack.c.b16 %v2272, %v2270
      %v2331 = vpack.c.b16 %v2275, %v2273
      %v2332 = vpack.c.b16 %v2276, %v2274
      %v2333 = vpack.c.b16 %v2279, %v2277
      %v2334 = vpack.c.b16 %v2280, %v2278
      %v2335 = vpack.c.b16 %v2283, %v2281
      %v2336 = vpack.c.b16 %v2284, %v2282
      %v2337 = vpack.c.b16 %v2287, %v2285
      %v2338 = vpack.c.b16 %v2288, %v2286
      %v2339 = vpack.c.b16 %v2291, %v2289
      %v2340 = vpack.c.b16 %v2292, %v2290
      %v2341 = vpack.c.b16 %v2295, %v2293
      %v2342 = vpack.c.b16 %v2296, %v2294
      %v2343 = vpack.c.b16 %v2299, %v2297
      %v2344 = vpack.c.b16 %v2300, %v2298
      %v2345 = vpack.c.b16 %v2303, %v2301
      %v2346 = vpack.c.b16 %v2304, %v2302
      %v2347 = vpack.c.b16 %v2307, %v2305
      %v2348 = vpack.c.b16 %v2308, %v2306
      %v2349 = vpack.c.b16 %v2311, %v2309
      %v2350 = vpack.c.b16 %v2312, %v2310
      %v2351 = vpack.c.b16 %v2315, %v2313
      %v2352 = vpack.c.b16 %v2316, %v2314
      %v2353 = vpack.c.b16 %v2319, %v2317
      %v2354 = vpack.c.b16 %v2320, %v2318
      %v2355 = vpack.c.b16 %v2323, %v2321
      %v2356 = vpack.c.b16 %v2324, %v2322
      %v2421 = vunpack.c.l.b16 %v1565
      %v2422 = vunpack.c.h.b16 %v1565
      %v2423 = vunpack.c.l.b16 %v1566
      %v2424 = vunpack.c.h.b16 %v1566
      %v2425 = vunpack.c.l.b16 %v1567
      %v2426 = vunpack.c.h.b16 %v1567
      %v2427 = vunpack.c.l.b16 %v1568
      %v2428 = vunpack.c.h.b16 %v1568
      %v2429 = vunpack.c.l.b16 %v1569
      %v2430 = vunpack.c.h.b16 %v1569
      %v2431 = vunpack.c.l.b16 %v1570
      %v2432 = vunpack.c.h.b16 %v1570
      %v2433 = vunpack.c.l.b16 %v1571
      %v2434 = vunpack.c.h.b16 %v1571
      %v2435 = vunpack.c.l.b16 %v1572
      %v2436 = vunpack.c.h.b16 %v1572
      %v2437 = vunpack.c.l.b16 %v1573
      %v2438 = vunpack.c.h.b16 %v1573
      %v2439 = vunpack.c.l.b16 %v1574
      %v2440 = vunpack.c.h.b16 %v1574
      %v2441 = vunpack.c.l.b16 %v1575
      %v2442 = vunpack.c.h.b16 %v1575
      %v2443 = vunpack.c.l.b16 %v1576
      %v2444 = vunpack.c.h.b16 %v1576
      %v2445 = vunpack.c.l.b16 %v1577
      %v2446 = vunpack.c.h.b16 %v1577
      %v2447 = vunpack.c.l.b16 %v1578
      %v2448 = vunpack.c.h.b16 %v1578
      %v2449 = vunpack.c.l.b16 %v1579
      %v2450 = vunpack.c.h.b16 %v1579
      %v2451 = vunpack.c.l.b16 %v1580
      %v2452 = vunpack.c.h.b16 %v1580
      %v2453 = vunpack.c.l.b16 %v1581
      %v2454 = vunpack.c.h.b16 %v1581
      %v2455 = vunpack.c.l.b16 %v1582
      %v2456 = vunpack.c.h.b16 %v1582
      %v2457 = vunpack.c.l.b16 %v1583
      %v2458 = vunpack.c.h.b16 %v1583
      %v2459 = vunpack.c.l.b16 %v1584
      %v2460 = vunpack.c.h.b16 %v1584
      %v2461 = vunpack.c.l.b16 %v1585
      %v2462 = vunpack.c.h.b16 %v1585
      %v2463 = vunpack.c.l.b16 %v1586
      %v2464 = vunpack.c.h.b16 %v1586
      %v2465 = vunpack.c.l.b16 %v1587
      %v2466 = vunpack.c.h.b16 %v1587
      %v2467 = vunpack.c.l.b16 %v1588
      %v2468 = vunpack.c.h.b16 %v1588
      %v2469 = vunpack.c.l.b16 %v1589
      %v2470 = vunpack.c.h.b16 %v1589
      %v2471 = vunpack.c.l.b16 %v1590
      %v2472 = vunpack.c.h.b16 %v1590
      %v2473 = vunpack.c.l.b16 %v1591
      %v2474 = vunpack.c.h.b16 %v1591
      %v2475 = vunpack.c.l.b16 %v1592
      %v2476 = vunpack.c.h.b16 %v1592
      %v2477 = vunpack.c.l.b16 %v1593
      %v2478 = vunpack.c.h.b16 %v1593
      %v2479 = vunpack.c.l.b16 %v1594
      %v2480 = vunpack.c.h.b16 %v1594
      %v2481 = vunpack.c.l.b16 %v1595
      %v2482 = vunpack.c.h.b16 %v1595
      %v2483 = vunpack.c.l.b16 %v1596
      %v2484 = vunpack.c.h.b16 %v1596
      %v2485 = vpack.c.b16 %v2423, %v2421
      %v2486 = vpack.c.b16 %v2424, %v2422
      %v2487 = vpack.c.b16 %v2427, %v2425
      %v2488 = vpack.c.b16 %v2428, %v2426
      %v2489 = vpack.c.b16 %v2431, %v2429
      %v2490 = vpack.c.b16 %v2432, %v2430
      %v2491 = vpack.c.b16 %v2435, %v2433
      %v2492 = vpack.c.b16 %v2436, %v2434
      %v2493 = vpack.c.b16 %v2439, %v2437
      %v2494 = vpack.c.b16 %v2440, %v2438
      %v2495 = vpack.c.b16 %v2443, %v2441
      %v2496 = vpack.c.b16 %v2444, %v2442
      %v2497 = vpack.c.b16 %v2447, %v2445
      %v2498 = vpack.c.b16 %v2448, %v2446
      %v2499 = vpack.c.b16 %v2451, %v2449
      %v2500 = vpack.c.b16 %v2452, %v2450
      %v2501 = vpack.c.b16 %v2455, %v2453
      %v2502 = vpack.c.b16 %v2456, %v2454
      %v2503 = vpack.c.b16 %v2459, %v2457
      %v2504 = vpack.c.b16 %v2460, %v2458
      %v2505 = vpack.c.b16 %v2463, %v2461
      %v2506 = vpack.c.b16 %v2464, %v2462
      %v2507 = vpack.c.b16 %v2467, %v2465
      %v2508 = vpack.c.b16 %v2468, %v2466
      %v2509 = vpack.c.b16 %v2471, %v2469
      %v2510 = vpack.c.b16 %v2472, %v2470
      %v2511 = vpack.c.b16 %v2475, %v2473
      %v2512 = vpack.c.b16 %v2476, %v2474
      %v2513 = vpack.c.b16 %v2479, %v2477
      %v2514 = vpack.c.b16 %v2480, %v2478
      %v2515 = vpack.c.b16 %v2483, %v2481
      %v2516 = vpack.c.b16 %v2484, %v2482
      %v2581 = vunpack.c.l.b16 %v2197
      %v2582 = vunpack.c.h.b16 %v2197
      %v2583 = vunpack.c.l.b16 %v2198
      %v2584 = vunpack.c.h.b16 %v2198
      %v2585 = vunpack.c.l.b16 %v2199
      %v2586 = vunpack.c.h.b16 %v2199
      %v2587 = vunpack.c.l.b16 %v2200
      %v2588 = vunpack.c.h.b16 %v2200
      %v2589 = vunpack.c.l.b16 %v2201
      %v2590 = vunpack.c.h.b16 %v2201
      %v2591 = vunpack.c.l.b16 %v2202
      %v2592 = vunpack.c.h.b16 %v2202
      %v2593 = vunpack.c.l.b16 %v2203
      %v2594 = vunpack.c.h.b16 %v2203
      %v2595 = vunpack.c.l.b16 %v2204
      %v2596 = vunpack.c.h.b16 %v2204
      %v2597 = vunpack.c.l.b16 %v2205
      %v2598 = vunpack.c.h.b16 %v2205
      %v2599 = vunpack.c.l.b16 %v2206
      %v2600 = vunpack.c.h.b16 %v2206
      %v2601 = vunpack.c.l.b16 %v2207
      %v2602 = vunpack.c.h.b16 %v2207
      %v2603 = vunpack.c.l.b16 %v2208
      %v2604 = vunpack.c.h.b16 %v2208
      %v2605 = vunpack.c.l.b16 %v2209
      %v2606 = vunpack.c.h.b16 %v2209
      %v2607 = vunpack.c.l.b16 %v2210
      %v2608 = vunpack.c.h.b16 %v2210
      %v2609 = vunpack.c.l.b16 %v2211
      %v2610 = vunpack.c.h.b16 %v2211
      %v2611 = vunpack.c.l.b16 %v2212
      %v2612 = vunpack.c.h.b16 %v2212
      %v2613 = vunpack.c.l.b16 %v2213
      %v2614 = vunpack.c.h.b16 %v2213
      %v2615 = vunpack.c.l.b16 %v2214
      %v2616 = vunpack.c.h.b16 %v2214
      %v2617 = vunpack.c.l.b16 %v2215
      %v2618 = vunpack.c.h.b16 %v2215
      %v2619 = vunpack.c.l.b16 %v2216
      %v2620 = vunpack.c.h.b16 %v2216
      %v2621 = vunpack.c.l.b16 %v2217
      %v2622 = vunpack.c.h.b16 %v2217
      %v2623 = vunpack.c.l.b16 %v2218
      %v2624 = vunpack.c.h.b16 %v2218
      %v2625 = vunpack.c.l.b16 %v2219
      %v2626 = vunpack.c.h.b16 %v2219
      %v2627 = vunpack.c.l.b16 %v2220
      %v2628 = vunpack.c.h.b16 %v2220
      %v2629 = vunpack.c.l.b16 %v2221
      %v2630 = vunpack.c.h.b16 %v2221
      %v2631 = vunpack.c.l.b16 %v2222
      %v2632 = vunpack.c.h.b16 %v2222
      %v2633 = vunpack.c.l.b16 %v2223
      %v2634 = vunpack.c.h.b16 %v2223
      %v2635 = vunpack.c.l.b16 %v2224
      %v2636 = vunpack.c.h.b16 %v2224
      %v2637 = vunpack.c.l.b16 %v2225
      %v2638 = vunpack.c.h.b16 %v2225
      %v2639 = vunpack.c.l.b16 %v2226
      %v2640 = vunpack.c.h.b16 %v2226
      %v2641 = vunpack.c.l.b16 %v2227
      %v2642 = vunpack.c.h.b16 %v2227
      %v2643 = vunpack.c.l.b16 %v2228
      %v2644 = vunpack.c.h.b16 %v2228
      %v2645 = vpack.c.b16 %v2583, %v2581
      %v2646 = vpack.c.b16 %v2584, %v2582
      %v2647 = vpack.c.b16 %v2587, %v2585
      %v2648 = vpack.c.b16 %v2588, %v2586
      %v2649 = vpack.c.b16 %v2591, %v2589
      %v2650 = vpack.c.b16 %v2592, %v2590
      %v2651 = vpack.c.b16 %v2595, %v2593
      %v2652 = vpack.c.b16 %v2596, %v2594
      %v2653 = vpack.c.b16 %v2599, %v2597
      %v2654 = vpack.c.b16 %v2600, %v2598
      %v2655 = vpack.c.b16 %v2603, %v2601
      %v2656 = vpack.c.b16 %v2604, %v2602
      %v2657 = vpack.c.b16 %v2607, %v2605
      %v2658 = vpack.c.b16 %v2608, %v2606
      %v2659 = vpack.c.b16 %v2611, %v2609
      %v2660 = vpack.c.b16 %v2612, %v2610
      %v2661 = vpack.c.b16 %v2615, %v2613
      %v2662 = vpack.c.b16 %v2616, %v2614
      %v2663 = vpack.c.b16 %v2619, %v2617
      %v2664 = vpack.c.b16 %v2620, %v2618
      %v2665 = vpack.c.b16 %v2623, %v2621
      %v2666 = vpack.c.b16 %v2624, %v2622
      %v2667 = vpack.c.b16 %v2627, %v2625
      %v2668 = vpack.c.b16 %v2628, %v2626
      %v2669 = vpack.c.b16 %v2631, %v2629
      %v2670 = vpack.c.b16 %v2632, %v2630
      %v2671 = vpack.c.b16 %v2635, %v2633
      %v2672 = vpack.c.b16 %v2636, %v2634
      %v2673 = vpack.c.b16 %v2639, %v2637
      %v2674 = vpack.c.b16 %v2640, %v2638
      %v2675 = vpack.c.b16 %v2643, %v2641
      %v2676 = vpack.c.b16 %v2644, %v2642
      %v2710 = vunpack.c.l.b16 %v314
      %v2711 = vunpack.c.h.b16 %v314
      %v2712 = vpack.c.b16 %v2710, %v2710
      %v2713 = vpack.c.b16 %v2711, %v2711
      %2716 = vmatpush.bf16.msra.mxu0 %v2339
      %2717 = vmatpush.bf16.msra.mxu0 %v2337
      %2718 = vmatpush.bf16.msra.mxu0 %v2335
      %2719 = vmatpush.bf16.msra.mxu0 %v2333
      %2720 = vmatpush.bf16.msra.mxu0 %v2331
      %2721 = vmatpush.bf16.msra.mxu0 %v2329
      %2722 = vmatpush.bf16.msra.mxu0 %v2327
      %2723 = vmatpush.bf16.msra.mxu0 %v2325
      %2724 = vmatmul.bf16.gmra.mxu0 %v2712
      %v2725 = vpop.f32.mrf.mxu0
      %v2726 = vadd.f32 0.0, %v2725
      %v2727 = vpop.f32.mrf.mxu0
      %2728 = vdwg.mxu0
      %2729 = vmatpush.bf16.msra.mxu0 %v2355
      %2730 = vmatpush.bf16.msra.mxu0 %v2353
      %2731 = vmatpush.bf16.msra.mxu0 %v2351
      %2732 = vmatpush.bf16.msra.mxu0 %v2349
      %2733 = vmatpush.bf16.msra.mxu0 %v2347
      %2734 = vmatpush.bf16.msra.mxu0 %v2345
      %2735 = vmatpush.bf16.msra.mxu0 %v2343
      %2736 = vmatpush.bf16.msra.mxu0 %v2341
      %2737 = vmatmul.bf16.gmra.mxu0 %v2713
      %v2738 = vpop.f32.mrf.mxu0
      %v2739 = vadd.f32 %v2726, %v2738
      %v2740 = vpop.f32.mrf.mxu0
      %2741 = vdwg.mxu0
      %2742 = vmatpush.bf16.msra.mxu0 %v2340
      %2743 = vmatpush.bf16.msra.mxu0 %v2338
      %2744 = vmatpush.bf16.msra.mxu0 %v2336
      %2745 = vmatpush.bf16.msra.mxu0 %v2334
      %2746 = vmatpush.bf16.msra.mxu0 %v2332
      %2747 = vmatpush.bf16.msra.mxu0 %v2330
      %2748 = vmatpush.bf16.msra.mxu0 %v2328
      %2749 = vmatpush.bf16.msra.mxu0 %v2326
      %2750 = vmatmul.bf16.gmra.mxu0 %v2712
      %v2751 = vpop.f32.mrf.mxu0
      %v2752 = vadd.f32 0.0, %v2751
      %v2753 = vpop.f32.mrf.mxu0
      %2754 = vdwg.mxu0
      %2755 = vmatpush.bf16.msra.mxu0 %v2356
      %2756 = vmatpush.bf16.msra.mxu0 %v2354
      %2757 = vmatpush.bf16.msra.mxu0 %v2352
      %2758 = vmatpush.bf16.msra.mxu0 %v2350
      %2759 = vmatpush.bf16.msra.mxu0 %v2348
      %2760 = vmatpush.bf16.msra.mxu0 %v2346
      %2761 = vmatpush.bf16.msra.mxu0 %v2344
      %2762 = vmatpush.bf16.msra.mxu0 %v2342
      %2763 = vmatmul.bf16.gmra.mxu0 %v2713
      %v2764 = vpop.f32.mrf.mxu0
      %v2765 = vadd.f32 %v2752, %v2764
      %v2766 = vpop.f32.mrf.mxu0
      %2767 = vdwg.mxu0
      %2768 = vmatpush.bf16.msra.mxu0 %v2499
      %2769 = vmatpush.bf16.msra.mxu0 %v2497
      %2770 = vmatpush.bf16.msra.mxu0 %v2495
      %2771 = vmatpush.bf16.msra.mxu0 %v2493
      %2772 = vmatpush.bf16.msra.mxu0 %v2491
      %2773 = vmatpush.bf16.msra.mxu0 %v2489
      %2774 = vmatpush.bf16.msra.mxu0 %v2487
      %2775 = vmatpush.bf16.msra.mxu0 %v2485
      %2776 = vmatmul.bf16.gmra.mxu0 %v2712
      %v2777 = vpop.f32.mrf.mxu0
      %v2778 = vadd.f32 0.0, %v2777
      %v2779 = vpop.f32.mrf.mxu0
      %2780 = vdwg.mxu0
      %2781 = vmatpush.bf16.msra.mxu0 %v2515
      %2782 = vmatpush.bf16.msra.mxu0 %v2513
      %2783 = vmatpush.bf16.msra.mxu0 %v2511
      %2784 = vmatpush.bf16.msra.mxu0 %v2509
      %2785 = vmatpush.bf16.msra.mxu0 %v2507
      %2786 = vmatpush.bf16.msra.mxu0 %v2505
      %2787 = vmatpush.bf16.msra.mxu0 %v2503
      %2788 = vmatpush.bf16.msra.mxu0 %v2501
      %2789 = vmatmul.bf16.gmra.mxu0 %v2713
      %v2790 = vpop.f32.mrf.mxu0
      %v2791 = vadd.f32 %v2778, %v2790
      %v2792 = vpop.f32.mrf.mxu0
      %2793 = vdwg.mxu0
      %2794 = vmatpush.bf16.msra.mxu0 %v2500
      %2795 = vmatpush.bf16.msra.mxu0 %v2498
      %2796 = vmatpush.bf16.msra.mxu0 %v2496
      %2797 = vmatpush.bf16.msra.mxu0 %v2494
      %2798 = vmatpush.bf16.msra.mxu0 %v2492
      %2799 = vmatpush.bf16.msra.mxu0 %v2490
      %2800 = vmatpush.bf16.msra.mxu0 %v2488
      %2801 = vmatpush.bf16.msra.mxu0 %v2486
      %2802 = vmatmul.bf16.gmra.mxu0 %v2712
      %v2803 = vpop.f32.mrf.mxu0
      %v2804 = vadd.f32 0.0, %v2803
      %v2805 = vpop.f32.mrf.mxu0
      %2806 = vdwg.mxu0
      %2807 = vmatpush.bf16.msra.mxu0 %v2516
      %2808 = vmatpush.bf16.msra.mxu0 %v2514
      %2809 = vmatpush.bf16.msra.mxu0 %v2512
      %2810 = vmatpush.bf16.msra.mxu0 %v2510
      %2811 = vmatpush.bf16.msra.mxu0 %v2508
      %2812 = vmatpush.bf16.msra.mxu0 %v2506
      %2813 = vmatpush.bf16.msra.mxu0 %v2504
      %2814 = vmatpush.bf16.msra.mxu0 %v2502
      %2815 = vmatmul.bf16.gmra.mxu0 %v2713
      %v2816 = vpop.f32.mrf.mxu0
      %v2817 = vadd.f32 %v2804, %v2816
      %v2818 = vpop.f32.mrf.mxu0
      %2819 = vdwg.mxu0
      %2820 = vmatpush.bf16.msra.mxu0 %v2659
      %2821 = vmatpush.bf16.msra.mxu0 %v2657
      %2822 = vmatpush.bf16.msra.mxu0 %v2655
      %2823 = vmatpush.bf16.msra.mxu0 %v2653
      %2824 = vmatpush.bf16.msra.mxu0 %v2651
      %2825 = vmatpush.bf16.msra.mxu0 %v2649
      %2826 = vmatpush.bf16.msra.mxu0 %v2647
      %2827 = vmatpush.bf16.msra.mxu0 %v2645
      %2828 = vmatmul.bf16.gmra.mxu0 %v2712
      %v2829 = vpop.f32.mrf.mxu0
      %v2830 = vadd.f32 0.0, %v2829
      %v2831 = vpop.f32.mrf.mxu0
      %2832 = vdwg.mxu0
      %2833 = vmatpush.bf16.msra.mxu0 %v2675
      %2834 = vmatpush.bf16.msra.mxu0 %v2673
      %2835 = vmatpush.bf16.msra.mxu0 %v2671
      %2836 = vmatpush.bf16.msra.mxu0 %v2669
      %2837 = vmatpush.bf16.msra.mxu0 %v2667
      %2838 = vmatpush.bf16.msra.mxu0 %v2665
      %2839 = vmatpush.bf16.msra.mxu0 %v2663
      %2840 = vmatpush.bf16.msra.mxu0 %v2661
      %2841 = vmatmul.bf16.gmra.mxu0 %v2713
      %v2842 = vpop.f32.mrf.mxu0
      %v2843 = vadd.f32 %v2830, %v2842
      %v2844 = vpop.f32.mrf.mxu0
      %2845 = vdwg.mxu0
      %2846 = vmatpush.bf16.msra.mxu0 %v2660
      %2847 = vmatpush.bf16.msra.mxu0 %v2658
      %2848 = vmatpush.bf16.msra.mxu0 %v2656
      %2849 = vmatpush.bf16.msra.mxu0 %v2654
      %2850 = vmatpush.bf16.msra.mxu0 %v2652
      %2851 = vmatpush.bf16.msra.mxu0 %v2650
      %2852 = vmatpush.bf16.msra.mxu0 %v2648
      %2853 = vmatpush.bf16.msra.mxu0 %v2646
      %2854 = vmatmul.bf16.gmra.mxu0 %v2712
      %v2855 = vpop.f32.mrf.mxu0
      %v2856 = vadd.f32 0.0, %v2855
      %v2857 = vpop.f32.mrf.mxu0
      %2858 = vdwg.mxu0
      %2859 = vmatpush.bf16.msra.mxu0 %v2676
      %2860 = vmatpush.bf16.msra.mxu0 %v2674
      %2861 = vmatpush.bf16.msra.mxu0 %v2672
      %2862 = vmatpush.bf16.msra.mxu0 %v2670
      %2863 = vmatpush.bf16.msra.mxu0 %v2668
      %2864 = vmatpush.bf16.msra.mxu0 %v2666
      %2865 = vmatpush.bf16.msra.mxu0 %v2664
      %2866 = vmatpush.bf16.msra.mxu0 %v2662
      %2867 = vmatmul.bf16.gmra.mxu0 %v2713
      %v2868 = vpop.f32.mrf.mxu0
      %v2869 = vadd.f32 %v2856, %v2868
      %v2870 = vpop.f32.mrf.mxu0
      %2871 = vdwg.mxu0
      %v2872 = vmul.f32 %v2739, %v929
      %v2873 = vmul.f32 %v2765, %v930
      %v2874 = vadd.f32 %v2872, %v316
      %v2875 = vadd.f32 %v2873, %v317
      %v2876 = vmul.f32 %v2791, %v1563
      %v2877 = vmul.f32 %v2817, %v1564
      %v2878 = vadd.f32 %v2876, %v316
      %v2879 = vadd.f32 %v2877, %v317
      %v2880 = vmul.f32 %v2843, %v2195
      %v2881 = vmul.f32 %v2869, %v2196
      %v2882 = vadd.f32 %v2880, %v316
      %v2883 = vadd.f32 %v2881, %v317
      %v2884 = vld [vmem:[%s292] sm:$0xcc]
      %v2885 = vld [vmem:[%s281] sm:$0xcc]
      %v2886 = vld [vmem:[%s301] sm:$0xf0]
      %v2887 = vld [vmem:[%s301 + $0x8] sm:$0xf0]
      %v2889 = vunpack.c.l.b16 %v2885
      %v2890 = vunpack.c.h.b16 %v2885
      %v2891 = vpack.c.b16 %v2889, %v2889
      %v2892 = vpack.c.b16 %v2890, %v2890
      %v2893 = vrot.slane %v2891, 2
      %v2894 = vrot.slane %v2892, 2
      %v2896 = vsel %vm404, %v2893, 0
      %v2899 = vsel %vm404, %v2894, 0
      %2901 = vmatpush.bf16.msra.mxu0 0
      %2902 = vmatpush.bf16.msra.mxu0 0
      %2903 = vmatpush.bf16.msra.mxu0 0
      %2904 = vmatpush.bf16.msra.mxu0 0
      %2905 = vmatpush.bf16.msra.mxu0 0
      %2906 = vmatpush.bf16.msra.mxu0 0
      %2907 = vmatpush.bf16.msra.mxu0 0
      %2908 = vmatpush.bf16.msra.mxu0 %v2896
      %2909 = vmatmul.bf16.gmra.mxu0 %v357
      %v2910 = vpop.f32.mrf.mxu0
      %v2911 = vadd.f32 0.0, %v2910
      %v2912 = vpop.f32.mrf.mxu0
      %v2913 = vadd.f32 0.0, %v2912
      %2914 = vmatmul.bf16.gmra.mxu0 %v360
      %v2915 = vpop.f32.mrf.mxu0
      %v2916 = vadd.f32 0.0, %v2915
      %v2917 = vpop.f32.mrf.mxu0
      %v2918 = vadd.f32 0.0, %v2917
      %2919 = vmatmul.bf16.gmra.mxu0 %v363
      %v2920 = vpop.f32.mrf.mxu0
      %v2921 = vadd.f32 0.0, %v2920
      %v2922 = vpop.f32.mrf.mxu0
      %v2923 = vadd.f32 0.0, %v2922
      %2924 = vmatmul.bf16.gmra.mxu0 %v366
      %v2925 = vpop.f32.mrf.mxu0
      %v2926 = vadd.f32 0.0, %v2925
      %v2927 = vpop.f32.mrf.mxu0
      %v2928 = vadd.f32 0.0, %v2927
      %2929 = vmatmul.bf16.gmra.mxu0 %v369
      %v2930 = vpop.f32.mrf.mxu0
      %v2931 = vadd.f32 0.0, %v2930
      %v2932 = vpop.f32.mrf.mxu0
      %v2933 = vadd.f32 0.0, %v2932
      %2934 = vmatmul.bf16.gmra.mxu0 %v372
      %v2935 = vpop.f32.mrf.mxu0
      %v2936 = vadd.f32 0.0, %v2935
      %v2937 = vpop.f32.mrf.mxu0
      %v2938 = vadd.f32 0.0, %v2937
      %2939 = vmatmul.bf16.gmra.mxu0 %v375
      %v2940 = vpop.f32.mrf.mxu0
      %v2941 = vadd.f32 0.0, %v2940
      %v2942 = vpop.f32.mrf.mxu0
      %v2943 = vadd.f32 0.0, %v2942
      %2944 = vmatmul.bf16.gmra.mxu0 %v378
      %v2945 = vpop.f32.mrf.mxu0
      %v2946 = vadd.f32 0.0, %v2945
      %v2947 = vpop.f32.mrf.mxu0
      %v2948 = vadd.f32 0.0, %v2947
      %2949 = vmatmul.bf16.gmra.mxu0 %v381
      %v2950 = vpop.f32.mrf.mxu0
      %v2951 = vadd.f32 0.0, %v2950
      %v2952 = vpop.f32.mrf.mxu0
      %v2953 = vadd.f32 0.0, %v2952
      %2954 = vmatmul.bf16.gmra.mxu0 %v384
      %v2955 = vpop.f32.mrf.mxu0
      %v2956 = vadd.f32 0.0, %v2955
      %v2957 = vpop.f32.mrf.mxu0
      %v2958 = vadd.f32 0.0, %v2957
      %2959 = vmatmul.bf16.gmra.mxu0 %v387
      %v2960 = vpop.f32.mrf.mxu0
      %v2961 = vadd.f32 0.0, %v2960
      %v2962 = vpop.f32.mrf.mxu0
      %v2963 = vadd.f32 0.0, %v2962
      %2964 = vmatmul.bf16.gmra.mxu0 %v390
      %v2965 = vpop.f32.mrf.mxu0
      %v2966 = vadd.f32 0.0, %v2965
      %v2967 = vpop.f32.mrf.mxu0
      %v2968 = vadd.f32 0.0, %v2967
      %2969 = vmatmul.bf16.gmra.mxu0 %v393
      %v2970 = vpop.f32.mrf.mxu0
      %v2971 = vadd.f32 0.0, %v2970
      %v2972 = vpop.f32.mrf.mxu0
      %v2973 = vadd.f32 0.0, %v2972
      %2974 = vmatmul.bf16.gmra.mxu0 %v396
      %v2975 = vpop.f32.mrf.mxu0
      %v2976 = vadd.f32 0.0, %v2975
      %v2977 = vpop.f32.mrf.mxu0
      %v2978 = vadd.f32 0.0, %v2977
      %2979 = vmatmul.bf16.gmra.mxu0 %v399
      %v2980 = vpop.f32.mrf.mxu0
      %v2981 = vadd.f32 0.0, %v2980
      %v2982 = vpop.f32.mrf.mxu0
      %v2983 = vadd.f32 0.0, %v2982
      %2984 = vmatmul.bf16.gmra.mxu0 %v402
      %v2985 = vpop.f32.mrf.mxu0
      %v2986 = vadd.f32 0.0, %v2985
      %v2987 = vpop.f32.mrf.mxu0
      %v2988 = vadd.f32 0.0, %v2987
      %2989 = vdwg.mxu0
      %2990 = vmatpush.bf16.msra.mxu0 0
      %2991 = vmatpush.bf16.msra.mxu0 0
      %2992 = vmatpush.bf16.msra.mxu0 0
      %2993 = vmatpush.bf16.msra.mxu0 0
      %2994 = vmatpush.bf16.msra.mxu0 0
      %2995 = vmatpush.bf16.msra.mxu0 0
      %2996 = vmatpush.bf16.msra.mxu0 0
      %2997 = vmatpush.bf16.msra.mxu0 %v2899
      %2998 = vmatmul.bf16.gmra.mxu0 %v357
      %v2999 = vpop.f32.mrf.mxu0
      %v3000 = vadd.f32 0.0, %v2999
      %v3001 = vpop.f32.mrf.mxu0
      %v3002 = vadd.f32 0.0, %v3001
      %3003 = vmatmul.bf16.gmra.mxu0 %v360
      %v3004 = vpop.f32.mrf.mxu0
      %v3005 = vadd.f32 0.0, %v3004
      %v3006 = vpop.f32.mrf.mxu0
      %v3007 = vadd.f32 0.0, %v3006
      %3008 = vmatmul.bf16.gmra.mxu0 %v363
      %v3009 = vpop.f32.mrf.mxu0
      %v3010 = vadd.f32 0.0, %v3009
      %v3011 = vpop.f32.mrf.mxu0
      %v3012 = vadd.f32 0.0, %v3011
      %3013 = vmatmul.bf16.gmra.mxu0 %v366
      %v3014 = vpop.f32.mrf.mxu0
      %v3015 = vadd.f32 0.0, %v3014
      %v3016 = vpop.f32.mrf.mxu0
      %v3017 = vadd.f32 0.0, %v3016
      %3018 = vmatmul.bf16.gmra.mxu0 %v369
      %v3019 = vpop.f32.mrf.mxu0
      %v3020 = vadd.f32 0.0, %v3019
      %v3021 = vpop.f32.mrf.mxu0
      %v3022 = vadd.f32 0.0, %v3021
      %3023 = vmatmul.bf16.gmra.mxu0 %v372
      %v3024 = vpop.f32.mrf.mxu0
      %v3025 = vadd.f32 0.0, %v3024
      %v3026 = vpop.f32.mrf.mxu0
      %v3027 = vadd.f32 0.0, %v3026
      %3028 = vmatmul.bf16.gmra.mxu0 %v375
      %v3029 = vpop.f32.mrf.mxu0
      %v3030 = vadd.f32 0.0, %v3029
      %v3031 = vpop.f32.mrf.mxu0
      %v3032 = vadd.f32 0.0, %v3031
      %3033 = vmatmul.bf16.gmra.mxu0 %v378
      %v3034 = vpop.f32.mrf.mxu0
      %v3035 = vadd.f32 0.0, %v3034
      %v3036 = vpop.f32.mrf.mxu0
      %v3037 = vadd.f32 0.0, %v3036
      %3038 = vmatmul.bf16.gmra.mxu0 %v381
      %v3039 = vpop.f32.mrf.mxu0
      %v3040 = vadd.f32 0.0, %v3039
      %v3041 = vpop.f32.mrf.mxu0
      %v3042 = vadd.f32 0.0, %v3041
      %3043 = vmatmul.bf16.gmra.mxu0 %v384
      %v3044 = vpop.f32.mrf.mxu0
      %v3045 = vadd.f32 0.0, %v3044
      %v3046 = vpop.f32.mrf.mxu0
      %v3047 = vadd.f32 0.0, %v3046
      %3048 = vmatmul.bf16.gmra.mxu0 %v387
      %v3049 = vpop.f32.mrf.mxu0
      %v3050 = vadd.f32 0.0, %v3049
      %v3051 = vpop.f32.mrf.mxu0
      %v3052 = vadd.f32 0.0, %v3051
      %3053 = vmatmul.bf16.gmra.mxu0 %v390
      %v3054 = vpop.f32.mrf.mxu0
      %v3055 = vadd.f32 0.0, %v3054
      %v3056 = vpop.f32.mrf.mxu0
      %v3057 = vadd.f32 0.0, %v3056
      %3058 = vmatmul.bf16.gmra.mxu0 %v393
      %v3059 = vpop.f32.mrf.mxu0
      %v3060 = vadd.f32 0.0, %v3059
      %v3061 = vpop.f32.mrf.mxu0
      %v3062 = vadd.f32 0.0, %v3061
      %3063 = vmatmul.bf16.gmra.mxu0 %v396
      %v3064 = vpop.f32.mrf.mxu0
      %v3065 = vadd.f32 0.0, %v3064
      %v3066 = vpop.f32.mrf.mxu0
      %v3067 = vadd.f32 0.0, %v3066
      %3068 = vmatmul.bf16.gmra.mxu0 %v399
      %v3069 = vpop.f32.mrf.mxu0
      %v3070 = vadd.f32 0.0, %v3069
      %v3071 = vpop.f32.mrf.mxu0
      %v3072 = vadd.f32 0.0, %v3071
      %3073 = vmatmul.bf16.gmra.mxu0 %v402
      %v3074 = vpop.f32.mrf.mxu0
      %v3075 = vadd.f32 0.0, %v3074
      %v3076 = vpop.f32.mrf.mxu0
      %v3077 = vadd.f32 0.0, %v3076
      %3078 = vdwg.mxu0
      %v3079 = vmax.f32 %v2911, %v2916
      %v3080 = vmax.f32 %v2913, %v2918
      %v3081 = vmax.f32 %v3079, %v2921
      %v3082 = vmax.f32 %v3080, %v2923
      %v3083 = vmax.f32 %v3081, %v2926
      %v3084 = vmax.f32 %v3082, %v2928
      %v3085 = vmax.f32 %v3083, %v2931
      %v3086 = vmax.f32 %v3084, %v2933
      %v3087 = vmax.f32 %v3085, %v2936
      %v3088 = vmax.f32 %v3086, %v2938
      %v3089 = vmax.f32 %v3087, %v2941
      %v3090 = vmax.f32 %v3088, %v2943
      %v3091 = vmax.f32 %v3089, %v2946
      %v3092 = vmax.f32 %v3090, %v2948
      %v3093 = vmax.f32 %v3091, %v2951
      %v3094 = vmax.f32 %v3092, %v2953
      %v3095 = vmax.f32 %v3093, %v2956
      %v3096 = vmax.f32 %v3094, %v2958
      %v3097 = vmax.f32 %v3095, %v2961
      %v3098 = vmax.f32 %v3096, %v2963
      %v3099 = vmax.f32 %v3097, %v2966
      %v3100 = vmax.f32 %v3098, %v2968
      %v3101 = vmax.f32 %v3099, %v2971
      %v3102 = vmax.f32 %v3100, %v2973
      %v3103 = vmax.f32 %v3101, %v2976
      %v3104 = vmax.f32 %v3102, %v2978
      %v3105 = vmax.f32 %v3103, %v2981
      %v3106 = vmax.f32 %v3104, %v2983
      %v3107 = vmax.f32 %v3105, %v2986
      %v3108 = vmax.f32 %v3106, %v2988
      %v3109 = vmax.f32 %v3107, %v3108
      %v3110 = vrot.slane %v3109, 4
      %v3111 = vmax.f32 %v3109, %v3110
      %v3112 = vrot.slane %v3111, 2
      %v3113 = vmax.f32 %v3111, %v3112
      %v3114 = vrot.slane %v3113, 1
      %v3115 = vmax.f32 %v3113, %v3114
      %v3116 = vmax.f32 %v3000, %v3005
      %v3117 = vmax.f32 %v3002, %v3007
      %v3118 = vmax.f32 %v3116, %v3010
      %v3119 = vmax.f32 %v3117, %v3012
      %v3120 = vmax.f32 %v3118, %v3015
      %v3121 = vmax.f32 %v3119, %v3017
      %v3122 = vmax.f32 %v3120, %v3020
      %v3123 = vmax.f32 %v3121, %v3022
      %v3124 = vmax.f32 %v3122, %v3025
      %v3125 = vmax.f32 %v3123, %v3027
      %v3126 = vmax.f32 %v3124, %v3030
      %v3127 = vmax.f32 %v3125, %v3032
      %v3128 = vmax.f32 %v3126, %v3035
      %v3129 = vmax.f32 %v3127, %v3037
      %v3130 = vmax.f32 %v3128, %v3040
      %v3131 = vmax.f32 %v3129, %v3042
      %v3132 = vmax.f32 %v3130, %v3045
      %v3133 = vmax.f32 %v3131, %v3047
      %v3134 = vmax.f32 %v3132, %v3050
      %v3135 = vmax.f32 %v3133, %v3052
      %v3136 = vmax.f32 %v3134, %v3055
      %v3137 = vmax.f32 %v3135, %v3057
      %v3138 = vmax.f32 %v3136, %v3060
      %v3139 = vmax.f32 %v3137, %v3062
      %v3140 = vmax.f32 %v3138, %v3065
      %v3141 = vmax.f32 %v3139, %v3067
      %v3142 = vmax.f32 %v3140, %v3070
      %v3143 = vmax.f32 %v3141, %v3072
      %v3144 = vmax.f32 %v3142, %v3075
      %v3145 = vmax.f32 %v3143, %v3077
      %v3146 = vmax.f32 %v3144, %v3145
      %v3147 = vrot.slane %v3146, 4
      %v3148 = vmax.f32 %v3146, %v3147
      %v3149 = vrot.slane %v3148, 2
      %v3150 = vmax.f32 %v3148, %v3149
      %v3151 = vrot.slane %v3150, 1
      %v3152 = vmax.f32 %v3150, %v3151
      %v3153 = vsub.f32 %v2911, %v3115
      %v3154 = vsub.f32 %v3000, %v3152
      %v3155 = vsub.f32 %v2913, %v3115
      %v3156 = vsub.f32 %v3002, %v3152
      %v3157 = vsub.f32 %v2916, %v3115
      %v3158 = vsub.f32 %v3005, %v3152
      %v3159 = vsub.f32 %v2918, %v3115
      %v3160 = vsub.f32 %v3007, %v3152
      %v3161 = vsub.f32 %v2921, %v3115
      %v3162 = vsub.f32 %v3010, %v3152
      %v3163 = vsub.f32 %v2923, %v3115
      %v3164 = vsub.f32 %v3012, %v3152
      %v3165 = vsub.f32 %v2926, %v3115
      %v3166 = vsub.f32 %v3015, %v3152
      %v3167 = vsub.f32 %v2928, %v3115
      %v3168 = vsub.f32 %v3017, %v3152
      %v3169 = vsub.f32 %v2931, %v3115
      %v3170 = vsub.f32 %v3020, %v3152
      %v3171 = vsub.f32 %v2933, %v3115
      %v3172 = vsub.f32 %v3022, %v3152
      %v3173 = vsub.f32 %v2936, %v3115
      %v3174 = vsub.f32 %v3025, %v3152
      %v3175 = vsub.f32 %v2938, %v3115
      %v3176 = vsub.f32 %v3027, %v3152
      %v3177 = vsub.f32 %v2941, %v3115
      %v3178 = vsub.f32 %v3030, %v3152
      %v3179 = vsub.f32 %v2943, %v3115
      %v3180 = vsub.f32 %v3032, %v3152
      %v3181 = vsub.f32 %v2946, %v3115
      %v3182 = vsub.f32 %v3035, %v3152
      %v3183 = vsub.f32 %v2948, %v3115
      %v3184 = vsub.f32 %v3037, %v3152
      %v3185 = vsub.f32 %v2951, %v3115
      %v3186 = vsub.f32 %v3040, %v3152
      %v3187 = vsub.f32 %v2953, %v3115
      %v3188 = vsub.f32 %v3042, %v3152
      %v3189 = vsub.f32 %v2956, %v3115
      %v3190 = vsub.f32 %v3045, %v3152
      %v3191 = vsub.f32 %v2958, %v3115
      %v3192 = vsub.f32 %v3047, %v3152
      %v3193 = vsub.f32 %v2961, %v3115
      %v3194 = vsub.f32 %v3050, %v3152
      %v3195 = vsub.f32 %v2963, %v3115
      %v3196 = vsub.f32 %v3052, %v3152
      %v3197 = vsub.f32 %v2966, %v3115
      %v3198 = vsub.f32 %v3055, %v3152
      %v3199 = vsub.f32 %v2968, %v3115
      %v3200 = vsub.f32 %v3057, %v3152
      %v3201 = vsub.f32 %v2971, %v3115
      %v3202 = vsub.f32 %v3060, %v3152
      %v3203 = vsub.f32 %v2973, %v3115
      %v3204 = vsub.f32 %v3062, %v3152
      %v3205 = vsub.f32 %v2976, %v3115
      %v3206 = vsub.f32 %v3065, %v3152
      %v3207 = vsub.f32 %v2978, %v3115
      %v3208 = vsub.f32 %v3067, %v3152
      %v3209 = vsub.f32 %v2981, %v3115
      %v3210 = vsub.f32 %v3070, %v3152
      %v3211 = vsub.f32 %v2983, %v3115
      %v3212 = vsub.f32 %v3072, %v3152
      %v3213 = vsub.f32 %v2986, %v3115
      %v3214 = vsub.f32 %v3075, %v3152
      %v3215 = vsub.f32 %v2988, %v3115
      %v3216 = vsub.f32 %v3077, %v3152
      %v3217 = vmul.f32 %v3153, 1.442695
      %v3218 = vpow.pop %v3217
      %v3219 = vmul.f32 %v3154, 1.442695
      %v3220 = vpow.pop %v3219
      %v3221 = vmul.f32 %v3155, 1.442695
      %v3222 = vpow.pop %v3221
      %v3223 = vmul.f32 %v3156, 1.442695
      %v3224 = vpow.pop %v3223
      %v3225 = vmul.f32 %v3157, 1.442695
      %v3226 = vpow.pop %v3225
      %v3227 = vmul.f32 %v3158, 1.442695
      %v3228 = vpow.pop %v3227
      %v3229 = vmul.f32 %v3159, 1.442695
      %v3230 = vpow.pop %v3229
      %v3231 = vmul.f32 %v3160, 1.442695
      %v3232 = vpow.pop %v3231
      %v3233 = vmul.f32 %v3161, 1.442695
      %v3234 = vpow.pop %v3233
      %v3235 = vmul.f32 %v3162, 1.442695
      %v3236 = vpow.pop %v3235
      %v3237 = vmul.f32 %v3163, 1.442695
      %v3238 = vpow.pop %v3237
      %v3239 = vmul.f32 %v3164, 1.442695
      %v3240 = vpow.pop %v3239
      %v3241 = vmul.f32 %v3165, 1.442695
      %v3242 = vpow.pop %v3241
      %v3243 = vmul.f32 %v3166, 1.442695
      %v3244 = vpow.pop %v3243
      %v3245 = vmul.f32 %v3167, 1.442695
      %v3246 = vpow.pop %v3245
      %v3247 = vmul.f32 %v3168, 1.442695
      %v3248 = vpow.pop %v3247
      %v3249 = vmul.f32 %v3169, 1.442695
      %v3250 = vpow.pop %v3249
      %v3251 = vmul.f32 %v3170, 1.442695
      %v3252 = vpow.pop %v3251
      %v3253 = vmul.f32 %v3171, 1.442695
      %v3254 = vpow.pop %v3253
      %v3255 = vmul.f32 %v3172, 1.442695
      %v3256 = vpow.pop %v3255
      %v3257 = vmul.f32 %v3173, 1.442695
      %v3258 = vpow.pop %v3257
      %v3259 = vmul.f32 %v3174, 1.442695
      %v3260 = vpow.pop %v3259
      %v3261 = vmul.f32 %v3175, 1.442695
      %v3262 = vpow.pop %v3261
      %v3263 = vmul.f32 %v3176, 1.442695
      %v3264 = vpow.pop %v3263
      %v3265 = vmul.f32 %v3177, 1.442695
      %v3266 = vpow.pop %v3265
      %v3267 = vmul.f32 %v3178, 1.442695
      %v3268 = vpow.pop %v3267
      %v3269 = vmul.f32 %v3179, 1.442695
      %v3270 = vpow.pop %v3269
      %v3271 = vmul.f32 %v3180, 1.442695
      %v3272 = vpow.pop %v3271
      %v3273 = vmul.f32 %v3181, 1.442695
      %v3274 = vpow.pop %v3273
      %v3275 = vmul.f32 %v3182, 1.442695
      %v3276 = vpow.pop %v3275
      %v3277 = vmul.f32 %v3183, 1.442695
      %v3278 = vpow.pop %v3277
      %v3279 = vmul.f32 %v3184, 1.442695
      %v3280 = vpow.pop %v3279
      %v3281 = vmul.f32 %v3185, 1.442695
      %v3282 = vpow.pop %v3281
      %v3283 = vmul.f32 %v3186, 1.442695
      %v3284 = vpow.pop %v3283
      %v3285 = vmul.f32 %v3187, 1.442695
      %v3286 = vpow.pop %v3285
      %v3287 = vmul.f32 %v3188, 1.442695
      %v3288 = vpow.pop %v3287
      %v3289 = vmul.f32 %v3189, 1.442695
      %v3290 = vpow.pop %v3289
      %v3291 = vmul.f32 %v3190, 1.442695
      %v3292 = vpow.pop %v3291
      %v3293 = vmul.f32 %v3191, 1.442695
      %v3294 = vpow.pop %v3293
      %v3295 = vmul.f32 %v3192, 1.442695
      %v3296 = vpow.pop %v3295
      %v3297 = vmul.f32 %v3193, 1.442695
      %v3298 = vpow.pop %v3297
      %v3299 = vmul.f32 %v3194, 1.442695
      %v3300 = vpow.pop %v3299
      %v3301 = vmul.f32 %v3195, 1.442695
      %v3302 = vpow.pop %v3301
      %v3303 = vmul.f32 %v3196, 1.442695
      %v3304 = vpow.pop %v3303
      %v3305 = vmul.f32 %v3197, 1.442695
      %v3306 = vpow.pop %v3305
      %v3307 = vmul.f32 %v3198, 1.442695
      %v3308 = vpow.pop %v3307
      %v3309 = vmul.f32 %v3199, 1.442695
      %v3310 = vpow.pop %v3309
      %v3311 = vmul.f32 %v3200, 1.442695
      %v3312 = vpow.pop %v3311
      %v3313 = vmul.f32 %v3201, 1.442695
      %v3314 = vpow.pop %v3313
      %v3315 = vmul.f32 %v3202, 1.442695
      %v3316 = vpow.pop %v3315
      %v3317 = vmul.f32 %v3203, 1.442695
      %v3318 = vpow.pop %v3317
      %v3319 = vmul.f32 %v3204, 1.442695
      %v3320 = vpow.pop %v3319
      %v3321 = vmul.f32 %v3205, 1.442695
      %v3322 = vpow.pop %v3321
      %v3323 = vmul.f32 %v3206, 1.442695
      %v3324 = vpow.pop %v3323
      %v3325 = vmul.f32 %v3207, 1.442695
      %v3326 = vpow.pop %v3325
      %v3327 = vmul.f32 %v3208, 1.442695
      %v3328 = vpow.pop %v3327
      %v3329 = vmul.f32 %v3209, 1.442695
      %v3330 = vpow.pop %v3329
      %v3331 = vmul.f32 %v3210, 1.442695
      %v3332 = vpow.pop %v3331
      %v3333 = vmul.f32 %v3211, 1.442695
      %v3334 = vpow.pop %v3333
      %v3335 = vmul.f32 %v3212, 1.442695
      %v3336 = vpow.pop %v3335
      %v3337 = vmul.f32 %v3213, 1.442695
      %v3338 = vpow.pop %v3337
      %v3339 = vmul.f32 %v3214, 1.442695
      %v3340 = vpow.pop %v3339
      %v3341 = vmul.f32 %v3215, 1.442695
      %v3342 = vpow.pop %v3341
      %v3343 = vmul.f32 %v3216, 1.442695
      %v3344 = vpow.pop %v3343
      %v3345 = vadd.f32 %v3218, %v3222
      %v3346 = vadd.f32 %v3345, %v3226
      %v3347 = vadd.f32 %v3346, %v3230
      %v3348 = vadd.f32 %v3347, %v3234
      %v3349 = vadd.f32 %v3348, %v3238
      %v3350 = vadd.f32 %v3349, %v3242
      %v3351 = vadd.f32 %v3350, %v3246
      %v3352 = vadd.f32 %v3351, %v3250
      %v3353 = vadd.f32 %v3352, %v3254
      %v3354 = vadd.f32 %v3353, %v3258
      %v3355 = vadd.f32 %v3354, %v3262
      %v3356 = vadd.f32 %v3355, %v3266
      %v3357 = vadd.f32 %v3356, %v3270
      %v3358 = vadd.f32 %v3357, %v3274
      %v3359 = vadd.f32 %v3358, %v3278
      %v3360 = vadd.f32 %v3359, %v3282
      %v3361 = vadd.f32 %v3360, %v3286
      %v3362 = vadd.f32 %v3361, %v3290
      %v3363 = vadd.f32 %v3362, %v3294
      %v3364 = vadd.f32 %v3363, %v3298
      %v3365 = vadd.f32 %v3364, %v3302
      %v3366 = vadd.f32 %v3365, %v3306
      %v3367 = vadd.f32 %v3366, %v3310
      %v3368 = vadd.f32 %v3367, %v3314
      %v3369 = vadd.f32 %v3368, %v3318
      %v3370 = vadd.f32 %v3369, %v3322
      %v3371 = vadd.f32 %v3370, %v3326
      %v3372 = vadd.f32 %v3371, %v3330
      %v3373 = vadd.f32 %v3372, %v3334
      %v3374 = vadd.f32 %v3373, %v3338
      %v3375 = vadd.f32 %v3374, %v3342
      %v3376 = vrot.slane %v3375, 4
      %v3377 = vadd.f32 %v3375, %v3376
      %v3378 = vrot.slane %v3377, 2
      %v3379 = vadd.f32 %v3377, %v3378
      %v3380 = vrot.slane %v3379, 1
      %v3381 = vadd.f32 %v3379, %v3380
      %v3382 = vadd.f32 %v3220, %v3224
      %v3383 = vadd.f32 %v3382, %v3228
      %v3384 = vadd.f32 %v3383, %v3232
      %v3385 = vadd.f32 %v3384, %v3236
      %v3386 = vadd.f32 %v3385, %v3240
      %v3387 = vadd.f32 %v3386, %v3244
      %v3388 = vadd.f32 %v3387, %v3248
      %v3389 = vadd.f32 %v3388, %v3252
      %v3390 = vadd.f32 %v3389, %v3256
      %v3391 = vadd.f32 %v3390, %v3260
      %v3392 = vadd.f32 %v3391, %v3264
      %v3393 = vadd.f32 %v3392, %v3268
      %v3394 = vadd.f32 %v3393, %v3272
      %v3395 = vadd.f32 %v3394, %v3276
      %v3396 = vadd.f32 %v3395, %v3280
      %v3397 = vadd.f32 %v3396, %v3284
      %v3398 = vadd.f32 %v3397, %v3288
      %v3399 = vadd.f32 %v3398, %v3292
      %v3400 = vadd.f32 %v3399, %v3296
      %v3401 = vadd.f32 %v3400, %v3300
      %v3402 = vadd.f32 %v3401, %v3304
      %v3403 = vadd.f32 %v3402, %v3308
      %v3404 = vadd.f32 %v3403, %v3312
      %v3405 = vadd.f32 %v3404, %v3316
      %v3406 = vadd.f32 %v3405, %v3320
      %v3407 = vadd.f32 %v3406, %v3324
      %v3408 = vadd.f32 %v3407, %v3328
      %v3409 = vadd.f32 %v3408, %v3332
      %v3410 = vadd.f32 %v3409, %v3336
      %v3411 = vadd.f32 %v3410, %v3340
      %v3412 = vadd.f32 %v3411, %v3344
      %v3413 = vrot.slane %v3412, 4
      %v3414 = vadd.f32 %v3412, %v3413
      %v3415 = vrot.slane %v3414, 2
      %v3416 = vadd.f32 %v3414, %v3415
      %v3417 = vrot.slane %v3416, 1
      %v3418 = vadd.f32 %v3416, %v3417
      %v3419 = vrcp.pop %v3381
      %v3420 = vrcp.pop %v3418
      %v3421 = vpack.c.bf16 %v3220, %v3218
      %v3422 = vpack.c.bf16 %v3224, %v3222
      %v3423 = vpack.c.bf16 %v3228, %v3226
      %v3424 = vpack.c.bf16 %v3232, %v3230
      %v3425 = vpack.c.bf16 %v3236, %v3234
      %v3426 = vpack.c.bf16 %v3240, %v3238
      %v3427 = vpack.c.bf16 %v3244, %v3242
      %v3428 = vpack.c.bf16 %v3248, %v3246
      %v3429 = vpack.c.bf16 %v3252, %v3250
      %v3430 = vpack.c.bf16 %v3256, %v3254
      %v3431 = vpack.c.bf16 %v3260, %v3258
      %v3432 = vpack.c.bf16 %v3264, %v3262
      %v3433 = vpack.c.bf16 %v3268, %v3266
      %v3434 = vpack.c.bf16 %v3272, %v3270
      %v3435 = vpack.c.bf16 %v3276, %v3274
      %v3436 = vpack.c.bf16 %v3280, %v3278
      %v3437 = vpack.c.bf16 %v3284, %v3282
      %v3438 = vpack.c.bf16 %v3288, %v3286
      %v3439 = vpack.c.bf16 %v3292, %v3290
      %v3440 = vpack.c.bf16 %v3296, %v3294
      %v3441 = vpack.c.bf16 %v3300, %v3298
      %v3442 = vpack.c.bf16 %v3304, %v3302
      %v3443 = vpack.c.bf16 %v3308, %v3306
      %v3444 = vpack.c.bf16 %v3312, %v3310
      %v3445 = vpack.c.bf16 %v3316, %v3314
      %v3446 = vpack.c.bf16 %v3320, %v3318
      %v3447 = vpack.c.bf16 %v3324, %v3322
      %v3448 = vpack.c.bf16 %v3328, %v3326
      %v3449 = vpack.c.bf16 %v3332, %v3330
      %v3450 = vpack.c.bf16 %v3336, %v3334
      %v3451 = vpack.c.bf16 %v3340, %v3338
      %v3452 = vpack.c.bf16 %v3344, %v3342
      %3453 = vmatpush.bf16.msra.mxu0 0
      %3454 = vmatpush.bf16.msra.mxu0 0
      %3455 = vmatpush.bf16.msra.mxu0 0
      %3456 = vmatpush.bf16.msra.mxu0 0
      %3457 = vmatpush.bf16.msra.mxu0 0
      %3458 = vmatpush.bf16.msra.mxu0 0
      %3459 = vmatpush.bf16.msra.mxu0 0
      %3460 = vmatpush.bf16.msra.mxu0 %v2896
      %3461 = vmatmul.bf16.gmra.mxu0 %v998
      %v3462 = vpop.f32.mrf.mxu0
      %v3463 = vadd.f32 0.0, %v3462
      %v3464 = vpop.f32.mrf.mxu0
      %v3465 = vadd.f32 0.0, %v3464
      %3466 = vmatmul.bf16.gmra.mxu0 %v1001
      %v3467 = vpop.f32.mrf.mxu0
      %v3468 = vadd.f32 0.0, %v3467
      %v3469 = vpop.f32.mrf.mxu0
      %v3470 = vadd.f32 0.0, %v3469
      %3471 = vmatmul.bf16.gmra.mxu0 %v1004
      %v3472 = vpop.f32.mrf.mxu0
      %v3473 = vadd.f32 0.0, %v3472
      %v3474 = vpop.f32.mrf.mxu0
      %v3475 = vadd.f32 0.0, %v3474
      %3476 = vmatmul.bf16.gmra.mxu0 %v1007
      %v3477 = vpop.f32.mrf.mxu0
      %v3478 = vadd.f32 0.0, %v3477
      %v3479 = vpop.f32.mrf.mxu0
      %v3480 = vadd.f32 0.0, %v3479
      %3481 = vmatmul.bf16.gmra.mxu0 %v1010
      %v3482 = vpop.f32.mrf.mxu0
      %v3483 = vadd.f32 0.0, %v3482
      %v3484 = vpop.f32.mrf.mxu0
      %v3485 = vadd.f32 0.0, %v3484
      %3486 = vmatmul.bf16.gmra.mxu0 %v1013
      %v3487 = vpop.f32.mrf.mxu0
      %v3488 = vadd.f32 0.0, %v3487
      %v3489 = vpop.f32.mrf.mxu0
      %v3490 = vadd.f32 0.0, %v3489
      %3491 = vmatmul.bf16.gmra.mxu0 %v1016
      %v3492 = vpop.f32.mrf.mxu0
      %v3493 = vadd.f32 0.0, %v3492
      %v3494 = vpop.f32.mrf.mxu0
      %v3495 = vadd.f32 0.0, %v3494
      %3496 = vmatmul.bf16.gmra.mxu0 %v1019
      %v3497 = vpop.f32.mrf.mxu0
      %v3498 = vadd.f32 0.0, %v3497
      %v3499 = vpop.f32.mrf.mxu0
      %v3500 = vadd.f32 0.0, %v3499
      %3501 = vmatmul.bf16.gmra.mxu0 %v1022
      %v3502 = vpop.f32.mrf.mxu0
      %v3503 = vadd.f32 0.0, %v3502
      %v3504 = vpop.f32.mrf.mxu0
      %v3505 = vadd.f32 0.0, %v3504
      %3506 = vmatmul.bf16.gmra.mxu0 %v1025
      %v3507 = vpop.f32.mrf.mxu0
      %v3508 = vadd.f32 0.0, %v3507
      %v3509 = vpop.f32.mrf.mxu0
      %v3510 = vadd.f32 0.0, %v3509
      %3511 = vmatmul.bf16.gmra.mxu0 %v1028
      %v3512 = vpop.f32.mrf.mxu0
      %v3513 = vadd.f32 0.0, %v3512
      %v3514 = vpop.f32.mrf.mxu0
      %v3515 = vadd.f32 0.0, %v3514
      %3516 = vmatmul.bf16.gmra.mxu0 %v1031
      %v3517 = vpop.f32.mrf.mxu0
      %v3518 = vadd.f32 0.0, %v3517
      %v3519 = vpop.f32.mrf.mxu0
      %v3520 = vadd.f32 0.0, %v3519
      %3521 = vmatmul.bf16.gmra.mxu0 %v1034
      %v3522 = vpop.f32.mrf.mxu0
      %v3523 = vadd.f32 0.0, %v3522
      %v3524 = vpop.f32.mrf.mxu0
      %v3525 = vadd.f32 0.0, %v3524
      %3526 = vmatmul.bf16.gmra.mxu0 %v1037
      %v3527 = vpop.f32.mrf.mxu0
      %v3528 = vadd.f32 0.0, %v3527
      %v3529 = vpop.f32.mrf.mxu0
      %v3530 = vadd.f32 0.0, %v3529
      %3531 = vmatmul.bf16.gmra.mxu0 %v1040
      %v3532 = vpop.f32.mrf.mxu0
      %v3533 = vadd.f32 0.0, %v3532
      %v3534 = vpop.f32.mrf.mxu0
      %v3535 = vadd.f32 0.0, %v3534
      %3536 = vmatmul.bf16.gmra.mxu0 %v1043
      %v3537 = vpop.f32.mrf.mxu0
      %v3538 = vadd.f32 0.0, %v3537
      %v3539 = vpop.f32.mrf.mxu0
      %v3540 = vadd.f32 0.0, %v3539
      %3541 = vdwg.mxu0
      %3542 = vmatpush.bf16.msra.mxu0 0
      %3543 = vmatpush.bf16.msra.mxu0 0
      %3544 = vmatpush.bf16.msra.mxu0 0
      %3545 = vmatpush.bf16.msra.mxu0 0
      %3546 = vmatpush.bf16.msra.mxu0 0
      %3547 = vmatpush.bf16.msra.mxu0 0
      %3548 = vmatpush.bf16.msra.mxu0 0
      %3549 = vmatpush.bf16.msra.mxu0 %v2899
      %3550 = vmatmul.bf16.gmra.mxu0 %v998
      %v3551 = vpop.f32.mrf.mxu0
      %v3552 = vadd.f32 0.0, %v3551
      %v3553 = vpop.f32.mrf.mxu0
      %v3554 = vadd.f32 0.0, %v3553
      %3555 = vmatmul.bf16.gmra.mxu0 %v1001
      %v3556 = vpop.f32.mrf.mxu0
      %v3557 = vadd.f32 0.0, %v3556
      %v3558 = vpop.f32.mrf.mxu0
      %v3559 = vadd.f32 0.0, %v3558
      %3560 = vmatmul.bf16.gmra.mxu0 %v1004
      %v3561 = vpop.f32.mrf.mxu0
      %v3562 = vadd.f32 0.0, %v3561
      %v3563 = vpop.f32.mrf.mxu0
      %v3564 = vadd.f32 0.0, %v3563
      %3565 = vmatmul.bf16.gmra.mxu0 %v1007
      %v3566 = vpop.f32.mrf.mxu0
      %v3567 = vadd.f32 0.0, %v3566
      %v3568 = vpop.f32.mrf.mxu0
      %v3569 = vadd.f32 0.0, %v3568
      %3570 = vmatmul.bf16.gmra.mxu0 %v1010
      %v3571 = vpop.f32.mrf.mxu0
      %v3572 = vadd.f32 0.0, %v3571
      %v3573 = vpop.f32.mrf.mxu0
      %v3574 = vadd.f32 0.0, %v3573
      %3575 = vmatmul.bf16.gmra.mxu0 %v1013
      %v3576 = vpop.f32.mrf.mxu0
      %v3577 = vadd.f32 0.0, %v3576
      %v3578 = vpop.f32.mrf.mxu0
      %v3579 = vadd.f32 0.0, %v3578
      %3580 = vmatmul.bf16.gmra.mxu0 %v1016
      %v3581 = vpop.f32.mrf.mxu0
      %v3582 = vadd.f32 0.0, %v3581
      %v3583 = vpop.f32.mrf.mxu0
      %v3584 = vadd.f32 0.0, %v3583
      %3585 = vmatmul.bf16.gmra.mxu0 %v1019
      %v3586 = vpop.f32.mrf.mxu0
      %v3587 = vadd.f32 0.0, %v3586
      %v3588 = vpop.f32.mrf.mxu0
      %v3589 = vadd.f32 0.0, %v3588
      %3590 = vmatmul.bf16.gmra.mxu0 %v1022
      %v3591 = vpop.f32.mrf.mxu0
      %v3592 = vadd.f32 0.0, %v3591
      %v3593 = vpop.f32.mrf.mxu0
      %v3594 = vadd.f32 0.0, %v3593
      %3595 = vmatmul.bf16.gmra.mxu0 %v1025
      %v3596 = vpop.f32.mrf.mxu0
      %v3597 = vadd.f32 0.0, %v3596
      %v3598 = vpop.f32.mrf.mxu0
      %v3599 = vadd.f32 0.0, %v3598
      %3600 = vmatmul.bf16.gmra.mxu0 %v1028
      %v3601 = vpop.f32.mrf.mxu0
      %v3602 = vadd.f32 0.0, %v3601
      %v3603 = vpop.f32.mrf.mxu0
      %v3604 = vadd.f32 0.0, %v3603
      %3605 = vmatmul.bf16.gmra.mxu0 %v1031
      %v3606 = vpop.f32.mrf.mxu0
      %v3607 = vadd.f32 0.0, %v3606
      %v3608 = vpop.f32.mrf.mxu0
      %v3609 = vadd.f32 0.0, %v3608
      %3610 = vmatmul.bf16.gmra.mxu0 %v1034
      %v3611 = vpop.f32.mrf.mxu0
      %v3612 = vadd.f32 0.0, %v3611
      %v3613 = vpop.f32.mrf.mxu0
      %v3614 = vadd.f32 0.0, %v3613
      %3615 = vmatmul.bf16.gmra.mxu0 %v1037
      %v3616 = vpop.f32.mrf.mxu0
      %v3617 = vadd.f32 0.0, %v3616
      %v3618 = vpop.f32.mrf.mxu0
      %v3619 = vadd.f32 0.0, %v3618
      %3620 = vmatmul.bf16.gmra.mxu0 %v1040
      %v3621 = vpop.f32.mrf.mxu0
      %v3622 = vadd.f32 0.0, %v3621
      %v3623 = vpop.f32.mrf.mxu0
      %v3624 = vadd.f32 0.0, %v3623
      %3625 = vmatmul.bf16.gmra.mxu0 %v1043
      %v3626 = vpop.f32.mrf.mxu0
      %v3627 = vadd.f32 0.0, %v3626
      %v3628 = vpop.f32.mrf.mxu0
      %v3629 = vadd.f32 0.0, %v3628
      %3630 = vdwg.mxu0
      %v3631 = vmax.f32 %v3463, %v3468
      %v3632 = vmax.f32 %v3465, %v3470
      %v3633 = vmax.f32 %v3631, %v3473
      %v3634 = vmax.f32 %v3632, %v3475
      %v3635 = vmax.f32 %v3633, %v3478
      %v3636 = vmax.f32 %v3634, %v3480
      %v3637 = vmax.f32 %v3635, %v3483
      %v3638 = vmax.f32 %v3636, %v3485
      %v3639 = vmax.f32 %v3637, %v3488
      %v3640 = vmax.f32 %v3638, %v3490
      %v3641 = vmax.f32 %v3639, %v3493
      %v3642 = vmax.f32 %v3640, %v3495
      %v3643 = vmax.f32 %v3641, %v3498
      %v3644 = vmax.f32 %v3642, %v3500
      %v3645 = vmax.f32 %v3643, %v3503
      %v3646 = vmax.f32 %v3644, %v3505
      %v3647 = vmax.f32 %v3645, %v3508
      %v3648 = vmax.f32 %v3646, %v3510
      %v3649 = vmax.f32 %v3647, %v3513
      %v3650 = vmax.f32 %v3648, %v3515
      %v3651 = vmax.f32 %v3649, %v3518
      %v3652 = vmax.f32 %v3650, %v3520
      %v3653 = vmax.f32 %v3651, %v3523
      %v3654 = vmax.f32 %v3652, %v3525
      %v3655 = vmax.f32 %v3653, %v3528
      %v3656 = vmax.f32 %v3654, %v3530
      %v3657 = vmax.f32 %v3655, %v3533
      %v3658 = vmax.f32 %v3656, %v3535
      %v3659 = vmax.f32 %v3657, %v3538
      %v3660 = vmax.f32 %v3658, %v3540
      %v3661 = vmax.f32 %v3659, %v3660
      %v3662 = vrot.slane %v3661, 4
      %v3663 = vmax.f32 %v3661, %v3662
      %v3664 = vrot.slane %v3663, 2
      %v3665 = vmax.f32 %v3663, %v3664
      %v3666 = vrot.slane %v3665, 1
      %v3667 = vmax.f32 %v3665, %v3666
      %v3668 = vmax.f32 %v3552, %v3557
      %v3669 = vmax.f32 %v3554, %v3559
      %v3670 = vmax.f32 %v3668, %v3562
      %v3671 = vmax.f32 %v3669, %v3564
      %v3672 = vmax.f32 %v3670, %v3567
      %v3673 = vmax.f32 %v3671, %v3569
      %v3674 = vmax.f32 %v3672, %v3572
      %v3675 = vmax.f32 %v3673, %v3574
      %v3676 = vmax.f32 %v3674, %v3577
      %v3677 = vmax.f32 %v3675, %v3579
      %v3678 = vmax.f32 %v3676, %v3582
      %v3679 = vmax.f32 %v3677, %v3584
      %v3680 = vmax.f32 %v3678, %v3587
      %v3681 = vmax.f32 %v3679, %v3589
      %v3682 = vmax.f32 %v3680, %v3592
      %v3683 = vmax.f32 %v3681, %v3594
      %v3684 = vmax.f32 %v3682, %v3597
      %v3685 = vmax.f32 %v3683, %v3599
      %v3686 = vmax.f32 %v3684, %v3602
      %v3687 = vmax.f32 %v3685, %v3604
      %v3688 = vmax.f32 %v3686, %v3607
      %v3689 = vmax.f32 %v3687, %v3609
      %v3690 = vmax.f32 %v3688, %v3612
      %v3691 = vmax.f32 %v3689, %v3614
      %v3692 = vmax.f32 %v3690, %v3617
      %v3693 = vmax.f32 %v3691, %v3619
      %v3694 = vmax.f32 %v3692, %v3622
      %v3695 = vmax.f32 %v3693, %v3624
      %v3696 = vmax.f32 %v3694, %v3627
      %v3697 = vmax.f32 %v3695, %v3629
      %v3698 = vmax.f32 %v3696, %v3697
      %v3699 = vrot.slane %v3698, 4
      %v3700 = vmax.f32 %v3698, %v3699
      %v3701 = vrot.slane %v3700, 2
      %v3702 = vmax.f32 %v3700, %v3701
      %v3703 = vrot.slane %v3702, 1
      %v3704 = vmax.f32 %v3702, %v3703
      %v3705 = vsub.f32 %v3463, %v3667
      %v3706 = vsub.f32 %v3552, %v3704
      %v3707 = vsub.f32 %v3465, %v3667
      %v3708 = vsub.f32 %v3554, %v3704
      %v3709 = vsub.f32 %v3468, %v3667
      %v3710 = vsub.f32 %v3557, %v3704
      %v3711 = vsub.f32 %v3470, %v3667
      %v3712 = vsub.f32 %v3559, %v3704
      %v3713 = vsub.f32 %v3473, %v3667
      %v3714 = vsub.f32 %v3562, %v3704
      %v3715 = vsub.f32 %v3475, %v3667
      %v3716 = vsub.f32 %v3564, %v3704
      %v3717 = vsub.f32 %v3478, %v3667
      %v3718 = vsub.f32 %v3567, %v3704
      %v3719 = vsub.f32 %v3480, %v3667
      %v3720 = vsub.f32 %v3569, %v3704
      %v3721 = vsub.f32 %v3483, %v3667
      %v3722 = vsub.f32 %v3572, %v3704
      %v3723 = vsub.f32 %v3485, %v3667
      %v3724 = vsub.f32 %v3574, %v3704
      %v3725 = vsub.f32 %v3488, %v3667
      %v3726 = vsub.f32 %v3577, %v3704
      %v3727 = vsub.f32 %v3490, %v3667
      %v3728 = vsub.f32 %v3579, %v3704
      %v3729 = vsub.f32 %v3493, %v3667
      %v3730 = vsub.f32 %v3582, %v3704
      %v3731 = vsub.f32 %v3495, %v3667
      %v3732 = vsub.f32 %v3584, %v3704
      %v3733 = vsub.f32 %v3498, %v3667
      %v3734 = vsub.f32 %v3587, %v3704
      %v3735 = vsub.f32 %v3500, %v3667
      %v3736 = vsub.f32 %v3589, %v3704
      %v3737 = vsub.f32 %v3503, %v3667
      %v3738 = vsub.f32 %v3592, %v3704
      %v3739 = vsub.f32 %v3505, %v3667
      %v3740 = vsub.f32 %v3594, %v3704
      %v3741 = vsub.f32 %v3508, %v3667
      %v3742 = vsub.f32 %v3597, %v3704
      %v3743 = vsub.f32 %v3510, %v3667
      %v3744 = vsub.f32 %v3599, %v3704
      %v3745 = vsub.f32 %v3513, %v3667
      %v3746 = vsub.f32 %v3602, %v3704
      %v3747 = vsub.f32 %v3515, %v3667
      %v3748 = vsub.f32 %v3604, %v3704
      %v3749 = vsub.f32 %v3518, %v3667
      %v3750 = vsub.f32 %v3607, %v3704
      %v3751 = vsub.f32 %v3520, %v3667
      %v3752 = vsub.f32 %v3609, %v3704
      %v3753 = vsub.f32 %v3523, %v3667
      %v3754 = vsub.f32 %v3612, %v3704
      %v3755 = vsub.f32 %v3525, %v3667
      %v3756 = vsub.f32 %v3614, %v3704
      %v3757 = vsub.f32 %v3528, %v3667
      %v3758 = vsub.f32 %v3617, %v3704
      %v3759 = vsub.f32 %v3530, %v3667
      %v3760 = vsub.f32 %v3619, %v3704
      %v3761 = vsub.f32 %v3533, %v3667
      %v3762 = vsub.f32 %v3622, %v3704
      %v3763 = vsub.f32 %v3535, %v3667
      %v3764 = vsub.f32 %v3624, %v3704
      %v3765 = vsub.f32 %v3538, %v3667
      %v3766 = vsub.f32 %v3627, %v3704
      %v3767 = vsub.f32 %v3540, %v3667
      %v3768 = vsub.f32 %v3629, %v3704
      %v3769 = vmul.f32 %v3705, 1.442695
      %v3770 = vpow.pop %v3769
      %v3771 = vmul.f32 %v3706, 1.442695
      %v3772 = vpow.pop %v3771
      %v3773 = vmul.f32 %v3707, 1.442695
      %v3774 = vpow.pop %v3773
      %v3775 = vmul.f32 %v3708, 1.442695
      %v3776 = vpow.pop %v3775
      %v3777 = vmul.f32 %v3709, 1.442695
      %v3778 = vpow.pop %v3777
      %v3779 = vmul.f32 %v3710, 1.442695
      %v3780 = vpow.pop %v3779
      %v3781 = vmul.f32 %v3711, 1.442695
      %v3782 = vpow.pop %v3781
      %v3783 = vmul.f32 %v3712, 1.442695
      %v3784 = vpow.pop %v3783
      %v3785 = vmul.f32 %v3713, 1.442695
      %v3786 = vpow.pop %v3785
      %v3787 = vmul.f32 %v3714, 1.442695
      %v3788 = vpow.pop %v3787
      %v3789 = vmul.f32 %v3715, 1.442695
      %v3790 = vpow.pop %v3789
      %v3791 = vmul.f32 %v3716, 1.442695
      %v3792 = vpow.pop %v3791
      %v3793 = vmul.f32 %v3717, 1.442695
      %v3794 = vpow.pop %v3793
      %v3795 = vmul.f32 %v3718, 1.442695
      %v3796 = vpow.pop %v3795
      %v3797 = vmul.f32 %v3719, 1.442695
      %v3798 = vpow.pop %v3797
      %v3799 = vmul.f32 %v3720, 1.442695
      %v3800 = vpow.pop %v3799
      %v3801 = vmul.f32 %v3721, 1.442695
      %v3802 = vpow.pop %v3801
      %v3803 = vmul.f32 %v3722, 1.442695
      %v3804 = vpow.pop %v3803
      %v3805 = vmul.f32 %v3723, 1.442695
      %v3806 = vpow.pop %v3805
      %v3807 = vmul.f32 %v3724, 1.442695
      %v3808 = vpow.pop %v3807
      %v3809 = vmul.f32 %v3725, 1.442695
      %v3810 = vpow.pop %v3809
      %v3811 = vmul.f32 %v3726, 1.442695
      %v3812 = vpow.pop %v3811
      %v3813 = vmul.f32 %v3727, 1.442695
      %v3814 = vpow.pop %v3813
      %v3815 = vmul.f32 %v3728, 1.442695
      %v3816 = vpow.pop %v3815
      %v3817 = vmul.f32 %v3729, 1.442695
      %v3818 = vpow.pop %v3817
      %v3819 = vmul.f32 %v3730, 1.442695
      %v3820 = vpow.pop %v3819
      %v3821 = vmul.f32 %v3731, 1.442695
      %v3822 = vpow.pop %v3821
      %v3823 = vmul.f32 %v3732, 1.442695
      %v3824 = vpow.pop %v3823
      %v3825 = vmul.f32 %v3733, 1.442695
      %v3826 = vpow.pop %v3825
      %v3827 = vmul.f32 %v3734, 1.442695
      %v3828 = vpow.pop %v3827
      %v3829 = vmul.f32 %v3735, 1.442695
      %v3830 = vpow.pop %v3829
      %v3831 = vmul.f32 %v3736, 1.442695
      %v3832 = vpow.pop %v3831
      %v3833 = vmul.f32 %v3737, 1.442695
      %v3834 = vpow.pop %v3833
      %v3835 = vmul.f32 %v3738, 1.442695
      %v3836 = vpow.pop %v3835
      %v3837 = vmul.f32 %v3739, 1.442695
      %v3838 = vpow.pop %v3837
      %v3839 = vmul.f32 %v3740, 1.442695
      %v3840 = vpow.pop %v3839
      %v3841 = vmul.f32 %v3741, 1.442695
      %v3842 = vpow.pop %v3841
      %v3843 = vmul.f32 %v3742, 1.442695
      %v3844 = vpow.pop %v3843
      %v3845 = vmul.f32 %v3743, 1.442695
      %v3846 = vpow.pop %v3845
      %v3847 = vmul.f32 %v3744, 1.442695
      %v3848 = vpow.pop %v3847
      %v3849 = vmul.f32 %v3745, 1.442695
      %v3850 = vpow.pop %v3849
      %v3851 = vmul.f32 %v3746, 1.442695
      %v3852 = vpow.pop %v3851
      %v3853 = vmul.f32 %v3747, 1.442695
      %v3854 = vpow.pop %v3853
      %v3855 = vmul.f32 %v3748, 1.442695
      %v3856 = vpow.pop %v3855
      %v3857 = vmul.f32 %v3749, 1.442695
      %v3858 = vpow.pop %v3857
      %v3859 = vmul.f32 %v3750, 1.442695
      %v3860 = vpow.pop %v3859
      %v3861 = vmul.f32 %v3751, 1.442695
      %v3862 = vpow.pop %v3861
      %v3863 = vmul.f32 %v3752, 1.442695
      %v3864 = vpow.pop %v3863
      %v3865 = vmul.f32 %v3753, 1.442695
      %v3866 = vpow.pop %v3865
      %v3867 = vmul.f32 %v3754, 1.442695
      %v3868 = vpow.pop %v3867
      %v3869 = vmul.f32 %v3755, 1.442695
      %v3870 = vpow.pop %v3869
      %v3871 = vmul.f32 %v3756, 1.442695
      %v3872 = vpow.pop %v3871
      %v3873 = vmul.f32 %v3757, 1.442695
      %v3874 = vpow.pop %v3873
      %v3875 = vmul.f32 %v3758, 1.442695
      %v3876 = vpow.pop %v3875
      %v3877 = vmul.f32 %v3759, 1.442695
      %v3878 = vpow.pop %v3877
      %v3879 = vmul.f32 %v3760, 1.442695
      %v3880 = vpow.pop %v3879
      %v3881 = vmul.f32 %v3761, 1.442695
      %v3882 = vpow.pop %v3881
      %v3883 = vmul.f32 %v3762, 1.442695
      %v3884 = vpow.pop %v3883
      %v3885 = vmul.f32 %v3763, 1.442695
      %v3886 = vpow.pop %v3885
      %v3887 = vmul.f32 %v3764, 1.442695
      %v3888 = vpow.pop %v3887
      %v3889 = vmul.f32 %v3765, 1.442695
      %v3890 = vpow.pop %v3889
      %v3891 = vmul.f32 %v3766, 1.442695
      %v3892 = vpow.pop %v3891
      %v3893 = vmul.f32 %v3767, 1.442695
      %v3894 = vpow.pop %v3893
      %v3895 = vmul.f32 %v3768, 1.442695
      %v3896 = vpow.pop %v3895
      %v3897 = vadd.f32 %v3770, %v3774
      %v3898 = vadd.f32 %v3897, %v3778
      %v3899 = vadd.f32 %v3898, %v3782
      %v3900 = vadd.f32 %v3899, %v3786
      %v3901 = vadd.f32 %v3900, %v3790
      %v3902 = vadd.f32 %v3901, %v3794
      %v3903 = vadd.f32 %v3902, %v3798
      %v3904 = vadd.f32 %v3903, %v3802
      %v3905 = vadd.f32 %v3904, %v3806
      %v3906 = vadd.f32 %v3905, %v3810
      %v3907 = vadd.f32 %v3906, %v3814
      %v3908 = vadd.f32 %v3907, %v3818
      %v3909 = vadd.f32 %v3908, %v3822
      %v3910 = vadd.f32 %v3909, %v3826
      %v3911 = vadd.f32 %v3910, %v3830
      %v3912 = vadd.f32 %v3911, %v3834
      %v3913 = vadd.f32 %v3912, %v3838
      %v3914 = vadd.f32 %v3913, %v3842
      %v3915 = vadd.f32 %v3914, %v3846
      %v3916 = vadd.f32 %v3915, %v3850
      %v3917 = vadd.f32 %v3916, %v3854
      %v3918 = vadd.f32 %v3917, %v3858
      %v3919 = vadd.f32 %v3918, %v3862
      %v3920 = vadd.f32 %v3919, %v3866
      %v3921 = vadd.f32 %v3920, %v3870
      %v3922 = vadd.f32 %v3921, %v3874
      %v3923 = vadd.f32 %v3922, %v3878
      %v3924 = vadd.f32 %v3923, %v3882
      %v3925 = vadd.f32 %v3924, %v3886
      %v3926 = vadd.f32 %v3925, %v3890
      %v3927 = vadd.f32 %v3926, %v3894
      %v3928 = vrot.slane %v3927, 4
      %v3929 = vadd.f32 %v3927, %v3928
      %v3930 = vrot.slane %v3929, 2
      %v3931 = vadd.f32 %v3929, %v3930
      %v3932 = vrot.slane %v3931, 1
      %v3933 = vadd.f32 %v3931, %v3932
      %v3934 = vadd.f32 %v3772, %v3776
      %v3935 = vadd.f32 %v3934, %v3780
      %v3936 = vadd.f32 %v3935, %v3784
      %v3937 = vadd.f32 %v3936, %v3788
      %v3938 = vadd.f32 %v3937, %v3792
      %v3939 = vadd.f32 %v3938, %v3796
      %v3940 = vadd.f32 %v3939, %v3800
      %v3941 = vadd.f32 %v3940, %v3804
      %v3942 = vadd.f32 %v3941, %v3808
      %v3943 = vadd.f32 %v3942, %v3812
      %v3944 = vadd.f32 %v3943, %v3816
      %v3945 = vadd.f32 %v3944, %v3820
      %v3946 = vadd.f32 %v3945, %v3824
      %v3947 = vadd.f32 %v3946, %v3828
      %v3948 = vadd.f32 %v3947, %v3832
      %v3949 = vadd.f32 %v3948, %v3836
      %v3950 = vadd.f32 %v3949, %v3840
      %v3951 = vadd.f32 %v3950, %v3844
      %v3952 = vadd.f32 %v3951, %v3848
      %v3953 = vadd.f32 %v3952, %v3852
      %v3954 = vadd.f32 %v3953, %v3856
      %v3955 = vadd.f32 %v3954, %v3860
      %v3956 = vadd.f32 %v3955, %v3864
      %v3957 = vadd.f32 %v3956, %v3868
      %v3958 = vadd.f32 %v3957, %v3872
      %v3959 = vadd.f32 %v3958, %v3876
      %v3960 = vadd.f32 %v3959, %v3880
      %v3961 = vadd.f32 %v3960, %v3884
      %v3962 = vadd.f32 %v3961, %v3888
      %v3963 = vadd.f32 %v3962, %v3892
      %v3964 = vadd.f32 %v3963, %v3896
      %v3965 = vrot.slane %v3964, 4
      %v3966 = vadd.f32 %v3964, %v3965
      %v3967 = vrot.slane %v3966, 2
      %v3968 = vadd.f32 %v3966, %v3967
      %v3969 = vrot.slane %v3968, 1
      %v3970 = vadd.f32 %v3968, %v3969
      %v3971 = vrcp.pop %v3933
      %v3972 = vrcp.pop %v3970
      %v3973 = vpack.c.bf16 %v3772, %v3770
      %v3974 = vpack.c.bf16 %v3776, %v3774
      %v3975 = vpack.c.bf16 %v3780, %v3778
      %v3976 = vpack.c.bf16 %v3784, %v3782
      %v3977 = vpack.c.bf16 %v3788, %v3786
      %v3978 = vpack.c.bf16 %v3792, %v3790
      %v3979 = vpack.c.bf16 %v3796, %v3794
      %v3980 = vpack.c.bf16 %v3800, %v3798
      %v3981 = vpack.c.bf16 %v3804, %v3802
      %v3982 = vpack.c.bf16 %v3808, %v3806
      %v3983 = vpack.c.bf16 %v3812, %v3810
      %v3984 = vpack.c.bf16 %v3816, %v3814
      %v3985 = vpack.c.bf16 %v3820, %v3818
      %v3986 = vpack.c.bf16 %v3824, %v3822
      %v3987 = vpack.c.bf16 %v3828, %v3826
      %v3988 = vpack.c.bf16 %v3832, %v3830
      %v3989 = vpack.c.bf16 %v3836, %v3834
      %v3990 = vpack.c.bf16 %v3840, %v3838
      %v3991 = vpack.c.bf16 %v3844, %v3842
      %v3992 = vpack.c.bf16 %v3848, %v3846
      %v3993 = vpack.c.bf16 %v3852, %v3850
      %v3994 = vpack.c.bf16 %v3856, %v3854
      %v3995 = vpack.c.bf16 %v3860, %v3858
      %v3996 = vpack.c.bf16 %v3864, %v3862
      %v3997 = vpack.c.bf16 %v3868, %v3866
      %v3998 = vpack.c.bf16 %v3872, %v3870
      %v3999 = vpack.c.bf16 %v3876, %v3874
      %v4000 = vpack.c.bf16 %v3880, %v3878
      %v4001 = vpack.c.bf16 %v3884, %v3882
      %v4002 = vpack.c.bf16 %v3888, %v3886
      %v4003 = vpack.c.bf16 %v3892, %v3890
      %v4004 = vpack.c.bf16 %v3896, %v3894
      %4005 = vmatpush.bf16.msra.mxu0 0
      %4006 = vmatpush.bf16.msra.mxu0 0
      %4007 = vmatpush.bf16.msra.mxu0 0
      %4008 = vmatpush.bf16.msra.mxu0 0
      %4009 = vmatpush.bf16.msra.mxu0 0
      %4010 = vmatpush.bf16.msra.mxu0 0
      %4011 = vmatpush.bf16.msra.mxu0 0
      %4012 = vmatpush.bf16.msra.mxu0 %v2896
      %4013 = vmatmul.bf16.gmra.mxu0 %v1630
      %v4014 = vpop.f32.mrf.mxu0
      %v4015 = vadd.f32 0.0, %v4014
      %v4016 = vpop.f32.mrf.mxu0
      %v4017 = vadd.f32 0.0, %v4016
      %4018 = vmatmul.bf16.gmra.mxu0 %v1633
      %v4019 = vpop.f32.mrf.mxu0
      %v4020 = vadd.f32 0.0, %v4019
      %v4021 = vpop.f32.mrf.mxu0
      %v4022 = vadd.f32 0.0, %v4021
      %4023 = vmatmul.bf16.gmra.mxu0 %v1636
      %v4024 = vpop.f32.mrf.mxu0
      %v4025 = vadd.f32 0.0, %v4024
      %v4026 = vpop.f32.mrf.mxu0
      %v4027 = vadd.f32 0.0, %v4026
      %4028 = vmatmul.bf16.gmra.mxu0 %v1639
      %v4029 = vpop.f32.mrf.mxu0
      %v4030 = vadd.f32 0.0, %v4029
      %v4031 = vpop.f32.mrf.mxu0
      %v4032 = vadd.f32 0.0, %v4031
      %4033 = vmatmul.bf16.gmra.mxu0 %v1642
      %v4034 = vpop.f32.mrf.mxu0
      %v4035 = vadd.f32 0.0, %v4034
      %v4036 = vpop.f32.mrf.mxu0
      %v4037 = vadd.f32 0.0, %v4036
      %4038 = vmatmul.bf16.gmra.mxu0 %v1645
      %v4039 = vpop.f32.mrf.mxu0
      %v4040 = vadd.f32 0.0, %v4039
      %v4041 = vpop.f32.mrf.mxu0
      %v4042 = vadd.f32 0.0, %v4041
      %4043 = vmatmul.bf16.gmra.mxu0 %v1648
      %v4044 = vpop.f32.mrf.mxu0
      %v4045 = vadd.f32 0.0, %v4044
      %v4046 = vpop.f32.mrf.mxu0
      %v4047 = vadd.f32 0.0, %v4046
      %4048 = vmatmul.bf16.gmra.mxu0 %v1651
      %v4049 = vpop.f32.mrf.mxu0
      %v4050 = vadd.f32 0.0, %v4049
      %v4051 = vpop.f32.mrf.mxu0
      %v4052 = vadd.f32 0.0, %v4051
      %4053 = vmatmul.bf16.gmra.mxu0 %v1654
      %v4054 = vpop.f32.mrf.mxu0
      %v4055 = vadd.f32 0.0, %v4054
      %v4056 = vpop.f32.mrf.mxu0
      %v4057 = vadd.f32 0.0, %v4056
      %4058 = vmatmul.bf16.gmra.mxu0 %v1657
      %v4059 = vpop.f32.mrf.mxu0
      %v4060 = vadd.f32 0.0, %v4059
      %v4061 = vpop.f32.mrf.mxu0
      %v4062 = vadd.f32 0.0, %v4061
      %4063 = vmatmul.bf16.gmra.mxu0 %v1660
      %v4064 = vpop.f32.mrf.mxu0
      %v4065 = vadd.f32 0.0, %v4064
      %v4066 = vpop.f32.mrf.mxu0
      %v4067 = vadd.f32 0.0, %v4066
      %4068 = vmatmul.bf16.gmra.mxu0 %v1663
      %v4069 = vpop.f32.mrf.mxu0
      %v4070 = vadd.f32 0.0, %v4069
      %v4071 = vpop.f32.mrf.mxu0
      %v4072 = vadd.f32 0.0, %v4071
      %4073 = vmatmul.bf16.gmra.mxu0 %v1666
      %v4074 = vpop.f32.mrf.mxu0
      %v4075 = vadd.f32 0.0, %v4074
      %v4076 = vpop.f32.mrf.mxu0
      %v4077 = vadd.f32 0.0, %v4076
      %4078 = vmatmul.bf16.gmra.mxu0 %v1669
      %v4079 = vpop.f32.mrf.mxu0
      %v4080 = vadd.f32 0.0, %v4079
      %v4081 = vpop.f32.mrf.mxu0
      %v4082 = vadd.f32 0.0, %v4081
      %4083 = vmatmul.bf16.gmra.mxu0 %v1672
      %v4084 = vpop.f32.mrf.mxu0
      %v4085 = vadd.f32 0.0, %v4084
      %v4086 = vpop.f32.mrf.mxu0
      %v4087 = vadd.f32 0.0, %v4086
      %4088 = vmatmul.bf16.gmra.mxu0 %v1675
      %v4089 = vpop.f32.mrf.mxu0
      %v4090 = vadd.f32 0.0, %v4089
      %v4091 = vpop.f32.mrf.mxu0
      %v4092 = vadd.f32 0.0, %v4091
      %4093 = vdwg.mxu0
      %4094 = vmatpush.bf16.msra.mxu0 0
      %4095 = vmatpush.bf16.msra.mxu0 0
      %4096 = vmatpush.bf16.msra.mxu0 0
      %4097 = vmatpush.bf16.msra.mxu0 0
      %4098 = vmatpush.bf16.msra.mxu0 0
      %4099 = vmatpush.bf16.msra.mxu0 0
      %4100 = vmatpush.bf16.msra.mxu0 0
      %4101 = vmatpush.bf16.msra.mxu0 %v2899
      %4102 = vmatmul.bf16.gmra.mxu0 %v1630
      %v4103 = vpop.f32.mrf.mxu0
      %v4104 = vadd.f32 0.0, %v4103
      %v4105 = vpop.f32.mrf.mxu0
      %v4106 = vadd.f32 0.0, %v4105
      %4107 = vmatmul.bf16.gmra.mxu0 %v1633
      %v4108 = vpop.f32.mrf.mxu0
      %v4109 = vadd.f32 0.0, %v4108
      %v4110 = vpop.f32.mrf.mxu0
      %v4111 = vadd.f32 0.0, %v4110
      %4112 = vmatmul.bf16.gmra.mxu0 %v1636
      %v4113 = vpop.f32.mrf.mxu0
      %v4114 = vadd.f32 0.0, %v4113
      %v4115 = vpop.f32.mrf.mxu0
      %v4116 = vadd.f32 0.0, %v4115
      %4117 = vmatmul.bf16.gmra.mxu0 %v1639
      %v4118 = vpop.f32.mrf.mxu0
      %v4119 = vadd.f32 0.0, %v4118
      %v4120 = vpop.f32.mrf.mxu0
      %v4121 = vadd.f32 0.0, %v4120
      %4122 = vmatmul.bf16.gmra.mxu0 %v1642
      %v4123 = vpop.f32.mrf.mxu0
      %v4124 = vadd.f32 0.0, %v4123
      %v4125 = vpop.f32.mrf.mxu0
      %v4126 = vadd.f32 0.0, %v4125
      %4127 = vmatmul.bf16.gmra.mxu0 %v1645
      %v4128 = vpop.f32.mrf.mxu0
      %v4129 = vadd.f32 0.0, %v4128
      %v4130 = vpop.f32.mrf.mxu0
      %v4131 = vadd.f32 0.0, %v4130
      %4132 = vmatmul.bf16.gmra.mxu0 %v1648
      %v4133 = vpop.f32.mrf.mxu0
      %v4134 = vadd.f32 0.0, %v4133
      %v4135 = vpop.f32.mrf.mxu0
      %v4136 = vadd.f32 0.0, %v4135
      %4137 = vmatmul.bf16.gmra.mxu0 %v1651
      %v4138 = vpop.f32.mrf.mxu0
      %v4139 = vadd.f32 0.0, %v4138
      %v4140 = vpop.f32.mrf.mxu0
      %v4141 = vadd.f32 0.0, %v4140
      %4142 = vmatmul.bf16.gmra.mxu0 %v1654
      %v4143 = vpop.f32.mrf.mxu0
      %v4144 = vadd.f32 0.0, %v4143
      %v4145 = vpop.f32.mrf.mxu0
      %v4146 = vadd.f32 0.0, %v4145
      %4147 = vmatmul.bf16.gmra.mxu0 %v1657
      %v4148 = vpop.f32.mrf.mxu0
      %v4149 = vadd.f32 0.0, %v4148
      %v4150 = vpop.f32.mrf.mxu0
      %v4151 = vadd.f32 0.0, %v4150
      %4152 = vmatmul.bf16.gmra.mxu0 %v1660
      %v4153 = vpop.f32.mrf.mxu0
      %v4154 = vadd.f32 0.0, %v4153
      %v4155 = vpop.f32.mrf.mxu0
      %v4156 = vadd.f32 0.0, %v4155
      %4157 = vmatmul.bf16.gmra.mxu0 %v1663
      %v4158 = vpop.f32.mrf.mxu0
      %v4159 = vadd.f32 0.0, %v4158
      %v4160 = vpop.f32.mrf.mxu0
      %v4161 = vadd.f32 0.0, %v4160
      %4162 = vmatmul.bf16.gmra.mxu0 %v1666
      %v4163 = vpop.f32.mrf.mxu0
      %v4164 = vadd.f32 0.0, %v4163
      %v4165 = vpop.f32.mrf.mxu0
      %v4166 = vadd.f32 0.0, %v4165
      %4167 = vmatmul.bf16.gmra.mxu0 %v1669
      %v4168 = vpop.f32.mrf.mxu0
      %v4169 = vadd.f32 0.0, %v4168
      %v4170 = vpop.f32.mrf.mxu0
      %v4171 = vadd.f32 0.0, %v4170
      %4172 = vmatmul.bf16.gmra.mxu0 %v1672
      %v4173 = vpop.f32.mrf.mxu0
      %v4174 = vadd.f32 0.0, %v4173
      %v4175 = vpop.f32.mrf.mxu0
      %v4176 = vadd.f32 0.0, %v4175
      %4177 = vmatmul.bf16.gmra.mxu0 %v1675
      %v4178 = vpop.f32.mrf.mxu0
      %v4179 = vadd.f32 0.0, %v4178
      %v4180 = vpop.f32.mrf.mxu0
      %v4181 = vadd.f32 0.0, %v4180
      %4182 = vdwg.mxu0
      %v4183 = vmax.f32 %v4015, %v4020
      %v4184 = vmax.f32 %v4017, %v4022
      %v4185 = vmax.f32 %v4183, %v4025
      %v4186 = vmax.f32 %v4184, %v4027
      %v4187 = vmax.f32 %v4185, %v4030
      %v4188 = vmax.f32 %v4186, %v4032
      %v4189 = vmax.f32 %v4187, %v4035
      %v4190 = vmax.f32 %v4188, %v4037
      %v4191 = vmax.f32 %v4189, %v4040
      %v4192 = vmax.f32 %v4190, %v4042
      %v4193 = vmax.f32 %v4191, %v4045
      %v4194 = vmax.f32 %v4192, %v4047
      %v4195 = vmax.f32 %v4193, %v4050
      %v4196 = vmax.f32 %v4194, %v4052
      %v4197 = vmax.f32 %v4195, %v4055
      %v4198 = vmax.f32 %v4196, %v4057
      %v4199 = vmax.f32 %v4197, %v4060
      %v4200 = vmax.f32 %v4198, %v4062
      %v4201 = vmax.f32 %v4199, %v4065
      %v4202 = vmax.f32 %v4200, %v4067
      %v4203 = vmax.f32 %v4201, %v4070
      %v4204 = vmax.f32 %v4202, %v4072
      %v4205 = vmax.f32 %v4203, %v4075
      %v4206 = vmax.f32 %v4204, %v4077
      %v4207 = vmax.f32 %v4205, %v4080
      %v4208 = vmax.f32 %v4206, %v4082
      %v4209 = vmax.f32 %v4207, %v4085
      %v4210 = vmax.f32 %v4208, %v4087
      %v4211 = vmax.f32 %v4209, %v4090
      %v4212 = vmax.f32 %v4210, %v4092
      %v4213 = vmax.f32 %v4211, %v4212
      %v4214 = vrot.slane %v4213, 4
      %v4215 = vmax.f32 %v4213, %v4214
      %v4216 = vrot.slane %v4215, 2
      %v4217 = vmax.f32 %v4215, %v4216
      %v4218 = vrot.slane %v4217, 1
      %v4219 = vmax.f32 %v4217, %v4218
      %v4220 = vmax.f32 %v4104, %v4109
      %v4221 = vmax.f32 %v4106, %v4111
      %v4222 = vmax.f32 %v4220, %v4114
      %v4223 = vmax.f32 %v4221, %v4116
      %v4224 = vmax.f32 %v4222, %v4119
      %v4225 = vmax.f32 %v4223, %v4121
      %v4226 = vmax.f32 %v4224, %v4124
      %v4227 = vmax.f32 %v4225, %v4126
      %v4228 = vmax.f32 %v4226, %v4129
      %v4229 = vmax.f32 %v4227, %v4131
      %v4230 = vmax.f32 %v4228, %v4134
      %v4231 = vmax.f32 %v4229, %v4136
      %v4232 = vmax.f32 %v4230, %v4139
      %v4233 = vmax.f32 %v4231, %v4141
      %v4234 = vmax.f32 %v4232, %v4144
      %v4235 = vmax.f32 %v4233, %v4146
      %v4236 = vmax.f32 %v4234, %v4149
      %v4237 = vmax.f32 %v4235, %v4151
      %v4238 = vmax.f32 %v4236, %v4154
      %v4239 = vmax.f32 %v4237, %v4156
      %v4240 = vmax.f32 %v4238, %v4159
      %v4241 = vmax.f32 %v4239, %v4161
      %v4242 = vmax.f32 %v4240, %v4164
      %v4243 = vmax.f32 %v4241, %v4166
      %v4244 = vmax.f32 %v4242, %v4169
      %v4245 = vmax.f32 %v4243, %v4171
      %v4246 = vmax.f32 %v4244, %v4174
      %v4247 = vmax.f32 %v4245, %v4176
      %v4248 = vmax.f32 %v4246, %v4179
      %v4249 = vmax.f32 %v4247, %v4181
      %v4250 = vmax.f32 %v4248, %v4249
      %v4251 = vrot.slane %v4250, 4
      %v4252 = vmax.f32 %v4250, %v4251
      %v4253 = vrot.slane %v4252, 2
      %v4254 = vmax.f32 %v4252, %v4253
      %v4255 = vrot.slane %v4254, 1
      %v4256 = vmax.f32 %v4254, %v4255
      %v4257 = vsub.f32 %v4015, %v4219
      %v4258 = vsub.f32 %v4104, %v4256
      %v4259 = vsub.f32 %v4017, %v4219
      %v4260 = vsub.f32 %v4106, %v4256
      %v4261 = vsub.f32 %v4020, %v4219
      %v4262 = vsub.f32 %v4109, %v4256
      %v4263 = vsub.f32 %v4022, %v4219
      %v4264 = vsub.f32 %v4111, %v4256
      %v4265 = vsub.f32 %v4025, %v4219
      %v4266 = vsub.f32 %v4114, %v4256
      %v4267 = vsub.f32 %v4027, %v4219
      %v4268 = vsub.f32 %v4116, %v4256
      %v4269 = vsub.f32 %v4030, %v4219
      %v4270 = vsub.f32 %v4119, %v4256
      %v4271 = vsub.f32 %v4032, %v4219
      %v4272 = vsub.f32 %v4121, %v4256
      %v4273 = vsub.f32 %v4035, %v4219
      %v4274 = vsub.f32 %v4124, %v4256
      %v4275 = vsub.f32 %v4037, %v4219
      %v4276 = vsub.f32 %v4126, %v4256
      %v4277 = vsub.f32 %v4040, %v4219
      %v4278 = vsub.f32 %v4129, %v4256
      %v4279 = vsub.f32 %v4042, %v4219
      %v4280 = vsub.f32 %v4131, %v4256
      %v4281 = vsub.f32 %v4045, %v4219
      %v4282 = vsub.f32 %v4134, %v4256
      %v4283 = vsub.f32 %v4047, %v4219
      %v4284 = vsub.f32 %v4136, %v4256
      %v4285 = vsub.f32 %v4050, %v4219
      %v4286 = vsub.f32 %v4139, %v4256
      %v4287 = vsub.f32 %v4052, %v4219
      %v4288 = vsub.f32 %v4141, %v4256
      %v4289 = vsub.f32 %v4055, %v4219
      %v4290 = vsub.f32 %v4144, %v4256
      %v4291 = vsub.f32 %v4057, %v4219
      %v4292 = vsub.f32 %v4146, %v4256
      %v4293 = vsub.f32 %v4060, %v4219
      %v4294 = vsub.f32 %v4149, %v4256
      %v4295 = vsub.f32 %v4062, %v4219
      %v4296 = vsub.f32 %v4151, %v4256
      %v4297 = vsub.f32 %v4065, %v4219
      %v4298 = vsub.f32 %v4154, %v4256
      %v4299 = vsub.f32 %v4067, %v4219
      %v4300 = vsub.f32 %v4156, %v4256
      %v4301 = vsub.f32 %v4070, %v4219
      %v4302 = vsub.f32 %v4159, %v4256
      %v4303 = vsub.f32 %v4072, %v4219
      %v4304 = vsub.f32 %v4161, %v4256
      %v4305 = vsub.f32 %v4075, %v4219
      %v4306 = vsub.f32 %v4164, %v4256
      %v4307 = vsub.f32 %v4077, %v4219
      %v4308 = vsub.f32 %v4166, %v4256
      %v4309 = vsub.f32 %v4080, %v4219
      %v4310 = vsub.f32 %v4169, %v4256
      %v4311 = vsub.f32 %v4082, %v4219
      %v4312 = vsub.f32 %v4171, %v4256
      %v4313 = vsub.f32 %v4085, %v4219
      %v4314 = vsub.f32 %v4174, %v4256
      %v4315 = vsub.f32 %v4087, %v4219
      %v4316 = vsub.f32 %v4176, %v4256
      %v4317 = vsub.f32 %v4090, %v4219
      %v4318 = vsub.f32 %v4179, %v4256
      %v4319 = vsub.f32 %v4092, %v4219
      %v4320 = vsub.f32 %v4181, %v4256
      %v4321 = vmul.f32 %v4257, 1.442695
      %v4322 = vpow.pop %v4321
      %v4323 = vmul.f32 %v4258, 1.442695
      %v4324 = vpow.pop %v4323
      %v4325 = vmul.f32 %v4259, 1.442695
      %v4326 = vpow.pop %v4325
      %v4327 = vmul.f32 %v4260, 1.442695
      %v4328 = vpow.pop %v4327
      %v4329 = vmul.f32 %v4261, 1.442695
      %v4330 = vpow.pop %v4329
      %v4331 = vmul.f32 %v4262, 1.442695
      %v4332 = vpow.pop %v4331
      %v4333 = vmul.f32 %v4263, 1.442695
      %v4334 = vpow.pop %v4333
      %v4335 = vmul.f32 %v4264, 1.442695
      %v4336 = vpow.pop %v4335
      %v4337 = vmul.f32 %v4265, 1.442695
      %v4338 = vpow.pop %v4337
      %v4339 = vmul.f32 %v4266, 1.442695
      %v4340 = vpow.pop %v4339
      %v4341 = vmul.f32 %v4267, 1.442695
      %v4342 = vpow.pop %v4341
      %v4343 = vmul.f32 %v4268, 1.442695
      %v4344 = vpow.pop %v4343
      %v4345 = vmul.f32 %v4269, 1.442695
      %v4346 = vpow.pop %v4345
      %v4347 = vmul.f32 %v4270, 1.442695
      %v4348 = vpow.pop %v4347
      %v4349 = vmul.f32 %v4271, 1.442695
      %v4350 = vpow.pop %v4349
      %v4351 = vmul.f32 %v4272, 1.442695
      %v4352 = vpow.pop %v4351
      %v4353 = vmul.f32 %v4273, 1.442695
      %v4354 = vpow.pop %v4353
      %v4355 = vmul.f32 %v4274, 1.442695
      %v4356 = vpow.pop %v4355
      %v4357 = vmul.f32 %v4275, 1.442695
      %v4358 = vpow.pop %v4357
      %v4359 = vmul.f32 %v4276, 1.442695
      %v4360 = vpow.pop %v4359
      %v4361 = vmul.f32 %v4277, 1.442695
      %v4362 = vpow.pop %v4361
      %v4363 = vmul.f32 %v4278, 1.442695
      %v4364 = vpow.pop %v4363
      %v4365 = vmul.f32 %v4279, 1.442695
      %v4366 = vpow.pop %v4365
      %v4367 = vmul.f32 %v4280, 1.442695
      %v4368 = vpow.pop %v4367
      %v4369 = vmul.f32 %v4281, 1.442695
      %v4370 = vpow.pop %v4369
      %v4371 = vmul.f32 %v4282, 1.442695
      %v4372 = vpow.pop %v4371
      %v4373 = vmul.f32 %v4283, 1.442695
      %v4374 = vpow.pop %v4373
      %v4375 = vmul.f32 %v4284, 1.442695
      %v4376 = vpow.pop %v4375
      %v4377 = vmul.f32 %v4285, 1.442695
      %v4378 = vpow.pop %v4377
      %v4379 = vmul.f32 %v4286, 1.442695
      %v4380 = vpow.pop %v4379
      %v4381 = vmul.f32 %v4287, 1.442695
      %v4382 = vpow.pop %v4381
      %v4383 = vmul.f32 %v4288, 1.442695
      %v4384 = vpow.pop %v4383
      %v4385 = vmul.f32 %v4289, 1.442695
      %v4386 = vpow.pop %v4385
      %v4387 = vmul.f32 %v4290, 1.442695
      %v4388 = vpow.pop %v4387
      %v4389 = vmul.f32 %v4291, 1.442695
      %v4390 = vpow.pop %v4389
      %v4391 = vmul.f32 %v4292, 1.442695
      %v4392 = vpow.pop %v4391
      %v4393 = vmul.f32 %v4293, 1.442695
      %v4394 = vpow.pop %v4393
      %v4395 = vmul.f32 %v4294, 1.442695
      %v4396 = vpow.pop %v4395
      %v4397 = vmul.f32 %v4295, 1.442695
      %v4398 = vpow.pop %v4397
      %v4399 = vmul.f32 %v4296, 1.442695
      %v4400 = vpow.pop %v4399
      %v4401 = vmul.f32 %v4297, 1.442695
      %v4402 = vpow.pop %v4401
      %v4403 = vmul.f32 %v4298, 1.442695
      %v4404 = vpow.pop %v4403
      %v4405 = vmul.f32 %v4299, 1.442695
      %v4406 = vpow.pop %v4405
      %v4407 = vmul.f32 %v4300, 1.442695
      %v4408 = vpow.pop %v4407
      %v4409 = vmul.f32 %v4301, 1.442695
      %v4410 = vpow.pop %v4409
      %v4411 = vmul.f32 %v4302, 1.442695
      %v4412 = vpow.pop %v4411
      %v4413 = vmul.f32 %v4303, 1.442695
      %v4414 = vpow.pop %v4413
      %v4415 = vmul.f32 %v4304, 1.442695
      %v4416 = vpow.pop %v4415
      %v4417 = vmul.f32 %v4305, 1.442695
      %v4418 = vpow.pop %v4417
      %v4419 = vmul.f32 %v4306, 1.442695
      %v4420 = vpow.pop %v4419
      %v4421 = vmul.f32 %v4307, 1.442695
      %v4422 = vpow.pop %v4421
      %v4423 = vmul.f32 %v4308, 1.442695
      %v4424 = vpow.pop %v4423
      %v4425 = vmul.f32 %v4309, 1.442695
      %v4426 = vpow.pop %v4425
      %v4427 = vmul.f32 %v4310, 1.442695
      %v4428 = vpow.pop %v4427
      %v4429 = vmul.f32 %v4311, 1.442695
      %v4430 = vpow.pop %v4429
      %v4431 = vmul.f32 %v4312, 1.442695
      %v4432 = vpow.pop %v4431
      %v4433 = vmul.f32 %v4313, 1.442695
      %v4434 = vpow.pop %v4433
      %v4435 = vmul.f32 %v4314, 1.442695
      %v4436 = vpow.pop %v4435
      %v4437 = vmul.f32 %v4315, 1.442695
      %v4438 = vpow.pop %v4437
      %v4439 = vmul.f32 %v4316, 1.442695
      %v4440 = vpow.pop %v4439
      %v4441 = vmul.f32 %v4317, 1.442695
      %v4442 = vpow.pop %v4441
      %v4443 = vmul.f32 %v4318, 1.442695
      %v4444 = vpow.pop %v4443
      %v4445 = vmul.f32 %v4319, 1.442695
      %v4446 = vpow.pop %v4445
      %v4447 = vmul.f32 %v4320, 1.442695
      %v4448 = vpow.pop %v4447
      %v4449 = vadd.f32 %v4322, %v4326
      %v4450 = vadd.f32 %v4449, %v4330
      %v4451 = vadd.f32 %v4450, %v4334
      %v4452 = vadd.f32 %v4451, %v4338
      %v4453 = vadd.f32 %v4452, %v4342
      %v4454 = vadd.f32 %v4453, %v4346
      %v4455 = vadd.f32 %v4454, %v4350
      %v4456 = vadd.f32 %v4455, %v4354
      %v4457 = vadd.f32 %v4456, %v4358
      %v4458 = vadd.f32 %v4457, %v4362
      %v4459 = vadd.f32 %v4458, %v4366
      %v4460 = vadd.f32 %v4459, %v4370
      %v4461 = vadd.f32 %v4460, %v4374
      %v4462 = vadd.f32 %v4461, %v4378
      %v4463 = vadd.f32 %v4462, %v4382
      %v4464 = vadd.f32 %v4463, %v4386
      %v4465 = vadd.f32 %v4464, %v4390
      %v4466 = vadd.f32 %v4465, %v4394
      %v4467 = vadd.f32 %v4466, %v4398
      %v4468 = vadd.f32 %v4467, %v4402
      %v4469 = vadd.f32 %v4468, %v4406
      %v4470 = vadd.f32 %v4469, %v4410
      %v4471 = vadd.f32 %v4470, %v4414
      %v4472 = vadd.f32 %v4471, %v4418
      %v4473 = vadd.f32 %v4472, %v4422
      %v4474 = vadd.f32 %v4473, %v4426
      %v4475 = vadd.f32 %v4474, %v4430
      %v4476 = vadd.f32 %v4475, %v4434
      %v4477 = vadd.f32 %v4476, %v4438
      %v4478 = vadd.f32 %v4477, %v4442
      %v4479 = vadd.f32 %v4478, %v4446
      %v4480 = vrot.slane %v4479, 4
      %v4481 = vadd.f32 %v4479, %v4480
      %v4482 = vrot.slane %v4481, 2
      %v4483 = vadd.f32 %v4481, %v4482
      %v4484 = vrot.slane %v4483, 1
      %v4485 = vadd.f32 %v4483, %v4484
      %v4486 = vadd.f32 %v4324, %v4328
      %v4487 = vadd.f32 %v4486, %v4332
      %v4488 = vadd.f32 %v4487, %v4336
      %v4489 = vadd.f32 %v4488, %v4340
      %v4490 = vadd.f32 %v4489, %v4344
      %v4491 = vadd.f32 %v4490, %v4348
      %v4492 = vadd.f32 %v4491, %v4352
      %v4493 = vadd.f32 %v4492, %v4356
      %v4494 = vadd.f32 %v4493, %v4360
      %v4495 = vadd.f32 %v4494, %v4364
      %v4496 = vadd.f32 %v4495, %v4368
      %v4497 = vadd.f32 %v4496, %v4372
      %v4498 = vadd.f32 %v4497, %v4376
      %v4499 = vadd.f32 %v4498, %v4380
      %v4500 = vadd.f32 %v4499, %v4384
      %v4501 = vadd.f32 %v4500, %v4388
      %v4502 = vadd.f32 %v4501, %v4392
      %v4503 = vadd.f32 %v4502, %v4396
      %v4504 = vadd.f32 %v4503, %v4400
      %v4505 = vadd.f32 %v4504, %v4404
      %v4506 = vadd.f32 %v4505, %v4408
      %v4507 = vadd.f32 %v4506, %v4412
      %v4508 = vadd.f32 %v4507, %v4416
      %v4509 = vadd.f32 %v4508, %v4420
      %v4510 = vadd.f32 %v4509, %v4424
      %v4511 = vadd.f32 %v4510, %v4428
      %v4512 = vadd.f32 %v4511, %v4432
      %v4513 = vadd.f32 %v4512, %v4436
      %v4514 = vadd.f32 %v4513, %v4440
      %v4515 = vadd.f32 %v4514, %v4444
      %v4516 = vadd.f32 %v4515, %v4448
      %v4517 = vrot.slane %v4516, 4
      %v4518 = vadd.f32 %v4516, %v4517
      %v4519 = vrot.slane %v4518, 2
      %v4520 = vadd.f32 %v4518, %v4519
      %v4521 = vrot.slane %v4520, 1
      %v4522 = vadd.f32 %v4520, %v4521
      %v4523 = vrcp.pop %v4485
      %v4524 = vrcp.pop %v4522
      %v4525 = vpack.c.bf16 %v4324, %v4322
      %v4526 = vpack.c.bf16 %v4328, %v4326
      %v4527 = vpack.c.bf16 %v4332, %v4330
      %v4528 = vpack.c.bf16 %v4336, %v4334
      %v4529 = vpack.c.bf16 %v4340, %v4338
      %v4530 = vpack.c.bf16 %v4344, %v4342
      %v4531 = vpack.c.bf16 %v4348, %v4346
      %v4532 = vpack.c.bf16 %v4352, %v4350
      %v4533 = vpack.c.bf16 %v4356, %v4354
      %v4534 = vpack.c.bf16 %v4360, %v4358
      %v4535 = vpack.c.bf16 %v4364, %v4362
      %v4536 = vpack.c.bf16 %v4368, %v4366
      %v4537 = vpack.c.bf16 %v4372, %v4370
      %v4538 = vpack.c.bf16 %v4376, %v4374
      %v4539 = vpack.c.bf16 %v4380, %v4378
      %v4540 = vpack.c.bf16 %v4384, %v4382
      %v4541 = vpack.c.bf16 %v4388, %v4386
      %v4542 = vpack.c.bf16 %v4392, %v4390
      %v4543 = vpack.c.bf16 %v4396, %v4394
      %v4544 = vpack.c.bf16 %v4400, %v4398
      %v4545 = vpack.c.bf16 %v4404, %v4402
      %v4546 = vpack.c.bf16 %v4408, %v4406
      %v4547 = vpack.c.bf16 %v4412, %v4410
      %v4548 = vpack.c.bf16 %v4416, %v4414
      %v4549 = vpack.c.bf16 %v4420, %v4418
      %v4550 = vpack.c.bf16 %v4424, %v4422
      %v4551 = vpack.c.bf16 %v4428, %v4426
      %v4552 = vpack.c.bf16 %v4432, %v4430
      %v4553 = vpack.c.bf16 %v4436, %v4434
      %v4554 = vpack.c.bf16 %v4440, %v4438
      %v4555 = vpack.c.bf16 %v4444, %v4442
      %v4556 = vpack.c.bf16 %v4448, %v4446
      %v4589 = vunpack.c.l.b16 %v3421
      %v4590 = vunpack.c.h.b16 %v3421
      %v4591 = vunpack.c.l.b16 %v3422
      %v4592 = vunpack.c.h.b16 %v3422
      %v4593 = vunpack.c.l.b16 %v3423
      %v4594 = vunpack.c.h.b16 %v3423
      %v4595 = vunpack.c.l.b16 %v3424
      %v4596 = vunpack.c.h.b16 %v3424
      %v4597 = vunpack.c.l.b16 %v3425
      %v4598 = vunpack.c.h.b16 %v3425
      %v4599 = vunpack.c.l.b16 %v3426
      %v4600 = vunpack.c.h.b16 %v3426
      %v4601 = vunpack.c.l.b16 %v3427
      %v4602 = vunpack.c.h.b16 %v3427
      %v4603 = vunpack.c.l.b16 %v3428
      %v4604 = vunpack.c.h.b16 %v3428
      %v4605 = vunpack.c.l.b16 %v3429
      %v4606 = vunpack.c.h.b16 %v3429
      %v4607 = vunpack.c.l.b16 %v3430
      %v4608 = vunpack.c.h.b16 %v3430
      %v4609 = vunpack.c.l.b16 %v3431
      %v4610 = vunpack.c.h.b16 %v3431
      %v4611 = vunpack.c.l.b16 %v3432
      %v4612 = vunpack.c.h.b16 %v3432
      %v4613 = vunpack.c.l.b16 %v3433
      %v4614 = vunpack.c.h.b16 %v3433
      %v4615 = vunpack.c.l.b16 %v3434
      %v4616 = vunpack.c.h.b16 %v3434
      %v4617 = vunpack.c.l.b16 %v3435
      %v4618 = vunpack.c.h.b16 %v3435
      %v4619 = vunpack.c.l.b16 %v3436
      %v4620 = vunpack.c.h.b16 %v3436
      %v4621 = vunpack.c.l.b16 %v3437
      %v4622 = vunpack.c.h.b16 %v3437
      %v4623 = vunpack.c.l.b16 %v3438
      %v4624 = vunpack.c.h.b16 %v3438
      %v4625 = vunpack.c.l.b16 %v3439
      %v4626 = vunpack.c.h.b16 %v3439
      %v4627 = vunpack.c.l.b16 %v3440
      %v4628 = vunpack.c.h.b16 %v3440
      %v4629 = vunpack.c.l.b16 %v3441
      %v4630 = vunpack.c.h.b16 %v3441
      %v4631 = vunpack.c.l.b16 %v3442
      %v4632 = vunpack.c.h.b16 %v3442
      %v4633 = vunpack.c.l.b16 %v3443
      %v4634 = vunpack.c.h.b16 %v3443
      %v4635 = vunpack.c.l.b16 %v3444
      %v4636 = vunpack.c.h.b16 %v3444
      %v4637 = vunpack.c.l.b16 %v3445
      %v4638 = vunpack.c.h.b16 %v3445
      %v4639 = vunpack.c.l.b16 %v3446
      %v4640 = vunpack.c.h.b16 %v3446
      %v4641 = vunpack.c.l.b16 %v3447
      %v4642 = vunpack.c.h.b16 %v3447
      %v4643 = vunpack.c.l.b16 %v3448
      %v4644 = vunpack.c.h.b16 %v3448
      %v4645 = vunpack.c.l.b16 %v3449
      %v4646 = vunpack.c.h.b16 %v3449
      %v4647 = vunpack.c.l.b16 %v3450
      %v4648 = vunpack.c.h.b16 %v3450
      %v4649 = vunpack.c.l.b16 %v3451
      %v4650 = vunpack.c.h.b16 %v3451
      %v4651 = vunpack.c.l.b16 %v3452
      %v4652 = vunpack.c.h.b16 %v3452
      %v4653 = vpack.c.b16 %v4591, %v4589
      %v4654 = vpack.c.b16 %v4592, %v4590
      %v4655 = vpack.c.b16 %v4595, %v4593
      %v4656 = vpack.c.b16 %v4596, %v4594
      %v4657 = vpack.c.b16 %v4599, %v4597
      %v4658 = vpack.c.b16 %v4600, %v4598
      %v4659 = vpack.c.b16 %v4603, %v4601
      %v4660 = vpack.c.b16 %v4604, %v4602
      %v4661 = vpack.c.b16 %v4607, %v4605
      %v4662 = vpack.c.b16 %v4608, %v4606
      %v4663 = vpack.c.b16 %v4611, %v4609
      %v4664 = vpack.c.b16 %v4612, %v4610
      %v4665 = vpack.c.b16 %v4615, %v4613
      %v4666 = vpack.c.b16 %v4616, %v4614
      %v4667 = vpack.c.b16 %v4619, %v4617
      %v4668 = vpack.c.b16 %v4620, %v4618
      %v4669 = vpack.c.b16 %v4623, %v4621
      %v4670 = vpack.c.b16 %v4624, %v4622
      %v4671 = vpack.c.b16 %v4627, %v4625
      %v4672 = vpack.c.b16 %v4628, %v4626
      %v4673 = vpack.c.b16 %v4631, %v4629
      %v4674 = vpack.c.b16 %v4632, %v4630
      %v4675 = vpack.c.b16 %v4635, %v4633
      %v4676 = vpack.c.b16 %v4636, %v4634
      %v4677 = vpack.c.b16 %v4639, %v4637
      %v4678 = vpack.c.b16 %v4640, %v4638
      %v4679 = vpack.c.b16 %v4643, %v4641
      %v4680 = vpack.c.b16 %v4644, %v4642
      %v4681 = vpack.c.b16 %v4647, %v4645
      %v4682 = vpack.c.b16 %v4648, %v4646
      %v4683 = vpack.c.b16 %v4651, %v4649
      %v4684 = vpack.c.b16 %v4652, %v4650
      %v4749 = vunpack.c.l.b16 %v3973
      %v4750 = vunpack.c.h.b16 %v3973
      %v4751 = vunpack.c.l.b16 %v3974
      %v4752 = vunpack.c.h.b16 %v3974
      %v4753 = vunpack.c.l.b16 %v3975
      %v4754 = vunpack.c.h.b16 %v3975
      %v4755 = vunpack.c.l.b16 %v3976
      %v4756 = vunpack.c.h.b16 %v3976
      %v4757 = vunpack.c.l.b16 %v3977
      %v4758 = vunpack.c.h.b16 %v3977
      %v4759 = vunpack.c.l.b16 %v3978
      %v4760 = vunpack.c.h.b16 %v3978
      %v4761 = vunpack.c.l.b16 %v3979
      %v4762 = vunpack.c.h.b16 %v3979
      %v4763 = vunpack.c.l.b16 %v3980
      %v4764 = vunpack.c.h.b16 %v3980
      %v4765 = vunpack.c.l.b16 %v3981
      %v4766 = vunpack.c.h.b16 %v3981
      %v4767 = vunpack.c.l.b16 %v3982
      %v4768 = vunpack.c.h.b16 %v3982
      %v4769 = vunpack.c.l.b16 %v3983
      %v4770 = vunpack.c.h.b16 %v3983
      %v4771 = vunpack.c.l.b16 %v3984
      %v4772 = vunpack.c.h.b16 %v3984
      %v4773 = vunpack.c.l.b16 %v3985
      %v4774 = vunpack.c.h.b16 %v3985
      %v4775 = vunpack.c.l.b16 %v3986
      %v4776 = vunpack.c.h.b16 %v3986
      %v4777 = vunpack.c.l.b16 %v3987
      %v4778 = vunpack.c.h.b16 %v3987
      %v4779 = vunpack.c.l.b16 %v3988
      %v4780 = vunpack.c.h.b16 %v3988
      %v4781 = vunpack.c.l.b16 %v3989
      %v4782 = vunpack.c.h.b16 %v3989
      %v4783 = vunpack.c.l.b16 %v3990
      %v4784 = vunpack.c.h.b16 %v3990
      %v4785 = vunpack.c.l.b16 %v3991
      %v4786 = vunpack.c.h.b16 %v3991
      %v4787 = vunpack.c.l.b16 %v3992
      %v4788 = vunpack.c.h.b16 %v3992
      %v4789 = vunpack.c.l.b16 %v3993
      %v4790 = vunpack.c.h.b16 %v3993
      %v4791 = vunpack.c.l.b16 %v3994
      %v4792 = vunpack.c.h.b16 %v3994
      %v4793 = vunpack.c.l.b16 %v3995
      %v4794 = vunpack.c.h.b16 %v3995
      %v4795 = vunpack.c.l.b16 %v3996
      %v4796 = vunpack.c.h.b16 %v3996
      %v4797 = vunpack.c.l.b16 %v3997
      %v4798 = vunpack.c.h.b16 %v3997
      %v4799 = vunpack.c.l.b16 %v3998
      %v4800 = vunpack.c.h.b16 %v3998
      %v4801 = vunpack.c.l.b16 %v3999
      %v4802 = vunpack.c.h.b16 %v3999
      %v4803 = vunpack.c.l.b16 %v4000
      %v4804 = vunpack.c.h.b16 %v4000
      %v4805 = vunpack.c.l.b16 %v4001
      %v4806 = vunpack.c.h.b16 %v4001
      %v4807 = vunpack.c.l.b16 %v4002
      %v4808 = vunpack.c.h.b16 %v4002
      %v4809 = vunpack.c.l.b16 %v4003
      %v4810 = vunpack.c.h.b16 %v4003
      %v4811 = vunpack.c.l.b16 %v4004
      %v4812 = vunpack.c.h.b16 %v4004
      %v4813 = vpack.c.b16 %v4751, %v4749
      %v4814 = vpack.c.b16 %v4752, %v4750
      %v4815 = vpack.c.b16 %v4755, %v4753
      %v4816 = vpack.c.b16 %v4756, %v4754
      %v4817 = vpack.c.b16 %v4759, %v4757
      %v4818 = vpack.c.b16 %v4760, %v4758
      %v4819 = vpack.c.b16 %v4763, %v4761
      %v4820 = vpack.c.b16 %v4764, %v4762
      %v4821 = vpack.c.b16 %v4767, %v4765
      %v4822 = vpack.c.b16 %v4768, %v4766
      %v4823 = vpack.c.b16 %v4771, %v4769
      %v4824 = vpack.c.b16 %v4772, %v4770
      %v4825 = vpack.c.b16 %v4775, %v4773
      %v4826 = vpack.c.b16 %v4776, %v4774
      %v4827 = vpack.c.b16 %v4779, %v4777
      %v4828 = vpack.c.b16 %v4780, %v4778
      %v4829 = vpack.c.b16 %v4783, %v4781
      %v4830 = vpack.c.b16 %v4784, %v4782
      %v4831 = vpack.c.b16 %v4787, %v4785
      %v4832 = vpack.c.b16 %v4788, %v4786
      %v4833 = vpack.c.b16 %v4791, %v4789
      %v4834 = vpack.c.b16 %v4792, %v4790
      %v4835 = vpack.c.b16 %v4795, %v4793
      %v4836 = vpack.c.b16 %v4796, %v4794
      %v4837 = vpack.c.b16 %v4799, %v4797
      %v4838 = vpack.c.b16 %v4800, %v4798
      %v4839 = vpack.c.b16 %v4803, %v4801
      %v4840 = vpack.c.b16 %v4804, %v4802
      %v4841 = vpack.c.b16 %v4807, %v4805
      %v4842 = vpack.c.b16 %v4808, %v4806
      %v4843 = vpack.c.b16 %v4811, %v4809
      %v4844 = vpack.c.b16 %v4812, %v4810
      %v4909 = vunpack.c.l.b16 %v4525
      %v4910 = vunpack.c.h.b16 %v4525
      %v4911 = vunpack.c.l.b16 %v4526
      %v4912 = vunpack.c.h.b16 %v4526
      %v4913 = vunpack.c.l.b16 %v4527
      %v4914 = vunpack.c.h.b16 %v4527
      %v4915 = vunpack.c.l.b16 %v4528
      %v4916 = vunpack.c.h.b16 %v4528
      %v4917 = vunpack.c.l.b16 %v4529
      %v4918 = vunpack.c.h.b16 %v4529
      %v4919 = vunpack.c.l.b16 %v4530
      %v4920 = vunpack.c.h.b16 %v4530
      %v4921 = vunpack.c.l.b16 %v4531
      %v4922 = vunpack.c.h.b16 %v4531
      %v4923 = vunpack.c.l.b16 %v4532
      %v4924 = vunpack.c.h.b16 %v4532
      %v4925 = vunpack.c.l.b16 %v4533
      %v4926 = vunpack.c.h.b16 %v4533
      %v4927 = vunpack.c.l.b16 %v4534
      %v4928 = vunpack.c.h.b16 %v4534
      %v4929 = vunpack.c.l.b16 %v4535
      %v4930 = vunpack.c.h.b16 %v4535
      %v4931 = vunpack.c.l.b16 %v4536
      %v4932 = vunpack.c.h.b16 %v4536
      %v4933 = vunpack.c.l.b16 %v4537
      %v4934 = vunpack.c.h.b16 %v4537
      %v4935 = vunpack.c.l.b16 %v4538
      %v4936 = vunpack.c.h.b16 %v4538
      %v4937 = vunpack.c.l.b16 %v4539
      %v4938 = vunpack.c.h.b16 %v4539
      %v4939 = vunpack.c.l.b16 %v4540
      %v4940 = vunpack.c.h.b16 %v4540
      %v4941 = vunpack.c.l.b16 %v4541
      %v4942 = vunpack.c.h.b16 %v4541
      %v4943 = vunpack.c.l.b16 %v4542
      %v4944 = vunpack.c.h.b16 %v4542
      %v4945 = vunpack.c.l.b16 %v4543
      %v4946 = vunpack.c.h.b16 %v4543
      %v4947 = vunpack.c.l.b16 %v4544
      %v4948 = vunpack.c.h.b16 %v4544
      %v4949 = vunpack.c.l.b16 %v4545
      %v4950 = vunpack.c.h.b16 %v4545
      %v4951 = vunpack.c.l.b16 %v4546
      %v4952 = vunpack.c.h.b16 %v4546
      %v4953 = vunpack.c.l.b16 %v4547
      %v4954 = vunpack.c.h.b16 %v4547
      %v4955 = vunpack.c.l.b16 %v4548
      %v4956 = vunpack.c.h.b16 %v4548
      %v4957 = vunpack.c.l.b16 %v4549
      %v4958 = vunpack.c.h.b16 %v4549
      %v4959 = vunpack.c.l.b16 %v4550
      %v4960 = vunpack.c.h.b16 %v4550
      %v4961 = vunpack.c.l.b16 %v4551
      %v4962 = vunpack.c.h.b16 %v4551
      %v4963 = vunpack.c.l.b16 %v4552
      %v4964 = vunpack.c.h.b16 %v4552
      %v4965 = vunpack.c.l.b16 %v4553
      %v4966 = vunpack.c.h.b16 %v4553
      %v4967 = vunpack.c.l.b16 %v4554
      %v4968 = vunpack.c.h.b16 %v4554
      %v4969 = vunpack.c.l.b16 %v4555
      %v4970 = vunpack.c.h.b16 %v4555
      %v4971 = vunpack.c.l.b16 %v4556
      %v4972 = vunpack.c.h.b16 %v4556
      %v4973 = vpack.c.b16 %v4911, %v4909
      %v4974 = vpack.c.b16 %v4912, %v4910
      %v4975 = vpack.c.b16 %v4915, %v4913
      %v4976 = vpack.c.b16 %v4916, %v4914
      %v4977 = vpack.c.b16 %v4919, %v4917
      %v4978 = vpack.c.b16 %v4920, %v4918
      %v4979 = vpack.c.b16 %v4923, %v4921
      %v4980 = vpack.c.b16 %v4924, %v4922
      %v4981 = vpack.c.b16 %v4927, %v4925
      %v4982 = vpack.c.b16 %v4928, %v4926
      %v4983 = vpack.c.b16 %v4931, %v4929
      %v4984 = vpack.c.b16 %v4932, %v4930
      %v4985 = vpack.c.b16 %v4935, %v4933
      %v4986 = vpack.c.b16 %v4936, %v4934
      %v4987 = vpack.c.b16 %v4939, %v4937
      %v4988 = vpack.c.b16 %v4940, %v4938
      %v4989 = vpack.c.b16 %v4943, %v4941
      %v4990 = vpack.c.b16 %v4944, %v4942
      %v4991 = vpack.c.b16 %v4947, %v4945
      %v4992 = vpack.c.b16 %v4948, %v4946
      %v4993 = vpack.c.b16 %v4951, %v4949
      %v4994 = vpack.c.b16 %v4952, %v4950
      %v4995 = vpack.c.b16 %v4955, %v4953
      %v4996 = vpack.c.b16 %v4956, %v4954
      %v4997 = vpack.c.b16 %v4959, %v4957
      %v4998 = vpack.c.b16 %v4960, %v4958
      %v4999 = vpack.c.b16 %v4963, %v4961
      %v5000 = vpack.c.b16 %v4964, %v4962
      %v5001 = vpack.c.b16 %v4967, %v4965
      %v5002 = vpack.c.b16 %v4968, %v4966
      %v5003 = vpack.c.b16 %v4971, %v4969
      %v5004 = vpack.c.b16 %v4972, %v4970
      %v5038 = vunpack.c.l.b16 %v2884
      %v5039 = vunpack.c.h.b16 %v2884
      %v5040 = vpack.c.b16 %v5038, %v5038
      %v5041 = vpack.c.b16 %v5039, %v5039
      %v5042 = vrot.slane %v5040, 2
      %v5043 = vrot.slane %v5041, 2
      %5046 = vmatpush.bf16.msra.mxu0 %v4667
      %5047 = vmatpush.bf16.msra.mxu0 %v4665
      %5048 = vmatpush.bf16.msra.mxu0 %v4663
      %5049 = vmatpush.bf16.msra.mxu0 %v4661
      %5050 = vmatpush.bf16.msra.mxu0 %v4659
      %5051 = vmatpush.bf16.msra.mxu0 %v4657
      %5052 = vmatpush.bf16.msra.mxu0 %v4655
      %5053 = vmatpush.bf16.msra.mxu0 %v4653
      %5054 = vmatmul.bf16.gmra.mxu0 %v5042
      %v5055 = vpop.f32.mrf.mxu0
      %v5056 = vadd.f32 0.0, %v5055
      %v5057 = vpop.f32.mrf.mxu0
      %5058 = vdwg.mxu0
      %5059 = vmatpush.bf16.msra.mxu0 %v4683
      %5060 = vmatpush.bf16.msra.mxu0 %v4681
      %5061 = vmatpush.bf16.msra.mxu0 %v4679
      %5062 = vmatpush.bf16.msra.mxu0 %v4677
      %5063 = vmatpush.bf16.msra.mxu0 %v4675
      %5064 = vmatpush.bf16.msra.mxu0 %v4673
      %5065 = vmatpush.bf16.msra.mxu0 %v4671
      %5066 = vmatpush.bf16.msra.mxu0 %v4669
      %5067 = vmatmul.bf16.gmra.mxu0 %v5043
      %v5068 = vpop.f32.mrf.mxu0
      %v5069 = vadd.f32 %v5056, %v5068
      %v5070 = vpop.f32.mrf.mxu0
      %5071 = vdwg.mxu0
      %5072 = vmatpush.bf16.msra.mxu0 %v4668
      %5073 = vmatpush.bf16.msra.mxu0 %v4666
      %5074 = vmatpush.bf16.msra.mxu0 %v4664
      %5075 = vmatpush.bf16.msra.mxu0 %v4662
      %5076 = vmatpush.bf16.msra.mxu0 %v4660
      %5077 = vmatpush.bf16.msra.mxu0 %v4658
      %5078 = vmatpush.bf16.msra.mxu0 %v4656
      %5079 = vmatpush.bf16.msra.mxu0 %v4654
      %5080 = vmatmul.bf16.gmra.mxu0 %v5042
      %v5081 = vpop.f32.mrf.mxu0
      %v5082 = vadd.f32 0.0, %v5081
      %v5083 = vpop.f32.mrf.mxu0
      %5084 = vdwg.mxu0
      %5085 = vmatpush.bf16.msra.mxu0 %v4684
      %5086 = vmatpush.bf16.msra.mxu0 %v4682
      %5087 = vmatpush.bf16.msra.mxu0 %v4680
      %5088 = vmatpush.bf16.msra.mxu0 %v4678
      %5089 = vmatpush.bf16.msra.mxu0 %v4676
      %5090 = vmatpush.bf16.msra.mxu0 %v4674
      %5091 = vmatpush.bf16.msra.mxu0 %v4672
      %5092 = vmatpush.bf16.msra.mxu0 %v4670
      %5093 = vmatmul.bf16.gmra.mxu0 %v5043
      %v5094 = vpop.f32.mrf.mxu0
      %v5095 = vadd.f32 %v5082, %v5094
      %v5096 = vpop.f32.mrf.mxu0
      %5097 = vdwg.mxu0
      %5098 = vmatpush.bf16.msra.mxu0 %v4827
      %5099 = vmatpush.bf16.msra.mxu0 %v4825
      %5100 = vmatpush.bf16.msra.mxu0 %v4823
      %5101 = vmatpush.bf16.msra.mxu0 %v4821
      %5102 = vmatpush.bf16.msra.mxu0 %v4819
      %5103 = vmatpush.bf16.msra.mxu0 %v4817
      %5104 = vmatpush.bf16.msra.mxu0 %v4815
      %5105 = vmatpush.bf16.msra.mxu0 %v4813
      %5106 = vmatmul.bf16.gmra.mxu0 %v5042
      %v5107 = vpop.f32.mrf.mxu0
      %v5108 = vadd.f32 0.0, %v5107
      %v5109 = vpop.f32.mrf.mxu0
      %5110 = vdwg.mxu0
      %5111 = vmatpush.bf16.msra.mxu0 %v4843
      %5112 = vmatpush.bf16.msra.mxu0 %v4841
      %5113 = vmatpush.bf16.msra.mxu0 %v4839
      %5114 = vmatpush.bf16.msra.mxu0 %v4837
      %5115 = vmatpush.bf16.msra.mxu0 %v4835
      %5116 = vmatpush.bf16.msra.mxu0 %v4833
      %5117 = vmatpush.bf16.msra.mxu0 %v4831
      %5118 = vmatpush.bf16.msra.mxu0 %v4829
      %5119 = vmatmul.bf16.gmra.mxu0 %v5043
      %v5120 = vpop.f32.mrf.mxu0
      %v5121 = vadd.f32 %v5108, %v5120
      %v5122 = vpop.f32.mrf.mxu0
      %5123 = vdwg.mxu0
      %5124 = vmatpush.bf16.msra.mxu0 %v4828
      %5125 = vmatpush.bf16.msra.mxu0 %v4826
      %5126 = vmatpush.bf16.msra.mxu0 %v4824
      %5127 = vmatpush.bf16.msra.mxu0 %v4822
      %5128 = vmatpush.bf16.msra.mxu0 %v4820
      %5129 = vmatpush.bf16.msra.mxu0 %v4818
      %5130 = vmatpush.bf16.msra.mxu0 %v4816
      %5131 = vmatpush.bf16.msra.mxu0 %v4814
      %5132 = vmatmul.bf16.gmra.mxu0 %v5042
      %v5133 = vpop.f32.mrf.mxu0
      %v5134 = vadd.f32 0.0, %v5133
      %v5135 = vpop.f32.mrf.mxu0
      %5136 = vdwg.mxu0
      %5137 = vmatpush.bf16.msra.mxu0 %v4844
      %5138 = vmatpush.bf16.msra.mxu0 %v4842
      %5139 = vmatpush.bf16.msra.mxu0 %v4840
      %5140 = vmatpush.bf16.msra.mxu0 %v4838
      %5141 = vmatpush.bf16.msra.mxu0 %v4836
      %5142 = vmatpush.bf16.msra.mxu0 %v4834
      %5143 = vmatpush.bf16.msra.mxu0 %v4832
      %5144 = vmatpush.bf16.msra.mxu0 %v4830
      %5145 = vmatmul.bf16.gmra.mxu0 %v5043
      %v5146 = vpop.f32.mrf.mxu0
      %v5147 = vadd.f32 %v5134, %v5146
      %v5148 = vpop.f32.mrf.mxu0
      %5149 = vdwg.mxu0
      %5150 = vmatpush.bf16.msra.mxu0 %v4987
      %5151 = vmatpush.bf16.msra.mxu0 %v4985
      %5152 = vmatpush.bf16.msra.mxu0 %v4983
      %5153 = vmatpush.bf16.msra.mxu0 %v4981
      %5154 = vmatpush.bf16.msra.mxu0 %v4979
      %5155 = vmatpush.bf16.msra.mxu0 %v4977
      %5156 = vmatpush.bf16.msra.mxu0 %v4975
      %5157 = vmatpush.bf16.msra.mxu0 %v4973
      %5158 = vmatmul.bf16.gmra.mxu0 %v5042
      %v5159 = vpop.f32.mrf.mxu0
      %v5160 = vadd.f32 0.0, %v5159
      %v5161 = vpop.f32.mrf.mxu0
      %5162 = vdwg.mxu0
      %5163 = vmatpush.bf16.msra.mxu0 %v5003
      %5164 = vmatpush.bf16.msra.mxu0 %v5001
      %5165 = vmatpush.bf16.msra.mxu0 %v4999
      %5166 = vmatpush.bf16.msra.mxu0 %v4997
      %5167 = vmatpush.bf16.msra.mxu0 %v4995
      %5168 = vmatpush.bf16.msra.mxu0 %v4993
      %5169 = vmatpush.bf16.msra.mxu0 %v4991
      %5170 = vmatpush.bf16.msra.mxu0 %v4989
      %5171 = vmatmul.bf16.gmra.mxu0 %v5043
      %v5172 = vpop.f32.mrf.mxu0
      %v5173 = vadd.f32 %v5160, %v5172
      %v5174 = vpop.f32.mrf.mxu0
      %5175 = vdwg.mxu0
      %5176 = vmatpush.bf16.msra.mxu0 %v4988
      %5177 = vmatpush.bf16.msra.mxu0 %v4986
      %5178 = vmatpush.bf16.msra.mxu0 %v4984
      %5179 = vmatpush.bf16.msra.mxu0 %v4982
      %5180 = vmatpush.bf16.msra.mxu0 %v4980
      %5181 = vmatpush.bf16.msra.mxu0 %v4978
      %5182 = vmatpush.bf16.msra.mxu0 %v4976
      %5183 = vmatpush.bf16.msra.mxu0 %v4974
      %5184 = vmatmul.bf16.gmra.mxu0 %v5042
      %v5185 = vpop.f32.mrf.mxu0
      %v5186 = vadd.f32 0.0, %v5185
      %v5187 = vpop.f32.mrf.mxu0
      %5188 = vdwg.mxu0
      %5189 = vmatpush.bf16.msra.mxu0 %v5004
      %5190 = vmatpush.bf16.msra.mxu0 %v5002
      %5191 = vmatpush.bf16.msra.mxu0 %v5000
      %5192 = vmatpush.bf16.msra.mxu0 %v4998
      %5193 = vmatpush.bf16.msra.mxu0 %v4996
      %5194 = vmatpush.bf16.msra.mxu0 %v4994
      %5195 = vmatpush.bf16.msra.mxu0 %v4992
      %5196 = vmatpush.bf16.msra.mxu0 %v4990
      %5197 = vmatmul.bf16.gmra.mxu0 %v5043
      %v5198 = vpop.f32.mrf.mxu0
      %v5199 = vadd.f32 %v5186, %v5198
      %v5200 = vpop.f32.mrf.mxu0
      %5201 = vdwg.mxu0
      %v5202 = vmul.f32 %v5069, %v3419
      %v5203 = vmul.f32 %v5095, %v3420
      %v5206 = vrot.slane %v2886, 4
      %v5207 = vrot.slane %v2887, 4
      %v5210 = vadd.f32 %v5202, %v5206
      %v5211 = vadd.f32 %v5203, %v5207
      %v5212 = vmul.f32 %v5121, %v3971
      %v5213 = vmul.f32 %v5147, %v3972
      %v5214 = vadd.f32 %v5212, %v5206
      %v5215 = vadd.f32 %v5213, %v5207
      %v5216 = vmul.f32 %v5173, %v4523
      %v5217 = vmul.f32 %v5199, %v4524
      %v5218 = vadd.f32 %v5216, %v5206
      %v5219 = vadd.f32 %v5217, %v5207
      %v5220 = vld [vmem:[%s292 + $0x8] sm:$0x33]
      %v5221 = vld [vmem:[%s281 + $0x8] sm:$0x33]
      %v5222 = vld [vmem:[%s301 + $0x10] sm:$0xf]
      %v5223 = vld [vmem:[%s301 + $0x18] sm:$0xf]
      %v5225 = vunpack.c.l.b16 %v5221
      %v5226 = vunpack.c.h.b16 %v5221
      %v5227 = vpack.c.b16 %v5225, %v5225
      %v5228 = vpack.c.b16 %v5226, %v5226
      %v5230 = vsel %vm404, %v5227, 0
      %v5233 = vsel %vm404, %v5228, 0
      %5235 = vmatpush.bf16.msra.mxu0 0
      %5236 = vmatpush.bf16.msra.mxu0 0
      %5237 = vmatpush.bf16.msra.mxu0 0
      %5238 = vmatpush.bf16.msra.mxu0 0
      %5239 = vmatpush.bf16.msra.mxu0 0
      %5240 = vmatpush.bf16.msra.mxu0 0
      %5241 = vmatpush.bf16.msra.mxu0 0
      %5242 = vmatpush.bf16.msra.mxu0 %v5230
      %5243 = vmatmul.bf16.gmra.mxu0 %v357
      %v5244 = vpop.f32.mrf.mxu0
      %v5245 = vadd.f32 0.0, %v5244
      %v5246 = vpop.f32.mrf.mxu0
      %v5247 = vadd.f32 0.0, %v5246
      %5248 = vmatmul.bf16.gmra.mxu0 %v360
      %v5249 = vpop.f32.mrf.mxu0
      %v5250 = vadd.f32 0.0, %v5249
      %v5251 = vpop.f32.mrf.mxu0
      %v5252 = vadd.f32 0.0, %v5251
      %5253 = vmatmul.bf16.gmra.mxu0 %v363
      %v5254 = vpop.f32.mrf.mxu0
      %v5255 = vadd.f32 0.0, %v5254
      %v5256 = vpop.f32.mrf.mxu0
      %v5257 = vadd.f32 0.0, %v5256
      %5258 = vmatmul.bf16.gmra.mxu0 %v366
      %v5259 = vpop.f32.mrf.mxu0
      %v5260 = vadd.f32 0.0, %v5259
      %v5261 = vpop.f32.mrf.mxu0
      %v5262 = vadd.f32 0.0, %v5261
      %5263 = vmatmul.bf16.gmra.mxu0 %v369
      %v5264 = vpop.f32.mrf.mxu0
      %v5265 = vadd.f32 0.0, %v5264
      %v5266 = vpop.f32.mrf.mxu0
      %v5267 = vadd.f32 0.0, %v5266
      %5268 = vmatmul.bf16.gmra.mxu0 %v372
      %v5269 = vpop.f32.mrf.mxu0
      %v5270 = vadd.f32 0.0, %v5269
      %v5271 = vpop.f32.mrf.mxu0
      %v5272 = vadd.f32 0.0, %v5271
      %5273 = vmatmul.bf16.gmra.mxu0 %v375
      %v5274 = vpop.f32.mrf.mxu0
      %v5275 = vadd.f32 0.0, %v5274
      %v5276 = vpop.f32.mrf.mxu0
      %v5277 = vadd.f32 0.0, %v5276
      %5278 = vmatmul.bf16.gmra.mxu0 %v378
      %v5279 = vpop.f32.mrf.mxu0
      %v5280 = vadd.f32 0.0, %v5279
      %v5281 = vpop.f32.mrf.mxu0
      %v5282 = vadd.f32 0.0, %v5281
      %5283 = vmatmul.bf16.gmra.mxu0 %v381
      %v5284 = vpop.f32.mrf.mxu0
      %v5285 = vadd.f32 0.0, %v5284
      %v5286 = vpop.f32.mrf.mxu0
      %v5287 = vadd.f32 0.0, %v5286
      %5288 = vmatmul.bf16.gmra.mxu0 %v384
      %v5289 = vpop.f32.mrf.mxu0
      %v5290 = vadd.f32 0.0, %v5289
      %v5291 = vpop.f32.mrf.mxu0
      %v5292 = vadd.f32 0.0, %v5291
      %5293 = vmatmul.bf16.gmra.mxu0 %v387
      %v5294 = vpop.f32.mrf.mxu0
      %v5295 = vadd.f32 0.0, %v5294
      %v5296 = vpop.f32.mrf.mxu0
      %v5297 = vadd.f32 0.0, %v5296
      %5298 = vmatmul.bf16.gmra.mxu0 %v390
      %v5299 = vpop.f32.mrf.mxu0
      %v5300 = vadd.f32 0.0, %v5299
      %v5301 = vpop.f32.mrf.mxu0
      %v5302 = vadd.f32 0.0, %v5301
      %5303 = vmatmul.bf16.gmra.mxu0 %v393
      %v5304 = vpop.f32.mrf.mxu0
      %v5305 = vadd.f32 0.0, %v5304
      %v5306 = vpop.f32.mrf.mxu0
      %v5307 = vadd.f32 0.0, %v5306
      %5308 = vmatmul.bf16.gmra.mxu0 %v396
      %v5309 = vpop.f32.mrf.mxu0
      %v5310 = vadd.f32 0.0, %v5309
      %v5311 = vpop.f32.mrf.mxu0
      %v5312 = vadd.f32 0.0, %v5311
      %5313 = vmatmul.bf16.gmra.mxu0 %v399
      %v5314 = vpop.f32.mrf.mxu0
      %v5315 = vadd.f32 0.0, %v5314
      %v5316 = vpop.f32.mrf.mxu0
      %v5317 = vadd.f32 0.0, %v5316
      %5318 = vmatmul.bf16.gmra.mxu0 %v402
      %v5319 = vpop.f32.mrf.mxu0
      %v5320 = vadd.f32 0.0, %v5319
      %v5321 = vpop.f32.mrf.mxu0
      %v5322 = vadd.f32 0.0, %v5321
      %5323 = vdwg.mxu0
      %5324 = vmatpush.bf16.msra.mxu0 0
      %5325 = vmatpush.bf16.msra.mxu0 0
      %5326 = vmatpush.bf16.msra.mxu0 0
      %5327 = vmatpush.bf16.msra.mxu0 0
      %5328 = vmatpush.bf16.msra.mxu0 0
      %5329 = vmatpush.bf16.msra.mxu0 0
      %5330 = vmatpush.bf16.msra.mxu0 0
      %5331 = vmatpush.bf16.msra.mxu0 %v5233
      %5332 = vmatmul.bf16.gmra.mxu0 %v357
      %v5333 = vpop.f32.mrf.mxu0
      %v5334 = vadd.f32 0.0, %v5333
      %v5335 = vpop.f32.mrf.mxu0
      %v5336 = vadd.f32 0.0, %v5335
      %5337 = vmatmul.bf16.gmra.mxu0 %v360
      %v5338 = vpop.f32.mrf.mxu0
      %v5339 = vadd.f32 0.0, %v5338
      %v5340 = vpop.f32.mrf.mxu0
      %v5341 = vadd.f32 0.0, %v5340
      %5342 = vmatmul.bf16.gmra.mxu0 %v363
      %v5343 = vpop.f32.mrf.mxu0
      %v5344 = vadd.f32 0.0, %v5343
      %v5345 = vpop.f32.mrf.mxu0
      %v5346 = vadd.f32 0.0, %v5345
      %5347 = vmatmul.bf16.gmra.mxu0 %v366
      %v5348 = vpop.f32.mrf.mxu0
      %v5349 = vadd.f32 0.0, %v5348
      %v5350 = vpop.f32.mrf.mxu0
      %v5351 = vadd.f32 0.0, %v5350
      %5352 = vmatmul.bf16.gmra.mxu0 %v369
      %v5353 = vpop.f32.mrf.mxu0
      %v5354 = vadd.f32 0.0, %v5353
      %v5355 = vpop.f32.mrf.mxu0
      %v5356 = vadd.f32 0.0, %v5355
      %5357 = vmatmul.bf16.gmra.mxu0 %v372
      %v5358 = vpop.f32.mrf.mxu0
      %v5359 = vadd.f32 0.0, %v5358
      %v5360 = vpop.f32.mrf.mxu0
      %v5361 = vadd.f32 0.0, %v5360
      %5362 = vmatmul.bf16.gmra.mxu0 %v375
      %v5363 = vpop.f32.mrf.mxu0
      %v5364 = vadd.f32 0.0, %v5363
      %v5365 = vpop.f32.mrf.mxu0
      %v5366 = vadd.f32 0.0, %v5365
      %5367 = vmatmul.bf16.gmra.mxu0 %v378
      %v5368 = vpop.f32.mrf.mxu0
      %v5369 = vadd.f32 0.0, %v5368
      %v5370 = vpop.f32.mrf.mxu0
      %v5371 = vadd.f32 0.0, %v5370
      %5372 = vmatmul.bf16.gmra.mxu0 %v381
      %v5373 = vpop.f32.mrf.mxu0
      %v5374 = vadd.f32 0.0, %v5373
      %v5375 = vpop.f32.mrf.mxu0
      %v5376 = vadd.f32 0.0, %v5375
      %5377 = vmatmul.bf16.gmra.mxu0 %v384
      %v5378 = vpop.f32.mrf.mxu0
      %v5379 = vadd.f32 0.0, %v5378
      %v5380 = vpop.f32.mrf.mxu0
      %v5381 = vadd.f32 0.0, %v5380
      %5382 = vmatmul.bf16.gmra.mxu0 %v387
      %v5383 = vpop.f32.mrf.mxu0
      %v5384 = vadd.f32 0.0, %v5383
      %v5385 = vpop.f32.mrf.mxu0
      %v5386 = vadd.f32 0.0, %v5385
      %5387 = vmatmul.bf16.gmra.mxu0 %v390
      %v5388 = vpop.f32.mrf.mxu0
      %v5389 = vadd.f32 0.0, %v5388
      %v5390 = vpop.f32.mrf.mxu0
      %v5391 = vadd.f32 0.0, %v5390
      %5392 = vmatmul.bf16.gmra.mxu0 %v393
      %v5393 = vpop.f32.mrf.mxu0
      %v5394 = vadd.f32 0.0, %v5393
      %v5395 = vpop.f32.mrf.mxu0
      %v5396 = vadd.f32 0.0, %v5395
      %5397 = vmatmul.bf16.gmra.mxu0 %v396
      %v5398 = vpop.f32.mrf.mxu0
      %v5399 = vadd.f32 0.0, %v5398
      %v5400 = vpop.f32.mrf.mxu0
      %v5401 = vadd.f32 0.0, %v5400
      %5402 = vmatmul.bf16.gmra.mxu0 %v399
      %v5403 = vpop.f32.mrf.mxu0
      %v5404 = vadd.f32 0.0, %v5403
      %v5405 = vpop.f32.mrf.mxu0
      %v5406 = vadd.f32 0.0, %v5405
      %5407 = vmatmul.bf16.gmra.mxu0 %v402
      %v5408 = vpop.f32.mrf.mxu0
      %v5409 = vadd.f32 0.0, %v5408
      %v5410 = vpop.f32.mrf.mxu0
      %v5411 = vadd.f32 0.0, %v5410
      %5412 = vdwg.mxu0
      %v5413 = vmax.f32 %v5245, %v5250
      %v5414 = vmax.f32 %v5247, %v5252
      %v5415 = vmax.f32 %v5413, %v5255
      %v5416 = vmax.f32 %v5414, %v5257
      %v5417 = vmax.f32 %v5415, %v5260
      %v5418 = vmax.f32 %v5416, %v5262
      %v5419 = vmax.f32 %v5417, %v5265
      %v5420 = vmax.f32 %v5418, %v5267
      %v5421 = vmax.f32 %v5419, %v5270
      %v5422 = vmax.f32 %v5420, %v5272
      %v5423 = vmax.f32 %v5421, %v5275
      %v5424 = vmax.f32 %v5422, %v5277
      %v5425 = vmax.f32 %v5423, %v5280
      %v5426 = vmax.f32 %v5424, %v5282
      %v5427 = vmax.f32 %v5425, %v5285
      %v5428 = vmax.f32 %v5426, %v5287
      %v5429 = vmax.f32 %v5427, %v5290
      %v5430 = vmax.f32 %v5428, %v5292
      %v5431 = vmax.f32 %v5429, %v5295
      %v5432 = vmax.f32 %v5430, %v5297
      %v5433 = vmax.f32 %v5431, %v5300
      %v5434 = vmax.f32 %v5432, %v5302
      %v5435 = vmax.f32 %v5433, %v5305
      %v5436 = vmax.f32 %v5434, %v5307
      %v5437 = vmax.f32 %v5435, %v5310
      %v5438 = vmax.f32 %v5436, %v5312
      %v5439 = vmax.f32 %v5437, %v5315
      %v5440 = vmax.f32 %v5438, %v5317
      %v5441 = vmax.f32 %v5439, %v5320
      %v5442 = vmax.f32 %v5440, %v5322
      %v5443 = vmax.f32 %v5441, %v5442
      %v5444 = vrot.slane %v5443, 4
      %v5445 = vmax.f32 %v5443, %v5444
      %v5446 = vrot.slane %v5445, 2
      %v5447 = vmax.f32 %v5445, %v5446
      %v5448 = vrot.slane %v5447, 1
      %v5449 = vmax.f32 %v5447, %v5448
      %v5450 = vmax.f32 %v5334, %v5339
      %v5451 = vmax.f32 %v5336, %v5341
      %v5452 = vmax.f32 %v5450, %v5344
      %v5453 = vmax.f32 %v5451, %v5346
      %v5454 = vmax.f32 %v5452, %v5349
      %v5455 = vmax.f32 %v5453, %v5351
      %v5456 = vmax.f32 %v5454, %v5354
      %v5457 = vmax.f32 %v5455, %v5356
      %v5458 = vmax.f32 %v5456, %v5359
      %v5459 = vmax.f32 %v5457, %v5361
      %v5460 = vmax.f32 %v5458, %v5364
      %v5461 = vmax.f32 %v5459, %v5366
      %v5462 = vmax.f32 %v5460, %v5369
      %v5463 = vmax.f32 %v5461, %v5371
      %v5464 = vmax.f32 %v5462, %v5374
      %v5465 = vmax.f32 %v5463, %v5376
      %v5466 = vmax.f32 %v5464, %v5379
      %v5467 = vmax.f32 %v5465, %v5381
      %v5468 = vmax.f32 %v5466, %v5384
      %v5469 = vmax.f32 %v5467, %v5386
      %v5470 = vmax.f32 %v5468, %v5389
      %v5471 = vmax.f32 %v5469, %v5391
      %v5472 = vmax.f32 %v5470, %v5394
      %v5473 = vmax.f32 %v5471, %v5396
      %v5474 = vmax.f32 %v5472, %v5399
      %v5475 = vmax.f32 %v5473, %v5401
      %v5476 = vmax.f32 %v5474, %v5404
      %v5477 = vmax.f32 %v5475, %v5406
      %v5478 = vmax.f32 %v5476, %v5409
      %v5479 = vmax.f32 %v5477, %v5411
      %v5480 = vmax.f32 %v5478, %v5479
      %v5481 = vrot.slane %v5480, 4
      %v5482 = vmax.f32 %v5480, %v5481
      %v5483 = vrot.slane %v5482, 2
      %v5484 = vmax.f32 %v5482, %v5483
      %v5485 = vrot.slane %v5484, 1
      %v5486 = vmax.f32 %v5484, %v5485
      %v5487 = vsub.f32 %v5245, %v5449
      %v5488 = vsub.f32 %v5334, %v5486
      %v5489 = vsub.f32 %v5247, %v5449
      %v5490 = vsub.f32 %v5336, %v5486
      %v5491 = vsub.f32 %v5250, %v5449
      %v5492 = vsub.f32 %v5339, %v5486
      %v5493 = vsub.f32 %v5252, %v5449
      %v5494 = vsub.f32 %v5341, %v5486
      %v5495 = vsub.f32 %v5255, %v5449
      %v5496 = vsub.f32 %v5344, %v5486
      %v5497 = vsub.f32 %v5257, %v5449
      %v5498 = vsub.f32 %v5346, %v5486
      %v5499 = vsub.f32 %v5260, %v5449
      %v5500 = vsub.f32 %v5349, %v5486
      %v5501 = vsub.f32 %v5262, %v5449
      %v5502 = vsub.f32 %v5351, %v5486
      %v5503 = vsub.f32 %v5265, %v5449
      %v5504 = vsub.f32 %v5354, %v5486
      %v5505 = vsub.f32 %v5267, %v5449
      %v5506 = vsub.f32 %v5356, %v5486
      %v5507 = vsub.f32 %v5270, %v5449
      %v5508 = vsub.f32 %v5359, %v5486
      %v5509 = vsub.f32 %v5272, %v5449
      %v5510 = vsub.f32 %v5361, %v5486
      %v5511 = vsub.f32 %v5275, %v5449
      %v5512 = vsub.f32 %v5364, %v5486
      %v5513 = vsub.f32 %v5277, %v5449
      %v5514 = vsub.f32 %v5366, %v5486
      %v5515 = vsub.f32 %v5280, %v5449
      %v5516 = vsub.f32 %v5369, %v5486
      %v5517 = vsub.f32 %v5282, %v5449
      %v5518 = vsub.f32 %v5371, %v5486
      %v5519 = vsub.f32 %v5285, %v5449
      %v5520 = vsub.f32 %v5374, %v5486
      %v5521 = vsub.f32 %v5287, %v5449
      %v5522 = vsub.f32 %v5376, %v5486
      %v5523 = vsub.f32 %v5290, %v5449
      %v5524 = vsub.f32 %v5379, %v5486
      %v5525 = vsub.f32 %v5292, %v5449
      %v5526 = vsub.f32 %v5381, %v5486
      %v5527 = vsub.f32 %v5295, %v5449
      %v5528 = vsub.f32 %v5384, %v5486
      %v5529 = vsub.f32 %v5297, %v5449
      %v5530 = vsub.f32 %v5386, %v5486
      %v5531 = vsub.f32 %v5300, %v5449
      %v5532 = vsub.f32 %v5389, %v5486
      %v5533 = vsub.f32 %v5302, %v5449
      %v5534 = vsub.f32 %v5391, %v5486
      %v5535 = vsub.f32 %v5305, %v5449
      %v5536 = vsub.f32 %v5394, %v5486
      %v5537 = vsub.f32 %v5307, %v5449
      %v5538 = vsub.f32 %v5396, %v5486
      %v5539 = vsub.f32 %v5310, %v5449
      %v5540 = vsub.f32 %v5399, %v5486
      %v5541 = vsub.f32 %v5312, %v5449
      %v5542 = vsub.f32 %v5401, %v5486
      %v5543 = vsub.f32 %v5315, %v5449
      %v5544 = vsub.f32 %v5404, %v5486
      %v5545 = vsub.f32 %v5317, %v5449
      %v5546 = vsub.f32 %v5406, %v5486
      %v5547 = vsub.f32 %v5320, %v5449
      %v5548 = vsub.f32 %v5409, %v5486
      %v5549 = vsub.f32 %v5322, %v5449
      %v5550 = vsub.f32 %v5411, %v5486
      %v5551 = vmul.f32 %v5487, 1.442695
      %v5552 = vpow.pop %v5551
      %v5553 = vmul.f32 %v5488, 1.442695
      %v5554 = vpow.pop %v5553
      %v5555 = vmul.f32 %v5489, 1.442695
      %v5556 = vpow.pop %v5555
      %v5557 = vmul.f32 %v5490, 1.442695
      %v5558 = vpow.pop %v5557
      %v5559 = vmul.f32 %v5491, 1.442695
      %v5560 = vpow.pop %v5559
      %v5561 = vmul.f32 %v5492, 1.442695
      %v5562 = vpow.pop %v5561
      %v5563 = vmul.f32 %v5493, 1.442695
      %v5564 = vpow.pop %v5563
      %v5565 = vmul.f32 %v5494, 1.442695
      %v5566 = vpow.pop %v5565
      %v5567 = vmul.f32 %v5495, 1.442695
      %v5568 = vpow.pop %v5567
      %v5569 = vmul.f32 %v5496, 1.442695
      %v5570 = vpow.pop %v5569
      %v5571 = vmul.f32 %v5497, 1.442695
      %v5572 = vpow.pop %v5571
      %v5573 = vmul.f32 %v5498, 1.442695
      %v5574 = vpow.pop %v5573
      %v5575 = vmul.f32 %v5499, 1.442695
      %v5576 = vpow.pop %v5575
      %v5577 = vmul.f32 %v5500, 1.442695
      %v5578 = vpow.pop %v5577
      %v5579 = vmul.f32 %v5501, 1.442695
      %v5580 = vpow.pop %v5579
      %v5581 = vmul.f32 %v5502, 1.442695
      %v5582 = vpow.pop %v5581
      %v5583 = vmul.f32 %v5503, 1.442695
      %v5584 = vpow.pop %v5583
      %v5585 = vmul.f32 %v5504, 1.442695
      %v5586 = vpow.pop %v5585
      %v5587 = vmul.f32 %v5505, 1.442695
      %v5588 = vpow.pop %v5587
      %v5589 = vmul.f32 %v5506, 1.442695
      %v5590 = vpow.pop %v5589
      %v5591 = vmul.f32 %v5507, 1.442695
      %v5592 = vpow.pop %v5591
      %v5593 = vmul.f32 %v5508, 1.442695
      %v5594 = vpow.pop %v5593
      %v5595 = vmul.f32 %v5509, 1.442695
      %v5596 = vpow.pop %v5595
      %v5597 = vmul.f32 %v5510, 1.442695
      %v5598 = vpow.pop %v5597
      %v5599 = vmul.f32 %v5511, 1.442695
      %v5600 = vpow.pop %v5599
      %v5601 = vmul.f32 %v5512, 1.442695
      %v5602 = vpow.pop %v5601
      %v5603 = vmul.f32 %v5513, 1.442695
      %v5604 = vpow.pop %v5603
      %v5605 = vmul.f32 %v5514, 1.442695
      %v5606 = vpow.pop %v5605
      %v5607 = vmul.f32 %v5515, 1.442695
      %v5608 = vpow.pop %v5607
      %v5609 = vmul.f32 %v5516, 1.442695
      %v5610 = vpow.pop %v5609
      %v5611 = vmul.f32 %v5517, 1.442695
      %v5612 = vpow.pop %v5611
      %v5613 = vmul.f32 %v5518, 1.442695
      %v5614 = vpow.pop %v5613
      %v5615 = vmul.f32 %v5519, 1.442695
      %v5616 = vpow.pop %v5615
      %v5617 = vmul.f32 %v5520, 1.442695
      %v5618 = vpow.pop %v5617
      %v5619 = vmul.f32 %v5521, 1.442695
      %v5620 = vpow.pop %v5619
      %v5621 = vmul.f32 %v5522, 1.442695
      %v5622 = vpow.pop %v5621
      %v5623 = vmul.f32 %v5523, 1.442695
      %v5624 = vpow.pop %v5623
      %v5625 = vmul.f32 %v5524, 1.442695
      %v5626 = vpow.pop %v5625
      %v5627 = vmul.f32 %v5525, 1.442695
      %v5628 = vpow.pop %v5627
      %v5629 = vmul.f32 %v5526, 1.442695
      %v5630 = vpow.pop %v5629
      %v5631 = vmul.f32 %v5527, 1.442695
      %v5632 = vpow.pop %v5631
      %v5633 = vmul.f32 %v5528, 1.442695
      %v5634 = vpow.pop %v5633
      %v5635 = vmul.f32 %v5529, 1.442695
      %v5636 = vpow.pop %v5635
      %v5637 = vmul.f32 %v5530, 1.442695
      %v5638 = vpow.pop %v5637
      %v5639 = vmul.f32 %v5531, 1.442695
      %v5640 = vpow.pop %v5639
      %v5641 = vmul.f32 %v5532, 1.442695
      %v5642 = vpow.pop %v5641
      %v5643 = vmul.f32 %v5533, 1.442695
      %v5644 = vpow.pop %v5643
      %v5645 = vmul.f32 %v5534, 1.442695
      %v5646 = vpow.pop %v5645
      %v5647 = vmul.f32 %v5535, 1.442695
      %v5648 = vpow.pop %v5647
      %v5649 = vmul.f32 %v5536, 1.442695
      %v5650 = vpow.pop %v5649
      %v5651 = vmul.f32 %v5537, 1.442695
      %v5652 = vpow.pop %v5651
      %v5653 = vmul.f32 %v5538, 1.442695
      %v5654 = vpow.pop %v5653
      %v5655 = vmul.f32 %v5539, 1.442695
      %v5656 = vpow.pop %v5655
      %v5657 = vmul.f32 %v5540, 1.442695
      %v5658 = vpow.pop %v5657
      %v5659 = vmul.f32 %v5541, 1.442695
      %v5660 = vpow.pop %v5659
      %v5661 = vmul.f32 %v5542, 1.442695
      %v5662 = vpow.pop %v5661
      %v5663 = vmul.f32 %v5543, 1.442695
      %v5664 = vpow.pop %v5663
      %v5665 = vmul.f32 %v5544, 1.442695
      %v5666 = vpow.pop %v5665
      %v5667 = vmul.f32 %v5545, 1.442695
      %v5668 = vpow.pop %v5667
      %v5669 = vmul.f32 %v5546, 1.442695
      %v5670 = vpow.pop %v5669
      %v5671 = vmul.f32 %v5547, 1.442695
      %v5672 = vpow.pop %v5671
      %v5673 = vmul.f32 %v5548, 1.442695
      %v5674 = vpow.pop %v5673
      %v5675 = vmul.f32 %v5549, 1.442695
      %v5676 = vpow.pop %v5675
      %v5677 = vmul.f32 %v5550, 1.442695
      %v5678 = vpow.pop %v5677
      %v5679 = vadd.f32 %v5552, %v5556
      %v5680 = vadd.f32 %v5679, %v5560
      %v5681 = vadd.f32 %v5680, %v5564
      %v5682 = vadd.f32 %v5681, %v5568
      %v5683 = vadd.f32 %v5682, %v5572
      %v5684 = vadd.f32 %v5683, %v5576
      %v5685 = vadd.f32 %v5684, %v5580
      %v5686 = vadd.f32 %v5685, %v5584
      %v5687 = vadd.f32 %v5686, %v5588
      %v5688 = vadd.f32 %v5687, %v5592
      %v5689 = vadd.f32 %v5688, %v5596
      %v5690 = vadd.f32 %v5689, %v5600
      %v5691 = vadd.f32 %v5690, %v5604
      %v5692 = vadd.f32 %v5691, %v5608
      %v5693 = vadd.f32 %v5692, %v5612
      %v5694 = vadd.f32 %v5693, %v5616
      %v5695 = vadd.f32 %v5694, %v5620
      %v5696 = vadd.f32 %v5695, %v5624
      %v5697 = vadd.f32 %v5696, %v5628
      %v5698 = vadd.f32 %v5697, %v5632
      %v5699 = vadd.f32 %v5698, %v5636
      %v5700 = vadd.f32 %v5699, %v5640
      %v5701 = vadd.f32 %v5700, %v5644
      %v5702 = vadd.f32 %v5701, %v5648
      %v5703 = vadd.f32 %v5702, %v5652
      %v5704 = vadd.f32 %v5703, %v5656
      %v5705 = vadd.f32 %v5704, %v5660
      %v5706 = vadd.f32 %v5705, %v5664
      %v5707 = vadd.f32 %v5706, %v5668
      %v5708 = vadd.f32 %v5707, %v5672
      %v5709 = vadd.f32 %v5708, %v5676
      %v5710 = vrot.slane %v5709, 4
      %v5711 = vadd.f32 %v5709, %v5710
      %v5712 = vrot.slane %v5711, 2
      %v5713 = vadd.f32 %v5711, %v5712
      %v5714 = vrot.slane %v5713, 1
      %v5715 = vadd.f32 %v5713, %v5714
      %v5716 = vadd.f32 %v5554, %v5558
      %v5717 = vadd.f32 %v5716, %v5562
      %v5718 = vadd.f32 %v5717, %v5566
      %v5719 = vadd.f32 %v5718, %v5570
      %v5720 = vadd.f32 %v5719, %v5574
      %v5721 = vadd.f32 %v5720, %v5578
      %v5722 = vadd.f32 %v5721, %v5582
      %v5723 = vadd.f32 %v5722, %v5586
      %v5724 = vadd.f32 %v5723, %v5590
      %v5725 = vadd.f32 %v5724, %v5594
      %v5726 = vadd.f32 %v5725, %v5598
      %v5727 = vadd.f32 %v5726, %v5602
      %v5728 = vadd.f32 %v5727, %v5606
      %v5729 = vadd.f32 %v5728, %v5610
      %v5730 = vadd.f32 %v5729, %v5614
      %v5731 = vadd.f32 %v5730, %v5618
      %v5732 = vadd.f32 %v5731, %v5622
      %v5733 = vadd.f32 %v5732, %v5626
      %v5734 = vadd.f32 %v5733, %v5630
      %v5735 = vadd.f32 %v5734, %v5634
      %v5736 = vadd.f32 %v5735, %v5638
      %v5737 = vadd.f32 %v5736, %v5642
      %v5738 = vadd.f32 %v5737, %v5646
      %v5739 = vadd.f32 %v5738, %v5650
      %v5740 = vadd.f32 %v5739, %v5654
      %v5741 = vadd.f32 %v5740, %v5658
      %v5742 = vadd.f32 %v5741, %v5662
      %v5743 = vadd.f32 %v5742, %v5666
      %v5744 = vadd.f32 %v5743, %v5670
      %v5745 = vadd.f32 %v5744, %v5674
      %v5746 = vadd.f32 %v5745, %v5678
      %v5747 = vrot.slane %v5746, 4
      %v5748 = vadd.f32 %v5746, %v5747
      %v5749 = vrot.slane %v5748, 2
      %v5750 = vadd.f32 %v5748, %v5749
      %v5751 = vrot.slane %v5750, 1
      %v5752 = vadd.f32 %v5750, %v5751
      %v5753 = vrcp.pop %v5715
      %v5754 = vrcp.pop %v5752
      %v5755 = vpack.c.bf16 %v5554, %v5552
      %v5756 = vpack.c.bf16 %v5558, %v5556
      %v5757 = vpack.c.bf16 %v5562, %v5560
      %v5758 = vpack.c.bf16 %v5566, %v5564
      %v5759 = vpack.c.bf16 %v5570, %v5568
      %v5760 = vpack.c.bf16 %v5574, %v5572
      %v5761 = vpack.c.bf16 %v5578, %v5576
      %v5762 = vpack.c.bf16 %v5582, %v5580
      %v5763 = vpack.c.bf16 %v5586, %v5584
      %v5764 = vpack.c.bf16 %v5590, %v5588
      %v5765 = vpack.c.bf16 %v5594, %v5592
      %v5766 = vpack.c.bf16 %v5598, %v5596
      %v5767 = vpack.c.bf16 %v5602, %v5600
      %v5768 = vpack.c.bf16 %v5606, %v5604
      %v5769 = vpack.c.bf16 %v5610, %v5608
      %v5770 = vpack.c.bf16 %v5614, %v5612
      %v5771 = vpack.c.bf16 %v5618, %v5616
      %v5772 = vpack.c.bf16 %v5622, %v5620
      %v5773 = vpack.c.bf16 %v5626, %v5624
      %v5774 = vpack.c.bf16 %v5630, %v5628
      %v5775 = vpack.c.bf16 %v5634, %v5632
      %v5776 = vpack.c.bf16 %v5638, %v5636
      %v5777 = vpack.c.bf16 %v5642, %v5640
      %v5778 = vpack.c.bf16 %v5646, %v5644
      %v5779 = vpack.c.bf16 %v5650, %v5648
      %v5780 = vpack.c.bf16 %v5654, %v5652
      %v5781 = vpack.c.bf16 %v5658, %v5656
      %v5782 = vpack.c.bf16 %v5662, %v5660
      %v5783 = vpack.c.bf16 %v5666, %v5664
      %v5784 = vpack.c.bf16 %v5670, %v5668
      %v5785 = vpack.c.bf16 %v5674, %v5672
      %v5786 = vpack.c.bf16 %v5678, %v5676
      %5787 = vmatpush.bf16.msra.mxu0 0
      %5788 = vmatpush.bf16.msra.mxu0 0
      %5789 = vmatpush.bf16.msra.mxu0 0
      %5790 = vmatpush.bf16.msra.mxu0 0
      %5791 = vmatpush.bf16.msra.mxu0 0
      %5792 = vmatpush.bf16.msra.mxu0 0
      %5793 = vmatpush.bf16.msra.mxu0 0
      %5794 = vmatpush.bf16.msra.mxu0 %v5230
      %5795 = vmatmul.bf16.gmra.mxu0 %v998
      %v5796 = vpop.f32.mrf.mxu0
      %v5797 = vadd.f32 0.0, %v5796
      %v5798 = vpop.f32.mrf.mxu0
      %v5799 = vadd.f32 0.0, %v5798
      %5800 = vmatmul.bf16.gmra.mxu0 %v1001
      %v5801 = vpop.f32.mrf.mxu0
      %v5802 = vadd.f32 0.0, %v5801
      %v5803 = vpop.f32.mrf.mxu0
      %v5804 = vadd.f32 0.0, %v5803
      %5805 = vmatmul.bf16.gmra.mxu0 %v1004
      %v5806 = vpop.f32.mrf.mxu0
      %v5807 = vadd.f32 0.0, %v5806
      %v5808 = vpop.f32.mrf.mxu0
      %v5809 = vadd.f32 0.0, %v5808
      %5810 = vmatmul.bf16.gmra.mxu0 %v1007
      %v5811 = vpop.f32.mrf.mxu0
      %v5812 = vadd.f32 0.0, %v5811
      %v5813 = vpop.f32.mrf.mxu0
      %v5814 = vadd.f32 0.0, %v5813
      %5815 = vmatmul.bf16.gmra.mxu0 %v1010
      %v5816 = vpop.f32.mrf.mxu0
      %v5817 = vadd.f32 0.0, %v5816
      %v5818 = vpop.f32.mrf.mxu0
      %v5819 = vadd.f32 0.0, %v5818
      %5820 = vmatmul.bf16.gmra.mxu0 %v1013
      %v5821 = vpop.f32.mrf.mxu0
      %v5822 = vadd.f32 0.0, %v5821
      %v5823 = vpop.f32.mrf.mxu0
      %v5824 = vadd.f32 0.0, %v5823
      %5825 = vmatmul.bf16.gmra.mxu0 %v1016
      %v5826 = vpop.f32.mrf.mxu0
      %v5827 = vadd.f32 0.0, %v5826
      %v5828 = vpop.f32.mrf.mxu0
      %v5829 = vadd.f32 0.0, %v5828
      %5830 = vmatmul.bf16.gmra.mxu0 %v1019
      %v5831 = vpop.f32.mrf.mxu0
      %v5832 = vadd.f32 0.0, %v5831
      %v5833 = vpop.f32.mrf.mxu0
      %v5834 = vadd.f32 0.0, %v5833
      %5835 = vmatmul.bf16.gmra.mxu0 %v1022
      %v5836 = vpop.f32.mrf.mxu0
      %v5837 = vadd.f32 0.0, %v5836
      %v5838 = vpop.f32.mrf.mxu0
      %v5839 = vadd.f32 0.0, %v5838
      %5840 = vmatmul.bf16.gmra.mxu0 %v1025
      %v5841 = vpop.f32.mrf.mxu0
      %v5842 = vadd.f32 0.0, %v5841
      %v5843 = vpop.f32.mrf.mxu0
      %v5844 = vadd.f32 0.0, %v5843
      %5845 = vmatmul.bf16.gmra.mxu0 %v1028
      %v5846 = vpop.f32.mrf.mxu0
      %v5847 = vadd.f32 0.0, %v5846
      %v5848 = vpop.f32.mrf.mxu0
      %v5849 = vadd.f32 0.0, %v5848
      %5850 = vmatmul.bf16.gmra.mxu0 %v1031
      %v5851 = vpop.f32.mrf.mxu0
      %v5852 = vadd.f32 0.0, %v5851
      %v5853 = vpop.f32.mrf.mxu0
      %v5854 = vadd.f32 0.0, %v5853
      %5855 = vmatmul.bf16.gmra.mxu0 %v1034
      %v5856 = vpop.f32.mrf.mxu0
      %v5857 = vadd.f32 0.0, %v5856
      %v5858 = vpop.f32.mrf.mxu0
      %v5859 = vadd.f32 0.0, %v5858
      %5860 = vmatmul.bf16.gmra.mxu0 %v1037
      %v5861 = vpop.f32.mrf.mxu0
      %v5862 = vadd.f32 0.0, %v5861
      %v5863 = vpop.f32.mrf.mxu0
      %v5864 = vadd.f32 0.0, %v5863
      %5865 = vmatmul.bf16.gmra.mxu0 %v1040
      %v5866 = vpop.f32.mrf.mxu0
      %v5867 = vadd.f32 0.0, %v5866
      %v5868 = vpop.f32.mrf.mxu0
      %v5869 = vadd.f32 0.0, %v5868
      %5870 = vmatmul.bf16.gmra.mxu0 %v1043
      %v5871 = vpop.f32.mrf.mxu0
      %v5872 = vadd.f32 0.0, %v5871
      %v5873 = vpop.f32.mrf.mxu0
      %v5874 = vadd.f32 0.0, %v5873
      %5875 = vdwg.mxu0
      %5876 = vmatpush.bf16.msra.mxu0 0
      %5877 = vmatpush.bf16.msra.mxu0 0
      %5878 = vmatpush.bf16.msra.mxu0 0
      %5879 = vmatpush.bf16.msra.mxu0 0
      %5880 = vmatpush.bf16.msra.mxu0 0
      %5881 = vmatpush.bf16.msra.mxu0 0
      %5882 = vmatpush.bf16.msra.mxu0 0
      %5883 = vmatpush.bf16.msra.mxu0 %v5233
      %5884 = vmatmul.bf16.gmra.mxu0 %v998
      %v5885 = vpop.f32.mrf.mxu0
      %v5886 = vadd.f32 0.0, %v5885
      %v5887 = vpop.f32.mrf.mxu0
      %v5888 = vadd.f32 0.0, %v5887
      %5889 = vmatmul.bf16.gmra.mxu0 %v1001
      %v5890 = vpop.f32.mrf.mxu0
      %v5891 = vadd.f32 0.0, %v5890
      %v5892 = vpop.f32.mrf.mxu0
      %v5893 = vadd.f32 0.0, %v5892
      %5894 = vmatmul.bf16.gmra.mxu0 %v1004
      %v5895 = vpop.f32.mrf.mxu0
      %v5896 = vadd.f32 0.0, %v5895
      %v5897 = vpop.f32.mrf.mxu0
      %v5898 = vadd.f32 0.0, %v5897
      %5899 = vmatmul.bf16.gmra.mxu0 %v1007
      %v5900 = vpop.f32.mrf.mxu0
      %v5901 = vadd.f32 0.0, %v5900
      %v5902 = vpop.f32.mrf.mxu0
      %v5903 = vadd.f32 0.0, %v5902
      %5904 = vmatmul.bf16.gmra.mxu0 %v1010
      %v5905 = vpop.f32.mrf.mxu0
      %v5906 = vadd.f32 0.0, %v5905
      %v5907 = vpop.f32.mrf.mxu0
      %v5908 = vadd.f32 0.0, %v5907
      %5909 = vmatmul.bf16.gmra.mxu0 %v1013
      %v5910 = vpop.f32.mrf.mxu0
      %v5911 = vadd.f32 0.0, %v5910
      %v5912 = vpop.f32.mrf.mxu0
      %v5913 = vadd.f32 0.0, %v5912
      %5914 = vmatmul.bf16.gmra.mxu0 %v1016
      %v5915 = vpop.f32.mrf.mxu0
      %v5916 = vadd.f32 0.0, %v5915
      %v5917 = vpop.f32.mrf.mxu0
      %v5918 = vadd.f32 0.0, %v5917
      %5919 = vmatmul.bf16.gmra.mxu0 %v1019
      %v5920 = vpop.f32.mrf.mxu0
      %v5921 = vadd.f32 0.0, %v5920
      %v5922 = vpop.f32.mrf.mxu0
      %v5923 = vadd.f32 0.0, %v5922
      %5924 = vmatmul.bf16.gmra.mxu0 %v1022
      %v5925 = vpop.f32.mrf.mxu0
      %v5926 = vadd.f32 0.0, %v5925
      %v5927 = vpop.f32.mrf.mxu0
      %v5928 = vadd.f32 0.0, %v5927
      %5929 = vmatmul.bf16.gmra.mxu0 %v1025
      %v5930 = vpop.f32.mrf.mxu0
      %v5931 = vadd.f32 0.0, %v5930
      %v5932 = vpop.f32.mrf.mxu0
      %v5933 = vadd.f32 0.0, %v5932
      %5934 = vmatmul.bf16.gmra.mxu0 %v1028
      %v5935 = vpop.f32.mrf.mxu0
      %v5936 = vadd.f32 0.0, %v5935
      %v5937 = vpop.f32.mrf.mxu0
      %v5938 = vadd.f32 0.0, %v5937
      %5939 = vmatmul.bf16.gmra.mxu0 %v1031
      %v5940 = vpop.f32.mrf.mxu0
      %v5941 = vadd.f32 0.0, %v5940
      %v5942 = vpop.f32.mrf.mxu0
      %v5943 = vadd.f32 0.0, %v5942
      %5944 = vmatmul.bf16.gmra.mxu0 %v1034
      %v5945 = vpop.f32.mrf.mxu0
      %v5946 = vadd.f32 0.0, %v5945
      %v5947 = vpop.f32.mrf.mxu0
      %v5948 = vadd.f32 0.0, %v5947
      %5949 = vmatmul.bf16.gmra.mxu0 %v1037
      %v5950 = vpop.f32.mrf.mxu0
      %v5951 = vadd.f32 0.0, %v5950
      %v5952 = vpop.f32.mrf.mxu0
      %v5953 = vadd.f32 0.0, %v5952
      %5954 = vmatmul.bf16.gmra.mxu0 %v1040
      %v5955 = vpop.f32.mrf.mxu0
      %v5956 = vadd.f32 0.0, %v5955
      %v5957 = vpop.f32.mrf.mxu0
      %v5958 = vadd.f32 0.0, %v5957
      %5959 = vmatmul.bf16.gmra.mxu0 %v1043
      %v5960 = vpop.f32.mrf.mxu0
      %v5961 = vadd.f32 0.0, %v5960
      %v5962 = vpop.f32.mrf.mxu0
      %v5963 = vadd.f32 0.0, %v5962
      %5964 = vdwg.mxu0
      %v5965 = vmax.f32 %v5797, %v5802
      %v5966 = vmax.f32 %v5799, %v5804
      %v5967 = vmax.f32 %v5965, %v5807
      %v5968 = vmax.f32 %v5966, %v5809
      %v5969 = vmax.f32 %v5967, %v5812
      %v5970 = vmax.f32 %v5968, %v5814
      %v5971 = vmax.f32 %v5969, %v5817
      %v5972 = vmax.f32 %v5970, %v5819
      %v5973 = vmax.f32 %v5971, %v5822
      %v5974 = vmax.f32 %v5972, %v5824
      %v5975 = vmax.f32 %v5973, %v5827
      %v5976 = vmax.f32 %v5974, %v5829
      %v5977 = vmax.f32 %v5975, %v5832
      %v5978 = vmax.f32 %v5976, %v5834
      %v5979 = vmax.f32 %v5977, %v5837
      %v5980 = vmax.f32 %v5978, %v5839
      %v5981 = vmax.f32 %v5979, %v5842
      %v5982 = vmax.f32 %v5980, %v5844
      %v5983 = vmax.f32 %v5981, %v5847
      %v5984 = vmax.f32 %v5982, %v5849
      %v5985 = vmax.f32 %v5983, %v5852
      %v5986 = vmax.f32 %v5984, %v5854
      %v5987 = vmax.f32 %v5985, %v5857
      %v5988 = vmax.f32 %v5986, %v5859
      %v5989 = vmax.f32 %v5987, %v5862
      %v5990 = vmax.f32 %v5988, %v5864
      %v5991 = vmax.f32 %v5989, %v5867
      %v5992 = vmax.f32 %v5990, %v5869
      %v5993 = vmax.f32 %v5991, %v5872
      %v5994 = vmax.f32 %v5992, %v5874
      %v5995 = vmax.f32 %v5993, %v5994
      %v5996 = vrot.slane %v5995, 4
      %v5997 = vmax.f32 %v5995, %v5996
      %v5998 = vrot.slane %v5997, 2
      %v5999 = vmax.f32 %v5997, %v5998
      %v6000 = vrot.slane %v5999, 1
      %v6001 = vmax.f32 %v5999, %v6000
      %v6002 = vmax.f32 %v5886, %v5891
      %v6003 = vmax.f32 %v5888, %v5893
      %v6004 = vmax.f32 %v6002, %v5896
      %v6005 = vmax.f32 %v6003, %v5898
      %v6006 = vmax.f32 %v6004, %v5901
      %v6007 = vmax.f32 %v6005, %v5903
      %v6008 = vmax.f32 %v6006, %v5906
      %v6009 = vmax.f32 %v6007, %v5908
      %v6010 = vmax.f32 %v6008, %v5911
      %v6011 = vmax.f32 %v6009, %v5913
      %v6012 = vmax.f32 %v6010, %v5916
      %v6013 = vmax.f32 %v6011, %v5918
      %v6014 = vmax.f32 %v6012, %v5921
      %v6015 = vmax.f32 %v6013, %v5923
      %v6016 = vmax.f32 %v6014, %v5926
      %v6017 = vmax.f32 %v6015, %v5928
      %v6018 = vmax.f32 %v6016, %v5931
      %v6019 = vmax.f32 %v6017, %v5933
      %v6020 = vmax.f32 %v6018, %v5936
      %v6021 = vmax.f32 %v6019, %v5938
      %v6022 = vmax.f32 %v6020, %v5941
      %v6023 = vmax.f32 %v6021, %v5943
      %v6024 = vmax.f32 %v6022, %v5946
      %v6025 = vmax.f32 %v6023, %v5948
      %v6026 = vmax.f32 %v6024, %v5951
      %v6027 = vmax.f32 %v6025, %v5953
      %v6028 = vmax.f32 %v6026, %v5956
      %v6029 = vmax.f32 %v6027, %v5958
      %v6030 = vmax.f32 %v6028, %v5961
      %v6031 = vmax.f32 %v6029, %v5963
      %v6032 = vmax.f32 %v6030, %v6031
      %v6033 = vrot.slane %v6032, 4
      %v6034 = vmax.f32 %v6032, %v6033
      %v6035 = vrot.slane %v6034, 2
      %v6036 = vmax.f32 %v6034, %v6035
      %v6037 = vrot.slane %v6036, 1
      %v6038 = vmax.f32 %v6036, %v6037
      %v6039 = vsub.f32 %v5797, %v6001
      %v6040 = vsub.f32 %v5886, %v6038
      %v6041 = vsub.f32 %v5799, %v6001
      %v6042 = vsub.f32 %v5888, %v6038
      %v6043 = vsub.f32 %v5802, %v6001
      %v6044 = vsub.f32 %v5891, %v6038
      %v6045 = vsub.f32 %v5804, %v6001
      %v6046 = vsub.f32 %v5893, %v6038
      %v6047 = vsub.f32 %v5807, %v6001
      %v6048 = vsub.f32 %v5896, %v6038
      %v6049 = vsub.f32 %v5809, %v6001
      %v6050 = vsub.f32 %v5898, %v6038
      %v6051 = vsub.f32 %v5812, %v6001
      %v6052 = vsub.f32 %v5901, %v6038
      %v6053 = vsub.f32 %v5814, %v6001
      %v6054 = vsub.f32 %v5903, %v6038
      %v6055 = vsub.f32 %v5817, %v6001
      %v6056 = vsub.f32 %v5906, %v6038
      %v6057 = vsub.f32 %v5819, %v6001
      %v6058 = vsub.f32 %v5908, %v6038
      %v6059 = vsub.f32 %v5822, %v6001
      %v6060 = vsub.f32 %v5911, %v6038
      %v6061 = vsub.f32 %v5824, %v6001
      %v6062 = vsub.f32 %v5913, %v6038
      %v6063 = vsub.f32 %v5827, %v6001
      %v6064 = vsub.f32 %v5916, %v6038
      %v6065 = vsub.f32 %v5829, %v6001
      %v6066 = vsub.f32 %v5918, %v6038
      %v6067 = vsub.f32 %v5832, %v6001
      %v6068 = vsub.f32 %v5921, %v6038
      %v6069 = vsub.f32 %v5834, %v6001
      %v6070 = vsub.f32 %v5923, %v6038
      %v6071 = vsub.f32 %v5837, %v6001
      %v6072 = vsub.f32 %v5926, %v6038
      %v6073 = vsub.f32 %v5839, %v6001
      %v6074 = vsub.f32 %v5928, %v6038
      %v6075 = vsub.f32 %v5842, %v6001
      %v6076 = vsub.f32 %v5931, %v6038
      %v6077 = vsub.f32 %v5844, %v6001
      %v6078 = vsub.f32 %v5933, %v6038
      %v6079 = vsub.f32 %v5847, %v6001
      %v6080 = vsub.f32 %v5936, %v6038
      %v6081 = vsub.f32 %v5849, %v6001
      %v6082 = vsub.f32 %v5938, %v6038
      %v6083 = vsub.f32 %v5852, %v6001
      %v6084 = vsub.f32 %v5941, %v6038
      %v6085 = vsub.f32 %v5854, %v6001
      %v6086 = vsub.f32 %v5943, %v6038
      %v6087 = vsub.f32 %v5857, %v6001
      %v6088 = vsub.f32 %v5946, %v6038
      %v6089 = vsub.f32 %v5859, %v6001
      %v6090 = vsub.f32 %v5948, %v6038
      %v6091 = vsub.f32 %v5862, %v6001
      %v6092 = vsub.f32 %v5951, %v6038
      %v6093 = vsub.f32 %v5864, %v6001
      %v6094 = vsub.f32 %v5953, %v6038
      %v6095 = vsub.f32 %v5867, %v6001
      %v6096 = vsub.f32 %v5956, %v6038
      %v6097 = vsub.f32 %v5869, %v6001
      %v6098 = vsub.f32 %v5958, %v6038
      %v6099 = vsub.f32 %v5872, %v6001
      %v6100 = vsub.f32 %v5961, %v6038
      %v6101 = vsub.f32 %v5874, %v6001
      %v6102 = vsub.f32 %v5963, %v6038
      %v6103 = vmul.f32 %v6039, 1.442695
      %v6104 = vpow.pop %v6103
      %v6105 = vmul.f32 %v6040, 1.442695
      %v6106 = vpow.pop %v6105
      %v6107 = vmul.f32 %v6041, 1.442695
      %v6108 = vpow.pop %v6107
      %v6109 = vmul.f32 %v6042, 1.442695
      %v6110 = vpow.pop %v6109
      %v6111 = vmul.f32 %v6043, 1.442695
      %v6112 = vpow.pop %v6111
      %v6113 = vmul.f32 %v6044, 1.442695
      %v6114 = vpow.pop %v6113
      %v6115 = vmul.f32 %v6045, 1.442695
      %v6116 = vpow.pop %v6115
      %v6117 = vmul.f32 %v6046, 1.442695
      %v6118 = vpow.pop %v6117
      %v6119 = vmul.f32 %v6047, 1.442695
      %v6120 = vpow.pop %v6119
      %v6121 = vmul.f32 %v6048, 1.442695
      %v6122 = vpow.pop %v6121
      %v6123 = vmul.f32 %v6049, 1.442695
      %v6124 = vpow.pop %v6123
      %v6125 = vmul.f32 %v6050, 1.442695
      %v6126 = vpow.pop %v6125
      %v6127 = vmul.f32 %v6051, 1.442695
      %v6128 = vpow.pop %v6127
      %v6129 = vmul.f32 %v6052, 1.442695
      %v6130 = vpow.pop %v6129
      %v6131 = vmul.f32 %v6053, 1.442695
      %v6132 = vpow.pop %v6131
      %v6133 = vmul.f32 %v6054, 1.442695
      %v6134 = vpow.pop %v6133
      %v6135 = vmul.f32 %v6055, 1.442695
      %v6136 = vpow.pop %v6135
      %v6137 = vmul.f32 %v6056, 1.442695
      %v6138 = vpow.pop %v6137
      %v6139 = vmul.f32 %v6057, 1.442695
      %v6140 = vpow.pop %v6139
      %v6141 = vmul.f32 %v6058, 1.442695
      %v6142 = vpow.pop %v6141
      %v6143 = vmul.f32 %v6059, 1.442695
      %v6144 = vpow.pop %v6143
      %v6145 = vmul.f32 %v6060, 1.442695
      %v6146 = vpow.pop %v6145
      %v6147 = vmul.f32 %v6061, 1.442695
      %v6148 = vpow.pop %v6147
      %v6149 = vmul.f32 %v6062, 1.442695
      %v6150 = vpow.pop %v6149
      %v6151 = vmul.f32 %v6063, 1.442695
      %v6152 = vpow.pop %v6151
      %v6153 = vmul.f32 %v6064, 1.442695
      %v6154 = vpow.pop %v6153
      %v6155 = vmul.f32 %v6065, 1.442695
      %v6156 = vpow.pop %v6155
      %v6157 = vmul.f32 %v6066, 1.442695
      %v6158 = vpow.pop %v6157
      %v6159 = vmul.f32 %v6067, 1.442695
      %v6160 = vpow.pop %v6159
      %v6161 = vmul.f32 %v6068, 1.442695
      %v6162 = vpow.pop %v6161
      %v6163 = vmul.f32 %v6069, 1.442695
      %v6164 = vpow.pop %v6163
      %v6165 = vmul.f32 %v6070, 1.442695
      %v6166 = vpow.pop %v6165
      %v6167 = vmul.f32 %v6071, 1.442695
      %v6168 = vpow.pop %v6167
      %v6169 = vmul.f32 %v6072, 1.442695
      %v6170 = vpow.pop %v6169
      %v6171 = vmul.f32 %v6073, 1.442695
      %v6172 = vpow.pop %v6171
      %v6173 = vmul.f32 %v6074, 1.442695
      %v6174 = vpow.pop %v6173
      %v6175 = vmul.f32 %v6075, 1.442695
      %v6176 = vpow.pop %v6175
      %v6177 = vmul.f32 %v6076, 1.442695
      %v6178 = vpow.pop %v6177
      %v6179 = vmul.f32 %v6077, 1.442695
      %v6180 = vpow.pop %v6179
      %v6181 = vmul.f32 %v6078, 1.442695
      %v6182 = vpow.pop %v6181
      %v6183 = vmul.f32 %v6079, 1.442695
      %v6184 = vpow.pop %v6183
      %v6185 = vmul.f32 %v6080, 1.442695
      %v6186 = vpow.pop %v6185
      %v6187 = vmul.f32 %v6081, 1.442695
      %v6188 = vpow.pop %v6187
      %v6189 = vmul.f32 %v6082, 1.442695
      %v6190 = vpow.pop %v6189
      %v6191 = vmul.f32 %v6083, 1.442695
      %v6192 = vpow.pop %v6191
      %v6193 = vmul.f32 %v6084, 1.442695
      %v6194 = vpow.pop %v6193
      %v6195 = vmul.f32 %v6085, 1.442695
      %v6196 = vpow.pop %v6195
      %v6197 = vmul.f32 %v6086, 1.442695
      %v6198 = vpow.pop %v6197
      %v6199 = vmul.f32 %v6087, 1.442695
      %v6200 = vpow.pop %v6199
      %v6201 = vmul.f32 %v6088, 1.442695
      %v6202 = vpow.pop %v6201
      %v6203 = vmul.f32 %v6089, 1.442695
      %v6204 = vpow.pop %v6203
      %v6205 = vmul.f32 %v6090, 1.442695
      %v6206 = vpow.pop %v6205
      %v6207 = vmul.f32 %v6091, 1.442695
      %v6208 = vpow.pop %v6207
      %v6209 = vmul.f32 %v6092, 1.442695
      %v6210 = vpow.pop %v6209
      %v6211 = vmul.f32 %v6093, 1.442695
      %v6212 = vpow.pop %v6211
      %v6213 = vmul.f32 %v6094, 1.442695
      %v6214 = vpow.pop %v6213
      %v6215 = vmul.f32 %v6095, 1.442695
      %v6216 = vpow.pop %v6215
      %v6217 = vmul.f32 %v6096, 1.442695
      %v6218 = vpow.pop %v6217
      %v6219 = vmul.f32 %v6097, 1.442695
      %v6220 = vpow.pop %v6219
      %v6221 = vmul.f32 %v6098, 1.442695
      %v6222 = vpow.pop %v6221
      %v6223 = vmul.f32 %v6099, 1.442695
      %v6224 = vpow.pop %v6223
      %v6225 = vmul.f32 %v6100, 1.442695
      %v6226 = vpow.pop %v6225
      %v6227 = vmul.f32 %v6101, 1.442695
      %v6228 = vpow.pop %v6227
      %v6229 = vmul.f32 %v6102, 1.442695
      %v6230 = vpow.pop %v6229
      %v6231 = vadd.f32 %v6104, %v6108
      %v6232 = vadd.f32 %v6231, %v6112
      %v6233 = vadd.f32 %v6232, %v6116
      %v6234 = vadd.f32 %v6233, %v6120
      %v6235 = vadd.f32 %v6234, %v6124
      %v6236 = vadd.f32 %v6235, %v6128
      %v6237 = vadd.f32 %v6236, %v6132
      %v6238 = vadd.f32 %v6237, %v6136
      %v6239 = vadd.f32 %v6238, %v6140
      %v6240 = vadd.f32 %v6239, %v6144
      %v6241 = vadd.f32 %v6240, %v6148
      %v6242 = vadd.f32 %v6241, %v6152
      %v6243 = vadd.f32 %v6242, %v6156
      %v6244 = vadd.f32 %v6243, %v6160
      %v6245 = vadd.f32 %v6244, %v6164
      %v6246 = vadd.f32 %v6245, %v6168
      %v6247 = vadd.f32 %v6246, %v6172
      %v6248 = vadd.f32 %v6247, %v6176
      %v6249 = vadd.f32 %v6248, %v6180
      %v6250 = vadd.f32 %v6249, %v6184
      %v6251 = vadd.f32 %v6250, %v6188
      %v6252 = vadd.f32 %v6251, %v6192
      %v6253 = vadd.f32 %v6252, %v6196
      %v6254 = vadd.f32 %v6253, %v6200
      %v6255 = vadd.f32 %v6254, %v6204
      %v6256 = vadd.f32 %v6255, %v6208
      %v6257 = vadd.f32 %v6256, %v6212
      %v6258 = vadd.f32 %v6257, %v6216
      %v6259 = vadd.f32 %v6258, %v6220
      %v6260 = vadd.f32 %v6259, %v6224
      %v6261 = vadd.f32 %v6260, %v6228
      %v6262 = vrot.slane %v6261, 4
      %v6263 = vadd.f32 %v6261, %v6262
      %v6264 = vrot.slane %v6263, 2
      %v6265 = vadd.f32 %v6263, %v6264
      %v6266 = vrot.slane %v6265, 1
      %v6267 = vadd.f32 %v6265, %v6266
      %v6268 = vadd.f32 %v6106, %v6110
      %v6269 = vadd.f32 %v6268, %v6114
      %v6270 = vadd.f32 %v6269, %v6118
      %v6271 = vadd.f32 %v6270, %v6122
      %v6272 = vadd.f32 %v6271, %v6126
      %v6273 = vadd.f32 %v6272, %v6130
      %v6274 = vadd.f32 %v6273, %v6134
      %v6275 = vadd.f32 %v6274, %v6138
      %v6276 = vadd.f32 %v6275, %v6142
      %v6277 = vadd.f32 %v6276, %v6146
      %v6278 = vadd.f32 %v6277, %v6150
      %v6279 = vadd.f32 %v6278, %v6154
      %v6280 = vadd.f32 %v6279, %v6158
      %v6281 = vadd.f32 %v6280, %v6162
      %v6282 = vadd.f32 %v6281, %v6166
      %v6283 = vadd.f32 %v6282, %v6170
      %v6284 = vadd.f32 %v6283, %v6174
      %v6285 = vadd.f32 %v6284, %v6178
      %v6286 = vadd.f32 %v6285, %v6182
      %v6287 = vadd.f32 %v6286, %v6186
      %v6288 = vadd.f32 %v6287, %v6190
      %v6289 = vadd.f32 %v6288, %v6194
      %v6290 = vadd.f32 %v6289, %v6198
      %v6291 = vadd.f32 %v6290, %v6202
      %v6292 = vadd.f32 %v6291, %v6206
      %v6293 = vadd.f32 %v6292, %v6210
      %v6294 = vadd.f32 %v6293, %v6214
      %v6295 = vadd.f32 %v6294, %v6218
      %v6296 = vadd.f32 %v6295, %v6222
      %v6297 = vadd.f32 %v6296, %v6226
      %v6298 = vadd.f32 %v6297, %v6230
      %v6299 = vrot.slane %v6298, 4
      %v6300 = vadd.f32 %v6298, %v6299
      %v6301 = vrot.slane %v6300, 2
      %v6302 = vadd.f32 %v6300, %v6301
      %v6303 = vrot.slane %v6302, 1
      %v6304 = vadd.f32 %v6302, %v6303
      %v6305 = vrcp.pop %v6267
      %v6306 = vrcp.pop %v6304
      %v6307 = vpack.c.bf16 %v6106, %v6104
      %v6308 = vpack.c.bf16 %v6110, %v6108
      %v6309 = vpack.c.bf16 %v6114, %v6112
      %v6310 = vpack.c.bf16 %v6118, %v6116
      %v6311 = vpack.c.bf16 %v6122, %v6120
      %v6312 = vpack.c.bf16 %v6126, %v6124
      %v6313 = vpack.c.bf16 %v6130, %v6128
      %v6314 = vpack.c.bf16 %v6134, %v6132
      %v6315 = vpack.c.bf16 %v6138, %v6136
      %v6316 = vpack.c.bf16 %v6142, %v6140
      %v6317 = vpack.c.bf16 %v6146, %v6144
      %v6318 = vpack.c.bf16 %v6150, %v6148
      %v6319 = vpack.c.bf16 %v6154, %v6152
      %v6320 = vpack.c.bf16 %v6158, %v6156
      %v6321 = vpack.c.bf16 %v6162, %v6160
      %v6322 = vpack.c.bf16 %v6166, %v6164
      %v6323 = vpack.c.bf16 %v6170, %v6168
      %v6324 = vpack.c.bf16 %v6174, %v6172
      %v6325 = vpack.c.bf16 %v6178, %v6176
      %v6326 = vpack.c.bf16 %v6182, %v6180
      %v6327 = vpack.c.bf16 %v6186, %v6184
      %v6328 = vpack.c.bf16 %v6190, %v6188
      %v6329 = vpack.c.bf16 %v6194, %v6192
      %v6330 = vpack.c.bf16 %v6198, %v6196
      %v6331 = vpack.c.bf16 %v6202, %v6200
      %v6332 = vpack.c.bf16 %v6206, %v6204
      %v6333 = vpack.c.bf16 %v6210, %v6208
      %v6334 = vpack.c.bf16 %v6214, %v6212
      %v6335 = vpack.c.bf16 %v6218, %v6216
      %v6336 = vpack.c.bf16 %v6222, %v6220
      %v6337 = vpack.c.bf16 %v6226, %v6224
      %v6338 = vpack.c.bf16 %v6230, %v6228
      %6339 = vmatpush.bf16.msra.mxu0 0
      %6340 = vmatpush.bf16.msra.mxu0 0
      %6341 = vmatpush.bf16.msra.mxu0 0
      %6342 = vmatpush.bf16.msra.mxu0 0
      %6343 = vmatpush.bf16.msra.mxu0 0
      %6344 = vmatpush.bf16.msra.mxu0 0
      %6345 = vmatpush.bf16.msra.mxu0 0
      %6346 = vmatpush.bf16.msra.mxu0 %v5230
      %6347 = vmatmul.bf16.gmra.mxu0 %v1630
      %v6348 = vpop.f32.mrf.mxu0
      %v6349 = vadd.f32 0.0, %v6348
      %v6350 = vpop.f32.mrf.mxu0
      %v6351 = vadd.f32 0.0, %v6350
      %6352 = vmatmul.bf16.gmra.mxu0 %v1633
      %v6353 = vpop.f32.mrf.mxu0
      %v6354 = vadd.f32 0.0, %v6353
      %v6355 = vpop.f32.mrf.mxu0
      %v6356 = vadd.f32 0.0, %v6355
      %6357 = vmatmul.bf16.gmra.mxu0 %v1636
      %v6358 = vpop.f32.mrf.mxu0
      %v6359 = vadd.f32 0.0, %v6358
      %v6360 = vpop.f32.mrf.mxu0
      %v6361 = vadd.f32 0.0, %v6360
      %6362 = vmatmul.bf16.gmra.mxu0 %v1639
      %v6363 = vpop.f32.mrf.mxu0
      %v6364 = vadd.f32 0.0, %v6363
      %v6365 = vpop.f32.mrf.mxu0
      %v6366 = vadd.f32 0.0, %v6365
      %6367 = vmatmul.bf16.gmra.mxu0 %v1642
      %v6368 = vpop.f32.mrf.mxu0
      %v6369 = vadd.f32 0.0, %v6368
      %v6370 = vpop.f32.mrf.mxu0
      %v6371 = vadd.f32 0.0, %v6370
      %6372 = vmatmul.bf16.gmra.mxu0 %v1645
      %v6373 = vpop.f32.mrf.mxu0
      %v6374 = vadd.f32 0.0, %v6373
      %v6375 = vpop.f32.mrf.mxu0
      %v6376 = vadd.f32 0.0, %v6375
      %6377 = vmatmul.bf16.gmra.mxu0 %v1648
      %v6378 = vpop.f32.mrf.mxu0
      %v6379 = vadd.f32 0.0, %v6378
      %v6380 = vpop.f32.mrf.mxu0
      %v6381 = vadd.f32 0.0, %v6380
      %6382 = vmatmul.bf16.gmra.mxu0 %v1651
      %v6383 = vpop.f32.mrf.mxu0
      %v6384 = vadd.f32 0.0, %v6383
      %v6385 = vpop.f32.mrf.mxu0
      %v6386 = vadd.f32 0.0, %v6385
      %6387 = vmatmul.bf16.gmra.mxu0 %v1654
      %v6388 = vpop.f32.mrf.mxu0
      %v6389 = vadd.f32 0.0, %v6388
      %v6390 = vpop.f32.mrf.mxu0
      %v6391 = vadd.f32 0.0, %v6390
      %6392 = vmatmul.bf16.gmra.mxu0 %v1657
      %v6393 = vpop.f32.mrf.mxu0
      %v6394 = vadd.f32 0.0, %v6393
      %v6395 = vpop.f32.mrf.mxu0
      %v6396 = vadd.f32 0.0, %v6395
      %6397 = vmatmul.bf16.gmra.mxu0 %v1660
      %v6398 = vpop.f32.mrf.mxu0
      %v6399 = vadd.f32 0.0, %v6398
      %v6400 = vpop.f32.mrf.mxu0
      %v6401 = vadd.f32 0.0, %v6400
      %6402 = vmatmul.bf16.gmra.mxu0 %v1663
      %v6403 = vpop.f32.mrf.mxu0
      %v6404 = vadd.f32 0.0, %v6403
      %v6405 = vpop.f32.mrf.mxu0
      %v6406 = vadd.f32 0.0, %v6405
      %6407 = vmatmul.bf16.gmra.mxu0 %v1666
      %v6408 = vpop.f32.mrf.mxu0
      %v6409 = vadd.f32 0.0, %v6408
      %v6410 = vpop.f32.mrf.mxu0
      %v6411 = vadd.f32 0.0, %v6410
      %6412 = vmatmul.bf16.gmra.mxu0 %v1669
      %v6413 = vpop.f32.mrf.mxu0
      %v6414 = vadd.f32 0.0, %v6413
      %v6415 = vpop.f32.mrf.mxu0
      %v6416 = vadd.f32 0.0, %v6415
      %6417 = vmatmul.bf16.gmra.mxu0 %v1672
      %v6418 = vpop.f32.mrf.mxu0
      %v6419 = vadd.f32 0.0, %v6418
      %v6420 = vpop.f32.mrf.mxu0
      %v6421 = vadd.f32 0.0, %v6420
      %6422 = vmatmul.bf16.gmra.mxu0 %v1675
      %v6423 = vpop.f32.mrf.mxu0
      %v6424 = vadd.f32 0.0, %v6423
      %v6425 = vpop.f32.mrf.mxu0
      %v6426 = vadd.f32 0.0, %v6425
      %6427 = vdwg.mxu0
      %6428 = vmatpush.bf16.msra.mxu0 0
      %6429 = vmatpush.bf16.msra.mxu0 0
      %6430 = vmatpush.bf16.msra.mxu0 0
      %6431 = vmatpush.bf16.msra.mxu0 0
      %6432 = vmatpush.bf16.msra.mxu0 0
      %6433 = vmatpush.bf16.msra.mxu0 0
      %6434 = vmatpush.bf16.msra.mxu0 0
      %6435 = vmatpush.bf16.msra.mxu0 %v5233
      %6436 = vmatmul.bf16.gmra.mxu0 %v1630
      %v6437 = vpop.f32.mrf.mxu0
      %v6438 = vadd.f32 0.0, %v6437
      %v6439 = vpop.f32.mrf.mxu0
      %v6440 = vadd.f32 0.0, %v6439
      %6441 = vmatmul.bf16.gmra.mxu0 %v1633
      %v6442 = vpop.f32.mrf.mxu0
      %v6443 = vadd.f32 0.0, %v6442
      %v6444 = vpop.f32.mrf.mxu0
      %v6445 = vadd.f32 0.0, %v6444
      %6446 = vmatmul.bf16.gmra.mxu0 %v1636
      %v6447 = vpop.f32.mrf.mxu0
      %v6448 = vadd.f32 0.0, %v6447
      %v6449 = vpop.f32.mrf.mxu0
      %v6450 = vadd.f32 0.0, %v6449
      %6451 = vmatmul.bf16.gmra.mxu0 %v1639
      %v6452 = vpop.f32.mrf.mxu0
      %v6453 = vadd.f32 0.0, %v6452
      %v6454 = vpop.f32.mrf.mxu0
      %v6455 = vadd.f32 0.0, %v6454
      %6456 = vmatmul.bf16.gmra.mxu0 %v1642
      %v6457 = vpop.f32.mrf.mxu0
      %v6458 = vadd.f32 0.0, %v6457
      %v6459 = vpop.f32.mrf.mxu0
      %v6460 = vadd.f32 0.0, %v6459
      %6461 = vmatmul.bf16.gmra.mxu0 %v1645
      %v6462 = vpop.f32.mrf.mxu0
      %v6463 = vadd.f32 0.0, %v6462
      %v6464 = vpop.f32.mrf.mxu0
      %v6465 = vadd.f32 0.0, %v6464
      %6466 = vmatmul.bf16.gmra.mxu0 %v1648
      %v6467 = vpop.f32.mrf.mxu0
      %v6468 = vadd.f32 0.0, %v6467
      %v6469 = vpop.f32.mrf.mxu0
      %v6470 = vadd.f32 0.0, %v6469
      %6471 = vmatmul.bf16.gmra.mxu0 %v1651
      %v6472 = vpop.f32.mrf.mxu0
      %v6473 = vadd.f32 0.0, %v6472
      %v6474 = vpop.f32.mrf.mxu0
      %v6475 = vadd.f32 0.0, %v6474
      %6476 = vmatmul.bf16.gmra.mxu0 %v1654
      %v6477 = vpop.f32.mrf.mxu0
      %v6478 = vadd.f32 0.0, %v6477
      %v6479 = vpop.f32.mrf.mxu0
      %v6480 = vadd.f32 0.0, %v6479
      %6481 = vmatmul.bf16.gmra.mxu0 %v1657
      %v6482 = vpop.f32.mrf.mxu0
      %v6483 = vadd.f32 0.0, %v6482
      %v6484 = vpop.f32.mrf.mxu0
      %v6485 = vadd.f32 0.0, %v6484
      %6486 = vmatmul.bf16.gmra.mxu0 %v1660
      %v6487 = vpop.f32.mrf.mxu0
      %v6488 = vadd.f32 0.0, %v6487
      %v6489 = vpop.f32.mrf.mxu0
      %v6490 = vadd.f32 0.0, %v6489
      %6491 = vmatmul.bf16.gmra.mxu0 %v1663
      %v6492 = vpop.f32.mrf.mxu0
      %v6493 = vadd.f32 0.0, %v6492
      %v6494 = vpop.f32.mrf.mxu0
      %v6495 = vadd.f32 0.0, %v6494
      %6496 = vmatmul.bf16.gmra.mxu0 %v1666
      %v6497 = vpop.f32.mrf.mxu0
      %v6498 = vadd.f32 0.0, %v6497
      %v6499 = vpop.f32.mrf.mxu0
      %v6500 = vadd.f32 0.0, %v6499
      %6501 = vmatmul.bf16.gmra.mxu0 %v1669
      %v6502 = vpop.f32.mrf.mxu0
      %v6503 = vadd.f32 0.0, %v6502
      %v6504 = vpop.f32.mrf.mxu0
      %v6505 = vadd.f32 0.0, %v6504
      %6506 = vmatmul.bf16.gmra.mxu0 %v1672
      %v6507 = vpop.f32.mrf.mxu0
      %v6508 = vadd.f32 0.0, %v6507
      %v6509 = vpop.f32.mrf.mxu0
      %v6510 = vadd.f32 0.0, %v6509
      %6511 = vmatmul.bf16.gmra.mxu0 %v1675
      %v6512 = vpop.f32.mrf.mxu0
      %v6513 = vadd.f32 0.0, %v6512
      %v6514 = vpop.f32.mrf.mxu0
      %v6515 = vadd.f32 0.0, %v6514
      %6516 = vdwg.mxu0
      %v6517 = vmax.f32 %v6349, %v6354
      %v6518 = vmax.f32 %v6351, %v6356
      %v6519 = vmax.f32 %v6517, %v6359
      %v6520 = vmax.f32 %v6518, %v6361
      %v6521 = vmax.f32 %v6519, %v6364
      %v6522 = vmax.f32 %v6520, %v6366
      %v6523 = vmax.f32 %v6521, %v6369
      %v6524 = vmax.f32 %v6522, %v6371
      %v6525 = vmax.f32 %v6523, %v6374
      %v6526 = vmax.f32 %v6524, %v6376
      %v6527 = vmax.f32 %v6525, %v6379
      %v6528 = vmax.f32 %v6526, %v6381
      %v6529 = vmax.f32 %v6527, %v6384
      %v6530 = vmax.f32 %v6528, %v6386
      %v6531 = vmax.f32 %v6529, %v6389
      %v6532 = vmax.f32 %v6530, %v6391
      %v6533 = vmax.f32 %v6531, %v6394
      %v6534 = vmax.f32 %v6532, %v6396
      %v6535 = vmax.f32 %v6533, %v6399
      %v6536 = vmax.f32 %v6534, %v6401
      %v6537 = vmax.f32 %v6535, %v6404
      %v6538 = vmax.f32 %v6536, %v6406
      %v6539 = vmax.f32 %v6537, %v6409
      %v6540 = vmax.f32 %v6538, %v6411
      %v6541 = vmax.f32 %v6539, %v6414
      %v6542 = vmax.f32 %v6540, %v6416
      %v6543 = vmax.f32 %v6541, %v6419
      %v6544 = vmax.f32 %v6542, %v6421
      %v6545 = vmax.f32 %v6543, %v6424
      %v6546 = vmax.f32 %v6544, %v6426
      %v6547 = vmax.f32 %v6545, %v6546
      %v6548 = vrot.slane %v6547, 4
      %v6549 = vmax.f32 %v6547, %v6548
      %v6550 = vrot.slane %v6549, 2
      %v6551 = vmax.f32 %v6549, %v6550
      %v6552 = vrot.slane %v6551, 1
      %v6553 = vmax.f32 %v6551, %v6552
      %v6554 = vmax.f32 %v6438, %v6443
      %v6555 = vmax.f32 %v6440, %v6445
      %v6556 = vmax.f32 %v6554, %v6448
      %v6557 = vmax.f32 %v6555, %v6450
      %v6558 = vmax.f32 %v6556, %v6453
      %v6559 = vmax.f32 %v6557, %v6455
      %v6560 = vmax.f32 %v6558, %v6458
      %v6561 = vmax.f32 %v6559, %v6460
      %v6562 = vmax.f32 %v6560, %v6463
      %v6563 = vmax.f32 %v6561, %v6465
      %v6564 = vmax.f32 %v6562, %v6468
      %v6565 = vmax.f32 %v6563, %v6470
      %v6566 = vmax.f32 %v6564, %v6473
      %v6567 = vmax.f32 %v6565, %v6475
      %v6568 = vmax.f32 %v6566, %v6478
      %v6569 = vmax.f32 %v6567, %v6480
      %v6570 = vmax.f32 %v6568, %v6483
      %v6571 = vmax.f32 %v6569, %v6485
      %v6572 = vmax.f32 %v6570, %v6488
      %v6573 = vmax.f32 %v6571, %v6490
      %v6574 = vmax.f32 %v6572, %v6493
      %v6575 = vmax.f32 %v6573, %v6495
      %v6576 = vmax.f32 %v6574, %v6498
      %v6577 = vmax.f32 %v6575, %v6500
      %v6578 = vmax.f32 %v6576, %v6503
      %v6579 = vmax.f32 %v6577, %v6505
      %v6580 = vmax.f32 %v6578, %v6508
      %v6581 = vmax.f32 %v6579, %v6510
      %v6582 = vmax.f32 %v6580, %v6513
      %v6583 = vmax.f32 %v6581, %v6515
      %v6584 = vmax.f32 %v6582, %v6583
      %v6585 = vrot.slane %v6584, 4
      %v6586 = vmax.f32 %v6584, %v6585
      %v6587 = vrot.slane %v6586, 2
      %v6588 = vmax.f32 %v6586, %v6587
      %v6589 = vrot.slane %v6588, 1
      %v6590 = vmax.f32 %v6588, %v6589
      %v6591 = vsub.f32 %v6349, %v6553
      %v6592 = vsub.f32 %v6438, %v6590
      %v6593 = vsub.f32 %v6351, %v6553
      %v6594 = vsub.f32 %v6440, %v6590
      %v6595 = vsub.f32 %v6354, %v6553
      %v6596 = vsub.f32 %v6443, %v6590
      %v6597 = vsub.f32 %v6356, %v6553
      %v6598 = vsub.f32 %v6445, %v6590
      %v6599 = vsub.f32 %v6359, %v6553
      %v6600 = vsub.f32 %v6448, %v6590
      %v6601 = vsub.f32 %v6361, %v6553
      %v6602 = vsub.f32 %v6450, %v6590
      %v6603 = vsub.f32 %v6364, %v6553
      %v6604 = vsub.f32 %v6453, %v6590
      %v6605 = vsub.f32 %v6366, %v6553
      %v6606 = vsub.f32 %v6455, %v6590
      %v6607 = vsub.f32 %v6369, %v6553
      %v6608 = vsub.f32 %v6458, %v6590
      %v6609 = vsub.f32 %v6371, %v6553
      %v6610 = vsub.f32 %v6460, %v6590
      %v6611 = vsub.f32 %v6374, %v6553
      %v6612 = vsub.f32 %v6463, %v6590
      %v6613 = vsub.f32 %v6376, %v6553
      %v6614 = vsub.f32 %v6465, %v6590
      %v6615 = vsub.f32 %v6379, %v6553
      %v6616 = vsub.f32 %v6468, %v6590
      %v6617 = vsub.f32 %v6381, %v6553
      %v6618 = vsub.f32 %v6470, %v6590
      %v6619 = vsub.f32 %v6384, %v6553
      %v6620 = vsub.f32 %v6473, %v6590
      %v6621 = vsub.f32 %v6386, %v6553
      %v6622 = vsub.f32 %v6475, %v6590
      %v6623 = vsub.f32 %v6389, %v6553
      %v6624 = vsub.f32 %v6478, %v6590
      %v6625 = vsub.f32 %v6391, %v6553
      %v6626 = vsub.f32 %v6480, %v6590
      %v6627 = vsub.f32 %v6394, %v6553
      %v6628 = vsub.f32 %v6483, %v6590
      %v6629 = vsub.f32 %v6396, %v6553
      %v6630 = vsub.f32 %v6485, %v6590
      %v6631 = vsub.f32 %v6399, %v6553
      %v6632 = vsub.f32 %v6488, %v6590
      %v6633 = vsub.f32 %v6401, %v6553
      %v6634 = vsub.f32 %v6490, %v6590
      %v6635 = vsub.f32 %v6404, %v6553
      %v6636 = vsub.f32 %v6493, %v6590
      %v6637 = vsub.f32 %v6406, %v6553
      %v6638 = vsub.f32 %v6495, %v6590
      %v6639 = vsub.f32 %v6409, %v6553
      %v6640 = vsub.f32 %v6498, %v6590
      %v6641 = vsub.f32 %v6411, %v6553
      %v6642 = vsub.f32 %v6500, %v6590
      %v6643 = vsub.f32 %v6414, %v6553
      %v6644 = vsub.f32 %v6503, %v6590
      %v6645 = vsub.f32 %v6416, %v6553
      %v6646 = vsub.f32 %v6505, %v6590
      %v6647 = vsub.f32 %v6419, %v6553
      %v6648 = vsub.f32 %v6508, %v6590
      %v6649 = vsub.f32 %v6421, %v6553
      %v6650 = vsub.f32 %v6510, %v6590
      %v6651 = vsub.f32 %v6424, %v6553
      %v6652 = vsub.f32 %v6513, %v6590
      %v6653 = vsub.f32 %v6426, %v6553
      %v6654 = vsub.f32 %v6515, %v6590
      %v6655 = vmul.f32 %v6591, 1.442695
      %v6656 = vpow.pop %v6655
      %v6657 = vmul.f32 %v6592, 1.442695
      %v6658 = vpow.pop %v6657
      %v6659 = vmul.f32 %v6593, 1.442695
      %v6660 = vpow.pop %v6659
      %v6661 = vmul.f32 %v6594, 1.442695
      %v6662 = vpow.pop %v6661
      %v6663 = vmul.f32 %v6595, 1.442695
      %v6664 = vpow.pop %v6663
      %v6665 = vmul.f32 %v6596, 1.442695
      %v6666 = vpow.pop %v6665
      %v6667 = vmul.f32 %v6597, 1.442695
      %v6668 = vpow.pop %v6667
      %v6669 = vmul.f32 %v6598, 1.442695
      %v6670 = vpow.pop %v6669
      %v6671 = vmul.f32 %v6599, 1.442695
      %v6672 = vpow.pop %v6671
      %v6673 = vmul.f32 %v6600, 1.442695
      %v6674 = vpow.pop %v6673
      %v6675 = vmul.f32 %v6601, 1.442695
      %v6676 = vpow.pop %v6675
      %v6677 = vmul.f32 %v6602, 1.442695
      %v6678 = vpow.pop %v6677
      %v6679 = vmul.f32 %v6603, 1.442695
      %v6680 = vpow.pop %v6679
      %v6681 = vmul.f32 %v6604, 1.442695
      %v6682 = vpow.pop %v6681
      %v6683 = vmul.f32 %v6605, 1.442695
      %v6684 = vpow.pop %v6683
      %v6685 = vmul.f32 %v6606, 1.442695
      %v6686 = vpow.pop %v6685
      %v6687 = vmul.f32 %v6607, 1.442695
      %v6688 = vpow.pop %v6687
      %v6689 = vmul.f32 %v6608, 1.442695
      %v6690 = vpow.pop %v6689
      %v6691 = vmul.f32 %v6609, 1.442695
      %v6692 = vpow.pop %v6691
      %v6693 = vmul.f32 %v6610, 1.442695
      %v6694 = vpow.pop %v6693
      %v6695 = vmul.f32 %v6611, 1.442695
      %v6696 = vpow.pop %v6695
      %v6697 = vmul.f32 %v6612, 1.442695
      %v6698 = vpow.pop %v6697
      %v6699 = vmul.f32 %v6613, 1.442695
      %v6700 = vpow.pop %v6699
      %v6701 = vmul.f32 %v6614, 1.442695
      %v6702 = vpow.pop %v6701
      %v6703 = vmul.f32 %v6615, 1.442695
      %v6704 = vpow.pop %v6703
      %v6705 = vmul.f32 %v6616, 1.442695
      %v6706 = vpow.pop %v6705
      %v6707 = vmul.f32 %v6617, 1.442695
      %v6708 = vpow.pop %v6707
      %v6709 = vmul.f32 %v6618, 1.442695
      %v6710 = vpow.pop %v6709
      %v6711 = vmul.f32 %v6619, 1.442695
      %v6712 = vpow.pop %v6711
      %v6713 = vmul.f32 %v6620, 1.442695
      %v6714 = vpow.pop %v6713
      %v6715 = vmul.f32 %v6621, 1.442695
      %v6716 = vpow.pop %v6715
      %v6717 = vmul.f32 %v6622, 1.442695
      %v6718 = vpow.pop %v6717
      %v6719 = vmul.f32 %v6623, 1.442695
      %v6720 = vpow.pop %v6719
      %v6721 = vmul.f32 %v6624, 1.442695
      %v6722 = vpow.pop %v6721
      %v6723 = vmul.f32 %v6625, 1.442695
      %v6724 = vpow.pop %v6723
      %v6725 = vmul.f32 %v6626, 1.442695
      %v6726 = vpow.pop %v6725
      %v6727 = vmul.f32 %v6627, 1.442695
      %v6728 = vpow.pop %v6727
      %v6729 = vmul.f32 %v6628, 1.442695
      %v6730 = vpow.pop %v6729
      %v6731 = vmul.f32 %v6629, 1.442695
      %v6732 = vpow.pop %v6731
      %v6733 = vmul.f32 %v6630, 1.442695
      %v6734 = vpow.pop %v6733
      %v6735 = vmul.f32 %v6631, 1.442695
      %v6736 = vpow.pop %v6735
      %v6737 = vmul.f32 %v6632, 1.442695
      %v6738 = vpow.pop %v6737
      %v6739 = vmul.f32 %v6633, 1.442695
      %v6740 = vpow.pop %v6739
      %v6741 = vmul.f32 %v6634, 1.442695
      %v6742 = vpow.pop %v6741
      %v6743 = vmul.f32 %v6635, 1.442695
      %v6744 = vpow.pop %v6743
      %v6745 = vmul.f32 %v6636, 1.442695
      %v6746 = vpow.pop %v6745
      %v6747 = vmul.f32 %v6637, 1.442695
      %v6748 = vpow.pop %v6747
      %v6749 = vmul.f32 %v6638, 1.442695
      %v6750 = vpow.pop %v6749
      %v6751 = vmul.f32 %v6639, 1.442695
      %v6752 = vpow.pop %v6751
      %v6753 = vmul.f32 %v6640, 1.442695
      %v6754 = vpow.pop %v6753
      %v6755 = vmul.f32 %v6641, 1.442695
      %v6756 = vpow.pop %v6755
      %v6757 = vmul.f32 %v6642, 1.442695
      %v6758 = vpow.pop %v6757
      %v6759 = vmul.f32 %v6643, 1.442695
      %v6760 = vpow.pop %v6759
      %v6761 = vmul.f32 %v6644, 1.442695
      %v6762 = vpow.pop %v6761
      %v6763 = vmul.f32 %v6645, 1.442695
      %v6764 = vpow.pop %v6763
      %v6765 = vmul.f32 %v6646, 1.442695
      %v6766 = vpow.pop %v6765
      %v6767 = vmul.f32 %v6647, 1.442695
      %v6768 = vpow.pop %v6767
      %v6769 = vmul.f32 %v6648, 1.442695
      %v6770 = vpow.pop %v6769
      %v6771 = vmul.f32 %v6649, 1.442695
      %v6772 = vpow.pop %v6771
      %v6773 = vmul.f32 %v6650, 1.442695
      %v6774 = vpow.pop %v6773
      %v6775 = vmul.f32 %v6651, 1.442695
      %v6776 = vpow.pop %v6775
      %v6777 = vmul.f32 %v6652, 1.442695
      %v6778 = vpow.pop %v6777
      %v6779 = vmul.f32 %v6653, 1.442695
      %v6780 = vpow.pop %v6779
      %v6781 = vmul.f32 %v6654, 1.442695
      %v6782 = vpow.pop %v6781
      %v6783 = vadd.f32 %v6656, %v6660
      %v6784 = vadd.f32 %v6783, %v6664
      %v6785 = vadd.f32 %v6784, %v6668
      %v6786 = vadd.f32 %v6785, %v6672
      %v6787 = vadd.f32 %v6786, %v6676
      %v6788 = vadd.f32 %v6787, %v6680
      %v6789 = vadd.f32 %v6788, %v6684
      %v6790 = vadd.f32 %v6789, %v6688
      %v6791 = vadd.f32 %v6790, %v6692
      %v6792 = vadd.f32 %v6791, %v6696
      %v6793 = vadd.f32 %v6792, %v6700
      %v6794 = vadd.f32 %v6793, %v6704
      %v6795 = vadd.f32 %v6794, %v6708
      %v6796 = vadd.f32 %v6795, %v6712
      %v6797 = vadd.f32 %v6796, %v6716
      %v6798 = vadd.f32 %v6797, %v6720
      %v6799 = vadd.f32 %v6798, %v6724
      %v6800 = vadd.f32 %v6799, %v6728
      %v6801 = vadd.f32 %v6800, %v6732
      %v6802 = vadd.f32 %v6801, %v6736
      %v6803 = vadd.f32 %v6802, %v6740
      %v6804 = vadd.f32 %v6803, %v6744
      %v6805 = vadd.f32 %v6804, %v6748
      %v6806 = vadd.f32 %v6805, %v6752
      %v6807 = vadd.f32 %v6806, %v6756
      %v6808 = vadd.f32 %v6807, %v6760
      %v6809 = vadd.f32 %v6808, %v6764
      %v6810 = vadd.f32 %v6809, %v6768
      %v6811 = vadd.f32 %v6810, %v6772
      %v6812 = vadd.f32 %v6811, %v6776
      %v6813 = vadd.f32 %v6812, %v6780
      %v6814 = vrot.slane %v6813, 4
      %v6815 = vadd.f32 %v6813, %v6814
      %v6816 = vrot.slane %v6815, 2
      %v6817 = vadd.f32 %v6815, %v6816
      %v6818 = vrot.slane %v6817, 1
      %v6819 = vadd.f32 %v6817, %v6818
      %v6820 = vadd.f32 %v6658, %v6662
      %v6821 = vadd.f32 %v6820, %v6666
      %v6822 = vadd.f32 %v6821, %v6670
      %v6823 = vadd.f32 %v6822, %v6674
      %v6824 = vadd.f32 %v6823, %v6678
      %v6825 = vadd.f32 %v6824, %v6682
      %v6826 = vadd.f32 %v6825, %v6686
      %v6827 = vadd.f32 %v6826, %v6690
      %v6828 = vadd.f32 %v6827, %v6694
      %v6829 = vadd.f32 %v6828, %v6698
      %v6830 = vadd.f32 %v6829, %v6702
      %v6831 = vadd.f32 %v6830, %v6706
      %v6832 = vadd.f32 %v6831, %v6710
      %v6833 = vadd.f32 %v6832, %v6714
      %v6834 = vadd.f32 %v6833, %v6718
      %v6835 = vadd.f32 %v6834, %v6722
      %v6836 = vadd.f32 %v6835, %v6726
      %v6837 = vadd.f32 %v6836, %v6730
      %v6838 = vadd.f32 %v6837, %v6734
      %v6839 = vadd.f32 %v6838, %v6738
      %v6840 = vadd.f32 %v6839, %v6742
      %v6841 = vadd.f32 %v6840, %v6746
      %v6842 = vadd.f32 %v6841, %v6750
      %v6843 = vadd.f32 %v6842, %v6754
      %v6844 = vadd.f32 %v6843, %v6758
      %v6845 = vadd.f32 %v6844, %v6762
      %v6846 = vadd.f32 %v6845, %v6766
      %v6847 = vadd.f32 %v6846, %v6770
      %v6848 = vadd.f32 %v6847, %v6774
      %v6849 = vadd.f32 %v6848, %v6778
      %v6850 = vadd.f32 %v6849, %v6782
      %v6851 = vrot.slane %v6850, 4
      %v6852 = vadd.f32 %v6850, %v6851
      %v6853 = vrot.slane %v6852, 2
      %v6854 = vadd.f32 %v6852, %v6853
      %v6855 = vrot.slane %v6854, 1
      %v6856 = vadd.f32 %v6854, %v6855
      %v6857 = vrcp.pop %v6819
      %v6858 = vrcp.pop %v6856
      %v6859 = vpack.c.bf16 %v6658, %v6656
      %v6860 = vpack.c.bf16 %v6662, %v6660
      %v6861 = vpack.c.bf16 %v6666, %v6664
      %v6862 = vpack.c.bf16 %v6670, %v6668
      %v6863 = vpack.c.bf16 %v6674, %v6672
      %v6864 = vpack.c.bf16 %v6678, %v6676
      %v6865 = vpack.c.bf16 %v6682, %v6680
      %v6866 = vpack.c.bf16 %v6686, %v6684
      %v6867 = vpack.c.bf16 %v6690, %v6688
      %v6868 = vpack.c.bf16 %v6694, %v6692
      %v6869 = vpack.c.bf16 %v6698, %v6696
      %v6870 = vpack.c.bf16 %v6702, %v6700
      %v6871 = vpack.c.bf16 %v6706, %v6704
      %v6872 = vpack.c.bf16 %v6710, %v6708
      %v6873 = vpack.c.bf16 %v6714, %v6712
      %v6874 = vpack.c.bf16 %v6718, %v6716
      %v6875 = vpack.c.bf16 %v6722, %v6720
      %v6876 = vpack.c.bf16 %v6726, %v6724
      %v6877 = vpack.c.bf16 %v6730, %v6728
      %v6878 = vpack.c.bf16 %v6734, %v6732
      %v6879 = vpack.c.bf16 %v6738, %v6736
      %v6880 = vpack.c.bf16 %v6742, %v6740
      %v6881 = vpack.c.bf16 %v6746, %v6744
      %v6882 = vpack.c.bf16 %v6750, %v6748
      %v6883 = vpack.c.bf16 %v6754, %v6752
      %v6884 = vpack.c.bf16 %v6758, %v6756
      %v6885 = vpack.c.bf16 %v6762, %v6760
      %v6886 = vpack.c.bf16 %v6766, %v6764
      %v6887 = vpack.c.bf16 %v6770, %v6768
      %v6888 = vpack.c.bf16 %v6774, %v6772
      %v6889 = vpack.c.bf16 %v6778, %v6776
      %v6890 = vpack.c.bf16 %v6782, %v6780
      %v6923 = vunpack.c.l.b16 %v5755
      %v6924 = vunpack.c.h.b16 %v5755
      %v6925 = vunpack.c.l.b16 %v5756
      %v6926 = vunpack.c.h.b16 %v5756
      %v6927 = vunpack.c.l.b16 %v5757
      %v6928 = vunpack.c.h.b16 %v5757
      %v6929 = vunpack.c.l.b16 %v5758
      %v6930 = vunpack.c.h.b16 %v5758
      %v6931 = vunpack.c.l.b16 %v5759
      %v6932 = vunpack.c.h.b16 %v5759
      %v6933 = vunpack.c.l.b16 %v5760
      %v6934 = vunpack.c.h.b16 %v5760
      %v6935 = vunpack.c.l.b16 %v5761
      %v6936 = vunpack.c.h.b16 %v5761
      %v6937 = vunpack.c.l.b16 %v5762
      %v6938 = vunpack.c.h.b16 %v5762
      %v6939 = vunpack.c.l.b16 %v5763
      %v6940 = vunpack.c.h.b16 %v5763
      %v6941 = vunpack.c.l.b16 %v5764
      %v6942 = vunpack.c.h.b16 %v5764
      %v6943 = vunpack.c.l.b16 %v5765
      %v6944 = vunpack.c.h.b16 %v5765
      %v6945 = vunpack.c.l.b16 %v5766
      %v6946 = vunpack.c.h.b16 %v5766
      %v6947 = vunpack.c.l.b16 %v5767
      %v6948 = vunpack.c.h.b16 %v5767
      %v6949 = vunpack.c.l.b16 %v5768
      %v6950 = vunpack.c.h.b16 %v5768
      %v6951 = vunpack.c.l.b16 %v5769
      %v6952 = vunpack.c.h.b16 %v5769
      %v6953 = vunpack.c.l.b16 %v5770
      %v6954 = vunpack.c.h.b16 %v5770
      %v6955 = vunpack.c.l.b16 %v5771
      %v6956 = vunpack.c.h.b16 %v5771
      %v6957 = vunpack.c.l.b16 %v5772
      %v6958 = vunpack.c.h.b16 %v5772
      %v6959 = vunpack.c.l.b16 %v5773
      %v6960 = vunpack.c.h.b16 %v5773
      %v6961 = vunpack.c.l.b16 %v5774
      %v6962 = vunpack.c.h.b16 %v5774
      %v6963 = vunpack.c.l.b16 %v5775
      %v6964 = vunpack.c.h.b16 %v5775
      %v6965 = vunpack.c.l.b16 %v5776
      %v6966 = vunpack.c.h.b16 %v5776
      %v6967 = vunpack.c.l.b16 %v5777
      %v6968 = vunpack.c.h.b16 %v5777
      %v6969 = vunpack.c.l.b16 %v5778
      %v6970 = vunpack.c.h.b16 %v5778
      %v6971 = vunpack.c.l.b16 %v5779
      %v6972 = vunpack.c.h.b16 %v5779
      %v6973 = vunpack.c.l.b16 %v5780
      %v6974 = vunpack.c.h.b16 %v5780
      %v6975 = vunpack.c.l.b16 %v5781
      %v6976 = vunpack.c.h.b16 %v5781
      %v6977 = vunpack.c.l.b16 %v5782
      %v6978 = vunpack.c.h.b16 %v5782
      %v6979 = vunpack.c.l.b16 %v5783
      %v6980 = vunpack.c.h.b16 %v5783
      %v6981 = vunpack.c.l.b16 %v5784
      %v6982 = vunpack.c.h.b16 %v5784
      %v6983 = vunpack.c.l.b16 %v5785
      %v6984 = vunpack.c.h.b16 %v5785
      %v6985 = vunpack.c.l.b16 %v5786
      %v6986 = vunpack.c.h.b16 %v5786
      %v6987 = vpack.c.b16 %v6925, %v6923
      %v6988 = vpack.c.b16 %v6926, %v6924
      %v6989 = vpack.c.b16 %v6929, %v6927
      %v6990 = vpack.c.b16 %v6930, %v6928
      %v6991 = vpack.c.b16 %v6933, %v6931
      %v6992 = vpack.c.b16 %v6934, %v6932
      %v6993 = vpack.c.b16 %v6937, %v6935
      %v6994 = vpack.c.b16 %v6938, %v6936
      %v6995 = vpack.c.b16 %v6941, %v6939
      %v6996 = vpack.c.b16 %v6942, %v6940
      %v6997 = vpack.c.b16 %v6945, %v6943
      %v6998 = vpack.c.b16 %v6946, %v6944
      %v6999 = vpack.c.b16 %v6949, %v6947
      %v7000 = vpack.c.b16 %v6950, %v6948
      %v7001 = vpack.c.b16 %v6953, %v6951
      %v7002 = vpack.c.b16 %v6954, %v6952
      %v7003 = vpack.c.b16 %v6957, %v6955
      %v7004 = vpack.c.b16 %v6958, %v6956
      %v7005 = vpack.c.b16 %v6961, %v6959
      %v7006 = vpack.c.b16 %v6962, %v6960
      %v7007 = vpack.c.b16 %v6965, %v6963
      %v7008 = vpack.c.b16 %v6966, %v6964
      %v7009 = vpack.c.b16 %v6969, %v6967
      %v7010 = vpack.c.b16 %v6970, %v6968
      %v7011 = vpack.c.b16 %v6973, %v6971
      %v7012 = vpack.c.b16 %v6974, %v6972
      %v7013 = vpack.c.b16 %v6977, %v6975
      %v7014 = vpack.c.b16 %v6978, %v6976
      %v7015 = vpack.c.b16 %v6981, %v6979
      %v7016 = vpack.c.b16 %v6982, %v6980
      %v7017 = vpack.c.b16 %v6985, %v6983
      %v7018 = vpack.c.b16 %v6986, %v6984
      %v7083 = vunpack.c.l.b16 %v6307
      %v7084 = vunpack.c.h.b16 %v6307
      %v7085 = vunpack.c.l.b16 %v6308
      %v7086 = vunpack.c.h.b16 %v6308
      %v7087 = vunpack.c.l.b16 %v6309
      %v7088 = vunpack.c.h.b16 %v6309
      %v7089 = vunpack.c.l.b16 %v6310
      %v7090 = vunpack.c.h.b16 %v6310
      %v7091 = vunpack.c.l.b16 %v6311
      %v7092 = vunpack.c.h.b16 %v6311
      %v7093 = vunpack.c.l.b16 %v6312
      %v7094 = vunpack.c.h.b16 %v6312
      %v7095 = vunpack.c.l.b16 %v6313
      %v7096 = vunpack.c.h.b16 %v6313
      %v7097 = vunpack.c.l.b16 %v6314
      %v7098 = vunpack.c.h.b16 %v6314
      %v7099 = vunpack.c.l.b16 %v6315
      %v7100 = vunpack.c.h.b16 %v6315
      %v7101 = vunpack.c.l.b16 %v6316
      %v7102 = vunpack.c.h.b16 %v6316
      %v7103 = vunpack.c.l.b16 %v6317
      %v7104 = vunpack.c.h.b16 %v6317
      %v7105 = vunpack.c.l.b16 %v6318
      %v7106 = vunpack.c.h.b16 %v6318
      %v7107 = vunpack.c.l.b16 %v6319
      %v7108 = vunpack.c.h.b16 %v6319
      %v7109 = vunpack.c.l.b16 %v6320
      %v7110 = vunpack.c.h.b16 %v6320
      %v7111 = vunpack.c.l.b16 %v6321
      %v7112 = vunpack.c.h.b16 %v6321
      %v7113 = vunpack.c.l.b16 %v6322
      %v7114 = vunpack.c.h.b16 %v6322
      %v7115 = vunpack.c.l.b16 %v6323
      %v7116 = vunpack.c.h.b16 %v6323
      %v7117 = vunpack.c.l.b16 %v6324
      %v7118 = vunpack.c.h.b16 %v6324
      %v7119 = vunpack.c.l.b16 %v6325
      %v7120 = vunpack.c.h.b16 %v6325
      %v7121 = vunpack.c.l.b16 %v6326
      %v7122 = vunpack.c.h.b16 %v6326
      %v7123 = vunpack.c.l.b16 %v6327
      %v7124 = vunpack.c.h.b16 %v6327
      %v7125 = vunpack.c.l.b16 %v6328
      %v7126 = vunpack.c.h.b16 %v6328
      %v7127 = vunpack.c.l.b16 %v6329
      %v7128 = vunpack.c.h.b16 %v6329
      %v7129 = vunpack.c.l.b16 %v6330
      %v7130 = vunpack.c.h.b16 %v6330
      %v7131 = vunpack.c.l.b16 %v6331
      %v7132 = vunpack.c.h.b16 %v6331
      %v7133 = vunpack.c.l.b16 %v6332
      %v7134 = vunpack.c.h.b16 %v6332
      %v7135 = vunpack.c.l.b16 %v6333
      %v7136 = vunpack.c.h.b16 %v6333
      %v7137 = vunpack.c.l.b16 %v6334
      %v7138 = vunpack.c.h.b16 %v6334
      %v7139 = vunpack.c.l.b16 %v6335
      %v7140 = vunpack.c.h.b16 %v6335
      %v7141 = vunpack.c.l.b16 %v6336
      %v7142 = vunpack.c.h.b16 %v6336
      %v7143 = vunpack.c.l.b16 %v6337
      %v7144 = vunpack.c.h.b16 %v6337
      %v7145 = vunpack.c.l.b16 %v6338
      %v7146 = vunpack.c.h.b16 %v6338
      %v7147 = vpack.c.b16 %v7085, %v7083
      %v7148 = vpack.c.b16 %v7086, %v7084
      %v7149 = vpack.c.b16 %v7089, %v7087
      %v7150 = vpack.c.b16 %v7090, %v7088
      %v7151 = vpack.c.b16 %v7093, %v7091
      %v7152 = vpack.c.b16 %v7094, %v7092
      %v7153 = vpack.c.b16 %v7097, %v7095
      %v7154 = vpack.c.b16 %v7098, %v7096
      %v7155 = vpack.c.b16 %v7101, %v7099
      %v7156 = vpack.c.b16 %v7102, %v7100
      %v7157 = vpack.c.b16 %v7105, %v7103
      %v7158 = vpack.c.b16 %v7106, %v7104
      %v7159 = vpack.c.b16 %v7109, %v7107
      %v7160 = vpack.c.b16 %v7110, %v7108
      %v7161 = vpack.c.b16 %v7113, %v7111
      %v7162 = vpack.c.b16 %v7114, %v7112
      %v7163 = vpack.c.b16 %v7117, %v7115
      %v7164 = vpack.c.b16 %v7118, %v7116
      %v7165 = vpack.c.b16 %v7121, %v7119
      %v7166 = vpack.c.b16 %v7122, %v7120
      %v7167 = vpack.c.b16 %v7125, %v7123
      %v7168 = vpack.c.b16 %v7126, %v7124
      %v7169 = vpack.c.b16 %v7129, %v7127
      %v7170 = vpack.c.b16 %v7130, %v7128
      %v7171 = vpack.c.b16 %v7133, %v7131
      %v7172 = vpack.c.b16 %v7134, %v7132
      %v7173 = vpack.c.b16 %v7137, %v7135
      %v7174 = vpack.c.b16 %v7138, %v7136
      %v7175 = vpack.c.b16 %v7141, %v7139
      %v7176 = vpack.c.b16 %v7142, %v7140
      %v7177 = vpack.c.b16 %v7145, %v7143
      %v7178 = vpack.c.b16 %v7146, %v7144
      %v7243 = vunpack.c.l.b16 %v6859
      %v7244 = vunpack.c.h.b16 %v6859
      %v7245 = vunpack.c.l.b16 %v6860
      %v7246 = vunpack.c.h.b16 %v6860
      %v7247 = vunpack.c.l.b16 %v6861
      %v7248 = vunpack.c.h.b16 %v6861
      %v7249 = vunpack.c.l.b16 %v6862
      %v7250 = vunpack.c.h.b16 %v6862
      %v7251 = vunpack.c.l.b16 %v6863
      %v7252 = vunpack.c.h.b16 %v6863
      %v7253 = vunpack.c.l.b16 %v6864
      %v7254 = vunpack.c.h.b16 %v6864
      %v7255 = vunpack.c.l.b16 %v6865
      %v7256 = vunpack.c.h.b16 %v6865
      %v7257 = vunpack.c.l.b16 %v6866
      %v7258 = vunpack.c.h.b16 %v6866
      %v7259 = vunpack.c.l.b16 %v6867
      %v7260 = vunpack.c.h.b16 %v6867
      %v7261 = vunpack.c.l.b16 %v6868
      %v7262 = vunpack.c.h.b16 %v6868
      %v7263 = vunpack.c.l.b16 %v6869
      %v7264 = vunpack.c.h.b16 %v6869
      %v7265 = vunpack.c.l.b16 %v6870
      %v7266 = vunpack.c.h.b16 %v6870
      %v7267 = vunpack.c.l.b16 %v6871
      %v7268 = vunpack.c.h.b16 %v6871
      %v7269 = vunpack.c.l.b16 %v6872
      %v7270 = vunpack.c.h.b16 %v6872
      %v7271 = vunpack.c.l.b16 %v6873
      %v7272 = vunpack.c.h.b16 %v6873
      %v7273 = vunpack.c.l.b16 %v6874
      %v7274 = vunpack.c.h.b16 %v6874
      %v7275 = vunpack.c.l.b16 %v6875
      %v7276 = vunpack.c.h.b16 %v6875
      %v7277 = vunpack.c.l.b16 %v6876
      %v7278 = vunpack.c.h.b16 %v6876
      %v7279 = vunpack.c.l.b16 %v6877
      %v7280 = vunpack.c.h.b16 %v6877
      %v7281 = vunpack.c.l.b16 %v6878
      %v7282 = vunpack.c.h.b16 %v6878
      %v7283 = vunpack.c.l.b16 %v6879
      %v7284 = vunpack.c.h.b16 %v6879
      %v7285 = vunpack.c.l.b16 %v6880
      %v7286 = vunpack.c.h.b16 %v6880
      %v7287 = vunpack.c.l.b16 %v6881
      %v7288 = vunpack.c.h.b16 %v6881
      %v7289 = vunpack.c.l.b16 %v6882
      %v7290 = vunpack.c.h.b16 %v6882
      %v7291 = vunpack.c.l.b16 %v6883
      %v7292 = vunpack.c.h.b16 %v6883
      %v7293 = vunpack.c.l.b16 %v6884
      %v7294 = vunpack.c.h.b16 %v6884
      %v7295 = vunpack.c.l.b16 %v6885
      %v7296 = vunpack.c.h.b16 %v6885
      %v7297 = vunpack.c.l.b16 %v6886
      %v7298 = vunpack.c.h.b16 %v6886
      %v7299 = vunpack.c.l.b16 %v6887
      %v7300 = vunpack.c.h.b16 %v6887
      %v7301 = vunpack.c.l.b16 %v6888
      %v7302 = vunpack.c.h.b16 %v6888
      %v7303 = vunpack.c.l.b16 %v6889
      %v7304 = vunpack.c.h.b16 %v6889
      %v7305 = vunpack.c.l.b16 %v6890
      %v7306 = vunpack.c.h.b16 %v6890
      %v7307 = vpack.c.b16 %v7245, %v7243
      %v7308 = vpack.c.b16 %v7246, %v7244
      %v7309 = vpack.c.b16 %v7249, %v7247
      %v7310 = vpack.c.b16 %v7250, %v7248
      %v7311 = vpack.c.b16 %v7253, %v7251
      %v7312 = vpack.c.b16 %v7254, %v7252
      %v7313 = vpack.c.b16 %v7257, %v7255
      %v7314 = vpack.c.b16 %v7258, %v7256
      %v7315 = vpack.c.b16 %v7261, %v7259
      %v7316 = vpack.c.b16 %v7262, %v7260
      %v7317 = vpack.c.b16 %v7265, %v7263
      %v7318 = vpack.c.b16 %v7266, %v7264
      %v7319 = vpack.c.b16 %v7269, %v7267
      %v7320 = vpack.c.b16 %v7270, %v7268
      %v7321 = vpack.c.b16 %v7273, %v7271
      %v7322 = vpack.c.b16 %v7274, %v7272
      %v7323 = vpack.c.b16 %v7277, %v7275
      %v7324 = vpack.c.b16 %v7278, %v7276
      %v7325 = vpack.c.b16 %v7281, %v7279
      %v7326 = vpack.c.b16 %v7282, %v7280
      %v7327 = vpack.c.b16 %v7285, %v7283
      %v7328 = vpack.c.b16 %v7286, %v7284
      %v7329 = vpack.c.b16 %v7289, %v7287
      %v7330 = vpack.c.b16 %v7290, %v7288
      %v7331 = vpack.c.b16 %v7293, %v7291
      %v7332 = vpack.c.b16 %v7294, %v7292
      %v7333 = vpack.c.b16 %v7297, %v7295
      %v7334 = vpack.c.b16 %v7298, %v7296
      %v7335 = vpack.c.b16 %v7301, %v7299
      %v7336 = vpack.c.b16 %v7302, %v7300
      %v7337 = vpack.c.b16 %v7305, %v7303
      %v7338 = vpack.c.b16 %v7306, %v7304
      %v7372 = vunpack.c.l.b16 %v5220
      %v7373 = vunpack.c.h.b16 %v5220
      %v7374 = vpack.c.b16 %v7372, %v7372
      %v7375 = vpack.c.b16 %v7373, %v7373
      %7378 = vmatpush.bf16.msra.mxu0 %v7001
      %7379 = vmatpush.bf16.msra.mxu0 %v6999
      %7380 = vmatpush.bf16.msra.mxu0 %v6997
      %7381 = vmatpush.bf16.msra.mxu0 %v6995
      %7382 = vmatpush.bf16.msra.mxu0 %v6993
      %7383 = vmatpush.bf16.msra.mxu0 %v6991
      %7384 = vmatpush.bf16.msra.mxu0 %v6989
      %7385 = vmatpush.bf16.msra.mxu0 %v6987
      %7386 = vmatmul.bf16.gmra.mxu0 %v7374
      %v7387 = vpop.f32.mrf.mxu0
      %v7388 = vadd.f32 0.0, %v7387
      %v7389 = vpop.f32.mrf.mxu0
      %7390 = vdwg.mxu0
      %7391 = vmatpush.bf16.msra.mxu0 %v7017
      %7392 = vmatpush.bf16.msra.mxu0 %v7015
      %7393 = vmatpush.bf16.msra.mxu0 %v7013
      %7394 = vmatpush.bf16.msra.mxu0 %v7011
      %7395 = vmatpush.bf16.msra.mxu0 %v7009
      %7396 = vmatpush.bf16.msra.mxu0 %v7007
      %7397 = vmatpush.bf16.msra.mxu0 %v7005
      %7398 = vmatpush.bf16.msra.mxu0 %v7003
      %7399 = vmatmul.bf16.gmra.mxu0 %v7375
      %v7400 = vpop.f32.mrf.mxu0
      %v7401 = vadd.f32 %v7388, %v7400
      %v7402 = vpop.f32.mrf.mxu0
      %7403 = vdwg.mxu0
      %7404 = vmatpush.bf16.msra.mxu0 %v7002
      %7405 = vmatpush.bf16.msra.mxu0 %v7000
      %7406 = vmatpush.bf16.msra.mxu0 %v6998
      %7407 = vmatpush.bf16.msra.mxu0 %v6996
      %7408 = vmatpush.bf16.msra.mxu0 %v6994
      %7409 = vmatpush.bf16.msra.mxu0 %v6992
      %7410 = vmatpush.bf16.msra.mxu0 %v6990
      %7411 = vmatpush.bf16.msra.mxu0 %v6988
      %7412 = vmatmul.bf16.gmra.mxu0 %v7374
      %v7413 = vpop.f32.mrf.mxu0
      %v7414 = vadd.f32 0.0, %v7413
      %v7415 = vpop.f32.mrf.mxu0
      %7416 = vdwg.mxu0
      %7417 = vmatpush.bf16.msra.mxu0 %v7018
      %7418 = vmatpush.bf16.msra.mxu0 %v7016
      %7419 = vmatpush.bf16.msra.mxu0 %v7014
      %7420 = vmatpush.bf16.msra.mxu0 %v7012
      %7421 = vmatpush.bf16.msra.mxu0 %v7010
      %7422 = vmatpush.bf16.msra.mxu0 %v7008
      %7423 = vmatpush.bf16.msra.mxu0 %v7006
      %7424 = vmatpush.bf16.msra.mxu0 %v7004
      %7425 = vmatmul.bf16.gmra.mxu0 %v7375
      %v7426 = vpop.f32.mrf.mxu0
      %v7427 = vadd.f32 %v7414, %v7426
      %v7428 = vpop.f32.mrf.mxu0
      %7429 = vdwg.mxu0
      %7430 = vmatpush.bf16.msra.mxu0 %v7161
      %7431 = vmatpush.bf16.msra.mxu0 %v7159
      %7432 = vmatpush.bf16.msra.mxu0 %v7157
      %7433 = vmatpush.bf16.msra.mxu0 %v7155
      %7434 = vmatpush.bf16.msra.mxu0 %v7153
      %7435 = vmatpush.bf16.msra.mxu0 %v7151
      %7436 = vmatpush.bf16.msra.mxu0 %v7149
      %7437 = vmatpush.bf16.msra.mxu0 %v7147
      %7438 = vmatmul.bf16.gmra.mxu0 %v7374
      %v7439 = vpop.f32.mrf.mxu0
      %v7440 = vadd.f32 0.0, %v7439
      %v7441 = vpop.f32.mrf.mxu0
      %7442 = vdwg.mxu0
      %7443 = vmatpush.bf16.msra.mxu0 %v7177
      %7444 = vmatpush.bf16.msra.mxu0 %v7175
      %7445 = vmatpush.bf16.msra.mxu0 %v7173
      %7446 = vmatpush.bf16.msra.mxu0 %v7171
      %7447 = vmatpush.bf16.msra.mxu0 %v7169
      %7448 = vmatpush.bf16.msra.mxu0 %v7167
      %7449 = vmatpush.bf16.msra.mxu0 %v7165
      %7450 = vmatpush.bf16.msra.mxu0 %v7163
      %7451 = vmatmul.bf16.gmra.mxu0 %v7375
      %v7452 = vpop.f32.mrf.mxu0
      %v7453 = vadd.f32 %v7440, %v7452
      %v7454 = vpop.f32.mrf.mxu0
      %7455 = vdwg.mxu0
      %7456 = vmatpush.bf16.msra.mxu0 %v7162
      %7457 = vmatpush.bf16.msra.mxu0 %v7160
      %7458 = vmatpush.bf16.msra.mxu0 %v7158
      %7459 = vmatpush.bf16.msra.mxu0 %v7156
      %7460 = vmatpush.bf16.msra.mxu0 %v7154
      %7461 = vmatpush.bf16.msra.mxu0 %v7152
      %7462 = vmatpush.bf16.msra.mxu0 %v7150
      %7463 = vmatpush.bf16.msra.mxu0 %v7148
      %7464 = vmatmul.bf16.gmra.mxu0 %v7374
      %v7465 = vpop.f32.mrf.mxu0
      %v7466 = vadd.f32 0.0, %v7465
      %v7467 = vpop.f32.mrf.mxu0
      %7468 = vdwg.mxu0
      %7469 = vmatpush.bf16.msra.mxu0 %v7178
      %7470 = vmatpush.bf16.msra.mxu0 %v7176
      %7471 = vmatpush.bf16.msra.mxu0 %v7174
      %7472 = vmatpush.bf16.msra.mxu0 %v7172
      %7473 = vmatpush.bf16.msra.mxu0 %v7170
      %7474 = vmatpush.bf16.msra.mxu0 %v7168
      %7475 = vmatpush.bf16.msra.mxu0 %v7166
      %7476 = vmatpush.bf16.msra.mxu0 %v7164
      %7477 = vmatmul.bf16.gmra.mxu0 %v7375
      %v7478 = vpop.f32.mrf.mxu0
      %v7479 = vadd.f32 %v7466, %v7478
      %v7480 = vpop.f32.mrf.mxu0
      %7481 = vdwg.mxu0
      %7482 = vmatpush.bf16.msra.mxu0 %v7321
      %7483 = vmatpush.bf16.msra.mxu0 %v7319
      %7484 = vmatpush.bf16.msra.mxu0 %v7317
      %7485 = vmatpush.bf16.msra.mxu0 %v7315
      %7486 = vmatpush.bf16.msra.mxu0 %v7313
      %7487 = vmatpush.bf16.msra.mxu0 %v7311
      %7488 = vmatpush.bf16.msra.mxu0 %v7309
      %7489 = vmatpush.bf16.msra.mxu0 %v7307
      %7490 = vmatmul.bf16.gmra.mxu0 %v7374
      %v7491 = vpop.f32.mrf.mxu0
      %v7492 = vadd.f32 0.0, %v7491
      %v7493 = vpop.f32.mrf.mxu0
      %7494 = vdwg.mxu0
      %7495 = vmatpush.bf16.msra.mxu0 %v7337
      %7496 = vmatpush.bf16.msra.mxu0 %v7335
      %7497 = vmatpush.bf16.msra.mxu0 %v7333
      %7498 = vmatpush.bf16.msra.mxu0 %v7331
      %7499 = vmatpush.bf16.msra.mxu0 %v7329
      %7500 = vmatpush.bf16.msra.mxu0 %v7327
      %7501 = vmatpush.bf16.msra.mxu0 %v7325
      %7502 = vmatpush.bf16.msra.mxu0 %v7323
      %7503 = vmatmul.bf16.gmra.mxu0 %v7375
      %v7504 = vpop.f32.mrf.mxu0
      %v7505 = vadd.f32 %v7492, %v7504
      %v7506 = vpop.f32.mrf.mxu0
      %7507 = vdwg.mxu0
      %7508 = vmatpush.bf16.msra.mxu0 %v7322
      %7509 = vmatpush.bf16.msra.mxu0 %v7320
      %7510 = vmatpush.bf16.msra.mxu0 %v7318
      %7511 = vmatpush.bf16.msra.mxu0 %v7316
      %7512 = vmatpush.bf16.msra.mxu0 %v7314
      %7513 = vmatpush.bf16.msra.mxu0 %v7312
      %7514 = vmatpush.bf16.msra.mxu0 %v7310
      %7515 = vmatpush.bf16.msra.mxu0 %v7308
      %7516 = vmatmul.bf16.gmra.mxu0 %v7374
      %v7517 = vpop.f32.mrf.mxu0
      %v7518 = vadd.f32 0.0, %v7517
      %v7519 = vpop.f32.mrf.mxu0
      %7520 = vdwg.mxu0
      %7521 = vmatpush.bf16.msra.mxu0 %v7338
      %7522 = vmatpush.bf16.msra.mxu0 %v7336
      %7523 = vmatpush.bf16.msra.mxu0 %v7334
      %7524 = vmatpush.bf16.msra.mxu0 %v7332
      %7525 = vmatpush.bf16.msra.mxu0 %v7330
      %7526 = vmatpush.bf16.msra.mxu0 %v7328
      %7527 = vmatpush.bf16.msra.mxu0 %v7326
      %7528 = vmatpush.bf16.msra.mxu0 %v7324
      %7529 = vmatmul.bf16.gmra.mxu0 %v7375
      %v7530 = vpop.f32.mrf.mxu0
      %v7531 = vadd.f32 %v7518, %v7530
      %v7532 = vpop.f32.mrf.mxu0
      %7533 = vdwg.mxu0
      %v7534 = vmul.f32 %v7401, %v5753
      %v7535 = vmul.f32 %v7427, %v5754
      %v7536 = vadd.f32 %v7534, %v5222
      %v7537 = vadd.f32 %v7535, %v5223
      %v7538 = vmul.f32 %v7453, %v6305
      %v7539 = vmul.f32 %v7479, %v6306
      %v7540 = vadd.f32 %v7538, %v5222
      %v7541 = vadd.f32 %v7539, %v5223
      %v7542 = vmul.f32 %v7505, %v6857
      %v7543 = vmul.f32 %v7531, %v6858
      %v7544 = vadd.f32 %v7542, %v5222
      %v7545 = vadd.f32 %v7543, %v5223
      %v7548 = vrot.slane %v2878, 4
      %v7549 = vrot.slane %v2879, 4
      %v7554 = vrot.slane %v5210, 4
      %v7555 = vrot.slane %v5211, 4
      %v7560 = vrot.slane %v5218, 4
      %v7561 = vrot.slane %v5219, 4
      %v7566 = vrot.slane %v7540, 4
      %v7567 = vrot.slane %v7541, 4
      %vm7570 = vcmask 1043456
      %v7571 = vsel %vm7570, %v2874, %v7548
      %v7572 = vsel %vm7570, %v2875, %v7549
      %v7573 = vsel %vm7570, %v2882, %v7554
      %v7574 = vsel %vm7570, %v2883, %v7555
      %v7575 = vsel %vm7570, %v5214, %v7560
      %v7576 = vsel %vm7570, %v5215, %v7561
      %v7577 = vsel %vm7570, %v7536, %v7566
      %v7578 = vsel %vm7570, %v7537, %v7567
      %7579 = vst [vmem:[%s311] sm:$0xff] %v7571
      %7580 = vst [vmem:[%s311 + $0x8] sm:$0xff] %v7572
      %7581 = vst [vmem:[%s311 + $0x10] sm:$0xff] %v7573
      %7582 = vst [vmem:[%s311 + $0x18] sm:$0xff] %v7574
      %7583 = vst [vmem:[%s311 + $0x20] sm:$0xff] %v7575
      %7584 = vst [vmem:[%s311 + $0x28] sm:$0xff] %v7576
      %7585 = vst [vmem:[%s311 + $0x30] sm:$0xff] %v7577
      %7586 = vst [vmem:[%s311 + $0x38] sm:$0xff] %v7578
      %7587 = vst [vmem:[%s311 + $0x40] sm:$0xf] %v7544
      %7588 = vst [vmem:[%s311 + $0x48] sm:$0xf] %v7545
      %s7589 = smul.u32 2, %s20
      %p7590 = scmp.lt.s32.totalorder %s19, 1
      %s7591 = scalar_select %p7590, %s19, 1
      %p7592 = scmp.lt.s32.totalorder %s7589, 1
      %s7593 = scalar_select %p7592, %s7589, 1
      %s7594 = smul.addr %s7591, 10
      %s7595 = sadd.s32 %s7593, %s7594
      %s7596 = smul.addr %s7595, 8
      %s7597 = scalar_lea.vmem %s4, %s7596
      // Predicated region
      $region37: #{image_cross_attention_forward.1} parent=35 // pred_check
        %p7598 = pneg %p155
      $region38: #{image_cross_attention_forward.1} parent=35 // pred_check_branch
        %7600 = sbr.rel (%p7598) target = $region40
      $region39: #{image_cross_attention_forward.1} parent=35 // pred_region
        %s7601 = smul.u32 2, %s20
      $region40: #{image_cross_attention_forward.1} parent=35 // pred_fallthru
        _
    $region36: #{image_cross_attention_forward.1} parent=5 // pred_fallthru
      _
    %p7602 = scmp.le.s32.totalorder 2, %s10
    // Predicated region
    $region41: #{image_cross_attention_forward.1} parent=5 // pred_check
      %p7603 = pneg %p7602
    $region42: #{image_cross_attention_forward.1} parent=5 // pred_check_branch
      %7605 = sbr.rel (%p7603) target = $region44
    $region43: #{image_cross_attention_forward.1} parent=5 // pred_region
      %s7606 = ssub.s32 %s10, 2
      // Predicated region
      $region45: #{image_cross_attention_forward.1} parent=43 // pred_check
        %p7607 = pneg %p161
      $region46: #{image_cross_attention_forward.1} parent=43 // pred_check_branch
        %7609 = sbr.rel (%p7607) target = $region48
      $region47: #{image_cross_attention_forward.1} parent=43 // pred_region
        %s7610 = smul.u32 2, %s22
        %p7611 = scmp.lt.s32.totalorder %s21, 1
        %s7612 = scalar_select %p7611, %s21, 1
        %p7613 = scmp.lt.s32.totalorder %s7610, 1
        %s7614 = scalar_select %p7613, %s7610, 1
        %s7615 = smul.addr %s7612, 10
        %s7616 = sadd.s32 %s7614, %s7615
        %s7617 = smul.addr %s7616, 8
        %s7618 = scalar_lea.vmem %s4, %s7617
      $region48: #{image_cross_attention_forward.1} parent=43 // pred_fallthru
        _
    $region44: #{image_cross_attention_forward.1} parent=5 // pred_fallthru
      _
  $region6: #{image_cross_attention_forward.1} parent=0 // loop_footer
    %s14 = sadd.s32 1, %s10
  $region7: #{image_cross_attention_forward.1} parent=0 // loop_footer_branch
    %9 = sbr.rel target = $region3
  $region8: #{image_cross_attention_forward.1} parent=0 // loop_exit
    _

</llo_original>
